<compile_context>
chip_gen: v5e
topology: v5e:2x2
jax: 0.10.0
libtpu: 0.0.40
codegen_flags: <defaults>
</compile_context>

<pallas_src>
import functools
import math

import jax
import jax.numpy as jnp
from jax import lax
from jax.experimental import pallas as pl
from jax.experimental.pallas import tpu as pltpu

LANE = 128                       # channel tile (lane width)
ACT_DTYPE = jnp.bfloat16         # activation storage dtype in HBM
COMPUTE_DTYPE = jnp.bfloat16     # MXU operand dtype (f32 accumulation)
BN_EPS = 1e-5
VMEM_LIMIT = 32 * 1024 * 1024    # explicit scoped-VMEM budget (fits v7x 64MiB)


# --------------------------------------------------------------------------
# small helpers
# --------------------------------------------------------------------------
def _round_up(v, m):
    return ((v + m - 1) // m) * m


def _pad_last_to(arr, target):
    c = arr.shape[-1]
    if c == target:
        return arr
    pads = [(0, 0)] * (arr.ndim - 1) + [(0, target - c)]
    return jnp.pad(arr, pads)


def _pad_conv_weight(w):
    """(kh, kw, cin, cout) -> zero-pad cin/cout up to multiples of LANE."""
    kh, kw, cin, cout = w.shape
    cin_p, cout_p = _round_up(cin, LANE), _round_up(cout, LANE)
    return jnp.pad(w, ((0, 0), (0, 0), (0, cin_p - cin), (0, cout_p - cout)))


def _fold_bn(bn, cin_padded):
    """Fold inference-mode BatchNorm into per-channel scale/bias (f32)."""
    scale = bn["gamma"] / jnp.sqrt(bn["var"] + BN_EPS)
    bias = bn["beta"] - bn["mean"] * scale
    scale = _pad_last_to(scale.astype(jnp.float32), cin_padded)
    bias = _pad_last_to(bias.astype(jnp.float32), cin_padded)
    return scale.reshape(1, cin_padded), bias.reshape(1, cin_padded)


def _pick_row_tile(ho, wo):
    """Largest divisor of ho so that the M tile (rows * wo) stays ~512."""
    target = max(8, 512 // max(wo, 1))
    best = 1
    for d in range(1, ho + 1):
        if ho % d == 0 and d <= target:
            best = d
    return best


# --------------------------------------------------------------------------
# fused (BN+ReLU) -> conv(k x k, stride, pad) -> (+ residual) kernel
# --------------------------------------------------------------------------
def _fused_conv_kernel(*refs, taps, plane_of_tap, stride, pad, h_in, w_in,
                       tro, wo, n_planes, apply_bn_relu, has_residual,
                       compute_dtype):
    idx = 0
    plane_refs = refs[idx:idx + n_planes]
    idx += n_planes
    w_ref = refs[idx]
    idx += 1
    if apply_bn_relu:
        scale_ref, bias_ref = refs[idx], refs[idx + 1]
        idx += 2
    if has_residual:
        res_ref = refs[idx]
        idx += 1
    o_ref = refs[idx]
    acc_ref = refs[idx + 1]

    i = pl.program_id(1)            # output row-tile index (M)
    k = pl.program_id(3)            # input-channel tile index (reduction, K)
    nk = pl.num_programs(3)

    @pl.when(k == 0)
    def _init():
        acc_ref[...] = jnp.zeros_like(acc_ref)

    if apply_bn_relu:
        scale = scale_ref[...].reshape(1, 1, -1)
        bias = bias_ref[...].reshape(1, 1, -1)

    row_base = i * tro
    if tro % 8 == 0:
        row_base = pl.multiple_of(row_base, 8)

    # 9 (or 1) accumulated matmuls over shifted views of the VMEM-resident
    # image block -- no im2col materialization.
    for t, (ky, kx) in enumerate(taps):
        p = plane_of_tap[t]
        roff = ky // stride
        coff = kx // stride
        slab = plane_refs[p][0, pl.ds(row_base + roff, tro),
                             pl.ds(coff, wo), :]              # (tro, wo, C)
        a = slab.astype(jnp.float32)
        if apply_bn_relu:
            a = jnp.maximum(a * scale + bias, 0.0)
            if pad > 0:
                # Zero contributions coming from the spatial zero-padding
                # (BN+ReLU of a padded zero is relu(bias) != 0).
                rr = lax.broadcasted_iota(jnp.int32, (tro, wo), 0)
                cc = lax.broadcasted_iota(jnp.int32, (tro, wo), 1)
                hh = (i * tro + rr) * stride + ky
                ww = cc * stride + kx
                valid = ((hh >= pad) & (hh < pad + h_in)
                         & (ww >= pad) & (ww < pad + w_in))
                a = jnp.where(valid[:, :, None], a, 0.0)
        a2 = a.reshape(tro * wo, a.shape[-1]).astype(compute_dtype)
        acc_ref[...] += jnp.dot(a2, w_ref[t],
                                preferred_element_type=jnp.float32)

    @pl.when(k == nk - 1)
    def _finalize():
        result = acc_ref[...]
        if has_residual:
            result = result + res_ref[...].reshape(tro * wo, -1).astype(
                jnp.float32)
        o_ref[...] = result.reshape(1, tro, wo, -1).astype(o_ref.dtype)


def fused_conv2d(x, w, *, stride, pad, bn_scale=None, bn_bias=None,
                 residual=None, apply_bn_relu=True, out_dtype=ACT_DTYPE,
                 compute_dtype=COMPUTE_DTYPE):
    """Fused (BN+ReLU) -> conv(kxk, stride, pad) -> (+residual), NHWC.

    x:        (N, H, W, Cin)  channels already padded to a multiple of LANE.
    w:        (k, k, Cin, Cout) channels padded likewise.
    residual: (N, Ho, Wo, Cout) or None (added in the conv epilogue).
    """
    n, h, wsp, cin = x.shape
    ks, ks2, cin_w, cout = w.shape
    assert ks == ks2 and cin_w == cin
    assert cin % LANE == 0 and cout % LANE == 0
    if stride > 1:
        assert (h + 2 * pad) % stride == 0 and (wsp + 2 * pad) % stride == 0

    ho = (h + 2 * pad - ks) // stride + 1
    wo = (wsp + 2 * pad - ks) // stride + 1

    taps = tuple((ky, kx) for ky in range(ks) for kx in range(ks))
    parities = sorted({(ky % stride, kx % stride) for ky, kx in taps})
    par_idx = {p: i for i, p in enumerate(parities)}
    plane_of_tap = tuple(par_idx[(ky % stride, kx % stride)]
                         for ky, kx in taps)

    # Spatial zero-pad once, then (for stride 2) a 1x re-layout into parity
    # planes so every in-kernel tap slice is contiguous (no strided DMA / no
    # 9x im2col blow-up).
    xp = x if pad == 0 else jnp.pad(
        x, ((0, 0), (pad, pad), (pad, pad), (0, 0)))
    planes = [xp[:, py::stride, px::stride, :] for (py, px) in parities]
    hp, wp = planes[0].shape[1], planes[0].shape[2]
    for pln in planes:
        assert pln.shape == planes[0].shape

    tro = _pick_row_tile(ho, wo)
    grid = (n, ho // tro, cout // LANE, cin // LANE)

    w_taps = w.reshape(ks * ks, cin, cout).astype(compute_dtype)

    inputs = []
    in_specs = []
    for pln in planes:
        inputs.append(pln)
        in_specs.append(
            pl.BlockSpec((1, hp, wp, LANE),
                         lambda bi, mi, ji, ki: (bi, 0, 0, ki)))
    inputs.append(w_taps)
    in_specs.append(
        pl.BlockSpec((ks * ks, LANE, LANE),
                     lambda bi, mi, ji, ki: (0, ki, ji)))
    if apply_bn_relu:
        inputs += [bn_scale, bn_bias]
        in_specs += [
            pl.BlockSpec((1, LANE), lambda bi, mi, ji, ki: (0, ki)),
            pl.BlockSpec((1, LANE), lambda bi, mi, ji, ki: (0, ki)),
        ]
    has_residual = residual is not None
    if has_residual:
        inputs.append(residual)
        in_specs.append(
            pl.BlockSpec((1, tro, wo, LANE),
                         lambda bi, mi, ji, ki: (bi, mi, 0, ji)))

    out_spec = pl.BlockSpec((1, tro, wo, LANE),
                            lambda bi, mi, ji, ki: (bi, mi, 0, ji))

    kernel = functools.partial(
        _fused_conv_kernel, taps=taps, plane_of_tap=plane_of_tap,
        stride=stride, pad=pad, h_in=h, w_in=wsp, tro=tro, wo=wo,
        n_planes=len(planes), apply_bn_relu=apply_bn_relu,
        has_residual=has_residual, compute_dtype=compute_dtype)

    conv = pl.pallas_call(
        kernel,
        out_shape=jax.ShapeDtypeStruct((n, ho, wo, cout), out_dtype),
        grid_spec=pltpu.PrefetchScalarGridSpec(
            num_scalar_prefetch=0,
            grid=grid,
            in_specs=in_specs,
            out_specs=out_spec,
            scratch_shapes=[pltpu.VMEM((tro * wo, LANE), jnp.float32)]),
        compiler_params=pltpu.CompilerParams(
            dimension_semantics=("parallel", "parallel", "parallel",
                                 "arbitrary"),
            vmem_limit_bytes=VMEM_LIMIT),
    )
    return conv(*inputs)


# --------------------------------------------------------------------------
# fused head: bn + relu + global avg pool + fc
# --------------------------------------------------------------------------
def _head_kernel(x_ref, scale_ref, bias_ref, pool_ref, fw_ref, fb_ref, o_ref):
    a = x_ref[...].astype(jnp.float32)
    a = jnp.maximum(a * scale_ref[...] + bias_ref[...], 0.0)
    pooled = jnp.dot(pool_ref[...], a, preferred_element_type=jnp.float32)
    logits = jnp.dot(pooled, fw_ref[...],
                     preferred_element_type=jnp.float32) + fb_ref[...]
    o_ref[...] = logits.astype(o_ref.dtype)


def fused_head(feat, bn_scale, bn_bias, fc_w, fc_b):
    """relu(bn(feat)) -> global avg pool -> fc, in a single Pallas kernel."""
    n, h, w, c = feat.shape
    m = n * h * w
    ncls = fc_w.shape[1]
    xflat = feat.reshape(m, c)
    pool = jnp.kron(jnp.eye(n, dtype=jnp.float32),
                    jnp.full((1, h * w), 1.0 / (h * w), jnp.float32))
    head = pl.pallas_call(
        _head_kernel,
        out_shape=jax.ShapeDtypeStruct((n, ncls), jnp.float32),
        grid_spec=pltpu.PrefetchScalarGridSpec(
            num_scalar_prefetch=0,
            grid=(1,),
            in_specs=[pl.BlockSpec((m, c), lambda i: (0, 0)),
                      pl.BlockSpec((1, c), lambda i: (0, 0)),
                      pl.BlockSpec((1, c), lambda i: (0, 0)),
                      pl.BlockSpec((n, m), lambda i: (0, 0)),
                      pl.BlockSpec((c, ncls), lambda i: (0, 0)),
                      pl.BlockSpec((1, ncls), lambda i: (0, 0))],
            out_specs=pl.BlockSpec((n, ncls), lambda i: (0, 0))),
        compiler_params=pltpu.CompilerParams(
            dimension_semantics=("arbitrary",),
            vmem_limit_bytes=VMEM_LIMIT),
    )
    return head(xflat, bn_scale, bn_bias, pool,
                fc_w.astype(jnp.float32), fc_b.astype(jnp.float32))


# --------------------------------------------------------------------------
# model: BottleBlock / NetworkBlockBottle / WideResNetBottle (Pallas path)
# --------------------------------------------------------------------------
def bottle_block_pallas(h, layer):
    """Pre-activation BottleBlock with BN/ReLU prologues, shortcut projection
    and residual add fused into the conv kernels."""
    cin = h.shape[-1]
    stride = layer["stride"]
    equal = layer["equal"]

    w1 = _pad_conv_weight(layer["conv1"])
    w2 = _pad_conv_weight(layer["conv2"])
    scale1, bias1 = _fold_bn(layer["bn1"], cin)
    scale2, bias2 = _fold_bn(layer["bn2"], w1.shape[-1])

    # conv1(relu(bn1(x)))
    h1 = fused_conv2d(h, w1, stride=stride, pad=1,
                      bn_scale=scale1, bn_bias=bias1, apply_bn_relu=True)
    # shortcut: identity (equal in/out) or 1x1 conv applied to relu(bn1(x))
    if equal:
        res = h
    else:
        wsc = _pad_conv_weight(layer["conv_sc"])
        res = fused_conv2d(h, wsc, stride=stride, pad=0,
                           bn_scale=scale1, bn_bias=bias1, apply_bn_relu=True)
    # conv2(relu(bn2(h1))) + shortcut   (residual add fused into the epilogue)
    # TODO(synk): dropout between bn2 and conv2 not implemented
    #             (module default dropRate=0.0 -> identity).
    out = fused_conv2d(h1, w2, stride=1, pad=1,
                       bn_scale=scale2, bn_bias=bias2, apply_bn_relu=True,
                       residual=res)
    return out


def wrn_forward_pallas(x_nchw, params):
    """WideResNetBottle forward (inference) built from fused Pallas kernels."""
    # Single NCHW -> NHWC layout change at the model boundary; everything
    # downstream stays channels-last with lane-padded channels.
    x = jnp.transpose(x_nchw, (0, 2, 3, 1)).astype(ACT_DTYPE)
    x = _pad_last_to(x, _round_up(x.shape[-1], LANE))

    # Stem conv (no BN/ReLU prologue).
    w0 = _pad_conv_weight(params["conv1"])
    h = fused_conv2d(x, w0, stride=1, pad=1, apply_bn_relu=False)

    for block_layers in params["blocks"]:
        for layer in block_layers:
            h = bottle_block_pallas(h, layer)

    # Head: bn + relu + global avg pool (== avg_pool2d(8) here) + fc.
    c_pad = h.shape[-1]
    scale_f, bias_f = _fold_bn(params["bn_final"], c_pad)
    num_classes = params["fc_w"].shape[1]
    ncls_pad = _round_up(max(num_classes, LANE), LANE)
    fc_w = jnp.zeros((c_pad, ncls_pad), jnp.float32)
    fc_w = fc_w.at[:params["fc_w"].shape[0], :num_classes].set(
        params["fc_w"].astype(jnp.float32))
    fc_b = jnp.zeros((1, ncls_pad), jnp.float32)
    fc_b = fc_b.at[0, :num_classes].set(params["fc_b"].astype(jnp.float32))

    logits = fused_head(h, scale_f, bias_f, fc_w, fc_b)
    return logits[:, :num_classes]


# --------------------------------------------------------------------------
# pure-JAX f32 reference (mirrors the PyTorch module) + parameter generation
# --------------------------------------------------------------------------
def _conv_ref(x, w, stride, pad):
    return lax.conv_general_dilated(
        x, w, window_strides=(stride, stride),
        padding=((pad, pad), (pad, pad)),
        dimension_numbers=("NHWC", "HWIO", "NHWC"))


def _bn_ref(x, bn):
    return (x - bn["mean"]) / jnp.sqrt(bn["var"] + BN_EPS) * bn["gamma"] \
        + bn["beta"]


def wrn_forward_reference(x_nchw, params):
    h = jnp.transpose(x_nchw, (0, 2, 3, 1)).astype(jnp.float32)
    h = _conv_ref(h, params["conv1"], 1, 1)
    for block_layers in params["blocks"]:
        for layer in block_layers:
            pre = jax.nn.relu(_bn_ref(h, layer["bn1"]))
            out = _conv_ref(pre, layer["conv1"], layer["stride"], 1)
            out = jax.nn.relu(_bn_ref(out, layer["bn2"]))
            out = _conv_ref(out, layer["conv2"], 1, 1)
            short = h if layer["equal"] else _conv_ref(
                pre, layer["conv_sc"], layer["stride"], 0)
            h = short + out
    h = jax.nn.relu(_bn_ref(h, params["bn_final"]))
    pooled = jnp.mean(h, axis=(1, 2))
    return pooled @ params["fc_w"] + params["fc_b"]


def make_wrn_params(key, depth=10, widen_factor=1, num_classes=10,
                    bottle_mult=0.5):
    assert (depth - 4) % 6 == 0
    n_per = (depth - 4) // 6
    nch = [16, 16 * widen_factor, 32 * widen_factor, 64 * widen_factor]

    def conv_w(k, kh, kw, cin, cout):
        std = math.sqrt(2.0 / (kh * kw * cout))
        return std * jax.random.normal(k, (kh, kw, cin, cout), jnp.float32)

    def bn_p(k, c):
        k1, k2, k3, k4 = jax.random.split(k, 4)
        return {"gamma": 0.5 + jax.random.uniform(k1, (c,), jnp.float32),
                "beta": 0.1 * jax.random.normal(k2, (c,), jnp.float32),
                "mean": 0.1 * jax.random.normal(k3, (c,), jnp.float32),
                "var": 0.5 + jax.random.uniform(k4, (c,), jnp.float32)}

    kit = iter(jax.random.split(key, 256))
    params = {"conv1": conv_w(next(kit), 3, 3, 3, nch[0])}
    blocks = []
    in_c = nch[0]
    strides = [1, 2, 2]
    for b in range(3):
        out_c = nch[b + 1]
        mid_c = int(nch[b + 1] * bottle_mult)
        layers = []
        for i in range(n_per):
            cin = in_c if i == 0 else out_c
            s = strides[b] if i == 0 else 1
            equal = cin == out_c
            layers.append({
                "bn1": bn_p(next(kit), cin),
                "conv1": conv_w(next(kit), 3, 3, cin, mid_c),
                "bn2": bn_p(next(kit), mid_c),
                "conv2": conv_w(next(kit), 3, 3, mid_c, out_c),
                "conv_sc": None if equal else conv_w(next(kit), 1, 1, cin,
                                                     out_c),
                "stride": s,
                "equal": equal,
            })
        blocks.append(layers)
        in_c = out_c
    params["blocks"] = blocks
    params["bn_final"] = bn_p(next(kit), nch[3])
    params["fc_w"] = 0.1 * jax.random.normal(next(kit),
                                             (nch[3], num_classes),
                                             jnp.float32)
    params["fc_b"] = 0.01 * jax.random.normal(next(kit), (num_classes,),
                                              jnp.float32)
    return params


# --------------------------------------------------------------------------
if __name__ == "__main__":
    key = jax.random.PRNGKey(0)
    kp, kx = jax.random.split(key)
    # Small WideResNetBottle: depth=10 (1 BottleBlock per stage), widen=1 so
    # stage 1 exercises the identity-shortcut branch and stages 2/3 the
    # projected (1x1, stride-2) shortcut branch.  CIFAR-style 32x32 input so
    # the final avg_pool2d(8) is a global pool, exactly as in the module.
    params = make_wrn_params(kp, depth=10, widen_factor=1, num_classes=10,
                             bottle_mult=0.5)
    x = jax.random.normal(kx, (2, 3, 32, 32), jnp.float32)

    logits = jax.block_until_ready(wrn_forward_pallas(x, params))
    ref = jax.block_until_ready(wrn_forward_reference(x, params))

    rel_err = float(jnp.linalg.norm(logits - ref)
                    / (jnp.linalg.norm(ref) + 1e-8))
    if not bool(jnp.all(jnp.isfinite(logits))) or rel_err > 5e-2:
        raise SystemExit(f"Pallas forward mismatch: rel_l2={rel_err:.4g}\n"
                         f"pallas={logits}\nref={ref}")
    print("KERNEL_OK")
</pallas_src>

<mosaic_0001>
module attributes {stable_mosaic.version = 11 : i64} {
  func.func @_fused_conv_kernel(%arg0: i32, %arg1: i32, %arg2: i32, %arg3: i32, %arg4: memref<1x34x34x128xbf16, #tpu.memory_space<vmem>>, %arg5: memref<9x128x128xbf16, #tpu.memory_space<vmem>>, %arg6: memref<1x16x32x128xbf16, #tpu.memory_space<vmem>>, %arg7: memref<512x128xf32, #tpu.memory_space<vmem>>) attributes {dimension_semantics = [#tpu.dimension_semantics<parallel>, #tpu.dimension_semantics<parallel>, #tpu.dimension_semantics<parallel>, #tpu.dimension_semantics<arbitrary>], iteration_bounds = array<i64: 2, 2, 1, 1>, scalar_prefetch = 0 : i64, scratch_operands = 1 : i64, tpu.core_type = #tpu.core_type<tc>, window_params = [{transform_indices = @transform_0, window_bounds = array<i64: 1, 34, 34, 128>}, {transform_indices = @transform_1, window_bounds = array<i64: 9, 128, 128>}, {transform_indices = @transform_2, window_bounds = array<i64: 1, 16, 32, 128>}]} {
    %c0_i32 = arith.constant 0 : i32
    %0 = arith.cmpi eq, %arg3, %c0_i32 : i32
    %1 = arith.extui %0 : i1 to i32
    %c0_i32_0 = arith.constant 0 : i32
    %2 = arith.cmpi ne, %1, %c0_i32_0 : i32
    scf.if %2 {
      %cst_99 = arith.constant 0.000000e+00 : f32
      %125 = vector.broadcast %cst_99 : f32 to vector<512x128xf32>
      %c0_100 = arith.constant 0 : index
      %c0_101 = arith.constant 0 : index
      %126 = vector.load %arg7[%c0_100, %c0_101] : memref<512x128xf32, #tpu.memory_space<vmem>>, vector<512x128xf32>
      tpu.vector_store %arg7[%c0_100, %c0_101], %125 {strides = array<i32>} : memref<512x128xf32, #tpu.memory_space<vmem>>, vector<512x128xf32>,
    } else {
    }
    %c16_i32 = arith.constant 16 : i32
    %3 = arith.muli %arg1, %c16_i32 : i32
    %4 = tpu.assume_multiple %3, 8 : i32
    %c0_i32_1 = arith.constant 0 : i32
    %5 = arith.addi %4, %c0_i32_1 : i32
    %c0 = arith.constant 0 : index
    %6 = arith.index_cast %5 : i32 to index
    %c0_2 = arith.constant 0 : index
    %c0_3 = arith.constant 0 : index
    %7 = vector.load %arg4[%c0, %6, %c0_2, %c0_3] : memref<1x34x34x128xbf16, #tpu.memory_space<vmem>>, vector<1x16x32x128xbf16>
    %8 = vector.shape_cast %7 : vector<1x16x32x128xbf16> to vector<16x32x128xbf16>
    %9 = arith.extf %8 : vector<16x32x128xbf16> to vector<16x32x128xf32>
    %10 = vector.shape_cast %9 : vector<16x32x128xf32> to vector<512x128xf32>
    %11 = arith.truncf %10 : vector<512x128xf32> to vector<512x128xbf16>
    %c0_4 = arith.constant 0 : index
    %c0_5 = arith.constant 0 : index
    %12 = vector.load %arg7[%c0_4, %c0_5] : memref<512x128xf32, #tpu.memory_space<vmem>>, vector<512x128xf32>
    %c0_6 = arith.constant 0 : index
    %c0_7 = arith.constant 0 : index
    %c0_8 = arith.constant 0 : index
    %13 = vector.load %arg5[%c0_6, %c0_7, %c0_8] : memref<9x128x128xbf16, #tpu.memory_space<vmem>>, vector<1x128x128xbf16>
    %14 = vector.shape_cast %13 : vector<1x128x128xbf16> to vector<128x128xbf16>
    %cst = arith.constant dense<0.000000e+00> : vector<512x128xf32>
    %15 = tpu.matmul %11, %14, %cst {dimension_numbers = #tpu.dot_dimension_numbers<[1], [0], [0], [1], [0, 0, 1, 1], [], []>} : vector<512x128xbf16>, vector<128x128xbf16>, vector<512x128xf32> -> vector<512x128xf32>
    %16 = arith.addf %12, %15 : vector<512x128xf32>
    %c0_9 = arith.constant 0 : index
    %c0_10 = arith.constant 0 : index
    %17 = vector.load %arg7[%c0_9, %c0_10] : memref<512x128xf32, #tpu.memory_space<vmem>>, vector<512x128xf32>
    tpu.vector_store %arg7[%c0_9, %c0_10], %16 {strides = array<i32>} : memref<512x128xf32, #tpu.memory_space<vmem>>, vector<512x128xf32>,
    %c0_i32_11 = arith.constant 0 : i32
    %18 = arith.addi %4, %c0_i32_11 : i32
    %c0_12 = arith.constant 0 : index
    %19 = arith.index_cast %18 : i32 to index
    %c1 = arith.constant 1 : index
    %c0_13 = arith.constant 0 : index
    %20 = vector.load %arg4[%c0_12, %19, %c1, %c0_13] : memref<1x34x34x128xbf16, #tpu.memory_space<vmem>>, vector<1x16x32x128xbf16>
    %21 = vector.shape_cast %20 : vector<1x16x32x128xbf16> to vector<16x32x128xbf16>
    %22 = arith.extf %21 : vector<16x32x128xbf16> to vector<16x32x128xf32>
    %23 = vector.shape_cast %22 : vector<16x32x128xf32> to vector<512x128xf32>
    %24 = arith.truncf %23 : vector<512x128xf32> to vector<512x128xbf16>
    %c0_14 = arith.constant 0 : index
    %c0_15 = arith.constant 0 : index
    %25 = vector.load %arg7[%c0_14, %c0_15] : memref<512x128xf32, #tpu.memory_space<vmem>>, vector<512x128xf32>
    %c1_16 = arith.constant 1 : index
    %c0_17 = arith.constant 0 : index
    %c0_18 = arith.constant 0 : index
    %26 = vector.load %arg5[%c1_16, %c0_17, %c0_18] : memref<9x128x128xbf16, #tpu.memory_space<vmem>>, vector<1x128x128xbf16>
    %27 = vector.shape_cast %26 : vector<1x128x128xbf16> to vector<128x128xbf16>
    %cst_19 = arith.constant dense<0.000000e+00> : vector<512x128xf32>
    %28 = tpu.matmul %24, %27, %cst_19 {dimension_numbers = #tpu.dot_dimension_numbers<[1], [0], [0], [1], [0, 0, 1, 1], [], []>} : vector<512x128xbf16>, vector<128x128xbf16>, vector<512x128xf32> -> vector<512x128xf32>
    %29 = arith.addf %25, %28 : vector<512x128xf32>
    %c0_20 = arith.constant 0 : index
    %c0_21 = arith.constant 0 : index
    %30 = vector.load %arg7[%c0_20, %c0_21] : memref<512x128xf32, #tpu.memory_space<vmem>>, vector<512x128xf32>
    tpu.vector_store %arg7[%c0_20, %c0_21], %29 {strides = array<i32>} : memref<512x128xf32, #tpu.memory_space<vmem>>, vector<512x128xf32>,
    %c0_i32_22 = arith.constant 0 : i32
    %31 = arith.addi %4, %c0_i32_22 : i32
    %c0_23 = arith.constant 0 : index
    %32 = arith.index_cast %31 : i32 to index
    %c2 = arith.constant 2 : index
    %c0_24 = arith.constant 0 : index
    %33 = vector.load %arg4[%c0_23, %32, %c2, %c0_24] : memref<1x34x34x128xbf16, #tpu.memory_space<vmem>>, vector<1x16x32x128xbf16>
    %34 = vector.shape_cast %33 : vector<1x16x32x128xbf16> to vector<16x32x128xbf16>
    %35 = arith.extf %34 : vector<16x32x128xbf16> to vector<16x32x128xf32>
    %36 = vector.shape_cast %35 : vector<16x32x128xf32> to vector<512x128xf32>
    %37 = arith.truncf %36 : vector<512x128xf32> to vector<512x128xbf16>
    %c0_25 = arith.constant 0 : index
    %c0_26 = arith.constant 0 : index
    %38 = vector.load %arg7[%c0_25, %c0_26] : memref<512x128xf32, #tpu.memory_space<vmem>>, vector<512x128xf32>
    %c2_27 = arith.constant 2 : index
    %c0_28 = arith.constant 0 : index
    %c0_29 = arith.constant 0 : index
    %39 = vector.load %arg5[%c2_27, %c0_28, %c0_29] : memref<9x128x128xbf16, #tpu.memory_space<vmem>>, vector<1x128x128xbf16>
    %40 = vector.shape_cast %39 : vector<1x128x128xbf16> to vector<128x128xbf16>
    %cst_30 = arith.constant dense<0.000000e+00> : vector<512x128xf32>
    %41 = tpu.matmul %37, %40, %cst_30 {dimension_numbers = #tpu.dot_dimension_numbers<[1], [0], [0], [1], [0, 0, 1, 1], [], []>} : vector<512x128xbf16>, vector<128x128xbf16>, vector<512x128xf32> -> vector<512x128xf32>
    %42 = arith.addf %38, %41 : vector<512x128xf32>
    %c0_31 = arith.constant 0 : index
    %c0_32 = arith.constant 0 : index
    %43 = vector.load %arg7[%c0_31, %c0_32] : memref<512x128xf32, #tpu.memory_space<vmem>>, vector<512x128xf32>
    tpu.vector_store %arg7[%c0_31, %c0_32], %42 {strides = array<i32>} : memref<512x128xf32, #tpu.memory_space<vmem>>, vector<512x128xf32>,
    %c1_i32 = arith.constant 1 : i32
    %44 = arith.addi %4, %c1_i32 : i32
    %c0_33 = arith.constant 0 : index
    %45 = arith.index_cast %44 : i32 to index
    %c0_34 = arith.constant 0 : index
    %c0_35 = arith.constant 0 : index
    %46 = vector.load %arg4[%c0_33, %45, %c0_34, %c0_35] : memref<1x34x34x128xbf16, #tpu.memory_space<vmem>>, vector<1x16x32x128xbf16>
    %47 = vector.shape_cast %46 : vector<1x16x32x128xbf16> to vector<16x32x128xbf16>
    %48 = arith.extf %47 : vector<16x32x128xbf16> to vector<16x32x128xf32>
    %49 = vector.shape_cast %48 : vector<16x32x128xf32> to vector<512x128xf32>
    %50 = arith.truncf %49 : vector<512x128xf32> to vector<512x128xbf16>
    %c0_36 = arith.constant 0 : index
    %c0_37 = arith.constant 0 : index
    %51 = vector.load %arg7[%c0_36, %c0_37] : memref<512x128xf32, #tpu.memory_space<vmem>>, vector<512x128xf32>
    %c3 = arith.constant 3 : index
    %c0_38 = arith.constant 0 : index
    %c0_39 = arith.constant 0 : index
    %52 = vector.load %arg5[%c3, %c0_38, %c0_39] : memref<9x128x128xbf16, #tpu.memory_space<vmem>>, vector<1x128x128xbf16>
    %53 = vector.shape_cast %52 : vector<1x128x128xbf16> to vector<128x128xbf16>
    %cst_40 = arith.constant dense<0.000000e+00> : vector<512x128xf32>
    %54 = tpu.matmul %50, %53, %cst_40 {dimension_numbers = #tpu.dot_dimension_numbers<[1], [0], [0], [1], [0, 0, 1, 1], [], []>} : vector<512x128xbf16>, vector<128x128xbf16>, vector<512x128xf32> -> vector<512x128xf32>
    %55 = arith.addf %51, %54 : vector<512x128xf32>
    %c0_41 = arith.constant 0 : index
    %c0_42 = arith.constant 0 : index
    %56 = vector.load %arg7[%c0_41, %c0_42] : memref<512x128xf32, #tpu.memory_space<vmem>>, vector<512x128xf32>
    tpu.vector_store %arg7[%c0_41, %c0_42], %55 {strides = array<i32>} : memref<512x128xf32, #tpu.memory_space<vmem>>, vector<512x128xf32>,
    %c1_i32_43 = arith.constant 1 : i32
    %57 = arith.addi %4, %c1_i32_43 : i32
    %c0_44 = arith.constant 0 : index
    %58 = arith.index_cast %57 : i32 to index
    %c1_45 = arith.constant 1 : index
    %c0_46 = arith.constant 0 : index
    %59 = vector.load %arg4[%c0_44, %58, %c1_45, %c0_46] : memref<1x34x34x128xbf16, #tpu.memory_space<vmem>>, vector<1x16x32x128xbf16>
    %60 = vector.shape_cast %59 : vector<1x16x32x128xbf16> to vector<16x32x128xbf16>
    %61 = arith.extf %60 : vector<16x32x128xbf16> to vector<16x32x128xf32>
    %62 = vector.shape_cast %61 : vector<16x32x128xf32> to vector<512x128xf32>
    %63 = arith.truncf %62 : vector<512x128xf32> to vector<512x128xbf16>
    %c0_47 = arith.constant 0 : index
    %c0_48 = arith.constant 0 : index
    %64 = vector.load %arg7[%c0_47, %c0_48] : memref<512x128xf32, #tpu.memory_space<vmem>>, vector<512x128xf32>
    %c4 = arith.constant 4 : index
    %c0_49 = arith.constant 0 : index
    %c0_50 = arith.constant 0 : index
    %65 = vector.load %arg5[%c4, %c0_49, %c0_50] : memref<9x128x128xbf16, #tpu.memory_space<vmem>>, vector<1x128x128xbf16>
    %66 = vector.shape_cast %65 : vector<1x128x128xbf16> to vector<128x128xbf16>
    %cst_51 = arith.constant dense<0.000000e+00> : vector<512x128xf32>
    %67 = tpu.matmul %63, %66, %cst_51 {dimension_numbers = #tpu.dot_dimension_numbers<[1], [0], [0], [1], [0, 0, 1, 1], [], []>} : vector<512x128xbf16>, vector<128x128xbf16>, vector<512x128xf32> -> vector<512x128xf32>
    %68 = arith.addf %64, %67 : vector<512x128xf32>
    %c0_52 = arith.constant 0 : index
    %c0_53 = arith.constant 0 : index
    %69 = vector.load %arg7[%c0_52, %c0_53] : memref<512x128xf32, #tpu.memory_space<vmem>>, vector<512x128xf32>
    tpu.vector_store %arg7[%c0_52, %c0_53], %68 {strides = array<i32>} : memref<512x128xf32, #tpu.memory_space<vmem>>, vector<512x128xf32>,
    %c1_i32_54 = arith.constant 1 : i32
    %70 = arith.addi %4, %c1_i32_54 : i32
    %c0_55 = arith.constant 0 : index
    %71 = arith.index_cast %70 : i32 to index
    %c2_56 = arith.constant 2 : index
    %c0_57 = arith.constant 0 : index
    %72 = vector.load %arg4[%c0_55, %71, %c2_56, %c0_57] : memref<1x34x34x128xbf16, #tpu.memory_space<vmem>>, vector<1x16x32x128xbf16>
    %73 = vector.shape_cast %72 : vector<1x16x32x128xbf16> to vector<16x32x128xbf16>
    %74 = arith.extf %73 : vector<16x32x128xbf16> to vector<16x32x128xf32>
    %75 = vector.shape_cast %74 : vector<16x32x128xf32> to vector<512x128xf32>
    %76 = arith.truncf %75 : vector<512x128xf32> to vector<512x128xbf16>
    %c0_58 = arith.constant 0 : index
    %c0_59 = arith.constant 0 : index
    %77 = vector.load %arg7[%c0_58, %c0_59] : memref<512x128xf32, #tpu.memory_space<vmem>>, vector<512x128xf32>
    %c5 = arith.constant 5 : index
    %c0_60 = arith.constant 0 : index
    %c0_61 = arith.constant 0 : index
    %78 = vector.load %arg5[%c5, %c0_60, %c0_61] : memref<9x128x128xbf16, #tpu.memory_space<vmem>>, vector<1x128x128xbf16>
    %79 = vector.shape_cast %78 : vector<1x128x128xbf16> to vector<128x128xbf16>
    %cst_62 = arith.constant dense<0.000000e+00> : vector<512x128xf32>
    %80 = tpu.matmul %76, %79, %cst_62 {dimension_numbers = #tpu.dot_dimension_numbers<[1], [0], [0], [1], [0, 0, 1, 1], [], []>} : vector<512x128xbf16>, vector<128x128xbf16>, vector<512x128xf32> -> vector<512x128xf32>
    %81 = arith.addf %77, %80 : vector<512x128xf32>
    %c0_63 = arith.constant 0 : index
    %c0_64 = arith.constant 0 : index
    %82 = vector.load %arg7[%c0_63, %c0_64] : memref<512x128xf32, #tpu.memory_space<vmem>>, vector<512x128xf32>
    tpu.vector_store %arg7[%c0_63, %c0_64], %81 {strides = array<i32>} : memref<512x128xf32, #tpu.memory_space<vmem>>, vector<512x128xf32>,
    %c2_i32 = arith.constant 2 : i32
    %83 = arith.addi %4, %c2_i32 : i32
    %c0_65 = arith.constant 0 : index
    %84 = arith.index_cast %83 : i32 to index
    %c0_66 = arith.constant 0 : index
    %c0_67 = arith.constant 0 : index
    %85 = vector.load %arg4[%c0_65, %84, %c0_66, %c0_67] : memref<1x34x34x128xbf16, #tpu.memory_space<vmem>>, vector<1x16x32x128xbf16>
    %86 = vector.shape_cast %85 : vector<1x16x32x128xbf16> to vector<16x32x128xbf16>
    %87 = arith.extf %86 : vector<16x32x128xbf16> to vector<16x32x128xf32>
    %88 = vector.shape_cast %87 : vector<16x32x128xf32> to vector<512x128xf32>
    %89 = arith.truncf %88 : vector<512x128xf32> to vector<512x128xbf16>
    %c0_68 = arith.constant 0 : index
    %c0_69 = arith.constant 0 : index
    %90 = vector.load %arg7[%c0_68, %c0_69] : memref<512x128xf32, #tpu.memory_space<vmem>>, vector<512x128xf32>
    %c6 = arith.constant 6 : index
    %c0_70 = arith.constant 0 : index
    %c0_71 = arith.constant 0 : index
    %91 = vector.load %arg5[%c6, %c0_70, %c0_71] : memref<9x128x128xbf16, #tpu.memory_space<vmem>>, vector<1x128x128xbf16>
    %92 = vector.shape_cast %91 : vector<1x128x128xbf16> to vector<128x128xbf16>
    %cst_72 = arith.constant dense<0.000000e+00> : vector<512x128xf32>
    %93 = tpu.matmul %89, %92, %cst_72 {dimension_numbers = #tpu.dot_dimension_numbers<[1], [0], [0], [1], [0, 0, 1, 1], [], []>} : vector<512x128xbf16>, vector<128x128xbf16>, vector<512x128xf32> -> vector<512x128xf32>
    %94 = arith.addf %90, %93 : vector<512x128xf32>
    %c0_73 = arith.constant 0 : index
    %c0_74 = arith.constant 0 : index
    %95 = vector.load %arg7[%c0_73, %c0_74] : memref<512x128xf32, #tpu.memory_space<vmem>>, vector<512x128xf32>
    tpu.vector_store %arg7[%c0_73, %c0_74], %94 {strides = array<i32>} : memref<512x128xf32, #tpu.memory_space<vmem>>, vector<512x128xf32>,
    %c2_i32_75 = arith.constant 2 : i32
    %96 = arith.addi %4, %c2_i32_75 : i32
    %c0_76 = arith.constant 0 : index
    %97 = arith.index_cast %96 : i32 to index
    %c1_77 = arith.constant 1 : index
    %c0_78 = arith.constant 0 : index
    %98 = vector.load %arg4[%c0_76, %97, %c1_77, %c0_78] : memref<1x34x34x128xbf16, #tpu.memory_space<vmem>>, vector<1x16x32x128xbf16>
    %99 = vector.shape_cast %98 : vector<1x16x32x128xbf16> to vector<16x32x128xbf16>
    %100 = arith.extf %99 : vector<16x32x128xbf16> to vector<16x32x128xf32>
    %101 = vector.shape_cast %100 : vector<16x32x128xf32> to vector<512x128xf32>
    %102 = arith.truncf %101 : vector<512x128xf32> to vector<512x128xbf16>
    %c0_79 = arith.constant 0 : index
    %c0_80 = arith.constant 0 : index
    %103 = vector.load %arg7[%c0_79, %c0_80] : memref<512x128xf32, #tpu.memory_space<vmem>>, vector<512x128xf32>
    %c7 = arith.constant 7 : index
    %c0_81 = arith.constant 0 : index
    %c0_82 = arith.constant 0 : index
    %104 = vector.load %arg5[%c7, %c0_81, %c0_82] : memref<9x128x128xbf16, #tpu.memory_space<vmem>>, vector<1x128x128xbf16>
    %105 = vector.shape_cast %104 : vector<1x128x128xbf16> to vector<128x128xbf16>
    %cst_83 = arith.constant dense<0.000000e+00> : vector<512x128xf32>
    %106 = tpu.matmul %102, %105, %cst_83 {dimension_numbers = #tpu.dot_dimension_numbers<[1], [0], [0], [1], [0, 0, 1, 1], [], []>} : vector<512x128xbf16>, vector<128x128xbf16>, vector<512x128xf32> -> vector<512x128xf32>
    %107 = arith.addf %103, %106 : vector<512x128xf32>
    %c0_84 = arith.constant 0 : index
    %c0_85 = arith.constant 0 : index
    %108 = vector.load %arg7[%c0_84, %c0_85] : memref<512x128xf32, #tpu.memory_space<vmem>>, vector<512x128xf32>
    tpu.vector_store %arg7[%c0_84, %c0_85], %107 {strides = array<i32>} : memref<512x128xf32, #tpu.memory_space<vmem>>, vector<512x128xf32>,
    %c2_i32_86 = arith.constant 2 : i32
    %109 = arith.addi %4, %c2_i32_86 : i32
    %c0_87 = arith.constant 0 : index
    %110 = arith.index_cast %109 : i32 to index
    %c2_88 = arith.constant 2 : index
    %c0_89 = arith.constant 0 : index
    %111 = vector.load %arg4[%c0_87, %110, %c2_88, %c0_89] : memref<1x34x34x128xbf16, #tpu.memory_space<vmem>>, vector<1x16x32x128xbf16>
    %112 = vector.shape_cast %111 : vector<1x16x32x128xbf16> to vector<16x32x128xbf16>
    %113 = arith.extf %112 : vector<16x32x128xbf16> to vector<16x32x128xf32>
    %114 = vector.shape_cast %113 : vector<16x32x128xf32> to vector<512x128xf32>
    %115 = arith.truncf %114 : vector<512x128xf32> to vector<512x128xbf16>
    %c0_90 = arith.constant 0 : index
    %c0_91 = arith.constant 0 : index
    %116 = vector.load %arg7[%c0_90, %c0_91] : memref<512x128xf32, #tpu.memory_space<vmem>>, vector<512x128xf32>
    %c8 = arith.constant 8 : index
    %c0_92 = arith.constant 0 : index
    %c0_93 = arith.constant 0 : index
    %117 = vector.load %arg5[%c8, %c0_92, %c0_93] : memref<9x128x128xbf16, #tpu.memory_space<vmem>>, vector<1x128x128xbf16>
    %118 = vector.shape_cast %117 : vector<1x128x128xbf16> to vector<128x128xbf16>
    %cst_94 = arith.constant dense<0.000000e+00> : vector<512x128xf32>
    %119 = tpu.matmul %115, %118, %cst_94 {dimension_numbers = #tpu.dot_dimension_numbers<[1], [0], [0], [1], [0, 0, 1, 1], [], []>} : vector<512x128xbf16>, vector<128x128xbf16>, vector<512x128xf32> -> vector<512x128xf32>
    %120 = arith.addf %116, %119 : vector<512x128xf32>
    %c0_95 = arith.constant 0 : index
    %c0_96 = arith.constant 0 : index
    %121 = vector.load %arg7[%c0_95, %c0_96] : memref<512x128xf32, #tpu.memory_space<vmem>>, vector<512x128xf32>
    tpu.vector_store %arg7[%c0_95, %c0_96], %120 {strides = array<i32>} : memref<512x128xf32, #tpu.memory_space<vmem>>, vector<512x128xf32>,
    %c0_i32_97 = arith.constant 0 : i32
    %122 = arith.cmpi eq, %arg3, %c0_i32_97 : i32
    %123 = arith.extui %122 : i1 to i32
    %c0_i32_98 = arith.constant 0 : i32
    %124 = arith.cmpi ne, %123, %c0_i32_98 : i32
    scf.if %124 {
      %c0_99 = arith.constant 0 : index
      %c0_100 = arith.constant 0 : index
      %125 = vector.load %arg7[%c0_99, %c0_100] : memref<512x128xf32, #tpu.memory_space<vmem>>, vector<512x128xf32>
      %126 = vector.shape_cast %125 : vector<512x128xf32> to vector<1x16x32x128xf32>
      %127 = arith.truncf %126 : vector<1x16x32x128xf32> to vector<1x16x32x128xbf16>
      %c0_101 = arith.constant 0 : index
      %c0_102 = arith.constant 0 : index
      %c0_103 = arith.constant 0 : index
      %c0_104 = arith.constant 0 : index
      %128 = vector.load %arg6[%c0_101, %c0_102, %c0_103, %c0_104] : memref<1x16x32x128xbf16, #tpu.memory_space<vmem>>, vector<1x16x32x128xbf16>
      tpu.vector_store %arg6[%c0_101, %c0_102, %c0_103, %c0_104], %127 {strides = array<i32>} : memref<1x16x32x128xbf16, #tpu.memory_space<vmem>>, vector<1x16x32x128xbf16>,
    } else {
    }
    return
  }
  func.func @transform_0(%arg0: i32, %arg1: i32, %arg2: i32, %arg3: i32) -> (i32, i32, i32, i32) {
    %c0_i32 = arith.constant 0 : i32
    %c0_i32_0 = arith.constant 0 : i32
    %c0_i32_1 = arith.constant 0 : i32
    return %arg0, %c0_i32, %c0_i32_0, %arg3 : i32, i32, i32, i32
  }
  func.func @transform_1(%arg0: i32, %arg1: i32, %arg2: i32, %arg3: i32) -> (i32, i32, i32) {
    %c0_i32 = arith.constant 0 : i32
    %c0_i32_0 = arith.constant 0 : i32
    return %c0_i32, %arg3, %arg2 : i32, i32, i32
  }
  func.func @transform_2(%arg0: i32, %arg1: i32, %arg2: i32, %arg3: i32) -> (i32, i32, i32, i32) {
    %c0_i32 = arith.constant 0 : i32
    %c0_i32_0 = arith.constant 0 : i32
    return %arg0, %arg1, %c0_i32, %arg2 : i32, i32, i32, i32
  }
}

</mosaic_0001>

<llo_original>
// kernel: tpu_custom_call.1
$region0: #{tpu_custom_call.1}
  #allocation0 [shape = 'u32[]', space=smem, size = 0x4, offset = 0x4, fixed_abs, tag = 'smem constant byte address 0x4 - core index']
  #allocation1 [shape = 'u32[72,128]{1,0:T(1,128)}', space=vmem, size = 0x9000, scoped, tag = 'internal scratch']
  #allocation2 [shape = 'f32[512,128]{1,0:T(8,128)}', space=vmem, size = 0x40000, scoped, tag = 'scratch operand']
  %s0 = inlined_call_operand.vmem [shape: bf16[2,34,34,128], index: 0, kind: input, shape index: {}]
  %s1 = inlined_call_operand.vmem [shape: bf16[9,128,128], index: 1, kind: input, shape index: {}]
  %s2 = inlined_call_operand.hbm [shape: bf16[2,32,32,128], index: 2, kind: output, shape index: {}]
  %s3 = sld [smem:[#allocation0]]
  $region49: #{tpu_custom_call.1} parent=0
    _
  %s5 = ssub.s32 1, %s3
  %s6 = scalar_select 0, %s5, %s3
  $region1: #{tpu_custom_call.1} parent=0
    #allocation3 [shape = 'u8[262144]{0}', space=vmem, size = 0x40000, scoped, tag = 'output window, operand 0']
    #allocation4 [shape = 's32[2]{0}', space=sflag, size = 0x8, scoped, tag = 'scoped memory for tpu_custom_call.1']
    %7 = vsyncpa [#allocation4], 0
    %s8 = scalar_lea.sflag [#allocation4], 1
    %9 = vsyncpa %s8, 0
    loop: start=0, step=1, limit=6
    $region2: #{tpu_custom_call.1} parent=1 // loop_pre_header
      _
    $region3: #{tpu_custom_call.1} parent=1 // loop_header
      %s11 = sphi 0, %s15
      %p12 = scmp.ge.s32.totalorder %s11, 6
      %s18 = sphi 0, %s44
      %s19 = sphi 0, %s40
      %s20 = sphi 0, %s36
      %s21 = sphi 0, %s32
      %s22 = sphi 0, %s18
      %s23 = sphi 0, %s19
      %s24 = sphi 0, %s20
      %s25 = sphi 0, %s21
      %s26 = sphi 0, %s22
      %s27 = sphi 0, %s23
      %s28 = sphi 0, %s24
      %s29 = sphi 0, %s25
      %s49 = sphi 0, %s51
      %s52 = sphi 0, %s49
      %s53 = sphi 0, %s52
      %s69 = sphi 0, %s53
      %s77 = sphi 0, %s79
      %s80 = sphi 0, %s77
      %s81 = sphi 0, %s80
      %s97 = sphi 0, %s81
      %s107 = sphi 0, %s109
      %s110 = sphi 0, %s107
      %s111 = sphi 0, %s110
      %s127 = sphi 0, %s111
    $region4: #{tpu_custom_call.1} parent=1 // loop_header_branch
      %14 = sbr.rel (%p12) target = $region8
    $region5: #{tpu_custom_call.1} parent=1 // loop_body
      %s16 = ssub.s32 %s11, 1
      %s17 = ssub.s32 %s11, 2
      %s30 = sadd.s32 1, %s21
      %p31 = scmp.ge.s32.totalorder %s30, 1
      %s32 = scalar_select %p31, 0, %s30
      %s33 = sadd.s32 1, %s20
      %s34 = scalar_select %p31, %s33, %s20
      %p35 = scmp.ge.s32.totalorder %s34, 1
      %s36 = scalar_select %p35, 0, %s34
      %s37 = sadd.s32 1, %s19
      %s38 = scalar_select %p35, %s37, %s19
      %p39 = scmp.ge.s32.totalorder %s38, 2
      %s40 = scalar_select %p39, 0, %s38
      %s41 = sadd.s32 1, %s18
      %s42 = scalar_select %p39, %s41, %s18
      %p43 = scmp.ge.s32.totalorder %s42, 2
      %s44 = scalar_select %p43, 0, %s42
      %s45 = ssub.s32 %s18, %s44
      %s46 = ssub.s32 %s21, %s32
      %s47 = sor.u32 %s45, %s46
      %p48 = scmp.eq.s32.totalorder %s47, 0
      %s50 = sadd.s32 %s49, 1
      %s51 = scalar_select %p48, %s49, %s50
      %p54 = pneg %p48
      %p55 = scmp.eq.s32.totalorder %s11, 3
      %p56 = por %p54, %p55
      %p57 = scmp.ne.s32.totalorder %s49, %s52
      %p58 = scmp.eq.s32.totalorder %s11, 0
      %p59 = por %p57, %p58
      %p60 = scmp.ne.s32.totalorder %s49, %s52
      %p61 = scmp.eq.s32.totalorder %s16, 3
      %p62 = por %p60, %p61
      %p63 = scmp.ne.s32.totalorder %s52, %s53
      %p64 = scmp.eq.s32.totalorder %s16, 0
      %p65 = por %p63, %p64
      %p66 = scmp.ne.s32.totalorder %s52, %s53
      %p67 = scmp.eq.s32.totalorder %s17, 3
      %p68 = por %p66, %p67
      %p70 = scmp.ne.s32.totalorder %s53, %s69
      %p71 = scmp.eq.s32.totalorder %s17, 0
      %p72 = por %p70, %p71
      %s73 = ssub.s32 %s21, %s32
      %s74 = ssub.s32 %s20, %s36
      %s75 = sor.u32 %s73, %s74
      %p76 = scmp.eq.s32.totalorder %s75, 0
      %s78 = sadd.s32 %s77, 1
      %s79 = scalar_select %p76, %s77, %s78
      %p82 = pneg %p76
      %p83 = scmp.eq.s32.totalorder %s11, 3
      %p84 = por %p82, %p83
      %p85 = scmp.ne.s32.totalorder %s77, %s80
      %p86 = scmp.eq.s32.totalorder %s11, 0
      %p87 = por %p85, %p86
      %p88 = scmp.ne.s32.totalorder %s77, %s80
      %p89 = scmp.eq.s32.totalorder %s16, 3
      %p90 = por %p88, %p89
      %p91 = scmp.ne.s32.totalorder %s80, %s81
      %p92 = scmp.eq.s32.totalorder %s16, 0
      %p93 = por %p91, %p92
      %p94 = scmp.ne.s32.totalorder %s80, %s81
      %p95 = scmp.eq.s32.totalorder %s17, 3
      %p96 = por %p94, %p95
      %p98 = scmp.ne.s32.totalorder %s81, %s97
      %p99 = scmp.eq.s32.totalorder %s17, 0
      %p100 = por %p98, %p99
      %s101 = ssub.s32 %s18, %s44
      %s102 = ssub.s32 %s19, %s40
      %s103 = sor.u32 %s101, %s102
      %s104 = ssub.s32 %s20, %s36
      %s105 = sor.u32 %s103, %s104
      %p106 = scmp.eq.s32.totalorder %s105, 0
      %s108 = sadd.s32 %s107, 1
      %s109 = scalar_select %p106, %s107, %s108
      %p112 = pneg %p106
      %p113 = scmp.eq.s32.totalorder %s11, 3
      %p114 = por %p112, %p113
      %p115 = scmp.ne.s32.totalorder %s107, %s110
      %p116 = scmp.eq.s32.totalorder %s11, 0
      %p117 = por %p115, %p116
      %p118 = scmp.ne.s32.totalorder %s107, %s110
      %p119 = scmp.eq.s32.totalorder %s16, 3
      %p120 = por %p118, %p119
      %p121 = scmp.ne.s32.totalorder %s110, %s111
      %p122 = scmp.eq.s32.totalorder %s16, 0
      %p123 = por %p121, %p122
      %p124 = scmp.ne.s32.totalorder %s110, %s111
      %p125 = scmp.eq.s32.totalorder %s17, 3
      %p126 = por %p124, %p125
      %p128 = scmp.ne.s32.totalorder %s111, %s127
      %p129 = scmp.eq.s32.totalorder %s17, 0
      %p130 = por %p128, %p129
      %p131 = scmp.le.s32.totalorder 1, %s11
      %p132 = scmp.lt.s32.totalorder %s11, 5
      %p133 = pnand %p131, %p132
      %p134 = pneg %p133
      // Predicated region
      $region9: #{tpu_custom_call.1} parent=5 // pred_check
        _
      $region10: #{tpu_custom_call.1} parent=5 // pred_check_branch
        %136 = sbr.rel (%p133) target = $region12
      $region11: #{tpu_custom_call.1} parent=5 // pred_region
        %s137 = ssub.s32 %s11, 1
        // Predicated region
        $region13: #{tpu_custom_call.1} parent=11 // pred_check
          %p138 = pneg %p93
        $region14: #{tpu_custom_call.1} parent=11 // pred_check_branch
          %140 = sbr.rel (%p138) target = $region16
        $region15: #{tpu_custom_call.1} parent=11 // pred_region
          %s141 = smul.u32 16, %s25
          %p142 = scmp.lt.s32.totalorder %s141, 15
          %s143 = scalar_select %p142, %s141, 15
          %p144 = scmp.lt.s32.totalorder %s24, 0
          %s145 = scalar_select %p144, %s24, 0
          %s146 = sadd.s32 %s145, %s143
          %s147 = smul.addr %s146, 4
          %s148 = scalar_lea.vmem %s1, %s147
          %s149 = smul.u32 16, %s25
        $region16: #{tpu_custom_call.1} parent=11 // pred_fallthru
          _
      $region12: #{tpu_custom_call.1} parent=5 // pred_fallthru
        _
      %p150 = scmp.lt.s32.totalorder %s11, 4
      // Predicated region
      $region17: #{tpu_custom_call.1} parent=5 // pred_check
        %p151 = pneg %p150
      $region18: #{tpu_custom_call.1} parent=5 // pred_check_branch
        %153 = sbr.rel (%p151) target = $region20
      $region19: #{tpu_custom_call.1} parent=5 // pred_region
        // Predicated region
        $region21: #{tpu_custom_call.1} parent=19 // pred_check
          %p154 = pneg %p59
        $region22: #{tpu_custom_call.1} parent=19 // pred_check_branch
          %156 = sbr.rel (%p154) target = $region24
        $region23: #{tpu_custom_call.1} parent=19 // pred_region
          %p157 = scmp.lt.s32.totalorder %s18, 1
          %s158 = scalar_select %p157, %s18, 1
          %p159 = scmp.lt.s32.totalorder %s21, 0
          %s160 = scalar_select %p159, %s21, 0
          %s161 = smul.addr %s158, 170
          %s162 = sadd.s32 %s160, %s161
          %s163 = smul.addr %s162, 4
          %s164 = scalar_lea.vmem %s0, %s163
        $region24: #{tpu_custom_call.1} parent=19 // pred_fallthru
          _
      $region20: #{tpu_custom_call.1} parent=5 // pred_fallthru
        _
      %p165 = scmp.le.s32.totalorder 1, %s11
      %p166 = scmp.lt.s32.totalorder %s11, 5
      %p167 = pnand %p165, %p166
      %p168 = pneg %p167
      // Predicated region
      $region25: #{tpu_custom_call.1} parent=5 // pred_check
        _
      $region26: #{tpu_custom_call.1} parent=5 // pred_check_branch
        %170 = sbr.rel (%p167) target = $region28
      $region27: #{tpu_custom_call.1} parent=5 // pred_region
        %s171 = ssub.s32 %s11, 1
        %p172 = scmp.lt.s32.totalorder %s22, 1
        %s173 = scalar_select %p172, %s22, 1
        %p174 = scmp.lt.s32.totalorder %s25, 0
        %s175 = scalar_select %p174, %s25, 0
        %s176 = smul.addr %s173, 170
        %s177 = sadd.s32 %s175, %s176
        %s178 = smul.addr %s177, 4
        %s179 = scalar_lea.vmem %s0, %s178
        %p180 = pneg %p65
        %p181 = pneg %p62
        %s182 = smul.u32 16, %s25
        %p183 = scmp.lt.s32.totalorder %s182, 15
        %s184 = scalar_select %p183, %s182, 15
        %p185 = scmp.lt.s32.totalorder %s24, 0
        %s186 = scalar_select %p185, %s24, 0
        %s187 = sadd.s32 %s186, %s184
        %s188 = smul.addr %s187, 4
        %s189 = scalar_lea.vmem %s1, %s188
        %p190 = pneg %p93
        %p191 = pneg %p90
        %p192 = pneg %p123
        %p193 = pneg %p120
        %s194 = sand.u32 %s110, 1
        %s195 = scalar_lea.sflag [#allocation4], %s194
        %s196 = sand.u32 %s110, 1
        %s197 = smul.addr %s196, 256
        %s198 = scalar_lea.vmem [#allocation3], %s197
        %p199 = scmp.lt.s32.totalorder %s22, 1
        %s200 = scalar_select %p199, %s22, 1
        %p201 = scmp.lt.s32.totalorder %s25, 0
        %s202 = scalar_select %p201, %s25, 0
        %s203 = smul.addr %s200, 170
        %s204 = sadd.s32 %s202, %s203
        %s205 = smul.addr %s204, 4
        %s206 = scalar_lea.vmem %s0, %s205
        %s207 = smul.u32 16, %s25
        %p208 = scmp.lt.s32.totalorder %s207, 15
        %s209 = scalar_select %p208, %s207, 15
        %p210 = scmp.lt.s32.totalorder %s24, 0
        %s211 = scalar_select %p210, %s24, 0
        %s212 = sadd.s32 %s211, %s209
        %s213 = smul.addr %s212, 4
        %s214 = scalar_lea.vmem %s1, %s213
        %s215 = smul.u32 16, %s25
        %s216 = smul.u32 16, %s23
        %p217 = scmp.eq.s32.totalorder %s25, 0
        // Predicated region
        $region29: #{tpu_custom_call.1} parent=27 // pred_check
          %p218 = pneg %p217
        $region30: #{tpu_custom_call.1} parent=27 // pred_check_branch
          %220 = sbr.rel (%p218) target = $region32
        $region31: #{tpu_custom_call.1} parent=27 // pred_region
          %221 = vst [vmem:[#allocation2] sm:$0xff] 0.0
          %222 = vst [vmem:[#allocation2 + $0x8] sm:$0xff] 0.0
          %223 = vst [vmem:[#allocation2 + $0x10] sm:$0xff] 0.0
          %224 = vst [vmem:[#allocation2 + $0x18] sm:$0xff] 0.0
          %225 = vst [vmem:[#allocation2 + $0x20] sm:$0xff] 0.0
          %226 = vst [vmem:[#allocation2 + $0x28] sm:$0xff] 0.0
          %227 = vst [vmem:[#allocation2 + $0x30] sm:$0xff] 0.0
          %228 = vst [vmem:[#allocation2 + $0x38] sm:$0xff] 0.0
          %229 = vst [vmem:[#allocation2 + $0x40] sm:$0xff] 0.0
          %230 = vst [vmem:[#allocation2 + $0x48] sm:$0xff] 0.0
          %231 = vst [vmem:[#allocation2 + $0x50] sm:$0xff] 0.0
          %232 = vst [vmem:[#allocation2 + $0x58] sm:$0xff] 0.0
          %233 = vst [vmem:[#allocation2 + $0x60] sm:$0xff] 0.0
          %234 = vst [vmem:[#allocation2 + $0x68] sm:$0xff] 0.0
          %235 = vst [vmem:[#allocation2 + $0x70] sm:$0xff] 0.0
          %236 = vst [vmem:[#allocation2 + $0x78] sm:$0xff] 0.0
          %237 = vst [vmem:[#allocation2 + $0x80] sm:$0xff] 0.0
          %238 = vst [vmem:[#allocation2 + $0x88] sm:$0xff] 0.0
          %239 = vst [vmem:[#allocation2 + $0x90] sm:$0xff] 0.0
          %240 = vst [vmem:[#allocation2 + $0x98] sm:$0xff] 0.0
          %241 = vst [vmem:[#allocation2 + $0xa0] sm:$0xff] 0.0
          %242 = vst [vmem:[#allocation2 + $0xa8] sm:$0xff] 0.0
          %243 = vst [vmem:[#allocation2 + $0xb0] sm:$0xff] 0.0
          %244 = vst [vmem:[#allocation2 + $0xb8] sm:$0xff] 0.0
          %245 = vst [vmem:[#allocation2 + $0xc0] sm:$0xff] 0.0
          %246 = vst [vmem:[#allocation2 + $0xc8] sm:$0xff] 0.0
          %247 = vst [vmem:[#allocation2 + $0xd0] sm:$0xff] 0.0
          %248 = vst [vmem:[#allocation2 + $0xd8] sm:$0xff] 0.0
          %249 = vst [vmem:[#allocation2 + $0xe0] sm:$0xff] 0.0
          %250 = vst [vmem:[#allocation2 + $0xe8] sm:$0xff] 0.0
          %251 = vst [vmem:[#allocation2 + $0xf0] sm:$0xff] 0.0
          %252 = vst [vmem:[#allocation2 + $0xf8] sm:$0xff] 0.0
          %253 = vst [vmem:[#allocation2 + $0x100] sm:$0xff] 0.0
          %254 = vst [vmem:[#allocation2 + $0x108] sm:$0xff] 0.0
          %255 = vst [vmem:[#allocation2 + $0x110] sm:$0xff] 0.0
          %256 = vst [vmem:[#allocation2 + $0x118] sm:$0xff] 0.0
          %257 = vst [vmem:[#allocation2 + $0x120] sm:$0xff] 0.0
          %258 = vst [vmem:[#allocation2 + $0x128] sm:$0xff] 0.0
          %259 = vst [vmem:[#allocation2 + $0x130] sm:$0xff] 0.0
          %260 = vst [vmem:[#allocation2 + $0x138] sm:$0xff] 0.0
          %261 = vst [vmem:[#allocation2 + $0x140] sm:$0xff] 0.0
          %262 = vst [vmem:[#allocation2 + $0x148] sm:$0xff] 0.0
          %263 = vst [vmem:[#allocation2 + $0x150] sm:$0xff] 0.0
          %264 = vst [vmem:[#allocation2 + $0x158] sm:$0xff] 0.0
          %265 = vst [vmem:[#allocation2 + $0x160] sm:$0xff] 0.0
          %266 = vst [vmem:[#allocation2 + $0x168] sm:$0xff] 0.0
          %267 = vst [vmem:[#allocation2 + $0x170] sm:$0xff] 0.0
          %268 = vst [vmem:[#allocation2 + $0x178] sm:$0xff] 0.0
          %269 = vst [vmem:[#allocation2 + $0x180] sm:$0xff] 0.0
          %270 = vst [vmem:[#allocation2 + $0x188] sm:$0xff] 0.0
          %271 = vst [vmem:[#allocation2 + $0x190] sm:$0xff] 0.0
          %272 = vst [vmem:[#allocation2 + $0x198] sm:$0xff] 0.0
          %273 = vst [vmem:[#allocation2 + $0x1a0] sm:$0xff] 0.0
          %274 = vst [vmem:[#allocation2 + $0x1a8] sm:$0xff] 0.0
          %275 = vst [vmem:[#allocation2 + $0x1b0] sm:$0xff] 0.0
          %276 = vst [vmem:[#allocation2 + $0x1b8] sm:$0xff] 0.0
          %277 = vst [vmem:[#allocation2 + $0x1c0] sm:$0xff] 0.0
          %278 = vst [vmem:[#allocation2 + $0x1c8] sm:$0xff] 0.0
          %279 = vst [vmem:[#allocation2 + $0x1d0] sm:$0xff] 0.0
          %280 = vst [vmem:[#allocation2 + $0x1d8] sm:$0xff] 0.0
          %281 = vst [vmem:[#allocation2 + $0x1e0] sm:$0xff] 0.0
          %282 = vst [vmem:[#allocation2 + $0x1e8] sm:$0xff] 0.0
          %283 = vst [vmem:[#allocation2 + $0x1f0] sm:$0xff] 0.0
          %284 = vst [vmem:[#allocation2 + $0x1f8] sm:$0xff] 0.0
        $region32: #{tpu_custom_call.1} parent=27 // pred_fallthru
          _
        %s285 = smul.u32 %s23, 16
        %s286 = smul.u32 %s285, 5
        %s287 = smul.addr %s286, 4
        %s288 = scalar_lea.vmem %s206, %s287
        %v289 = vld [vmem:[%s288] sm:$0xf]
        %v290 = vld [vmem:[%s288 + $0x4] sm:$0xf]
        %v291 = vld [vmem:[%s288 + $0x8] sm:$0xf]
        %v292 = vld [vmem:[%s288 + $0xc] sm:$0xf]
        %v293 = vld [vmem:[%s288 + $0x14] sm:$0xf]
        %v294 = vld [vmem:[%s288 + $0x18] sm:$0xf]
        %v295 = vld [vmem:[%s288 + $0x1c] sm:$0xf]
        %v296 = vld [vmem:[%s288 + $0x20] sm:$0xf]
        %v297 = vld [vmem:[%s288 + $0x28] sm:$0xf]
        %v298 = vld [vmem:[%s288 + $0x2c] sm:$0xf]
        %v299 = vld [vmem:[%s288 + $0x30] sm:$0xf]
        %v300 = vld [vmem:[%s288 + $0x34] sm:$0xf]
        %v301 = vld [vmem:[%s288 + $0x3c] sm:$0xf]
        %v302 = vld [vmem:[%s288 + $0x40] sm:$0xf]
        %v303 = vld [vmem:[%s288 + $0x44] sm:$0xf]
        %v304 = vld [vmem:[%s288 + $0x48] sm:$0xf]
        %v305 = vld [vmem:[%s288 + $0x50] sm:$0xf]
        %v306 = vld [vmem:[%s288 + $0x54] sm:$0xf]
        %v307 = vld [vmem:[%s288 + $0x58] sm:$0xf]
        %v308 = vld [vmem:[%s288 + $0x5c] sm:$0xf]
        %v309 = vld [vmem:[%s288 + $0x64] sm:$0xf]
        %v310 = vld [vmem:[%s288 + $0x68] sm:$0xf]
        %v311 = vld [vmem:[%s288 + $0x6c] sm:$0xf]
        %v312 = vld [vmem:[%s288 + $0x70] sm:$0xf]
        %v313 = vld [vmem:[%s288 + $0x78] sm:$0xf]
        %v314 = vld [vmem:[%s288 + $0x7c] sm:$0xf]
        %v315 = vld [vmem:[%s288 + $0x80] sm:$0xf]
        %v316 = vld [vmem:[%s288 + $0x84] sm:$0xf]
        %v317 = vld [vmem:[%s288 + $0x8c] sm:$0xf]
        %v318 = vld [vmem:[%s288 + $0x90] sm:$0xf]
        %v319 = vld [vmem:[%s288 + $0x94] sm:$0xf]
        %v320 = vld [vmem:[%s288 + $0x98] sm:$0xf]
        %v321 = vld [vmem:[%s288 + $0xa0] sm:$0xf]
        %v322 = vld [vmem:[%s288 + $0xa4] sm:$0xf]
        %v323 = vld [vmem:[%s288 + $0xa8] sm:$0xf]
        %v324 = vld [vmem:[%s288 + $0xac] sm:$0xf]
        %v325 = vld [vmem:[%s288 + $0xb4] sm:$0xf]
        %v326 = vld [vmem:[%s288 + $0xb8] sm:$0xf]
        %v327 = vld [vmem:[%s288 + $0xbc] sm:$0xf]
        %v328 = vld [vmem:[%s288 + $0xc0] sm:$0xf]
        %v329 = vld [vmem:[%s288 + $0xc8] sm:$0xf]
        %v330 = vld [vmem:[%s288 + $0xcc] sm:$0xf]
        %v331 = vld [vmem:[%s288 + $0xd0] sm:$0xf]
        %v332 = vld [vmem:[%s288 + $0xd4] sm:$0xf]
        %v333 = vld [vmem:[%s288 + $0xdc] sm:$0xf]
        %v334 = vld [vmem:[%s288 + $0xe0] sm:$0xf]
        %v335 = vld [vmem:[%s288 + $0xe4] sm:$0xf]
        %v336 = vld [vmem:[%s288 + $0xe8] sm:$0xf]
        %v337 = vld [vmem:[%s288 + $0xf0] sm:$0xf]
        %v338 = vld [vmem:[%s288 + $0xf4] sm:$0xf]
        %v339 = vld [vmem:[%s288 + $0xf8] sm:$0xf]
        %v340 = vld [vmem:[%s288 + $0xfc] sm:$0xf]
        %v341 = vld [vmem:[%s288 + $0x104] sm:$0xf]
        %v342 = vld [vmem:[%s288 + $0x108] sm:$0xf]
        %v343 = vld [vmem:[%s288 + $0x10c] sm:$0xf]
        %v344 = vld [vmem:[%s288 + $0x110] sm:$0xf]
        %v345 = vld [vmem:[%s288 + $0x118] sm:$0xf]
        %v346 = vld [vmem:[%s288 + $0x11c] sm:$0xf]
        %v347 = vld [vmem:[%s288 + $0x120] sm:$0xf]
        %v348 = vld [vmem:[%s288 + $0x124] sm:$0xf]
        %v349 = vld [vmem:[%s288 + $0x12c] sm:$0xf]
        %v350 = vld [vmem:[%s288 + $0x130] sm:$0xf]
        %v351 = vld [vmem:[%s288 + $0x134] sm:$0xf]
        %v352 = vld [vmem:[%s288 + $0x138] sm:$0xf]
        %v353 = vunpack.c.l.bf16 %v289
        %v354 = vunpack.c.l.bf16 %v290
        %v355 = vunpack.c.l.bf16 %v291
        %v356 = vunpack.c.l.bf16 %v292
        %v357 = vunpack.c.l.bf16 %v293
        %v358 = vunpack.c.l.bf16 %v294
        %v359 = vunpack.c.l.bf16 %v295
        %v360 = vunpack.c.l.bf16 %v296
        %v361 = vunpack.c.l.bf16 %v297
        %v362 = vunpack.c.l.bf16 %v298
        %v363 = vunpack.c.l.bf16 %v299
        %v364 = vunpack.c.l.bf16 %v300
        %v365 = vunpack.c.l.bf16 %v301
        %v366 = vunpack.c.l.bf16 %v302
        %v367 = vunpack.c.l.bf16 %v303
        %v368 = vunpack.c.l.bf16 %v304
        %v369 = vunpack.c.l.bf16 %v305
        %v370 = vunpack.c.l.bf16 %v306
        %v371 = vunpack.c.l.bf16 %v307
        %v372 = vunpack.c.l.bf16 %v308
        %v373 = vunpack.c.l.bf16 %v309
        %v374 = vunpack.c.l.bf16 %v310
        %v375 = vunpack.c.l.bf16 %v311
        %v376 = vunpack.c.l.bf16 %v312
        %v377 = vunpack.c.l.bf16 %v313
        %v378 = vunpack.c.l.bf16 %v314
        %v379 = vunpack.c.l.bf16 %v315
        %v380 = vunpack.c.l.bf16 %v316
        %v381 = vunpack.c.l.bf16 %v317
        %v382 = vunpack.c.l.bf16 %v318
        %v383 = vunpack.c.l.bf16 %v319
        %v384 = vunpack.c.l.bf16 %v320
        %v385 = vunpack.c.l.bf16 %v321
        %v386 = vunpack.c.l.bf16 %v322
        %v387 = vunpack.c.l.bf16 %v323
        %v388 = vunpack.c.l.bf16 %v324
        %v389 = vunpack.c.l.bf16 %v325
        %v390 = vunpack.c.l.bf16 %v326
        %v391 = vunpack.c.l.bf16 %v327
        %v392 = vunpack.c.l.bf16 %v328
        %v393 = vunpack.c.l.bf16 %v329
        %v394 = vunpack.c.l.bf16 %v330
        %v395 = vunpack.c.l.bf16 %v331
        %v396 = vunpack.c.l.bf16 %v332
        %v397 = vunpack.c.l.bf16 %v333
        %v398 = vunpack.c.l.bf16 %v334
        %v399 = vunpack.c.l.bf16 %v335
        %v400 = vunpack.c.l.bf16 %v336
        %v401 = vunpack.c.l.bf16 %v337
        %v402 = vunpack.c.l.bf16 %v338
        %v403 = vunpack.c.l.bf16 %v339
        %v404 = vunpack.c.l.bf16 %v340
        %v405 = vunpack.c.l.bf16 %v341
        %v406 = vunpack.c.l.bf16 %v342
        %v407 = vunpack.c.l.bf16 %v343
        %v408 = vunpack.c.l.bf16 %v344
        %v409 = vunpack.c.l.bf16 %v345
        %v410 = vunpack.c.l.bf16 %v346
        %v411 = vunpack.c.l.bf16 %v347
        %v412 = vunpack.c.l.bf16 %v348
        %v413 = vunpack.c.l.bf16 %v349
        %v414 = vunpack.c.l.bf16 %v350
        %v415 = vunpack.c.l.bf16 %v351
        %v416 = vunpack.c.l.bf16 %v352
        %v417 = vpack.c.bf16 %v354, %v353
        %v418 = vpack.c.bf16 %v356, %v355
        %v419 = vpack.c.bf16 %v358, %v357
        %v420 = vpack.c.bf16 %v360, %v359
        %v421 = vpack.c.bf16 %v362, %v361
        %v422 = vpack.c.bf16 %v364, %v363
        %v423 = vpack.c.bf16 %v366, %v365
        %v424 = vpack.c.bf16 %v368, %v367
        %v425 = vpack.c.bf16 %v370, %v369
        %v426 = vpack.c.bf16 %v372, %v371
        %v427 = vpack.c.bf16 %v374, %v373
        %v428 = vpack.c.bf16 %v376, %v375
        %v429 = vpack.c.bf16 %v378, %v377
        %v430 = vpack.c.bf16 %v380, %v379
        %v431 = vpack.c.bf16 %v382, %v381
        %v432 = vpack.c.bf16 %v384, %v383
        %v433 = vpack.c.bf16 %v386, %v385
        %v434 = vpack.c.bf16 %v388, %v387
        %v435 = vpack.c.bf16 %v390, %v389
        %v436 = vpack.c.bf16 %v392, %v391
        %v437 = vpack.c.bf16 %v394, %v393
        %v438 = vpack.c.bf16 %v396, %v395
        %v439 = vpack.c.bf16 %v398, %v397
        %v440 = vpack.c.bf16 %v400, %v399
        %v441 = vpack.c.bf16 %v402, %v401
        %v442 = vpack.c.bf16 %v404, %v403
        %v443 = vpack.c.bf16 %v406, %v405
        %v444 = vpack.c.bf16 %v408, %v407
        %v445 = vpack.c.bf16 %v410, %v409
        %v446 = vpack.c.bf16 %v412, %v411
        %v447 = vpack.c.bf16 %v414, %v413
        %v448 = vpack.c.bf16 %v416, %v415
        %v449 = vld [vmem:[#allocation2] sm:$0xff]
        %v450 = vld [vmem:[#allocation2 + $0x8] sm:$0xff]
        %v451 = vld [vmem:[#allocation2 + $0x10] sm:$0xff]
        %v452 = vld [vmem:[#allocation2 + $0x18] sm:$0xff]
        %v453 = vld [vmem:[#allocation2 + $0x20] sm:$0xff]
        %v454 = vld [vmem:[#allocation2 + $0x28] sm:$0xff]
        %v455 = vld [vmem:[#allocation2 + $0x30] sm:$0xff]
        %v456 = vld [vmem:[#allocation2 + $0x38] sm:$0xff]
        %v457 = vld [vmem:[#allocation2 + $0x40] sm:$0xff]
        %v458 = vld [vmem:[#allocation2 + $0x48] sm:$0xff]
        %v459 = vld [vmem:[#allocation2 + $0x50] sm:$0xff]
        %v460 = vld [vmem:[#allocation2 + $0x58] sm:$0xff]
        %v461 = vld [vmem:[#allocation2 + $0x60] sm:$0xff]
        %v462 = vld [vmem:[#allocation2 + $0x68] sm:$0xff]
        %v463 = vld [vmem:[#allocation2 + $0x70] sm:$0xff]
        %v464 = vld [vmem:[#allocation2 + $0x78] sm:$0xff]
        %v465 = vld [vmem:[#allocation2 + $0x80] sm:$0xff]
        %v466 = vld [vmem:[#allocation2 + $0x88] sm:$0xff]
        %v467 = vld [vmem:[#allocation2 + $0x90] sm:$0xff]
        %v468 = vld [vmem:[#allocation2 + $0x98] sm:$0xff]
        %v469 = vld [vmem:[#allocation2 + $0xa0] sm:$0xff]
        %v470 = vld [vmem:[#allocation2 + $0xa8] sm:$0xff]
        %v471 = vld [vmem:[#allocation2 + $0xb0] sm:$0xff]
        %v472 = vld [vmem:[#allocation2 + $0xb8] sm:$0xff]
        %v473 = vld [vmem:[#allocation2 + $0xc0] sm:$0xff]
        %v474 = vld [vmem:[#allocation2 + $0xc8] sm:$0xff]
        %v475 = vld [vmem:[#allocation2 + $0xd0] sm:$0xff]
        %v476 = vld [vmem:[#allocation2 + $0xd8] sm:$0xff]
        %v477 = vld [vmem:[#allocation2 + $0xe0] sm:$0xff]
        %v478 = vld [vmem:[#allocation2 + $0xe8] sm:$0xff]
        %v479 = vld [vmem:[#allocation2 + $0xf0] sm:$0xff]
        %v480 = vld [vmem:[#allocation2 + $0xf8] sm:$0xff]
        %v481 = vld [vmem:[#allocation2 + $0x100] sm:$0xff]
        %v482 = vld [vmem:[#allocation2 + $0x108] sm:$0xff]
        %v483 = vld [vmem:[#allocation2 + $0x110] sm:$0xff]
        %v484 = vld [vmem:[#allocation2 + $0x118] sm:$0xff]
        %v485 = vld [vmem:[#allocation2 + $0x120] sm:$0xff]
        %v486 = vld [vmem:[#allocation2 + $0x128] sm:$0xff]
        %v487 = vld [vmem:[#allocation2 + $0x130] sm:$0xff]
        %v488 = vld [vmem:[#allocation2 + $0x138] sm:$0xff]
        %v489 = vld [vmem:[#allocation2 + $0x140] sm:$0xff]
        %v490 = vld [vmem:[#allocation2 + $0x148] sm:$0xff]
        %v491 = vld [vmem:[#allocation2 + $0x150] sm:$0xff]
        %v492 = vld [vmem:[#allocation2 + $0x158] sm:$0xff]
        %v493 = vld [vmem:[#allocation2 + $0x160] sm:$0xff]
        %v494 = vld [vmem:[#allocation2 + $0x168] sm:$0xff]
        %v495 = vld [vmem:[#allocation2 + $0x170] sm:$0xff]
        %v496 = vld [vmem:[#allocation2 + $0x178] sm:$0xff]
        %v497 = vld [vmem:[#allocation2 + $0x180] sm:$0xff]
        %v498 = vld [vmem:[#allocation2 + $0x188] sm:$0xff]
        %v499 = vld [vmem:[#allocation2 + $0x190] sm:$0xff]
        %v500 = vld [vmem:[#allocation2 + $0x198] sm:$0xff]
        %v501 = vld [vmem:[#allocation2 + $0x1a0] sm:$0xff]
        %v502 = vld [vmem:[#allocation2 + $0x1a8] sm:$0xff]
        %v503 = vld [vmem:[#allocation2 + $0x1b0] sm:$0xff]
        %v504 = vld [vmem:[#allocation2 + $0x1b8] sm:$0xff]
        %v505 = vld [vmem:[#allocation2 + $0x1c0] sm:$0xff]
        %v506 = vld [vmem:[#allocation2 + $0x1c8] sm:$0xff]
        %v507 = vld [vmem:[#allocation2 + $0x1d0] sm:$0xff]
        %v508 = vld [vmem:[#allocation2 + $0x1d8] sm:$0xff]
        %v509 = vld [vmem:[#allocation2 + $0x1e0] sm:$0xff]
        %v510 = vld [vmem:[#allocation2 + $0x1e8] sm:$0xff]
        %v511 = vld [vmem:[#allocation2 + $0x1f0] sm:$0xff]
        %v512 = vld [vmem:[#allocation2 + $0x1f8] sm:$0xff]
        %v513 = vld [vmem:[%s214] sm:$0xf]
        %v514 = vld [vmem:[%s214 + $0x4] sm:$0xf]
        %v515 = vld [vmem:[%s214 + $0x8] sm:$0xf]
        %v516 = vld [vmem:[%s214 + $0xc] sm:$0xf]
        %v517 = vld [vmem:[%s214 + $0x10] sm:$0xf]
        %v518 = vld [vmem:[%s214 + $0x14] sm:$0xf]
        %v519 = vld [vmem:[%s214 + $0x18] sm:$0xf]
        %v520 = vld [vmem:[%s214 + $0x1c] sm:$0xf]
        %v521 = vld [vmem:[%s214 + $0x20] sm:$0xf]
        %v522 = vld [vmem:[%s214 + $0x24] sm:$0xf]
        %v523 = vld [vmem:[%s214 + $0x28] sm:$0xf]
        %v524 = vld [vmem:[%s214 + $0x2c] sm:$0xf]
        %v525 = vld [vmem:[%s214 + $0x30] sm:$0xf]
        %v526 = vld [vmem:[%s214 + $0x34] sm:$0xf]
        %v527 = vld [vmem:[%s214 + $0x38] sm:$0xf]
        %v528 = vld [vmem:[%s214 + $0x3c] sm:$0xf]
        %v545 = vunpack.c.l.b16 %v513
        %v546 = vunpack.c.l.b16 %v514
        %v547 = vunpack.c.l.b16 %v515
        %v548 = vunpack.c.l.b16 %v516
        %v549 = vunpack.c.l.b16 %v517
        %v550 = vunpack.c.l.b16 %v518
        %v551 = vunpack.c.l.b16 %v519
        %v552 = vunpack.c.l.b16 %v520
        %v553 = vunpack.c.l.b16 %v521
        %v554 = vunpack.c.l.b16 %v522
        %v555 = vunpack.c.l.b16 %v523
        %v556 = vunpack.c.l.b16 %v524
        %v557 = vunpack.c.l.b16 %v525
        %v558 = vunpack.c.l.b16 %v526
        %v559 = vunpack.c.l.b16 %v527
        %v560 = vunpack.c.l.b16 %v528
        %v561 = vpack.c.b16 %v546, %v545
        %v562 = vpack.c.b16 %v548, %v547
        %v563 = vpack.c.b16 %v550, %v549
        %v564 = vpack.c.b16 %v552, %v551
        %v565 = vpack.c.b16 %v554, %v553
        %v566 = vpack.c.b16 %v556, %v555
        %v567 = vpack.c.b16 %v558, %v557
        %v568 = vpack.c.b16 %v560, %v559
        %577 = vmatpush.bf16.msra.mxu0 %v568
        %578 = vmatpush.bf16.msra.mxu0 %v567
        %579 = vmatpush.bf16.msra.mxu0 %v566
        %580 = vmatpush.bf16.msra.mxu0 %v565
        %581 = vmatpush.bf16.msra.mxu0 %v564
        %582 = vmatpush.bf16.msra.mxu0 %v563
        %583 = vmatpush.bf16.msra.mxu0 %v562
        %584 = vmatpush.bf16.msra.mxu0 %v561
        %585 = vmatmul.bf16.gmra.mxu0 %v417
        %v586 = vpop.f32.mrf.mxu0
        %v587 = vadd.f32 0.0, %v586
        %v588 = vpop.f32.mrf.mxu0
        %v589 = vadd.f32 0.0, %v588
        %590 = vmatmul.bf16.gmra.mxu0 %v418
        %v591 = vpop.f32.mrf.mxu0
        %v592 = vadd.f32 0.0, %v591
        %v593 = vpop.f32.mrf.mxu0
        %v594 = vadd.f32 0.0, %v593
        %595 = vmatmul.bf16.gmra.mxu0 %v419
        %v596 = vpop.f32.mrf.mxu0
        %v597 = vadd.f32 0.0, %v596
        %v598 = vpop.f32.mrf.mxu0
        %v599 = vadd.f32 0.0, %v598
        %600 = vmatmul.bf16.gmra.mxu0 %v420
        %v601 = vpop.f32.mrf.mxu0
        %v602 = vadd.f32 0.0, %v601
        %v603 = vpop.f32.mrf.mxu0
        %v604 = vadd.f32 0.0, %v603
        %605 = vmatmul.bf16.gmra.mxu0 %v421
        %v606 = vpop.f32.mrf.mxu0
        %v607 = vadd.f32 0.0, %v606
        %v608 = vpop.f32.mrf.mxu0
        %v609 = vadd.f32 0.0, %v608
        %610 = vmatmul.bf16.gmra.mxu0 %v422
        %v611 = vpop.f32.mrf.mxu0
        %v612 = vadd.f32 0.0, %v611
        %v613 = vpop.f32.mrf.mxu0
        %v614 = vadd.f32 0.0, %v613
        %615 = vmatmul.bf16.gmra.mxu0 %v423
        %v616 = vpop.f32.mrf.mxu0
        %v617 = vadd.f32 0.0, %v616
        %v618 = vpop.f32.mrf.mxu0
        %v619 = vadd.f32 0.0, %v618
        %620 = vmatmul.bf16.gmra.mxu0 %v424
        %v621 = vpop.f32.mrf.mxu0
        %v622 = vadd.f32 0.0, %v621
        %v623 = vpop.f32.mrf.mxu0
        %v624 = vadd.f32 0.0, %v623
        %625 = vmatmul.bf16.gmra.mxu0 %v425
        %v626 = vpop.f32.mrf.mxu0
        %v627 = vadd.f32 0.0, %v626
        %v628 = vpop.f32.mrf.mxu0
        %v629 = vadd.f32 0.0, %v628
        %630 = vmatmul.bf16.gmra.mxu0 %v426
        %v631 = vpop.f32.mrf.mxu0
        %v632 = vadd.f32 0.0, %v631
        %v633 = vpop.f32.mrf.mxu0
        %v634 = vadd.f32 0.0, %v633
        %635 = vmatmul.bf16.gmra.mxu0 %v427
        %v636 = vpop.f32.mrf.mxu0
        %v637 = vadd.f32 0.0, %v636
        %v638 = vpop.f32.mrf.mxu0
        %v639 = vadd.f32 0.0, %v638
        %640 = vmatmul.bf16.gmra.mxu0 %v428
        %v641 = vpop.f32.mrf.mxu0
        %v642 = vadd.f32 0.0, %v641
        %v643 = vpop.f32.mrf.mxu0
        %v644 = vadd.f32 0.0, %v643
        %645 = vmatmul.bf16.gmra.mxu0 %v429
        %v646 = vpop.f32.mrf.mxu0
        %v647 = vadd.f32 0.0, %v646
        %v648 = vpop.f32.mrf.mxu0
        %v649 = vadd.f32 0.0, %v648
        %650 = vmatmul.bf16.gmra.mxu0 %v430
        %v651 = vpop.f32.mrf.mxu0
        %v652 = vadd.f32 0.0, %v651
        %v653 = vpop.f32.mrf.mxu0
        %v654 = vadd.f32 0.0, %v653
        %655 = vmatmul.bf16.gmra.mxu0 %v431
        %v656 = vpop.f32.mrf.mxu0
        %v657 = vadd.f32 0.0, %v656
        %v658 = vpop.f32.mrf.mxu0
        %v659 = vadd.f32 0.0, %v658
        %660 = vmatmul.bf16.gmra.mxu0 %v432
        %v661 = vpop.f32.mrf.mxu0
        %v662 = vadd.f32 0.0, %v661
        %v663 = vpop.f32.mrf.mxu0
        %v664 = vadd.f32 0.0, %v663
        %665 = vmatmul.bf16.gmra.mxu0 %v433
        %v666 = vpop.f32.mrf.mxu0
        %v667 = vadd.f32 0.0, %v666
        %v668 = vpop.f32.mrf.mxu0
        %v669 = vadd.f32 0.0, %v668
        %670 = vmatmul.bf16.gmra.mxu0 %v434
        %v671 = vpop.f32.mrf.mxu0
        %v672 = vadd.f32 0.0, %v671
        %v673 = vpop.f32.mrf.mxu0
        %v674 = vadd.f32 0.0, %v673
        %675 = vmatmul.bf16.gmra.mxu0 %v435
        %v676 = vpop.f32.mrf.mxu0
        %v677 = vadd.f32 0.0, %v676
        %v678 = vpop.f32.mrf.mxu0
        %v679 = vadd.f32 0.0, %v678
        %680 = vmatmul.bf16.gmra.mxu0 %v436
        %v681 = vpop.f32.mrf.mxu0
        %v682 = vadd.f32 0.0, %v681
        %v683 = vpop.f32.mrf.mxu0
        %v684 = vadd.f32 0.0, %v683
        %685 = vmatmul.bf16.gmra.mxu0 %v437
        %v686 = vpop.f32.mrf.mxu0
        %v687 = vadd.f32 0.0, %v686
        %v688 = vpop.f32.mrf.mxu0
        %v689 = vadd.f32 0.0, %v688
        %690 = vmatmul.bf16.gmra.mxu0 %v438
        %v691 = vpop.f32.mrf.mxu0
        %v692 = vadd.f32 0.0, %v691
        %v693 = vpop.f32.mrf.mxu0
        %v694 = vadd.f32 0.0, %v693
        %695 = vmatmul.bf16.gmra.mxu0 %v439
        %v696 = vpop.f32.mrf.mxu0
        %v697 = vadd.f32 0.0, %v696
        %v698 = vpop.f32.mrf.mxu0
        %v699 = vadd.f32 0.0, %v698
        %700 = vmatmul.bf16.gmra.mxu0 %v440
        %v701 = vpop.f32.mrf.mxu0
        %v702 = vadd.f32 0.0, %v701
        %v703 = vpop.f32.mrf.mxu0
        %v704 = vadd.f32 0.0, %v703
        %705 = vmatmul.bf16.gmra.mxu0 %v441
        %v706 = vpop.f32.mrf.mxu0
        %v707 = vadd.f32 0.0, %v706
        %v708 = vpop.f32.mrf.mxu0
        %v709 = vadd.f32 0.0, %v708
        %710 = vmatmul.bf16.gmra.mxu0 %v442
        %v711 = vpop.f32.mrf.mxu0
        %v712 = vadd.f32 0.0, %v711
        %v713 = vpop.f32.mrf.mxu0
        %v714 = vadd.f32 0.0, %v713
        %715 = vmatmul.bf16.gmra.mxu0 %v443
        %v716 = vpop.f32.mrf.mxu0
        %v717 = vadd.f32 0.0, %v716
        %v718 = vpop.f32.mrf.mxu0
        %v719 = vadd.f32 0.0, %v718
        %720 = vmatmul.bf16.gmra.mxu0 %v444
        %v721 = vpop.f32.mrf.mxu0
        %v722 = vadd.f32 0.0, %v721
        %v723 = vpop.f32.mrf.mxu0
        %v724 = vadd.f32 0.0, %v723
        %725 = vmatmul.bf16.gmra.mxu0 %v445
        %v726 = vpop.f32.mrf.mxu0
        %v727 = vadd.f32 0.0, %v726
        %v728 = vpop.f32.mrf.mxu0
        %v729 = vadd.f32 0.0, %v728
        %730 = vmatmul.bf16.gmra.mxu0 %v446
        %v731 = vpop.f32.mrf.mxu0
        %v732 = vadd.f32 0.0, %v731
        %v733 = vpop.f32.mrf.mxu0
        %v734 = vadd.f32 0.0, %v733
        %735 = vmatmul.bf16.gmra.mxu0 %v447
        %v736 = vpop.f32.mrf.mxu0
        %v737 = vadd.f32 0.0, %v736
        %v738 = vpop.f32.mrf.mxu0
        %v739 = vadd.f32 0.0, %v738
        %740 = vmatmul.bf16.gmra.mxu0 %v448
        %v741 = vpop.f32.mrf.mxu0
        %v742 = vadd.f32 0.0, %v741
        %v743 = vpop.f32.mrf.mxu0
        %v744 = vadd.f32 0.0, %v743
        %745 = vdwg.mxu0
        %v746 = vadd.f32 %v449, %v587
        %v747 = vadd.f32 %v450, %v589
        %v748 = vadd.f32 %v451, %v592
        %v749 = vadd.f32 %v452, %v594
        %v750 = vadd.f32 %v453, %v597
        %v751 = vadd.f32 %v454, %v599
        %v752 = vadd.f32 %v455, %v602
        %v753 = vadd.f32 %v456, %v604
        %v754 = vadd.f32 %v457, %v607
        %v755 = vadd.f32 %v458, %v609
        %v756 = vadd.f32 %v459, %v612
        %v757 = vadd.f32 %v460, %v614
        %v758 = vadd.f32 %v461, %v617
        %v759 = vadd.f32 %v462, %v619
        %v760 = vadd.f32 %v463, %v622
        %v761 = vadd.f32 %v464, %v624
        %v762 = vadd.f32 %v465, %v627
        %v763 = vadd.f32 %v466, %v629
        %v764 = vadd.f32 %v467, %v632
        %v765 = vadd.f32 %v468, %v634
        %v766 = vadd.f32 %v469, %v637
        %v767 = vadd.f32 %v470, %v639
        %v768 = vadd.f32 %v471, %v642
        %v769 = vadd.f32 %v472, %v644
        %v770 = vadd.f32 %v473, %v647
        %v771 = vadd.f32 %v474, %v649
        %v772 = vadd.f32 %v475, %v652
        %v773 = vadd.f32 %v476, %v654
        %v774 = vadd.f32 %v477, %v657
        %v775 = vadd.f32 %v478, %v659
        %v776 = vadd.f32 %v479, %v662
        %v777 = vadd.f32 %v480, %v664
        %v778 = vadd.f32 %v481, %v667
        %v779 = vadd.f32 %v482, %v669
        %v780 = vadd.f32 %v483, %v672
        %v781 = vadd.f32 %v484, %v674
        %v782 = vadd.f32 %v485, %v677
        %v783 = vadd.f32 %v486, %v679
        %v784 = vadd.f32 %v487, %v682
        %v785 = vadd.f32 %v488, %v684
        %v786 = vadd.f32 %v489, %v687
        %v787 = vadd.f32 %v490, %v689
        %v788 = vadd.f32 %v491, %v692
        %v789 = vadd.f32 %v492, %v694
        %v790 = vadd.f32 %v493, %v697
        %v791 = vadd.f32 %v494, %v699
        %v792 = vadd.f32 %v495, %v702
        %v793 = vadd.f32 %v496, %v704
        %v794 = vadd.f32 %v497, %v707
        %v795 = vadd.f32 %v498, %v709
        %v796 = vadd.f32 %v499, %v712
        %v797 = vadd.f32 %v500, %v714
        %v798 = vadd.f32 %v501, %v717
        %v799 = vadd.f32 %v502, %v719
        %v800 = vadd.f32 %v503, %v722
        %v801 = vadd.f32 %v504, %v724
        %v802 = vadd.f32 %v505, %v727
        %v803 = vadd.f32 %v506, %v729
        %v804 = vadd.f32 %v507, %v732
        %v805 = vadd.f32 %v508, %v734
        %v806 = vadd.f32 %v509, %v737
        %v807 = vadd.f32 %v510, %v739
        %v808 = vadd.f32 %v511, %v742
        %v809 = vadd.f32 %v512, %v744
        %810 = vst [vmem:[#allocation2] sm:$0xff] %v746
        %811 = vst [vmem:[#allocation2 + $0x8] sm:$0xff] %v747
        %812 = vst [vmem:[#allocation2 + $0x10] sm:$0xff] %v748
        %813 = vst [vmem:[#allocation2 + $0x18] sm:$0xff] %v749
        %814 = vst [vmem:[#allocation2 + $0x20] sm:$0xff] %v750
        %815 = vst [vmem:[#allocation2 + $0x28] sm:$0xff] %v751
        %816 = vst [vmem:[#allocation2 + $0x30] sm:$0xff] %v752
        %817 = vst [vmem:[#allocation2 + $0x38] sm:$0xff] %v753
        %818 = vst [vmem:[#allocation2 + $0x40] sm:$0xff] %v754
        %819 = vst [vmem:[#allocation2 + $0x48] sm:$0xff] %v755
        %820 = vst [vmem:[#allocation2 + $0x50] sm:$0xff] %v756
        %821 = vst [vmem:[#allocation2 + $0x58] sm:$0xff] %v757
        %822 = vst [vmem:[#allocation2 + $0x60] sm:$0xff] %v758
        %823 = vst [vmem:[#allocation2 + $0x68] sm:$0xff] %v759
        %824 = vst [vmem:[#allocation2 + $0x70] sm:$0xff] %v760
        %825 = vst [vmem:[#allocation2 + $0x78] sm:$0xff] %v761
        %826 = vst [vmem:[#allocation2 + $0x80] sm:$0xff] %v762
        %827 = vst [vmem:[#allocation2 + $0x88] sm:$0xff] %v763
        %828 = vst [vmem:[#allocation2 + $0x90] sm:$0xff] %v764
        %829 = vst [vmem:[#allocation2 + $0x98] sm:$0xff] %v765
        %830 = vst [vmem:[#allocation2 + $0xa0] sm:$0xff] %v766
        %831 = vst [vmem:[#allocation2 + $0xa8] sm:$0xff] %v767
        %832 = vst [vmem:[#allocation2 + $0xb0] sm:$0xff] %v768
        %833 = vst [vmem:[#allocation2 + $0xb8] sm:$0xff] %v769
        %834 = vst [vmem:[#allocation2 + $0xc0] sm:$0xff] %v770
        %835 = vst [vmem:[#allocation2 + $0xc8] sm:$0xff] %v771
        %836 = vst [vmem:[#allocation2 + $0xd0] sm:$0xff] %v772
        %837 = vst [vmem:[#allocation2 + $0xd8] sm:$0xff] %v773
        %838 = vst [vmem:[#allocation2 + $0xe0] sm:$0xff] %v774
        %839 = vst [vmem:[#allocation2 + $0xe8] sm:$0xff] %v775
        %840 = vst [vmem:[#allocation2 + $0xf0] sm:$0xff] %v776
        %841 = vst [vmem:[#allocation2 + $0xf8] sm:$0xff] %v777
        %842 = vst [vmem:[#allocation2 + $0x100] sm:$0xff] %v778
        %843 = vst [vmem:[#allocation2 + $0x108] sm:$0xff] %v779
        %844 = vst [vmem:[#allocation2 + $0x110] sm:$0xff] %v780
        %845 = vst [vmem:[#allocation2 + $0x118] sm:$0xff] %v781
        %846 = vst [vmem:[#allocation2 + $0x120] sm:$0xff] %v782
        %847 = vst [vmem:[#allocation2 + $0x128] sm:$0xff] %v783
        %848 = vst [vmem:[#allocation2 + $0x130] sm:$0xff] %v784
        %849 = vst [vmem:[#allocation2 + $0x138] sm:$0xff] %v785
        %850 = vst [vmem:[#allocation2 + $0x140] sm:$0xff] %v786
        %851 = vst [vmem:[#allocation2 + $0x148] sm:$0xff] %v787
        %852 = vst [vmem:[#allocation2 + $0x150] sm:$0xff] %v788
        %853 = vst [vmem:[#allocation2 + $0x158] sm:$0xff] %v789
        %854 = vst [vmem:[#allocation2 + $0x160] sm:$0xff] %v790
        %855 = vst [vmem:[#allocation2 + $0x168] sm:$0xff] %v791
        %856 = vst [vmem:[#allocation2 + $0x170] sm:$0xff] %v792
        %857 = vst [vmem:[#allocation2 + $0x178] sm:$0xff] %v793
        %858 = vst [vmem:[#allocation2 + $0x180] sm:$0xff] %v794
        %859 = vst [vmem:[#allocation2 + $0x188] sm:$0xff] %v795
        %860 = vst [vmem:[#allocation2 + $0x190] sm:$0xff] %v796
        %861 = vst [vmem:[#allocation2 + $0x198] sm:$0xff] %v797
        %862 = vst [vmem:[#allocation2 + $0x1a0] sm:$0xff] %v798
        %863 = vst [vmem:[#allocation2 + $0x1a8] sm:$0xff] %v799
        %864 = vst [vmem:[#allocation2 + $0x1b0] sm:$0xff] %v800
        %865 = vst [vmem:[#allocation2 + $0x1b8] sm:$0xff] %v801
        %866 = vst [vmem:[#allocation2 + $0x1c0] sm:$0xff] %v802
        %867 = vst [vmem:[#allocation2 + $0x1c8] sm:$0xff] %v803
        %868 = vst [vmem:[#allocation2 + $0x1d0] sm:$0xff] %v804
        %869 = vst [vmem:[#allocation2 + $0x1d8] sm:$0xff] %v805
        %870 = vst [vmem:[#allocation2 + $0x1e0] sm:$0xff] %v806
        %871 = vst [vmem:[#allocation2 + $0x1e8] sm:$0xff] %v807
        %872 = vst [vmem:[#allocation2 + $0x1f0] sm:$0xff] %v808
        %873 = vst [vmem:[#allocation2 + $0x1f8] sm:$0xff] %v809
        %v874 = vld [vmem:[%s288] sm:$0xf]
        %v875 = vld [vmem:[%s288 + $0x4] sm:$0xf]
        %v876 = vld [vmem:[%s288 + $0x8] sm:$0xf]
        %v877 = vld [vmem:[%s288 + $0xc] sm:$0xf]
        %v878 = vld [vmem:[%s288 + $0x10] sm:$0x1]
        %v879 = vld [vmem:[%s288 + $0x14] sm:$0xf]
        %v880 = vld [vmem:[%s288 + $0x18] sm:$0xf]
        %v881 = vld [vmem:[%s288 + $0x1c] sm:$0xf]
        %v882 = vld [vmem:[%s288 + $0x20] sm:$0xf]
        %v883 = vld [vmem:[%s288 + $0x24] sm:$0x1]
        %v884 = vld [vmem:[%s288 + $0x28] sm:$0xf]
        %v885 = vld [vmem:[%s288 + $0x2c] sm:$0xf]
        %v886 = vld [vmem:[%s288 + $0x30] sm:$0xf]
        %v887 = vld [vmem:[%s288 + $0x34] sm:$0xf]
        %v888 = vld [vmem:[%s288 + $0x38] sm:$0x1]
        %v889 = vld [vmem:[%s288 + $0x3c] sm:$0xf]
        %v890 = vld [vmem:[%s288 + $0x40] sm:$0xf]
        %v891 = vld [vmem:[%s288 + $0x44] sm:$0xf]
        %v892 = vld [vmem:[%s288 + $0x48] sm:$0xf]
        %v893 = vld [vmem:[%s288 + $0x4c] sm:$0x1]
        %v894 = vld [vmem:[%s288 + $0x50] sm:$0xf]
        %v895 = vld [vmem:[%s288 + $0x54] sm:$0xf]
        %v896 = vld [vmem:[%s288 + $0x58] sm:$0xf]
        %v897 = vld [vmem:[%s288 + $0x5c] sm:$0xf]
        %v898 = vld [vmem:[%s288 + $0x60] sm:$0x1]
        %v899 = vld [vmem:[%s288 + $0x64] sm:$0xf]
        %v900 = vld [vmem:[%s288 + $0x68] sm:$0xf]
        %v901 = vld [vmem:[%s288 + $0x6c] sm:$0xf]
        %v902 = vld [vmem:[%s288 + $0x70] sm:$0xf]
        %v903 = vld [vmem:[%s288 + $0x74] sm:$0x1]
        %v904 = vld [vmem:[%s288 + $0x78] sm:$0xf]
        %v905 = vld [vmem:[%s288 + $0x7c] sm:$0xf]
        %v906 = vld [vmem:[%s288 + $0x80] sm:$0xf]
        %v907 = vld [vmem:[%s288 + $0x84] sm:$0xf]
        %v908 = vld [vmem:[%s288 + $0x88] sm:$0x1]
        %v909 = vld [vmem:[%s288 + $0x8c] sm:$0xf]
        %v910 = vld [vmem:[%s288 + $0x90] sm:$0xf]
        %v911 = vld [vmem:[%s288 + $0x94] sm:$0xf]
        %v912 = vld [vmem:[%s288 + $0x98] sm:$0xf]
        %v913 = vld [vmem:[%s288 + $0x9c] sm:$0x1]
        %v914 = vld [vmem:[%s288 + $0xa0] sm:$0xf]
        %v915 = vld [vmem:[%s288 + $0xa4] sm:$0xf]
        %v916 = vld [vmem:[%s288 + $0xa8] sm:$0xf]
        %v917 = vld [vmem:[%s288 + $0xac] sm:$0xf]
        %v918 = vld [vmem:[%s288 + $0xb0] sm:$0x1]
        %v919 = vld [vmem:[%s288 + $0xb4] sm:$0xf]
        %v920 = vld [vmem:[%s288 + $0xb8] sm:$0xf]
        %v921 = vld [vmem:[%s288 + $0xbc] sm:$0xf]
        %v922 = vld [vmem:[%s288 + $0xc0] sm:$0xf]
        %v923 = vld [vmem:[%s288 + $0xc4] sm:$0x1]
        %v924 = vld [vmem:[%s288 + $0xc8] sm:$0xf]
        %v925 = vld [vmem:[%s288 + $0xcc] sm:$0xf]
        %v926 = vld [vmem:[%s288 + $0xd0] sm:$0xf]
        %v927 = vld [vmem:[%s288 + $0xd4] sm:$0xf]
        %v928 = vld [vmem:[%s288 + $0xd8] sm:$0x1]
        %v929 = vld [vmem:[%s288 + $0xdc] sm:$0xf]
        %v930 = vld [vmem:[%s288 + $0xe0] sm:$0xf]
        %v931 = vld [vmem:[%s288 + $0xe4] sm:$0xf]
        %v932 = vld [vmem:[%s288 + $0xe8] sm:$0xf]
        %v933 = vld [vmem:[%s288 + $0xec] sm:$0x1]
        %v934 = vld [vmem:[%s288 + $0xf0] sm:$0xf]
        %v935 = vld [vmem:[%s288 + $0xf4] sm:$0xf]
        %v936 = vld [vmem:[%s288 + $0xf8] sm:$0xf]
        %v937 = vld [vmem:[%s288 + $0xfc] sm:$0xf]
        %v938 = vld [vmem:[%s288 + $0x100] sm:$0x1]
        %v939 = vld [vmem:[%s288 + $0x104] sm:$0xf]
        %v940 = vld [vmem:[%s288 + $0x108] sm:$0xf]
        %v941 = vld [vmem:[%s288 + $0x10c] sm:$0xf]
        %v942 = vld [vmem:[%s288 + $0x110] sm:$0xf]
        %v943 = vld [vmem:[%s288 + $0x114] sm:$0x1]
        %v944 = vld [vmem:[%s288 + $0x118] sm:$0xf]
        %v945 = vld [vmem:[%s288 + $0x11c] sm:$0xf]
        %v946 = vld [vmem:[%s288 + $0x120] sm:$0xf]
        %v947 = vld [vmem:[%s288 + $0x124] sm:$0xf]
        %v948 = vld [vmem:[%s288 + $0x128] sm:$0x1]
        %v949 = vld [vmem:[%s288 + $0x12c] sm:$0xf]
        %v950 = vld [vmem:[%s288 + $0x130] sm:$0xf]
        %v951 = vld [vmem:[%s288 + $0x134] sm:$0xf]
        %v952 = vld [vmem:[%s288 + $0x138] sm:$0xf]
        %v953 = vld [vmem:[%s288 + $0x13c] sm:$0x1]
        %v954 = vunpack.c.l.bf16 %v874
        %v955 = vunpack.c.l.bf16 %v875
        %v956 = vunpack.c.l.bf16 %v876
        %v957 = vunpack.c.l.bf16 %v877
        %v958 = vunpack.c.l.bf16 %v878
        %v959 = vunpack.c.l.bf16 %v879
        %v960 = vunpack.c.l.bf16 %v880
        %v961 = vunpack.c.l.bf16 %v881
        %v962 = vunpack.c.l.bf16 %v882
        %v963 = vunpack.c.l.bf16 %v883
        %v964 = vunpack.c.l.bf16 %v884
        %v965 = vunpack.c.l.bf16 %v885
        %v966 = vunpack.c.l.bf16 %v886
        %v967 = vunpack.c.l.bf16 %v887
        %v968 = vunpack.c.l.bf16 %v888
        %v969 = vunpack.c.l.bf16 %v889
        %v970 = vunpack.c.l.bf16 %v890
        %v971 = vunpack.c.l.bf16 %v891
        %v972 = vunpack.c.l.bf16 %v892
        %v973 = vunpack.c.l.bf16 %v893
        %v974 = vunpack.c.l.bf16 %v894
        %v975 = vunpack.c.l.bf16 %v895
        %v976 = vunpack.c.l.bf16 %v896
        %v977 = vunpack.c.l.bf16 %v897
        %v978 = vunpack.c.l.bf16 %v898
        %v979 = vunpack.c.l.bf16 %v899
        %v980 = vunpack.c.l.bf16 %v900
        %v981 = vunpack.c.l.bf16 %v901
        %v982 = vunpack.c.l.bf16 %v902
        %v983 = vunpack.c.l.bf16 %v903
        %v984 = vunpack.c.l.bf16 %v904
        %v985 = vunpack.c.l.bf16 %v905
        %v986 = vunpack.c.l.bf16 %v906
        %v987 = vunpack.c.l.bf16 %v907
        %v988 = vunpack.c.l.bf16 %v908
        %v989 = vunpack.c.l.bf16 %v909
        %v990 = vunpack.c.l.bf16 %v910
        %v991 = vunpack.c.l.bf16 %v911
        %v992 = vunpack.c.l.bf16 %v912
        %v993 = vunpack.c.l.bf16 %v913
        %v994 = vunpack.c.l.bf16 %v914
        %v995 = vunpack.c.l.bf16 %v915
        %v996 = vunpack.c.l.bf16 %v916
        %v997 = vunpack.c.l.bf16 %v917
        %v998 = vunpack.c.l.bf16 %v918
        %v999 = vunpack.c.l.bf16 %v919
        %v1000 = vunpack.c.l.bf16 %v920
        %v1001 = vunpack.c.l.bf16 %v921
        %v1002 = vunpack.c.l.bf16 %v922
        %v1003 = vunpack.c.l.bf16 %v923
        %v1004 = vunpack.c.l.bf16 %v924
        %v1005 = vunpack.c.l.bf16 %v925
        %v1006 = vunpack.c.l.bf16 %v926
        %v1007 = vunpack.c.l.bf16 %v927
        %v1008 = vunpack.c.l.bf16 %v928
        %v1009 = vunpack.c.l.bf16 %v929
        %v1010 = vunpack.c.l.bf16 %v930
        %v1011 = vunpack.c.l.bf16 %v931
        %v1012 = vunpack.c.l.bf16 %v932
        %v1013 = vunpack.c.l.bf16 %v933
        %v1014 = vunpack.c.l.bf16 %v934
        %v1015 = vunpack.c.l.bf16 %v935
        %v1016 = vunpack.c.l.bf16 %v936
        %v1017 = vunpack.c.l.bf16 %v937
        %v1018 = vunpack.c.l.bf16 %v938
        %v1019 = vunpack.c.l.bf16 %v939
        %v1020 = vunpack.c.l.bf16 %v940
        %v1021 = vunpack.c.l.bf16 %v941
        %v1022 = vunpack.c.l.bf16 %v942
        %v1023 = vunpack.c.l.bf16 %v943
        %v1024 = vunpack.c.l.bf16 %v944
        %v1025 = vunpack.c.l.bf16 %v945
        %v1026 = vunpack.c.l.bf16 %v946
        %v1027 = vunpack.c.l.bf16 %v947
        %v1028 = vunpack.c.l.bf16 %v948
        %v1029 = vunpack.c.l.bf16 %v949
        %v1030 = vunpack.c.l.bf16 %v950
        %v1031 = vunpack.c.l.bf16 %v951
        %v1032 = vunpack.c.l.bf16 %v952
        %v1033 = vunpack.c.l.bf16 %v953
        %vm1114 = vcmask 1046528
        %v1115 = vrot.slane %v954, 1
        %v1116 = vrot.slane %v955, 1
        %v1117 = vsel %vm1114, %v1115, %v1116
        %v1118 = vrot.slane %v956, 1
        %v1119 = vsel %vm1114, %v1116, %v1118
        %v1120 = vrot.slane %v957, 1
        %v1121 = vsel %vm1114, %v1118, %v1120
        %v1122 = vrot.slane %v958, 1
        %v1123 = vsel %vm1114, %v1120, %v1122
        %v1124 = vrot.slane %v959, 1
        %v1125 = vrot.slane %v960, 1
        %v1126 = vsel %vm1114, %v1124, %v1125
        %v1127 = vrot.slane %v961, 1
        %v1128 = vsel %vm1114, %v1125, %v1127
        %v1129 = vrot.slane %v962, 1
        %v1130 = vsel %vm1114, %v1127, %v1129
        %v1131 = vrot.slane %v963, 1
        %v1132 = vsel %vm1114, %v1129, %v1131
        %v1133 = vrot.slane %v964, 1
        %v1134 = vrot.slane %v965, 1
        %v1135 = vsel %vm1114, %v1133, %v1134
        %v1136 = vrot.slane %v966, 1
        %v1137 = vsel %vm1114, %v1134, %v1136
        %v1138 = vrot.slane %v967, 1
        %v1139 = vsel %vm1114, %v1136, %v1138
        %v1140 = vrot.slane %v968, 1
        %v1141 = vsel %vm1114, %v1138, %v1140
        %v1142 = vrot.slane %v969, 1
        %v1143 = vrot.slane %v970, 1
        %v1144 = vsel %vm1114, %v1142, %v1143
        %v1145 = vrot.slane %v971, 1
        %v1146 = vsel %vm1114, %v1143, %v1145
        %v1147 = vrot.slane %v972, 1
        %v1148 = vsel %vm1114, %v1145, %v1147
        %v1149 = vrot.slane %v973, 1
        %v1150 = vsel %vm1114, %v1147, %v1149
        %v1151 = vrot.slane %v974, 1
        %v1152 = vrot.slane %v975, 1
        %v1153 = vsel %vm1114, %v1151, %v1152
        %v1154 = vrot.slane %v976, 1
        %v1155 = vsel %vm1114, %v1152, %v1154
        %v1156 = vrot.slane %v977, 1
        %v1157 = vsel %vm1114, %v1154, %v1156
        %v1158 = vrot.slane %v978, 1
        %v1159 = vsel %vm1114, %v1156, %v1158
        %v1160 = vrot.slane %v979, 1
        %v1161 = vrot.slane %v980, 1
        %v1162 = vsel %vm1114, %v1160, %v1161
        %v1163 = vrot.slane %v981, 1
        %v1164 = vsel %vm1114, %v1161, %v1163
        %v1165 = vrot.slane %v982, 1
        %v1166 = vsel %vm1114, %v1163, %v1165
        %v1167 = vrot.slane %v983, 1
        %v1168 = vsel %vm1114, %v1165, %v1167
        %v1169 = vrot.slane %v984, 1
        %v1170 = vrot.slane %v985, 1
        %v1171 = vsel %vm1114, %v1169, %v1170
        %v1172 = vrot.slane %v986, 1
        %v1173 = vsel %vm1114, %v1170, %v1172
        %v1174 = vrot.slane %v987, 1
        %v1175 = vsel %vm1114, %v1172, %v1174
        %v1176 = vrot.slane %v988, 1
        %v1177 = vsel %vm1114, %v1174, %v1176
        %v1178 = vrot.slane %v989, 1
        %v1179 = vrot.slane %v990, 1
        %v1180 = vsel %vm1114, %v1178, %v1179
        %v1181 = vrot.slane %v991, 1
        %v1182 = vsel %vm1114, %v1179, %v1181
        %v1183 = vrot.slane %v992, 1
        %v1184 = vsel %vm1114, %v1181, %v1183
        %v1185 = vrot.slane %v993, 1
        %v1186 = vsel %vm1114, %v1183, %v1185
        %v1187 = vrot.slane %v994, 1
        %v1188 = vrot.slane %v995, 1
        %v1189 = vsel %vm1114, %v1187, %v1188
        %v1190 = vrot.slane %v996, 1
        %v1191 = vsel %vm1114, %v1188, %v1190
        %v1192 = vrot.slane %v997, 1
        %v1193 = vsel %vm1114, %v1190, %v1192
        %v1194 = vrot.slane %v998, 1
        %v1195 = vsel %vm1114, %v1192, %v1194
        %v1196 = vrot.slane %v999, 1
        %v1197 = vrot.slane %v1000, 1
        %v1198 = vsel %vm1114, %v1196, %v1197
        %v1199 = vrot.slane %v1001, 1
        %v1200 = vsel %vm1114, %v1197, %v1199
        %v1201 = vrot.slane %v1002, 1
        %v1202 = vsel %vm1114, %v1199, %v1201
        %v1203 = vrot.slane %v1003, 1
        %v1204 = vsel %vm1114, %v1201, %v1203
        %v1205 = vrot.slane %v1004, 1
        %v1206 = vrot.slane %v1005, 1
        %v1207 = vsel %vm1114, %v1205, %v1206
        %v1208 = vrot.slane %v1006, 1
        %v1209 = vsel %vm1114, %v1206, %v1208
        %v1210 = vrot.slane %v1007, 1
        %v1211 = vsel %vm1114, %v1208, %v1210
        %v1212 = vrot.slane %v1008, 1
        %v1213 = vsel %vm1114, %v1210, %v1212
        %v1214 = vrot.slane %v1009, 1
        %v1215 = vrot.slane %v1010, 1
        %v1216 = vsel %vm1114, %v1214, %v1215
        %v1217 = vrot.slane %v1011, 1
        %v1218 = vsel %vm1114, %v1215, %v1217
        %v1219 = vrot.slane %v1012, 1
        %v1220 = vsel %vm1114, %v1217, %v1219
        %v1221 = vrot.slane %v1013, 1
        %v1222 = vsel %vm1114, %v1219, %v1221
        %v1223 = vrot.slane %v1014, 1
        %v1224 = vrot.slane %v1015, 1
        %v1225 = vsel %vm1114, %v1223, %v1224
        %v1226 = vrot.slane %v1016, 1
        %v1227 = vsel %vm1114, %v1224, %v1226
        %v1228 = vrot.slane %v1017, 1
        %v1229 = vsel %vm1114, %v1226, %v1228
        %v1230 = vrot.slane %v1018, 1
        %v1231 = vsel %vm1114, %v1228, %v1230
        %v1232 = vrot.slane %v1019, 1
        %v1233 = vrot.slane %v1020, 1
        %v1234 = vsel %vm1114, %v1232, %v1233
        %v1235 = vrot.slane %v1021, 1
        %v1236 = vsel %vm1114, %v1233, %v1235
        %v1237 = vrot.slane %v1022, 1
        %v1238 = vsel %vm1114, %v1235, %v1237
        %v1239 = vrot.slane %v1023, 1
        %v1240 = vsel %vm1114, %v1237, %v1239
        %v1241 = vrot.slane %v1024, 1
        %v1242 = vrot.slane %v1025, 1
        %v1243 = vsel %vm1114, %v1241, %v1242
        %v1244 = vrot.slane %v1026, 1
        %v1245 = vsel %vm1114, %v1242, %v1244
        %v1246 = vrot.slane %v1027, 1
        %v1247 = vsel %vm1114, %v1244, %v1246
        %v1248 = vrot.slane %v1028, 1
        %v1249 = vsel %vm1114, %v1246, %v1248
        %v1250 = vrot.slane %v1029, 1
        %v1251 = vrot.slane %v1030, 1
        %v1252 = vsel %vm1114, %v1250, %v1251
        %v1253 = vrot.slane %v1031, 1
        %v1254 = vsel %vm1114, %v1251, %v1253
        %v1255 = vrot.slane %v1032, 1
        %v1256 = vsel %vm1114, %v1253, %v1255
        %v1257 = vrot.slane %v1033, 1
        %v1258 = vsel %vm1114, %v1255, %v1257
        %v1323 = vpack.c.bf16 %v1119, %v1117
        %v1324 = vpack.c.bf16 %v1123, %v1121
        %v1325 = vpack.c.bf16 %v1128, %v1126
        %v1326 = vpack.c.bf16 %v1132, %v1130
        %v1327 = vpack.c.bf16 %v1137, %v1135
        %v1328 = vpack.c.bf16 %v1141, %v1139
        %v1329 = vpack.c.bf16 %v1146, %v1144
        %v1330 = vpack.c.bf16 %v1150, %v1148
        %v1331 = vpack.c.bf16 %v1155, %v1153
        %v1332 = vpack.c.bf16 %v1159, %v1157
        %v1333 = vpack.c.bf16 %v1164, %v1162
        %v1334 = vpack.c.bf16 %v1168, %v1166
        %v1335 = vpack.c.bf16 %v1173, %v1171
        %v1336 = vpack.c.bf16 %v1177, %v1175
        %v1337 = vpack.c.bf16 %v1182, %v1180
        %v1338 = vpack.c.bf16 %v1186, %v1184
        %v1339 = vpack.c.bf16 %v1191, %v1189
        %v1340 = vpack.c.bf16 %v1195, %v1193
        %v1341 = vpack.c.bf16 %v1200, %v1198
        %v1342 = vpack.c.bf16 %v1204, %v1202
        %v1343 = vpack.c.bf16 %v1209, %v1207
        %v1344 = vpack.c.bf16 %v1213, %v1211
        %v1345 = vpack.c.bf16 %v1218, %v1216
        %v1346 = vpack.c.bf16 %v1222, %v1220
        %v1347 = vpack.c.bf16 %v1227, %v1225
        %v1348 = vpack.c.bf16 %v1231, %v1229
        %v1349 = vpack.c.bf16 %v1236, %v1234
        %v1350 = vpack.c.bf16 %v1240, %v1238
        %v1351 = vpack.c.bf16 %v1245, %v1243
        %v1352 = vpack.c.bf16 %v1249, %v1247
        %v1353 = vpack.c.bf16 %v1254, %v1252
        %v1354 = vpack.c.bf16 %v1258, %v1256
        %v1355 = vld [vmem:[#allocation2] sm:$0xff]
        %v1356 = vld [vmem:[#allocation2 + $0x8] sm:$0xff]
        %v1357 = vld [vmem:[#allocation2 + $0x10] sm:$0xff]
        %v1358 = vld [vmem:[#allocation2 + $0x18] sm:$0xff]
        %v1359 = vld [vmem:[#allocation2 + $0x20] sm:$0xff]
        %v1360 = vld [vmem:[#allocation2 + $0x28] sm:$0xff]
        %v1361 = vld [vmem:[#allocation2 + $0x30] sm:$0xff]
        %v1362 = vld [vmem:[#allocation2 + $0x38] sm:$0xff]
        %v1363 = vld [vmem:[#allocation2 + $0x40] sm:$0xff]
        %v1364 = vld [vmem:[#allocation2 + $0x48] sm:$0xff]
        %v1365 = vld [vmem:[#allocation2 + $0x50] sm:$0xff]
        %v1366 = vld [vmem:[#allocation2 + $0x58] sm:$0xff]
        %v1367 = vld [vmem:[#allocation2 + $0x60] sm:$0xff]
        %v1368 = vld [vmem:[#allocation2 + $0x68] sm:$0xff]
        %v1369 = vld [vmem:[#allocation2 + $0x70] sm:$0xff]
        %v1370 = vld [vmem:[#allocation2 + $0x78] sm:$0xff]
        %v1371 = vld [vmem:[#allocation2 + $0x80] sm:$0xff]
        %v1372 = vld [vmem:[#allocation2 + $0x88] sm:$0xff]
        %v1373 = vld [vmem:[#allocation2 + $0x90] sm:$0xff]
        %v1374 = vld [vmem:[#allocation2 + $0x98] sm:$0xff]
        %v1375 = vld [vmem:[#allocation2 + $0xa0] sm:$0xff]
        %v1376 = vld [vmem:[#allocation2 + $0xa8] sm:$0xff]
        %v1377 = vld [vmem:[#allocation2 + $0xb0] sm:$0xff]
        %v1378 = vld [vmem:[#allocation2 + $0xb8] sm:$0xff]
        %v1379 = vld [vmem:[#allocation2 + $0xc0] sm:$0xff]
        %v1380 = vld [vmem:[#allocation2 + $0xc8] sm:$0xff]
        %v1381 = vld [vmem:[#allocation2 + $0xd0] sm:$0xff]
        %v1382 = vld [vmem:[#allocation2 + $0xd8] sm:$0xff]
        %v1383 = vld [vmem:[#allocation2 + $0xe0] sm:$0xff]
        %v1384 = vld [vmem:[#allocation2 + $0xe8] sm:$0xff]
        %v1385 = vld [vmem:[#allocation2 + $0xf0] sm:$0xff]
        %v1386 = vld [vmem:[#allocation2 + $0xf8] sm:$0xff]
        %v1387 = vld [vmem:[#allocation2 + $0x100] sm:$0xff]
        %v1388 = vld [vmem:[#allocation2 + $0x108] sm:$0xff]
        %v1389 = vld [vmem:[#allocation2 + $0x110] sm:$0xff]
        %v1390 = vld [vmem:[#allocation2 + $0x118] sm:$0xff]
        %v1391 = vld [vmem:[#allocation2 + $0x120] sm:$0xff]
        %v1392 = vld [vmem:[#allocation2 + $0x128] sm:$0xff]
        %v1393 = vld [vmem:[#allocation2 + $0x130] sm:$0xff]
        %v1394 = vld [vmem:[#allocation2 + $0x138] sm:$0xff]
        %v1395 = vld [vmem:[#allocation2 + $0x140] sm:$0xff]
        %v1396 = vld [vmem:[#allocation2 + $0x148] sm:$0xff]
        %v1397 = vld [vmem:[#allocation2 + $0x150] sm:$0xff]
        %v1398 = vld [vmem:[#allocation2 + $0x158] sm:$0xff]
        %v1399 = vld [vmem:[#allocation2 + $0x160] sm:$0xff]
        %v1400 = vld [vmem:[#allocation2 + $0x168] sm:$0xff]
        %v1401 = vld [vmem:[#allocation2 + $0x170] sm:$0xff]
        %v1402 = vld [vmem:[#allocation2 + $0x178] sm:$0xff]
        %v1403 = vld [vmem:[#allocation2 + $0x180] sm:$0xff]
        %v1404 = vld [vmem:[#allocation2 + $0x188] sm:$0xff]
        %v1405 = vld [vmem:[#allocation2 + $0x190] sm:$0xff]
        %v1406 = vld [vmem:[#allocation2 + $0x198] sm:$0xff]
        %v1407 = vld [vmem:[#allocation2 + $0x1a0] sm:$0xff]
        %v1408 = vld [vmem:[#allocation2 + $0x1a8] sm:$0xff]
        %v1409 = vld [vmem:[#allocation2 + $0x1b0] sm:$0xff]
        %v1410 = vld [vmem:[#allocation2 + $0x1b8] sm:$0xff]
        %v1411 = vld [vmem:[#allocation2 + $0x1c0] sm:$0xff]
        %v1412 = vld [vmem:[#allocation2 + $0x1c8] sm:$0xff]
        %v1413 = vld [vmem:[#allocation2 + $0x1d0] sm:$0xff]
        %v1414 = vld [vmem:[#allocation2 + $0x1d8] sm:$0xff]
        %v1415 = vld [vmem:[#allocation2 + $0x1e0] sm:$0xff]
        %v1416 = vld [vmem:[#allocation2 + $0x1e8] sm:$0xff]
        %v1417 = vld [vmem:[#allocation2 + $0x1f0] sm:$0xff]
        %v1418 = vld [vmem:[#allocation2 + $0x1f8] sm:$0xff]
        %s1419 = scalar_lea.vmem %s214, 64
        %v1420 = vld [vmem:[%s1419] sm:$0xf]
        %v1421 = vld [vmem:[%s1419 + $0x4] sm:$0xf]
        %v1422 = vld [vmem:[%s1419 + $0x8] sm:$0xf]
        %v1423 = vld [vmem:[%s1419 + $0xc] sm:$0xf]
        %v1424 = vld [vmem:[%s1419 + $0x10] sm:$0xf]
        %v1425 = vld [vmem:[%s1419 + $0x14] sm:$0xf]
        %v1426 = vld [vmem:[%s1419 + $0x18] sm:$0xf]
        %v1427 = vld [vmem:[%s1419 + $0x1c] sm:$0xf]
        %v1428 = vld [vmem:[%s1419 + $0x20] sm:$0xf]
        %v1429 = vld [vmem:[%s1419 + $0x24] sm:$0xf]
        %v1430 = vld [vmem:[%s1419 + $0x28] sm:$0xf]
        %v1431 = vld [vmem:[%s1419 + $0x2c] sm:$0xf]
        %v1432 = vld [vmem:[%s1419 + $0x30] sm:$0xf]
        %v1433 = vld [vmem:[%s1419 + $0x34] sm:$0xf]
        %v1434 = vld [vmem:[%s1419 + $0x38] sm:$0xf]
        %v1435 = vld [vmem:[%s1419 + $0x3c] sm:$0xf]
        %v1452 = vunpack.c.l.b16 %v1420
        %v1453 = vunpack.c.l.b16 %v1421
        %v1454 = vunpack.c.l.b16 %v1422
        %v1455 = vunpack.c.l.b16 %v1423
        %v1456 = vunpack.c.l.b16 %v1424
        %v1457 = vunpack.c.l.b16 %v1425
        %v1458 = vunpack.c.l.b16 %v1426
        %v1459 = vunpack.c.l.b16 %v1427
        %v1460 = vunpack.c.l.b16 %v1428
        %v1461 = vunpack.c.l.b16 %v1429
        %v1462 = vunpack.c.l.b16 %v1430
        %v1463 = vunpack.c.l.b16 %v1431
        %v1464 = vunpack.c.l.b16 %v1432
        %v1465 = vunpack.c.l.b16 %v1433
        %v1466 = vunpack.c.l.b16 %v1434
        %v1467 = vunpack.c.l.b16 %v1435
        %v1468 = vpack.c.b16 %v1453, %v1452
        %v1469 = vpack.c.b16 %v1455, %v1454
        %v1470 = vpack.c.b16 %v1457, %v1456
        %v1471 = vpack.c.b16 %v1459, %v1458
        %v1472 = vpack.c.b16 %v1461, %v1460
        %v1473 = vpack.c.b16 %v1463, %v1462
        %v1474 = vpack.c.b16 %v1465, %v1464
        %v1475 = vpack.c.b16 %v1467, %v1466
        %1484 = vmatpush.bf16.msra.mxu0 %v1475
        %1485 = vmatpush.bf16.msra.mxu0 %v1474
        %1486 = vmatpush.bf16.msra.mxu0 %v1473
        %1487 = vmatpush.bf16.msra.mxu0 %v1472
        %1488 = vmatpush.bf16.msra.mxu0 %v1471
        %1489 = vmatpush.bf16.msra.mxu0 %v1470
        %1490 = vmatpush.bf16.msra.mxu0 %v1469
        %1491 = vmatpush.bf16.msra.mxu0 %v1468
        %1492 = vmatmul.bf16.gmra.mxu0 %v1323
        %v1493 = vpop.f32.mrf.mxu0
        %v1494 = vadd.f32 0.0, %v1493
        %v1495 = vpop.f32.mrf.mxu0
        %v1496 = vadd.f32 0.0, %v1495
        %1497 = vmatmul.bf16.gmra.mxu0 %v1324
        %v1498 = vpop.f32.mrf.mxu0
        %v1499 = vadd.f32 0.0, %v1498
        %v1500 = vpop.f32.mrf.mxu0
        %v1501 = vadd.f32 0.0, %v1500
        %1502 = vmatmul.bf16.gmra.mxu0 %v1325
        %v1503 = vpop.f32.mrf.mxu0
        %v1504 = vadd.f32 0.0, %v1503
        %v1505 = vpop.f32.mrf.mxu0
        %v1506 = vadd.f32 0.0, %v1505
        %1507 = vmatmul.bf16.gmra.mxu0 %v1326
        %v1508 = vpop.f32.mrf.mxu0
        %v1509 = vadd.f32 0.0, %v1508
        %v1510 = vpop.f32.mrf.mxu0
        %v1511 = vadd.f32 0.0, %v1510
        %1512 = vmatmul.bf16.gmra.mxu0 %v1327
        %v1513 = vpop.f32.mrf.mxu0
        %v1514 = vadd.f32 0.0, %v1513
        %v1515 = vpop.f32.mrf.mxu0
        %v1516 = vadd.f32 0.0, %v1515
        %1517 = vmatmul.bf16.gmra.mxu0 %v1328
        %v1518 = vpop.f32.mrf.mxu0
        %v1519 = vadd.f32 0.0, %v1518
        %v1520 = vpop.f32.mrf.mxu0
        %v1521 = vadd.f32 0.0, %v1520
        %1522 = vmatmul.bf16.gmra.mxu0 %v1329
        %v1523 = vpop.f32.mrf.mxu0
        %v1524 = vadd.f32 0.0, %v1523
        %v1525 = vpop.f32.mrf.mxu0
        %v1526 = vadd.f32 0.0, %v1525
        %1527 = vmatmul.bf16.gmra.mxu0 %v1330
        %v1528 = vpop.f32.mrf.mxu0
        %v1529 = vadd.f32 0.0, %v1528
        %v1530 = vpop.f32.mrf.mxu0
        %v1531 = vadd.f32 0.0, %v1530
        %1532 = vmatmul.bf16.gmra.mxu0 %v1331
        %v1533 = vpop.f32.mrf.mxu0
        %v1534 = vadd.f32 0.0, %v1533
        %v1535 = vpop.f32.mrf.mxu0
        %v1536 = vadd.f32 0.0, %v1535
        %1537 = vmatmul.bf16.gmra.mxu0 %v1332
        %v1538 = vpop.f32.mrf.mxu0
        %v1539 = vadd.f32 0.0, %v1538
        %v1540 = vpop.f32.mrf.mxu0
        %v1541 = vadd.f32 0.0, %v1540
        %1542 = vmatmul.bf16.gmra.mxu0 %v1333
        %v1543 = vpop.f32.mrf.mxu0
        %v1544 = vadd.f32 0.0, %v1543
        %v1545 = vpop.f32.mrf.mxu0
        %v1546 = vadd.f32 0.0, %v1545
        %1547 = vmatmul.bf16.gmra.mxu0 %v1334
        %v1548 = vpop.f32.mrf.mxu0
        %v1549 = vadd.f32 0.0, %v1548
        %v1550 = vpop.f32.mrf.mxu0
        %v1551 = vadd.f32 0.0, %v1550
        %1552 = vmatmul.bf16.gmra.mxu0 %v1335
        %v1553 = vpop.f32.mrf.mxu0
        %v1554 = vadd.f32 0.0, %v1553
        %v1555 = vpop.f32.mrf.mxu0
        %v1556 = vadd.f32 0.0, %v1555
        %1557 = vmatmul.bf16.gmra.mxu0 %v1336
        %v1558 = vpop.f32.mrf.mxu0
        %v1559 = vadd.f32 0.0, %v1558
        %v1560 = vpop.f32.mrf.mxu0
        %v1561 = vadd.f32 0.0, %v1560
        %1562 = vmatmul.bf16.gmra.mxu0 %v1337
        %v1563 = vpop.f32.mrf.mxu0
        %v1564 = vadd.f32 0.0, %v1563
        %v1565 = vpop.f32.mrf.mxu0
        %v1566 = vadd.f32 0.0, %v1565
        %1567 = vmatmul.bf16.gmra.mxu0 %v1338
        %v1568 = vpop.f32.mrf.mxu0
        %v1569 = vadd.f32 0.0, %v1568
        %v1570 = vpop.f32.mrf.mxu0
        %v1571 = vadd.f32 0.0, %v1570
        %1572 = vmatmul.bf16.gmra.mxu0 %v1339
        %v1573 = vpop.f32.mrf.mxu0
        %v1574 = vadd.f32 0.0, %v1573
        %v1575 = vpop.f32.mrf.mxu0
        %v1576 = vadd.f32 0.0, %v1575
        %1577 = vmatmul.bf16.gmra.mxu0 %v1340
        %v1578 = vpop.f32.mrf.mxu0
        %v1579 = vadd.f32 0.0, %v1578
        %v1580 = vpop.f32.mrf.mxu0
        %v1581 = vadd.f32 0.0, %v1580
        %1582 = vmatmul.bf16.gmra.mxu0 %v1341
        %v1583 = vpop.f32.mrf.mxu0
        %v1584 = vadd.f32 0.0, %v1583
        %v1585 = vpop.f32.mrf.mxu0
        %v1586 = vadd.f32 0.0, %v1585
        %1587 = vmatmul.bf16.gmra.mxu0 %v1342
        %v1588 = vpop.f32.mrf.mxu0
        %v1589 = vadd.f32 0.0, %v1588
        %v1590 = vpop.f32.mrf.mxu0
        %v1591 = vadd.f32 0.0, %v1590
        %1592 = vmatmul.bf16.gmra.mxu0 %v1343
        %v1593 = vpop.f32.mrf.mxu0
        %v1594 = vadd.f32 0.0, %v1593
        %v1595 = vpop.f32.mrf.mxu0
        %v1596 = vadd.f32 0.0, %v1595
        %1597 = vmatmul.bf16.gmra.mxu0 %v1344
        %v1598 = vpop.f32.mrf.mxu0
        %v1599 = vadd.f32 0.0, %v1598
        %v1600 = vpop.f32.mrf.mxu0
        %v1601 = vadd.f32 0.0, %v1600
        %1602 = vmatmul.bf16.gmra.mxu0 %v1345
        %v1603 = vpop.f32.mrf.mxu0
        %v1604 = vadd.f32 0.0, %v1603
        %v1605 = vpop.f32.mrf.mxu0
        %v1606 = vadd.f32 0.0, %v1605
        %1607 = vmatmul.bf16.gmra.mxu0 %v1346
        %v1608 = vpop.f32.mrf.mxu0
        %v1609 = vadd.f32 0.0, %v1608
        %v1610 = vpop.f32.mrf.mxu0
        %v1611 = vadd.f32 0.0, %v1610
        %1612 = vmatmul.bf16.gmra.mxu0 %v1347
        %v1613 = vpop.f32.mrf.mxu0
        %v1614 = vadd.f32 0.0, %v1613
        %v1615 = vpop.f32.mrf.mxu0
        %v1616 = vadd.f32 0.0, %v1615
        %1617 = vmatmul.bf16.gmra.mxu0 %v1348
        %v1618 = vpop.f32.mrf.mxu0
        %v1619 = vadd.f32 0.0, %v1618
        %v1620 = vpop.f32.mrf.mxu0
        %v1621 = vadd.f32 0.0, %v1620
        %1622 = vmatmul.bf16.gmra.mxu0 %v1349
        %v1623 = vpop.f32.mrf.mxu0
        %v1624 = vadd.f32 0.0, %v1623
        %v1625 = vpop.f32.mrf.mxu0
        %v1626 = vadd.f32 0.0, %v1625
        %1627 = vmatmul.bf16.gmra.mxu0 %v1350
        %v1628 = vpop.f32.mrf.mxu0
        %v1629 = vadd.f32 0.0, %v1628
        %v1630 = vpop.f32.mrf.mxu0
        %v1631 = vadd.f32 0.0, %v1630
        %1632 = vmatmul.bf16.gmra.mxu0 %v1351
        %v1633 = vpop.f32.mrf.mxu0
        %v1634 = vadd.f32 0.0, %v1633
        %v1635 = vpop.f32.mrf.mxu0
        %v1636 = vadd.f32 0.0, %v1635
        %1637 = vmatmul.bf16.gmra.mxu0 %v1352
        %v1638 = vpop.f32.mrf.mxu0
        %v1639 = vadd.f32 0.0, %v1638
        %v1640 = vpop.f32.mrf.mxu0
        %v1641 = vadd.f32 0.0, %v1640
        %1642 = vmatmul.bf16.gmra.mxu0 %v1353
        %v1643 = vpop.f32.mrf.mxu0
        %v1644 = vadd.f32 0.0, %v1643
        %v1645 = vpop.f32.mrf.mxu0
        %v1646 = vadd.f32 0.0, %v1645
        %1647 = vmatmul.bf16.gmra.mxu0 %v1354
        %v1648 = vpop.f32.mrf.mxu0
        %v1649 = vadd.f32 0.0, %v1648
        %v1650 = vpop.f32.mrf.mxu0
        %v1651 = vadd.f32 0.0, %v1650
        %1652 = vdwg.mxu0
        %v1653 = vadd.f32 %v1355, %v1494
        %v1654 = vadd.f32 %v1356, %v1496
        %v1655 = vadd.f32 %v1357, %v1499
        %v1656 = vadd.f32 %v1358, %v1501
        %v1657 = vadd.f32 %v1359, %v1504
        %v1658 = vadd.f32 %v1360, %v1506
        %v1659 = vadd.f32 %v1361, %v1509
        %v1660 = vadd.f32 %v1362, %v1511
        %v1661 = vadd.f32 %v1363, %v1514
        %v1662 = vadd.f32 %v1364, %v1516
        %v1663 = vadd.f32 %v1365, %v1519
        %v1664 = vadd.f32 %v1366, %v1521
        %v1665 = vadd.f32 %v1367, %v1524
        %v1666 = vadd.f32 %v1368, %v1526
        %v1667 = vadd.f32 %v1369, %v1529
        %v1668 = vadd.f32 %v1370, %v1531
        %v1669 = vadd.f32 %v1371, %v1534
        %v1670 = vadd.f32 %v1372, %v1536
        %v1671 = vadd.f32 %v1373, %v1539
        %v1672 = vadd.f32 %v1374, %v1541
        %v1673 = vadd.f32 %v1375, %v1544
        %v1674 = vadd.f32 %v1376, %v1546
        %v1675 = vadd.f32 %v1377, %v1549
        %v1676 = vadd.f32 %v1378, %v1551
        %v1677 = vadd.f32 %v1379, %v1554
        %v1678 = vadd.f32 %v1380, %v1556
        %v1679 = vadd.f32 %v1381, %v1559
        %v1680 = vadd.f32 %v1382, %v1561
        %v1681 = vadd.f32 %v1383, %v1564
        %v1682 = vadd.f32 %v1384, %v1566
        %v1683 = vadd.f32 %v1385, %v1569
        %v1684 = vadd.f32 %v1386, %v1571
        %v1685 = vadd.f32 %v1387, %v1574
        %v1686 = vadd.f32 %v1388, %v1576
        %v1687 = vadd.f32 %v1389, %v1579
        %v1688 = vadd.f32 %v1390, %v1581
        %v1689 = vadd.f32 %v1391, %v1584
        %v1690 = vadd.f32 %v1392, %v1586
        %v1691 = vadd.f32 %v1393, %v1589
        %v1692 = vadd.f32 %v1394, %v1591
        %v1693 = vadd.f32 %v1395, %v1594
        %v1694 = vadd.f32 %v1396, %v1596
        %v1695 = vadd.f32 %v1397, %v1599
        %v1696 = vadd.f32 %v1398, %v1601
        %v1697 = vadd.f32 %v1399, %v1604
        %v1698 = vadd.f32 %v1400, %v1606
        %v1699 = vadd.f32 %v1401, %v1609
        %v1700 = vadd.f32 %v1402, %v1611
        %v1701 = vadd.f32 %v1403, %v1614
        %v1702 = vadd.f32 %v1404, %v1616
        %v1703 = vadd.f32 %v1405, %v1619
        %v1704 = vadd.f32 %v1406, %v1621
        %v1705 = vadd.f32 %v1407, %v1624
        %v1706 = vadd.f32 %v1408, %v1626
        %v1707 = vadd.f32 %v1409, %v1629
        %v1708 = vadd.f32 %v1410, %v1631
        %v1709 = vadd.f32 %v1411, %v1634
        %v1710 = vadd.f32 %v1412, %v1636
        %v1711 = vadd.f32 %v1413, %v1639
        %v1712 = vadd.f32 %v1414, %v1641
        %v1713 = vadd.f32 %v1415, %v1644
        %v1714 = vadd.f32 %v1416, %v1646
        %v1715 = vadd.f32 %v1417, %v1649
        %v1716 = vadd.f32 %v1418, %v1651
        %1717 = vst [vmem:[#allocation2] sm:$0xff] %v1653
        %1718 = vst [vmem:[#allocation2 + $0x8] sm:$0xff] %v1654
        %1719 = vst [vmem:[#allocation2 + $0x10] sm:$0xff] %v1655
        %1720 = vst [vmem:[#allocation2 + $0x18] sm:$0xff] %v1656
        %1721 = vst [vmem:[#allocation2 + $0x20] sm:$0xff] %v1657
        %1722 = vst [vmem:[#allocation2 + $0x28] sm:$0xff] %v1658
        %1723 = vst [vmem:[#allocation2 + $0x30] sm:$0xff] %v1659
        %1724 = vst [vmem:[#allocation2 + $0x38] sm:$0xff] %v1660
        %1725 = vst [vmem:[#allocation2 + $0x40] sm:$0xff] %v1661
        %1726 = vst [vmem:[#allocation2 + $0x48] sm:$0xff] %v1662
        %1727 = vst [vmem:[#allocation2 + $0x50] sm:$0xff] %v1663
        %1728 = vst [vmem:[#allocation2 + $0x58] sm:$0xff] %v1664
        %1729 = vst [vmem:[#allocation2 + $0x60] sm:$0xff] %v1665
        %1730 = vst [vmem:[#allocation2 + $0x68] sm:$0xff] %v1666
        %1731 = vst [vmem:[#allocation2 + $0x70] sm:$0xff] %v1667
        %1732 = vst [vmem:[#allocation2 + $0x78] sm:$0xff] %v1668
        %1733 = vst [vmem:[#allocation2 + $0x80] sm:$0xff] %v1669
        %1734 = vst [vmem:[#allocation2 + $0x88] sm:$0xff] %v1670
        %1735 = vst [vmem:[#allocation2 + $0x90] sm:$0xff] %v1671
        %1736 = vst [vmem:[#allocation2 + $0x98] sm:$0xff] %v1672
        %1737 = vst [vmem:[#allocation2 + $0xa0] sm:$0xff] %v1673
        %1738 = vst [vmem:[#allocation2 + $0xa8] sm:$0xff] %v1674
        %1739 = vst [vmem:[#allocation2 + $0xb0] sm:$0xff] %v1675
        %1740 = vst [vmem:[#allocation2 + $0xb8] sm:$0xff] %v1676
        %1741 = vst [vmem:[#allocation2 + $0xc0] sm:$0xff] %v1677
        %1742 = vst [vmem:[#allocation2 + $0xc8] sm:$0xff] %v1678
        %1743 = vst [vmem:[#allocation2 + $0xd0] sm:$0xff] %v1679
        %1744 = vst [vmem:[#allocation2 + $0xd8] sm:$0xff] %v1680
        %1745 = vst [vmem:[#allocation2 + $0xe0] sm:$0xff] %v1681
        %1746 = vst [vmem:[#allocation2 + $0xe8] sm:$0xff] %v1682
        %1747 = vst [vmem:[#allocation2 + $0xf0] sm:$0xff] %v1683
        %1748 = vst [vmem:[#allocation2 + $0xf8] sm:$0xff] %v1684
        %1749 = vst [vmem:[#allocation2 + $0x100] sm:$0xff] %v1685
        %1750 = vst [vmem:[#allocation2 + $0x108] sm:$0xff] %v1686
        %1751 = vst [vmem:[#allocation2 + $0x110] sm:$0xff] %v1687
        %1752 = vst [vmem:[#allocation2 + $0x118] sm:$0xff] %v1688
        %1753 = vst [vmem:[#allocation2 + $0x120] sm:$0xff] %v1689
        %1754 = vst [vmem:[#allocation2 + $0x128] sm:$0xff] %v1690
        %1755 = vst [vmem:[#allocation2 + $0x130] sm:$0xff] %v1691
        %1756 = vst [vmem:[#allocation2 + $0x138] sm:$0xff] %v1692
        %1757 = vst [vmem:[#allocation2 + $0x140] sm:$0xff] %v1693
        %1758 = vst [vmem:[#allocation2 + $0x148] sm:$0xff] %v1694
        %1759 = vst [vmem:[#allocation2 + $0x150] sm:$0xff] %v1695
        %1760 = vst [vmem:[#allocation2 + $0x158] sm:$0xff] %v1696
        %1761 = vst [vmem:[#allocation2 + $0x160] sm:$0xff] %v1697
        %1762 = vst [vmem:[#allocation2 + $0x168] sm:$0xff] %v1698
        %1763 = vst [vmem:[#allocation2 + $0x170] sm:$0xff] %v1699
        %1764 = vst [vmem:[#allocation2 + $0x178] sm:$0xff] %v1700
        %1765 = vst [vmem:[#allocation2 + $0x180] sm:$0xff] %v1701
        %1766 = vst [vmem:[#allocation2 + $0x188] sm:$0xff] %v1702
        %1767 = vst [vmem:[#allocation2 + $0x190] sm:$0xff] %v1703
        %1768 = vst [vmem:[#allocation2 + $0x198] sm:$0xff] %v1704
        %1769 = vst [vmem:[#allocation2 + $0x1a0] sm:$0xff] %v1705
        %1770 = vst [vmem:[#allocation2 + $0x1a8] sm:$0xff] %v1706
        %1771 = vst [vmem:[#allocation2 + $0x1b0] sm:$0xff] %v1707
        %1772 = vst [vmem:[#allocation2 + $0x1b8] sm:$0xff] %v1708
        %1773 = vst [vmem:[#allocation2 + $0x1c0] sm:$0xff] %v1709
        %1774 = vst [vmem:[#allocation2 + $0x1c8] sm:$0xff] %v1710
        %1775 = vst [vmem:[#allocation2 + $0x1d0] sm:$0xff] %v1711
        %1776 = vst [vmem:[#allocation2 + $0x1d8] sm:$0xff] %v1712
        %1777 = vst [vmem:[#allocation2 + $0x1e0] sm:$0xff] %v1713
        %1778 = vst [vmem:[#allocation2 + $0x1e8] sm:$0xff] %v1714
        %1779 = vst [vmem:[#allocation2 + $0x1f0] sm:$0xff] %v1715
        %1780 = vst [vmem:[#allocation2 + $0x1f8] sm:$0xff] %v1716
        %v1781 = vld [vmem:[%s288] sm:$0xe]
        %v1782 = vld [vmem:[%s288 + $0x4] sm:$0xf]
        %v1783 = vld [vmem:[%s288 + $0x8] sm:$0xf]
        %v1784 = vld [vmem:[%s288 + $0xc] sm:$0xf]
        %v1785 = vld [vmem:[%s288 + $0x10] sm:$0x1]
        %v1786 = vld [vmem:[%s288 + $0x14] sm:$0xe]
        %v1787 = vld [vmem:[%s288 + $0x18] sm:$0xf]
        %v1788 = vld [vmem:[%s288 + $0x1c] sm:$0xf]
        %v1789 = vld [vmem:[%s288 + $0x20] sm:$0xf]
        %v1790 = vld [vmem:[%s288 + $0x24] sm:$0x1]
        %v1791 = vld [vmem:[%s288 + $0x28] sm:$0xe]
        %v1792 = vld [vmem:[%s288 + $0x2c] sm:$0xf]
        %v1793 = vld [vmem:[%s288 + $0x30] sm:$0xf]
        %v1794 = vld [vmem:[%s288 + $0x34] sm:$0xf]
        %v1795 = vld [vmem:[%s288 + $0x38] sm:$0x1]
        %v1796 = vld [vmem:[%s288 + $0x3c] sm:$0xe]
        %v1797 = vld [vmem:[%s288 + $0x40] sm:$0xf]
        %v1798 = vld [vmem:[%s288 + $0x44] sm:$0xf]
        %v1799 = vld [vmem:[%s288 + $0x48] sm:$0xf]
        %v1800 = vld [vmem:[%s288 + $0x4c] sm:$0x1]
        %v1801 = vld [vmem:[%s288 + $0x50] sm:$0xe]
        %v1802 = vld [vmem:[%s288 + $0x54] sm:$0xf]
        %v1803 = vld [vmem:[%s288 + $0x58] sm:$0xf]
        %v1804 = vld [vmem:[%s288 + $0x5c] sm:$0xf]
        %v1805 = vld [vmem:[%s288 + $0x60] sm:$0x1]
        %v1806 = vld [vmem:[%s288 + $0x64] sm:$0xe]
        %v1807 = vld [vmem:[%s288 + $0x68] sm:$0xf]
        %v1808 = vld [vmem:[%s288 + $0x6c] sm:$0xf]
        %v1809 = vld [vmem:[%s288 + $0x70] sm:$0xf]
        %v1810 = vld [vmem:[%s288 + $0x74] sm:$0x1]
        %v1811 = vld [vmem:[%s288 + $0x78] sm:$0xe]
        %v1812 = vld [vmem:[%s288 + $0x7c] sm:$0xf]
        %v1813 = vld [vmem:[%s288 + $0x80] sm:$0xf]
        %v1814 = vld [vmem:[%s288 + $0x84] sm:$0xf]
        %v1815 = vld [vmem:[%s288 + $0x88] sm:$0x1]
        %v1816 = vld [vmem:[%s288 + $0x8c] sm:$0xe]
        %v1817 = vld [vmem:[%s288 + $0x90] sm:$0xf]
        %v1818 = vld [vmem:[%s288 + $0x94] sm:$0xf]
        %v1819 = vld [vmem:[%s288 + $0x98] sm:$0xf]
        %v1820 = vld [vmem:[%s288 + $0x9c] sm:$0x1]
        %v1821 = vld [vmem:[%s288 + $0xa0] sm:$0xe]
        %v1822 = vld [vmem:[%s288 + $0xa4] sm:$0xf]
        %v1823 = vld [vmem:[%s288 + $0xa8] sm:$0xf]
        %v1824 = vld [vmem:[%s288 + $0xac] sm:$0xf]
        %v1825 = vld [vmem:[%s288 + $0xb0] sm:$0x1]
        %v1826 = vld [vmem:[%s288 + $0xb4] sm:$0xe]
        %v1827 = vld [vmem:[%s288 + $0xb8] sm:$0xf]
        %v1828 = vld [vmem:[%s288 + $0xbc] sm:$0xf]
        %v1829 = vld [vmem:[%s288 + $0xc0] sm:$0xf]
        %v1830 = vld [vmem:[%s288 + $0xc4] sm:$0x1]
        %v1831 = vld [vmem:[%s288 + $0xc8] sm:$0xe]
        %v1832 = vld [vmem:[%s288 + $0xcc] sm:$0xf]
        %v1833 = vld [vmem:[%s288 + $0xd0] sm:$0xf]
        %v1834 = vld [vmem:[%s288 + $0xd4] sm:$0xf]
        %v1835 = vld [vmem:[%s288 + $0xd8] sm:$0x1]
        %v1836 = vld [vmem:[%s288 + $0xdc] sm:$0xe]
        %v1837 = vld [vmem:[%s288 + $0xe0] sm:$0xf]
        %v1838 = vld [vmem:[%s288 + $0xe4] sm:$0xf]
        %v1839 = vld [vmem:[%s288 + $0xe8] sm:$0xf]
        %v1840 = vld [vmem:[%s288 + $0xec] sm:$0x1]
        %v1841 = vld [vmem:[%s288 + $0xf0] sm:$0xe]
        %v1842 = vld [vmem:[%s288 + $0xf4] sm:$0xf]
        %v1843 = vld [vmem:[%s288 + $0xf8] sm:$0xf]
        %v1844 = vld [vmem:[%s288 + $0xfc] sm:$0xf]
        %v1845 = vld [vmem:[%s288 + $0x100] sm:$0x1]
        %v1846 = vld [vmem:[%s288 + $0x104] sm:$0xe]
        %v1847 = vld [vmem:[%s288 + $0x108] sm:$0xf]
        %v1848 = vld [vmem:[%s288 + $0x10c] sm:$0xf]
        %v1849 = vld [vmem:[%s288 + $0x110] sm:$0xf]
        %v1850 = vld [vmem:[%s288 + $0x114] sm:$0x1]
        %v1851 = vld [vmem:[%s288 + $0x118] sm:$0xe]
        %v1852 = vld [vmem:[%s288 + $0x11c] sm:$0xf]
        %v1853 = vld [vmem:[%s288 + $0x120] sm:$0xf]
        %v1854 = vld [vmem:[%s288 + $0x124] sm:$0xf]
        %v1855 = vld [vmem:[%s288 + $0x128] sm:$0x1]
        %v1856 = vld [vmem:[%s288 + $0x12c] sm:$0xe]
        %v1857 = vld [vmem:[%s288 + $0x130] sm:$0xf]
        %v1858 = vld [vmem:[%s288 + $0x134] sm:$0xf]
        %v1859 = vld [vmem:[%s288 + $0x138] sm:$0xf]
        %v1860 = vld [vmem:[%s288 + $0x13c] sm:$0x1]
        %v1861 = vunpack.c.l.bf16 %v1781
        %v1862 = vunpack.c.l.bf16 %v1782
        %v1863 = vunpack.c.l.bf16 %v1783
        %v1864 = vunpack.c.l.bf16 %v1784
        %v1865 = vunpack.c.l.bf16 %v1785
        %v1866 = vunpack.c.l.bf16 %v1786
        %v1867 = vunpack.c.l.bf16 %v1787
        %v1868 = vunpack.c.l.bf16 %v1788
        %v1869 = vunpack.c.l.bf16 %v1789
        %v1870 = vunpack.c.l.bf16 %v1790
        %v1871 = vunpack.c.l.bf16 %v1791
        %v1872 = vunpack.c.l.bf16 %v1792
        %v1873 = vunpack.c.l.bf16 %v1793
        %v1874 = vunpack.c.l.bf16 %v1794
        %v1875 = vunpack.c.l.bf16 %v1795
        %v1876 = vunpack.c.l.bf16 %v1796
        %v1877 = vunpack.c.l.bf16 %v1797
        %v1878 = vunpack.c.l.bf16 %v1798
        %v1879 = vunpack.c.l.bf16 %v1799
        %v1880 = vunpack.c.l.bf16 %v1800
        %v1881 = vunpack.c.l.bf16 %v1801
        %v1882 = vunpack.c.l.bf16 %v1802
        %v1883 = vunpack.c.l.bf16 %v1803
        %v1884 = vunpack.c.l.bf16 %v1804
        %v1885 = vunpack.c.l.bf16 %v1805
        %v1886 = vunpack.c.l.bf16 %v1806
        %v1887 = vunpack.c.l.bf16 %v1807
        %v1888 = vunpack.c.l.bf16 %v1808
        %v1889 = vunpack.c.l.bf16 %v1809
        %v1890 = vunpack.c.l.bf16 %v1810
        %v1891 = vunpack.c.l.bf16 %v1811
        %v1892 = vunpack.c.l.bf16 %v1812
        %v1893 = vunpack.c.l.bf16 %v1813
        %v1894 = vunpack.c.l.bf16 %v1814
        %v1895 = vunpack.c.l.bf16 %v1815
        %v1896 = vunpack.c.l.bf16 %v1816
        %v1897 = vunpack.c.l.bf16 %v1817
        %v1898 = vunpack.c.l.bf16 %v1818
        %v1899 = vunpack.c.l.bf16 %v1819
        %v1900 = vunpack.c.l.bf16 %v1820
        %v1901 = vunpack.c.l.bf16 %v1821
        %v1902 = vunpack.c.l.bf16 %v1822
        %v1903 = vunpack.c.l.bf16 %v1823
        %v1904 = vunpack.c.l.bf16 %v1824
        %v1905 = vunpack.c.l.bf16 %v1825
        %v1906 = vunpack.c.l.bf16 %v1826
        %v1907 = vunpack.c.l.bf16 %v1827
        %v1908 = vunpack.c.l.bf16 %v1828
        %v1909 = vunpack.c.l.bf16 %v1829
        %v1910 = vunpack.c.l.bf16 %v1830
        %v1911 = vunpack.c.l.bf16 %v1831
        %v1912 = vunpack.c.l.bf16 %v1832
        %v1913 = vunpack.c.l.bf16 %v1833
        %v1914 = vunpack.c.l.bf16 %v1834
        %v1915 = vunpack.c.l.bf16 %v1835
        %v1916 = vunpack.c.l.bf16 %v1836
        %v1917 = vunpack.c.l.bf16 %v1837
        %v1918 = vunpack.c.l.bf16 %v1838
        %v1919 = vunpack.c.l.bf16 %v1839
        %v1920 = vunpack.c.l.bf16 %v1840
        %v1921 = vunpack.c.l.bf16 %v1841
        %v1922 = vunpack.c.l.bf16 %v1842
        %v1923 = vunpack.c.l.bf16 %v1843
        %v1924 = vunpack.c.l.bf16 %v1844
        %v1925 = vunpack.c.l.bf16 %v1845
        %v1926 = vunpack.c.l.bf16 %v1846
        %v1927 = vunpack.c.l.bf16 %v1847
        %v1928 = vunpack.c.l.bf16 %v1848
        %v1929 = vunpack.c.l.bf16 %v1849
        %v1930 = vunpack.c.l.bf16 %v1850
        %v1931 = vunpack.c.l.bf16 %v1851
        %v1932 = vunpack.c.l.bf16 %v1852
        %v1933 = vunpack.c.l.bf16 %v1853
        %v1934 = vunpack.c.l.bf16 %v1854
        %v1935 = vunpack.c.l.bf16 %v1855
        %v1936 = vunpack.c.l.bf16 %v1856
        %v1937 = vunpack.c.l.bf16 %v1857
        %v1938 = vunpack.c.l.bf16 %v1858
        %v1939 = vunpack.c.l.bf16 %v1859
        %v1940 = vunpack.c.l.bf16 %v1860
        %vm2021 = vcmask 1045504
        %v2022 = vrot.slane %v1861, 2
        %v2023 = vrot.slane %v1862, 2
        %v2024 = vsel %vm2021, %v2022, %v2023
        %v2025 = vrot.slane %v1863, 2
        %v2026 = vsel %vm2021, %v2023, %v2025
        %v2027 = vrot.slane %v1864, 2
        %v2028 = vsel %vm2021, %v2025, %v2027
        %v2029 = vrot.slane %v1865, 2
        %v2030 = vsel %vm2021, %v2027, %v2029
        %v2031 = vrot.slane %v1866, 2
        %v2032 = vrot.slane %v1867, 2
        %v2033 = vsel %vm2021, %v2031, %v2032
        %v2034 = vrot.slane %v1868, 2
        %v2035 = vsel %vm2021, %v2032, %v2034
        %v2036 = vrot.slane %v1869, 2
        %v2037 = vsel %vm2021, %v2034, %v2036
        %v2038 = vrot.slane %v1870, 2
        %v2039 = vsel %vm2021, %v2036, %v2038
        %v2040 = vrot.slane %v1871, 2
        %v2041 = vrot.slane %v1872, 2
        %v2042 = vsel %vm2021, %v2040, %v2041
        %v2043 = vrot.slane %v1873, 2
        %v2044 = vsel %vm2021, %v2041, %v2043
        %v2045 = vrot.slane %v1874, 2
        %v2046 = vsel %vm2021, %v2043, %v2045
        %v2047 = vrot.slane %v1875, 2
        %v2048 = vsel %vm2021, %v2045, %v2047
        %v2049 = vrot.slane %v1876, 2
        %v2050 = vrot.slane %v1877, 2
        %v2051 = vsel %vm2021, %v2049, %v2050
        %v2052 = vrot.slane %v1878, 2
        %v2053 = vsel %vm2021, %v2050, %v2052
        %v2054 = vrot.slane %v1879, 2
        %v2055 = vsel %vm2021, %v2052, %v2054
        %v2056 = vrot.slane %v1880, 2
        %v2057 = vsel %vm2021, %v2054, %v2056
        %v2058 = vrot.slane %v1881, 2
        %v2059 = vrot.slane %v1882, 2
        %v2060 = vsel %vm2021, %v2058, %v2059
        %v2061 = vrot.slane %v1883, 2
        %v2062 = vsel %vm2021, %v2059, %v2061
        %v2063 = vrot.slane %v1884, 2
        %v2064 = vsel %vm2021, %v2061, %v2063
        %v2065 = vrot.slane %v1885, 2
        %v2066 = vsel %vm2021, %v2063, %v2065
        %v2067 = vrot.slane %v1886, 2
        %v2068 = vrot.slane %v1887, 2
        %v2069 = vsel %vm2021, %v2067, %v2068
        %v2070 = vrot.slane %v1888, 2
        %v2071 = vsel %vm2021, %v2068, %v2070
        %v2072 = vrot.slane %v1889, 2
        %v2073 = vsel %vm2021, %v2070, %v2072
        %v2074 = vrot.slane %v1890, 2
        %v2075 = vsel %vm2021, %v2072, %v2074
        %v2076 = vrot.slane %v1891, 2
        %v2077 = vrot.slane %v1892, 2
        %v2078 = vsel %vm2021, %v2076, %v2077
        %v2079 = vrot.slane %v1893, 2
        %v2080 = vsel %vm2021, %v2077, %v2079
        %v2081 = vrot.slane %v1894, 2
        %v2082 = vsel %vm2021, %v2079, %v2081
        %v2083 = vrot.slane %v1895, 2
        %v2084 = vsel %vm2021, %v2081, %v2083
        %v2085 = vrot.slane %v1896, 2
        %v2086 = vrot.slane %v1897, 2
        %v2087 = vsel %vm2021, %v2085, %v2086
        %v2088 = vrot.slane %v1898, 2
        %v2089 = vsel %vm2021, %v2086, %v2088
        %v2090 = vrot.slane %v1899, 2
        %v2091 = vsel %vm2021, %v2088, %v2090
        %v2092 = vrot.slane %v1900, 2
        %v2093 = vsel %vm2021, %v2090, %v2092
        %v2094 = vrot.slane %v1901, 2
        %v2095 = vrot.slane %v1902, 2
        %v2096 = vsel %vm2021, %v2094, %v2095
        %v2097 = vrot.slane %v1903, 2
        %v2098 = vsel %vm2021, %v2095, %v2097
        %v2099 = vrot.slane %v1904, 2
        %v2100 = vsel %vm2021, %v2097, %v2099
        %v2101 = vrot.slane %v1905, 2
        %v2102 = vsel %vm2021, %v2099, %v2101
        %v2103 = vrot.slane %v1906, 2
        %v2104 = vrot.slane %v1907, 2
        %v2105 = vsel %vm2021, %v2103, %v2104
        %v2106 = vrot.slane %v1908, 2
        %v2107 = vsel %vm2021, %v2104, %v2106
        %v2108 = vrot.slane %v1909, 2
        %v2109 = vsel %vm2021, %v2106, %v2108
        %v2110 = vrot.slane %v1910, 2
        %v2111 = vsel %vm2021, %v2108, %v2110
        %v2112 = vrot.slane %v1911, 2
        %v2113 = vrot.slane %v1912, 2
        %v2114 = vsel %vm2021, %v2112, %v2113
        %v2115 = vrot.slane %v1913, 2
        %v2116 = vsel %vm2021, %v2113, %v2115
        %v2117 = vrot.slane %v1914, 2
        %v2118 = vsel %vm2021, %v2115, %v2117
        %v2119 = vrot.slane %v1915, 2
        %v2120 = vsel %vm2021, %v2117, %v2119
        %v2121 = vrot.slane %v1916, 2
        %v2122 = vrot.slane %v1917, 2
        %v2123 = vsel %vm2021, %v2121, %v2122
        %v2124 = vrot.slane %v1918, 2
        %v2125 = vsel %vm2021, %v2122, %v2124
        %v2126 = vrot.slane %v1919, 2
        %v2127 = vsel %vm2021, %v2124, %v2126
        %v2128 = vrot.slane %v1920, 2
        %v2129 = vsel %vm2021, %v2126, %v2128
        %v2130 = vrot.slane %v1921, 2
        %v2131 = vrot.slane %v1922, 2
        %v2132 = vsel %vm2021, %v2130, %v2131
        %v2133 = vrot.slane %v1923, 2
        %v2134 = vsel %vm2021, %v2131, %v2133
        %v2135 = vrot.slane %v1924, 2
        %v2136 = vsel %vm2021, %v2133, %v2135
        %v2137 = vrot.slane %v1925, 2
        %v2138 = vsel %vm2021, %v2135, %v2137
        %v2139 = vrot.slane %v1926, 2
        %v2140 = vrot.slane %v1927, 2
        %v2141 = vsel %vm2021, %v2139, %v2140
        %v2142 = vrot.slane %v1928, 2
        %v2143 = vsel %vm2021, %v2140, %v2142
        %v2144 = vrot.slane %v1929, 2
        %v2145 = vsel %vm2021, %v2142, %v2144
        %v2146 = vrot.slane %v1930, 2
        %v2147 = vsel %vm2021, %v2144, %v2146
        %v2148 = vrot.slane %v1931, 2
        %v2149 = vrot.slane %v1932, 2
        %v2150 = vsel %vm2021, %v2148, %v2149
        %v2151 = vrot.slane %v1933, 2
        %v2152 = vsel %vm2021, %v2149, %v2151
        %v2153 = vrot.slane %v1934, 2
        %v2154 = vsel %vm2021, %v2151, %v2153
        %v2155 = vrot.slane %v1935, 2
        %v2156 = vsel %vm2021, %v2153, %v2155
        %v2157 = vrot.slane %v1936, 2
        %v2158 = vrot.slane %v1937, 2
        %v2159 = vsel %vm2021, %v2157, %v2158
        %v2160 = vrot.slane %v1938, 2
        %v2161 = vsel %vm2021, %v2158, %v2160
        %v2162 = vrot.slane %v1939, 2
        %v2163 = vsel %vm2021, %v2160, %v2162
        %v2164 = vrot.slane %v1940, 2
        %v2165 = vsel %vm2021, %v2162, %v2164
        %v2230 = vpack.c.bf16 %v2026, %v2024
        %v2231 = vpack.c.bf16 %v2030, %v2028
        %v2232 = vpack.c.bf16 %v2035, %v2033
        %v2233 = vpack.c.bf16 %v2039, %v2037
        %v2234 = vpack.c.bf16 %v2044, %v2042
        %v2235 = vpack.c.bf16 %v2048, %v2046
        %v2236 = vpack.c.bf16 %v2053, %v2051
        %v2237 = vpack.c.bf16 %v2057, %v2055
        %v2238 = vpack.c.bf16 %v2062, %v2060
        %v2239 = vpack.c.bf16 %v2066, %v2064
        %v2240 = vpack.c.bf16 %v2071, %v2069
        %v2241 = vpack.c.bf16 %v2075, %v2073
        %v2242 = vpack.c.bf16 %v2080, %v2078
        %v2243 = vpack.c.bf16 %v2084, %v2082
        %v2244 = vpack.c.bf16 %v2089, %v2087
        %v2245 = vpack.c.bf16 %v2093, %v2091
        %v2246 = vpack.c.bf16 %v2098, %v2096
        %v2247 = vpack.c.bf16 %v2102, %v2100
        %v2248 = vpack.c.bf16 %v2107, %v2105
        %v2249 = vpack.c.bf16 %v2111, %v2109
        %v2250 = vpack.c.bf16 %v2116, %v2114
        %v2251 = vpack.c.bf16 %v2120, %v2118
        %v2252 = vpack.c.bf16 %v2125, %v2123
        %v2253 = vpack.c.bf16 %v2129, %v2127
        %v2254 = vpack.c.bf16 %v2134, %v2132
        %v2255 = vpack.c.bf16 %v2138, %v2136
        %v2256 = vpack.c.bf16 %v2143, %v2141
        %v2257 = vpack.c.bf16 %v2147, %v2145
        %v2258 = vpack.c.bf16 %v2152, %v2150
        %v2259 = vpack.c.bf16 %v2156, %v2154
        %v2260 = vpack.c.bf16 %v2161, %v2159
        %v2261 = vpack.c.bf16 %v2165, %v2163
        %v2262 = vld [vmem:[#allocation2] sm:$0xff]
        %v2263 = vld [vmem:[#allocation2 + $0x8] sm:$0xff]
        %v2264 = vld [vmem:[#allocation2 + $0x10] sm:$0xff]
        %v2265 = vld [vmem:[#allocation2 + $0x18] sm:$0xff]
        %v2266 = vld [vmem:[#allocation2 + $0x20] sm:$0xff]
        %v2267 = vld [vmem:[#allocation2 + $0x28] sm:$0xff]
        %v2268 = vld [vmem:[#allocation2 + $0x30] sm:$0xff]
        %v2269 = vld [vmem:[#allocation2 + $0x38] sm:$0xff]
        %v2270 = vld [vmem:[#allocation2 + $0x40] sm:$0xff]
        %v2271 = vld [vmem:[#allocation2 + $0x48] sm:$0xff]
        %v2272 = vld [vmem:[#allocation2 + $0x50] sm:$0xff]
        %v2273 = vld [vmem:[#allocation2 + $0x58] sm:$0xff]
        %v2274 = vld [vmem:[#allocation2 + $0x60] sm:$0xff]
        %v2275 = vld [vmem:[#allocation2 + $0x68] sm:$0xff]
        %v2276 = vld [vmem:[#allocation2 + $0x70] sm:$0xff]
        %v2277 = vld [vmem:[#allocation2 + $0x78] sm:$0xff]
        %v2278 = vld [vmem:[#allocation2 + $0x80] sm:$0xff]
        %v2279 = vld [vmem:[#allocation2 + $0x88] sm:$0xff]
        %v2280 = vld [vmem:[#allocation2 + $0x90] sm:$0xff]
        %v2281 = vld [vmem:[#allocation2 + $0x98] sm:$0xff]
        %v2282 = vld [vmem:[#allocation2 + $0xa0] sm:$0xff]
        %v2283 = vld [vmem:[#allocation2 + $0xa8] sm:$0xff]
        %v2284 = vld [vmem:[#allocation2 + $0xb0] sm:$0xff]
        %v2285 = vld [vmem:[#allocation2 + $0xb8] sm:$0xff]
        %v2286 = vld [vmem:[#allocation2 + $0xc0] sm:$0xff]
        %v2287 = vld [vmem:[#allocation2 + $0xc8] sm:$0xff]
        %v2288 = vld [vmem:[#allocation2 + $0xd0] sm:$0xff]
        %v2289 = vld [vmem:[#allocation2 + $0xd8] sm:$0xff]
        %v2290 = vld [vmem:[#allocation2 + $0xe0] sm:$0xff]
        %v2291 = vld [vmem:[#allocation2 + $0xe8] sm:$0xff]
        %v2292 = vld [vmem:[#allocation2 + $0xf0] sm:$0xff]
        %v2293 = vld [vmem:[#allocation2 + $0xf8] sm:$0xff]
        %v2294 = vld [vmem:[#allocation2 + $0x100] sm:$0xff]
        %v2295 = vld [vmem:[#allocation2 + $0x108] sm:$0xff]
        %v2296 = vld [vmem:[#allocation2 + $0x110] sm:$0xff]
        %v2297 = vld [vmem:[#allocation2 + $0x118] sm:$0xff]
        %v2298 = vld [vmem:[#allocation2 + $0x120] sm:$0xff]
        %v2299 = vld [vmem:[#allocation2 + $0x128] sm:$0xff]
        %v2300 = vld [vmem:[#allocation2 + $0x130] sm:$0xff]
        %v2301 = vld [vmem:[#allocation2 + $0x138] sm:$0xff]
        %v2302 = vld [vmem:[#allocation2 + $0x140] sm:$0xff]
        %v2303 = vld [vmem:[#allocation2 + $0x148] sm:$0xff]
        %v2304 = vld [vmem:[#allocation2 + $0x150] sm:$0xff]
        %v2305 = vld [vmem:[#allocation2 + $0x158] sm:$0xff]
        %v2306 = vld [vmem:[#allocation2 + $0x160] sm:$0xff]
        %v2307 = vld [vmem:[#allocation2 + $0x168] sm:$0xff]
        %v2308 = vld [vmem:[#allocation2 + $0x170] sm:$0xff]
        %v2309 = vld [vmem:[#allocation2 + $0x178] sm:$0xff]
        %v2310 = vld [vmem:[#allocation2 + $0x180] sm:$0xff]
        %v2311 = vld [vmem:[#allocation2 + $0x188] sm:$0xff]
        %v2312 = vld [vmem:[#allocation2 + $0x190] sm:$0xff]
        %v2313 = vld [vmem:[#allocation2 + $0x198] sm:$0xff]
        %v2314 = vld [vmem:[#allocation2 + $0x1a0] sm:$0xff]
        %v2315 = vld [vmem:[#allocation2 + $0x1a8] sm:$0xff]
        %v2316 = vld [vmem:[#allocation2 + $0x1b0] sm:$0xff]
        %v2317 = vld [vmem:[#allocation2 + $0x1b8] sm:$0xff]
        %v2318 = vld [vmem:[#allocation2 + $0x1c0] sm:$0xff]
        %v2319 = vld [vmem:[#allocation2 + $0x1c8] sm:$0xff]
        %v2320 = vld [vmem:[#allocation2 + $0x1d0] sm:$0xff]
        %v2321 = vld [vmem:[#allocation2 + $0x1d8] sm:$0xff]
        %v2322 = vld [vmem:[#allocation2 + $0x1e0] sm:$0xff]
        %v2323 = vld [vmem:[#allocation2 + $0x1e8] sm:$0xff]
        %v2324 = vld [vmem:[#allocation2 + $0x1f0] sm:$0xff]
        %v2325 = vld [vmem:[#allocation2 + $0x1f8] sm:$0xff]
        %s2326 = scalar_lea.vmem %s214, 128
        %v2327 = vld [vmem:[%s2326] sm:$0xf]
        %v2328 = vld [vmem:[%s2326 + $0x4] sm:$0xf]
        %v2329 = vld [vmem:[%s2326 + $0x8] sm:$0xf]
        %v2330 = vld [vmem:[%s2326 + $0xc] sm:$0xf]
        %v2331 = vld [vmem:[%s2326 + $0x10] sm:$0xf]
        %v2332 = vld [vmem:[%s2326 + $0x14] sm:$0xf]
        %v2333 = vld [vmem:[%s2326 + $0x18] sm:$0xf]
        %v2334 = vld [vmem:[%s2326 + $0x1c] sm:$0xf]
        %v2335 = vld [vmem:[%s2326 + $0x20] sm:$0xf]
        %v2336 = vld [vmem:[%s2326 + $0x24] sm:$0xf]
        %v2337 = vld [vmem:[%s2326 + $0x28] sm:$0xf]
        %v2338 = vld [vmem:[%s2326 + $0x2c] sm:$0xf]
        %v2339 = vld [vmem:[%s2326 + $0x30] sm:$0xf]
        %v2340 = vld [vmem:[%s2326 + $0x34] sm:$0xf]
        %v2341 = vld [vmem:[%s2326 + $0x38] sm:$0xf]
        %v2342 = vld [vmem:[%s2326 + $0x3c] sm:$0xf]
        %v2359 = vunpack.c.l.b16 %v2327
        %v2360 = vunpack.c.l.b16 %v2328
        %v2361 = vunpack.c.l.b16 %v2329
        %v2362 = vunpack.c.l.b16 %v2330
        %v2363 = vunpack.c.l.b16 %v2331
        %v2364 = vunpack.c.l.b16 %v2332
        %v2365 = vunpack.c.l.b16 %v2333
        %v2366 = vunpack.c.l.b16 %v2334
        %v2367 = vunpack.c.l.b16 %v2335
        %v2368 = vunpack.c.l.b16 %v2336
        %v2369 = vunpack.c.l.b16 %v2337
        %v2370 = vunpack.c.l.b16 %v2338
        %v2371 = vunpack.c.l.b16 %v2339
        %v2372 = vunpack.c.l.b16 %v2340
        %v2373 = vunpack.c.l.b16 %v2341
        %v2374 = vunpack.c.l.b16 %v2342
        %v2375 = vpack.c.b16 %v2360, %v2359
        %v2376 = vpack.c.b16 %v2362, %v2361
        %v2377 = vpack.c.b16 %v2364, %v2363
        %v2378 = vpack.c.b16 %v2366, %v2365
        %v2379 = vpack.c.b16 %v2368, %v2367
        %v2380 = vpack.c.b16 %v2370, %v2369
        %v2381 = vpack.c.b16 %v2372, %v2371
        %v2382 = vpack.c.b16 %v2374, %v2373
        %2391 = vmatpush.bf16.msra.mxu0 %v2382
        %2392 = vmatpush.bf16.msra.mxu0 %v2381
        %2393 = vmatpush.bf16.msra.mxu0 %v2380
        %2394 = vmatpush.bf16.msra.mxu0 %v2379
        %2395 = vmatpush.bf16.msra.mxu0 %v2378
        %2396 = vmatpush.bf16.msra.mxu0 %v2377
        %2397 = vmatpush.bf16.msra.mxu0 %v2376
        %2398 = vmatpush.bf16.msra.mxu0 %v2375
        %2399 = vmatmul.bf16.gmra.mxu0 %v2230
        %v2400 = vpop.f32.mrf.mxu0
        %v2401 = vadd.f32 0.0, %v2400
        %v2402 = vpop.f32.mrf.mxu0
        %v2403 = vadd.f32 0.0, %v2402
        %2404 = vmatmul.bf16.gmra.mxu0 %v2231
        %v2405 = vpop.f32.mrf.mxu0
        %v2406 = vadd.f32 0.0, %v2405
        %v2407 = vpop.f32.mrf.mxu0
        %v2408 = vadd.f32 0.0, %v2407
        %2409 = vmatmul.bf16.gmra.mxu0 %v2232
        %v2410 = vpop.f32.mrf.mxu0
        %v2411 = vadd.f32 0.0, %v2410
        %v2412 = vpop.f32.mrf.mxu0
        %v2413 = vadd.f32 0.0, %v2412
        %2414 = vmatmul.bf16.gmra.mxu0 %v2233
        %v2415 = vpop.f32.mrf.mxu0
        %v2416 = vadd.f32 0.0, %v2415
        %v2417 = vpop.f32.mrf.mxu0
        %v2418 = vadd.f32 0.0, %v2417
        %2419 = vmatmul.bf16.gmra.mxu0 %v2234
        %v2420 = vpop.f32.mrf.mxu0
        %v2421 = vadd.f32 0.0, %v2420
        %v2422 = vpop.f32.mrf.mxu0
        %v2423 = vadd.f32 0.0, %v2422
        %2424 = vmatmul.bf16.gmra.mxu0 %v2235
        %v2425 = vpop.f32.mrf.mxu0
        %v2426 = vadd.f32 0.0, %v2425
        %v2427 = vpop.f32.mrf.mxu0
        %v2428 = vadd.f32 0.0, %v2427
        %2429 = vmatmul.bf16.gmra.mxu0 %v2236
        %v2430 = vpop.f32.mrf.mxu0
        %v2431 = vadd.f32 0.0, %v2430
        %v2432 = vpop.f32.mrf.mxu0
        %v2433 = vadd.f32 0.0, %v2432
        %2434 = vmatmul.bf16.gmra.mxu0 %v2237
        %v2435 = vpop.f32.mrf.mxu0
        %v2436 = vadd.f32 0.0, %v2435
        %v2437 = vpop.f32.mrf.mxu0
        %v2438 = vadd.f32 0.0, %v2437
        %2439 = vmatmul.bf16.gmra.mxu0 %v2238
        %v2440 = vpop.f32.mrf.mxu0
        %v2441 = vadd.f32 0.0, %v2440
        %v2442 = vpop.f32.mrf.mxu0
        %v2443 = vadd.f32 0.0, %v2442
        %2444 = vmatmul.bf16.gmra.mxu0 %v2239
        %v2445 = vpop.f32.mrf.mxu0
        %v2446 = vadd.f32 0.0, %v2445
        %v2447 = vpop.f32.mrf.mxu0
        %v2448 = vadd.f32 0.0, %v2447
        %2449 = vmatmul.bf16.gmra.mxu0 %v2240
        %v2450 = vpop.f32.mrf.mxu0
        %v2451 = vadd.f32 0.0, %v2450
        %v2452 = vpop.f32.mrf.mxu0
        %v2453 = vadd.f32 0.0, %v2452
        %2454 = vmatmul.bf16.gmra.mxu0 %v2241
        %v2455 = vpop.f32.mrf.mxu0
        %v2456 = vadd.f32 0.0, %v2455
        %v2457 = vpop.f32.mrf.mxu0
        %v2458 = vadd.f32 0.0, %v2457
        %2459 = vmatmul.bf16.gmra.mxu0 %v2242
        %v2460 = vpop.f32.mrf.mxu0
        %v2461 = vadd.f32 0.0, %v2460
        %v2462 = vpop.f32.mrf.mxu0
        %v2463 = vadd.f32 0.0, %v2462
        %2464 = vmatmul.bf16.gmra.mxu0 %v2243
        %v2465 = vpop.f32.mrf.mxu0
        %v2466 = vadd.f32 0.0, %v2465
        %v2467 = vpop.f32.mrf.mxu0
        %v2468 = vadd.f32 0.0, %v2467
        %2469 = vmatmul.bf16.gmra.mxu0 %v2244
        %v2470 = vpop.f32.mrf.mxu0
        %v2471 = vadd.f32 0.0, %v2470
        %v2472 = vpop.f32.mrf.mxu0
        %v2473 = vadd.f32 0.0, %v2472
        %2474 = vmatmul.bf16.gmra.mxu0 %v2245
        %v2475 = vpop.f32.mrf.mxu0
        %v2476 = vadd.f32 0.0, %v2475
        %v2477 = vpop.f32.mrf.mxu0
        %v2478 = vadd.f32 0.0, %v2477
        %2479 = vmatmul.bf16.gmra.mxu0 %v2246
        %v2480 = vpop.f32.mrf.mxu0
        %v2481 = vadd.f32 0.0, %v2480
        %v2482 = vpop.f32.mrf.mxu0
        %v2483 = vadd.f32 0.0, %v2482
        %2484 = vmatmul.bf16.gmra.mxu0 %v2247
        %v2485 = vpop.f32.mrf.mxu0
        %v2486 = vadd.f32 0.0, %v2485
        %v2487 = vpop.f32.mrf.mxu0
        %v2488 = vadd.f32 0.0, %v2487
        %2489 = vmatmul.bf16.gmra.mxu0 %v2248
        %v2490 = vpop.f32.mrf.mxu0
        %v2491 = vadd.f32 0.0, %v2490
        %v2492 = vpop.f32.mrf.mxu0
        %v2493 = vadd.f32 0.0, %v2492
        %2494 = vmatmul.bf16.gmra.mxu0 %v2249
        %v2495 = vpop.f32.mrf.mxu0
        %v2496 = vadd.f32 0.0, %v2495
        %v2497 = vpop.f32.mrf.mxu0
        %v2498 = vadd.f32 0.0, %v2497
        %2499 = vmatmul.bf16.gmra.mxu0 %v2250
        %v2500 = vpop.f32.mrf.mxu0
        %v2501 = vadd.f32 0.0, %v2500
        %v2502 = vpop.f32.mrf.mxu0
        %v2503 = vadd.f32 0.0, %v2502
        %2504 = vmatmul.bf16.gmra.mxu0 %v2251
        %v2505 = vpop.f32.mrf.mxu0
        %v2506 = vadd.f32 0.0, %v2505
        %v2507 = vpop.f32.mrf.mxu0
        %v2508 = vadd.f32 0.0, %v2507
        %2509 = vmatmul.bf16.gmra.mxu0 %v2252
        %v2510 = vpop.f32.mrf.mxu0
        %v2511 = vadd.f32 0.0, %v2510
        %v2512 = vpop.f32.mrf.mxu0
        %v2513 = vadd.f32 0.0, %v2512
        %2514 = vmatmul.bf16.gmra.mxu0 %v2253
        %v2515 = vpop.f32.mrf.mxu0
        %v2516 = vadd.f32 0.0, %v2515
        %v2517 = vpop.f32.mrf.mxu0
        %v2518 = vadd.f32 0.0, %v2517
        %2519 = vmatmul.bf16.gmra.mxu0 %v2254
        %v2520 = vpop.f32.mrf.mxu0
        %v2521 = vadd.f32 0.0, %v2520
        %v2522 = vpop.f32.mrf.mxu0
        %v2523 = vadd.f32 0.0, %v2522
        %2524 = vmatmul.bf16.gmra.mxu0 %v2255
        %v2525 = vpop.f32.mrf.mxu0
        %v2526 = vadd.f32 0.0, %v2525
        %v2527 = vpop.f32.mrf.mxu0
        %v2528 = vadd.f32 0.0, %v2527
        %2529 = vmatmul.bf16.gmra.mxu0 %v2256
        %v2530 = vpop.f32.mrf.mxu0
        %v2531 = vadd.f32 0.0, %v2530
        %v2532 = vpop.f32.mrf.mxu0
        %v2533 = vadd.f32 0.0, %v2532
        %2534 = vmatmul.bf16.gmra.mxu0 %v2257
        %v2535 = vpop.f32.mrf.mxu0
        %v2536 = vadd.f32 0.0, %v2535
        %v2537 = vpop.f32.mrf.mxu0
        %v2538 = vadd.f32 0.0, %v2537
        %2539 = vmatmul.bf16.gmra.mxu0 %v2258
        %v2540 = vpop.f32.mrf.mxu0
        %v2541 = vadd.f32 0.0, %v2540
        %v2542 = vpop.f32.mrf.mxu0
        %v2543 = vadd.f32 0.0, %v2542
        %2544 = vmatmul.bf16.gmra.mxu0 %v2259
        %v2545 = vpop.f32.mrf.mxu0
        %v2546 = vadd.f32 0.0, %v2545
        %v2547 = vpop.f32.mrf.mxu0
        %v2548 = vadd.f32 0.0, %v2547
        %2549 = vmatmul.bf16.gmra.mxu0 %v2260
        %v2550 = vpop.f32.mrf.mxu0
        %v2551 = vadd.f32 0.0, %v2550
        %v2552 = vpop.f32.mrf.mxu0
        %v2553 = vadd.f32 0.0, %v2552
        %2554 = vmatmul.bf16.gmra.mxu0 %v2261
        %v2555 = vpop.f32.mrf.mxu0
        %v2556 = vadd.f32 0.0, %v2555
        %v2557 = vpop.f32.mrf.mxu0
        %v2558 = vadd.f32 0.0, %v2557
        %2559 = vdwg.mxu0
        %v2560 = vadd.f32 %v2262, %v2401
        %v2561 = vadd.f32 %v2263, %v2403
        %v2562 = vadd.f32 %v2264, %v2406
        %v2563 = vadd.f32 %v2265, %v2408
        %v2564 = vadd.f32 %v2266, %v2411
        %v2565 = vadd.f32 %v2267, %v2413
        %v2566 = vadd.f32 %v2268, %v2416
        %v2567 = vadd.f32 %v2269, %v2418
        %v2568 = vadd.f32 %v2270, %v2421
        %v2569 = vadd.f32 %v2271, %v2423
        %v2570 = vadd.f32 %v2272, %v2426
        %v2571 = vadd.f32 %v2273, %v2428
        %v2572 = vadd.f32 %v2274, %v2431
        %v2573 = vadd.f32 %v2275, %v2433
        %v2574 = vadd.f32 %v2276, %v2436
        %v2575 = vadd.f32 %v2277, %v2438
        %v2576 = vadd.f32 %v2278, %v2441
        %v2577 = vadd.f32 %v2279, %v2443
        %v2578 = vadd.f32 %v2280, %v2446
        %v2579 = vadd.f32 %v2281, %v2448
        %v2580 = vadd.f32 %v2282, %v2451
        %v2581 = vadd.f32 %v2283, %v2453
        %v2582 = vadd.f32 %v2284, %v2456
        %v2583 = vadd.f32 %v2285, %v2458
        %v2584 = vadd.f32 %v2286, %v2461
        %v2585 = vadd.f32 %v2287, %v2463
        %v2586 = vadd.f32 %v2288, %v2466
        %v2587 = vadd.f32 %v2289, %v2468
        %v2588 = vadd.f32 %v2290, %v2471
        %v2589 = vadd.f32 %v2291, %v2473
        %v2590 = vadd.f32 %v2292, %v2476
        %v2591 = vadd.f32 %v2293, %v2478
        %v2592 = vadd.f32 %v2294, %v2481
        %v2593 = vadd.f32 %v2295, %v2483
        %v2594 = vadd.f32 %v2296, %v2486
        %v2595 = vadd.f32 %v2297, %v2488
        %v2596 = vadd.f32 %v2298, %v2491
        %v2597 = vadd.f32 %v2299, %v2493
        %v2598 = vadd.f32 %v2300, %v2496
        %v2599 = vadd.f32 %v2301, %v2498
        %v2600 = vadd.f32 %v2302, %v2501
        %v2601 = vadd.f32 %v2303, %v2503
        %v2602 = vadd.f32 %v2304, %v2506
        %v2603 = vadd.f32 %v2305, %v2508
        %v2604 = vadd.f32 %v2306, %v2511
        %v2605 = vadd.f32 %v2307, %v2513
        %v2606 = vadd.f32 %v2308, %v2516
        %v2607 = vadd.f32 %v2309, %v2518
        %v2608 = vadd.f32 %v2310, %v2521
        %v2609 = vadd.f32 %v2311, %v2523
        %v2610 = vadd.f32 %v2312, %v2526
        %v2611 = vadd.f32 %v2313, %v2528
        %v2612 = vadd.f32 %v2314, %v2531
        %v2613 = vadd.f32 %v2315, %v2533
        %v2614 = vadd.f32 %v2316, %v2536
        %v2615 = vadd.f32 %v2317, %v2538
        %v2616 = vadd.f32 %v2318, %v2541
        %v2617 = vadd.f32 %v2319, %v2543
        %v2618 = vadd.f32 %v2320, %v2546
        %v2619 = vadd.f32 %v2321, %v2548
        %v2620 = vadd.f32 %v2322, %v2551
        %v2621 = vadd.f32 %v2323, %v2553
        %v2622 = vadd.f32 %v2324, %v2556
        %v2623 = vadd.f32 %v2325, %v2558
        %2624 = vst [vmem:[#allocation2] sm:$0xff] %v2560
        %2625 = vst [vmem:[#allocation2 + $0x8] sm:$0xff] %v2561
        %2626 = vst [vmem:[#allocation2 + $0x10] sm:$0xff] %v2562
        %2627 = vst [vmem:[#allocation2 + $0x18] sm:$0xff] %v2563
        %2628 = vst [vmem:[#allocation2 + $0x20] sm:$0xff] %v2564
        %2629 = vst [vmem:[#allocation2 + $0x28] sm:$0xff] %v2565
        %2630 = vst [vmem:[#allocation2 + $0x30] sm:$0xff] %v2566
        %2631 = vst [vmem:[#allocation2 + $0x38] sm:$0xff] %v2567
        %2632 = vst [vmem:[#allocation2 + $0x40] sm:$0xff] %v2568
        %2633 = vst [vmem:[#allocation2 + $0x48] sm:$0xff] %v2569
        %2634 = vst [vmem:[#allocation2 + $0x50] sm:$0xff] %v2570
        %2635 = vst [vmem:[#allocation2 + $0x58] sm:$0xff] %v2571
        %2636 = vst [vmem:[#allocation2 + $0x60] sm:$0xff] %v2572
        %2637 = vst [vmem:[#allocation2 + $0x68] sm:$0xff] %v2573
        %2638 = vst [vmem:[#allocation2 + $0x70] sm:$0xff] %v2574
        %2639 = vst [vmem:[#allocation2 + $0x78] sm:$0xff] %v2575
        %2640 = vst [vmem:[#allocation2 + $0x80] sm:$0xff] %v2576
        %2641 = vst [vmem:[#allocation2 + $0x88] sm:$0xff] %v2577
        %2642 = vst [vmem:[#allocation2 + $0x90] sm:$0xff] %v2578
        %2643 = vst [vmem:[#allocation2 + $0x98] sm:$0xff] %v2579
        %2644 = vst [vmem:[#allocation2 + $0xa0] sm:$0xff] %v2580
        %2645 = vst [vmem:[#allocation2 + $0xa8] sm:$0xff] %v2581
        %2646 = vst [vmem:[#allocation2 + $0xb0] sm:$0xff] %v2582
        %2647 = vst [vmem:[#allocation2 + $0xb8] sm:$0xff] %v2583
        %2648 = vst [vmem:[#allocation2 + $0xc0] sm:$0xff] %v2584
        %2649 = vst [vmem:[#allocation2 + $0xc8] sm:$0xff] %v2585
        %2650 = vst [vmem:[#allocation2 + $0xd0] sm:$0xff] %v2586
        %2651 = vst [vmem:[#allocation2 + $0xd8] sm:$0xff] %v2587
        %2652 = vst [vmem:[#allocation2 + $0xe0] sm:$0xff] %v2588
        %2653 = vst [vmem:[#allocation2 + $0xe8] sm:$0xff] %v2589
        %2654 = vst [vmem:[#allocation2 + $0xf0] sm:$0xff] %v2590
        %2655 = vst [vmem:[#allocation2 + $0xf8] sm:$0xff] %v2591
        %2656 = vst [vmem:[#allocation2 + $0x100] sm:$0xff] %v2592
        %2657 = vst [vmem:[#allocation2 + $0x108] sm:$0xff] %v2593
        %2658 = vst [vmem:[#allocation2 + $0x110] sm:$0xff] %v2594
        %2659 = vst [vmem:[#allocation2 + $0x118] sm:$0xff] %v2595
        %2660 = vst [vmem:[#allocation2 + $0x120] sm:$0xff] %v2596
        %2661 = vst [vmem:[#allocation2 + $0x128] sm:$0xff] %v2597
        %2662 = vst [vmem:[#allocation2 + $0x130] sm:$0xff] %v2598
        %2663 = vst [vmem:[#allocation2 + $0x138] sm:$0xff] %v2599
        %2664 = vst [vmem:[#allocation2 + $0x140] sm:$0xff] %v2600
        %2665 = vst [vmem:[#allocation2 + $0x148] sm:$0xff] %v2601
        %2666 = vst [vmem:[#allocation2 + $0x150] sm:$0xff] %v2602
        %2667 = vst [vmem:[#allocation2 + $0x158] sm:$0xff] %v2603
        %2668 = vst [vmem:[#allocation2 + $0x160] sm:$0xff] %v2604
        %2669 = vst [vmem:[#allocation2 + $0x168] sm:$0xff] %v2605
        %2670 = vst [vmem:[#allocation2 + $0x170] sm:$0xff] %v2606
        %2671 = vst [vmem:[#allocation2 + $0x178] sm:$0xff] %v2607
        %2672 = vst [vmem:[#allocation2 + $0x180] sm:$0xff] %v2608
        %2673 = vst [vmem:[#allocation2 + $0x188] sm:$0xff] %v2609
        %2674 = vst [vmem:[#allocation2 + $0x190] sm:$0xff] %v2610
        %2675 = vst [vmem:[#allocation2 + $0x198] sm:$0xff] %v2611
        %2676 = vst [vmem:[#allocation2 + $0x1a0] sm:$0xff] %v2612
        %2677 = vst [vmem:[#allocation2 + $0x1a8] sm:$0xff] %v2613
        %2678 = vst [vmem:[#allocation2 + $0x1b0] sm:$0xff] %v2614
        %2679 = vst [vmem:[#allocation2 + $0x1b8] sm:$0xff] %v2615
        %2680 = vst [vmem:[#allocation2 + $0x1c0] sm:$0xff] %v2616
        %2681 = vst [vmem:[#allocation2 + $0x1c8] sm:$0xff] %v2617
        %2682 = vst [vmem:[#allocation2 + $0x1d0] sm:$0xff] %v2618
        %2683 = vst [vmem:[#allocation2 + $0x1d8] sm:$0xff] %v2619
        %2684 = vst [vmem:[#allocation2 + $0x1e0] sm:$0xff] %v2620
        %2685 = vst [vmem:[#allocation2 + $0x1e8] sm:$0xff] %v2621
        %2686 = vst [vmem:[#allocation2 + $0x1f0] sm:$0xff] %v2622
        %2687 = vst [vmem:[#allocation2 + $0x1f8] sm:$0xff] %v2623
        %s2688 = sadd.s32 %s285, 1
        %s2689 = smul.u32 %s2688, 5
        %s2690 = smul.addr %s2689, 4
        %s2691 = scalar_lea.vmem %s206, %s2690
        %v2692 = vld [vmem:[%s2691] sm:$0xf]
        %v2693 = vld [vmem:[%s2691 + $0x4] sm:$0xf]
        %v2694 = vld [vmem:[%s2691 + $0x8] sm:$0xf]
        %v2695 = vld [vmem:[%s2691 + $0xc] sm:$0xf]
        %v2696 = vld [vmem:[%s2691 + $0x14] sm:$0xf]
        %v2697 = vld [vmem:[%s2691 + $0x18] sm:$0xf]
        %v2698 = vld [vmem:[%s2691 + $0x1c] sm:$0xf]
        %v2699 = vld [vmem:[%s2691 + $0x20] sm:$0xf]
        %v2700 = vld [vmem:[%s2691 + $0x28] sm:$0xf]
        %v2701 = vld [vmem:[%s2691 + $0x2c] sm:$0xf]
        %v2702 = vld [vmem:[%s2691 + $0x30] sm:$0xf]
        %v2703 = vld [vmem:[%s2691 + $0x34] sm:$0xf]
        %v2704 = vld [vmem:[%s2691 + $0x3c] sm:$0xf]
        %v2705 = vld [vmem:[%s2691 + $0x40] sm:$0xf]
        %v2706 = vld [vmem:[%s2691 + $0x44] sm:$0xf]
        %v2707 = vld [vmem:[%s2691 + $0x48] sm:$0xf]
        %v2708 = vld [vmem:[%s2691 + $0x50] sm:$0xf]
        %v2709 = vld [vmem:[%s2691 + $0x54] sm:$0xf]
        %v2710 = vld [vmem:[%s2691 + $0x58] sm:$0xf]
        %v2711 = vld [vmem:[%s2691 + $0x5c] sm:$0xf]
        %v2712 = vld [vmem:[%s2691 + $0x64] sm:$0xf]
        %v2713 = vld [vmem:[%s2691 + $0x68] sm:$0xf]
        %v2714 = vld [vmem:[%s2691 + $0x6c] sm:$0xf]
        %v2715 = vld [vmem:[%s2691 + $0x70] sm:$0xf]
        %v2716 = vld [vmem:[%s2691 + $0x78] sm:$0xf]
        %v2717 = vld [vmem:[%s2691 + $0x7c] sm:$0xf]
        %v2718 = vld [vmem:[%s2691 + $0x80] sm:$0xf]
        %v2719 = vld [vmem:[%s2691 + $0x84] sm:$0xf]
        %v2720 = vld [vmem:[%s2691 + $0x8c] sm:$0xf]
        %v2721 = vld [vmem:[%s2691 + $0x90] sm:$0xf]
        %v2722 = vld [vmem:[%s2691 + $0x94] sm:$0xf]
        %v2723 = vld [vmem:[%s2691 + $0x98] sm:$0xf]
        %v2724 = vld [vmem:[%s2691 + $0xa0] sm:$0xf]
        %v2725 = vld [vmem:[%s2691 + $0xa4] sm:$0xf]
        %v2726 = vld [vmem:[%s2691 + $0xa8] sm:$0xf]
        %v2727 = vld [vmem:[%s2691 + $0xac] sm:$0xf]
        %v2728 = vld [vmem:[%s2691 + $0xb4] sm:$0xf]
        %v2729 = vld [vmem:[%s2691 + $0xb8] sm:$0xf]
        %v2730 = vld [vmem:[%s2691 + $0xbc] sm:$0xf]
        %v2731 = vld [vmem:[%s2691 + $0xc0] sm:$0xf]
        %v2732 = vld [vmem:[%s2691 + $0xc8] sm:$0xf]
        %v2733 = vld [vmem:[%s2691 + $0xcc] sm:$0xf]
        %v2734 = vld [vmem:[%s2691 + $0xd0] sm:$0xf]
        %v2735 = vld [vmem:[%s2691 + $0xd4] sm:$0xf]
        %v2736 = vld [vmem:[%s2691 + $0xdc] sm:$0xf]
        %v2737 = vld [vmem:[%s2691 + $0xe0] sm:$0xf]
        %v2738 = vld [vmem:[%s2691 + $0xe4] sm:$0xf]
        %v2739 = vld [vmem:[%s2691 + $0xe8] sm:$0xf]
        %v2740 = vld [vmem:[%s2691 + $0xf0] sm:$0xf]
        %v2741 = vld [vmem:[%s2691 + $0xf4] sm:$0xf]
        %v2742 = vld [vmem:[%s2691 + $0xf8] sm:$0xf]
        %v2743 = vld [vmem:[%s2691 + $0xfc] sm:$0xf]
        %v2744 = vld [vmem:[%s2691 + $0x104] sm:$0xf]
        %v2745 = vld [vmem:[%s2691 + $0x108] sm:$0xf]
        %v2746 = vld [vmem:[%s2691 + $0x10c] sm:$0xf]
        %v2747 = vld [vmem:[%s2691 + $0x110] sm:$0xf]
        %v2748 = vld [vmem:[%s2691 + $0x118] sm:$0xf]
        %v2749 = vld [vmem:[%s2691 + $0x11c] sm:$0xf]
        %v2750 = vld [vmem:[%s2691 + $0x120] sm:$0xf]
        %v2751 = vld [vmem:[%s2691 + $0x124] sm:$0xf]
        %v2752 = vld [vmem:[%s2691 + $0x12c] sm:$0xf]
        %v2753 = vld [vmem:[%s2691 + $0x130] sm:$0xf]
        %v2754 = vld [vmem:[%s2691 + $0x134] sm:$0xf]
        %v2755 = vld [vmem:[%s2691 + $0x138] sm:$0xf]
        %v2756 = vunpack.c.l.bf16 %v2692
        %v2757 = vunpack.c.l.bf16 %v2693
        %v2758 = vunpack.c.l.bf16 %v2694
        %v2759 = vunpack.c.l.bf16 %v2695
        %v2760 = vunpack.c.l.bf16 %v2696
        %v2761 = vunpack.c.l.bf16 %v2697
        %v2762 = vunpack.c.l.bf16 %v2698
        %v2763 = vunpack.c.l.bf16 %v2699
        %v2764 = vunpack.c.l.bf16 %v2700
        %v2765 = vunpack.c.l.bf16 %v2701
        %v2766 = vunpack.c.l.bf16 %v2702
        %v2767 = vunpack.c.l.bf16 %v2703
        %v2768 = vunpack.c.l.bf16 %v2704
        %v2769 = vunpack.c.l.bf16 %v2705
        %v2770 = vunpack.c.l.bf16 %v2706
        %v2771 = vunpack.c.l.bf16 %v2707
        %v2772 = vunpack.c.l.bf16 %v2708
        %v2773 = vunpack.c.l.bf16 %v2709
        %v2774 = vunpack.c.l.bf16 %v2710
        %v2775 = vunpack.c.l.bf16 %v2711
        %v2776 = vunpack.c.l.bf16 %v2712
        %v2777 = vunpack.c.l.bf16 %v2713
        %v2778 = vunpack.c.l.bf16 %v2714
        %v2779 = vunpack.c.l.bf16 %v2715
        %v2780 = vunpack.c.l.bf16 %v2716
        %v2781 = vunpack.c.l.bf16 %v2717
        %v2782 = vunpack.c.l.bf16 %v2718
        %v2783 = vunpack.c.l.bf16 %v2719
        %v2784 = vunpack.c.l.bf16 %v2720
        %v2785 = vunpack.c.l.bf16 %v2721
        %v2786 = vunpack.c.l.bf16 %v2722
        %v2787 = vunpack.c.l.bf16 %v2723
        %v2788 = vunpack.c.l.bf16 %v2724
        %v2789 = vunpack.c.l.bf16 %v2725
        %v2790 = vunpack.c.l.bf16 %v2726
        %v2791 = vunpack.c.l.bf16 %v2727
        %v2792 = vunpack.c.l.bf16 %v2728
        %v2793 = vunpack.c.l.bf16 %v2729
        %v2794 = vunpack.c.l.bf16 %v2730
        %v2795 = vunpack.c.l.bf16 %v2731
        %v2796 = vunpack.c.l.bf16 %v2732
        %v2797 = vunpack.c.l.bf16 %v2733
        %v2798 = vunpack.c.l.bf16 %v2734
        %v2799 = vunpack.c.l.bf16 %v2735
        %v2800 = vunpack.c.l.bf16 %v2736
        %v2801 = vunpack.c.l.bf16 %v2737
        %v2802 = vunpack.c.l.bf16 %v2738
        %v2803 = vunpack.c.l.bf16 %v2739
        %v2804 = vunpack.c.l.bf16 %v2740
        %v2805 = vunpack.c.l.bf16 %v2741
        %v2806 = vunpack.c.l.bf16 %v2742
        %v2807 = vunpack.c.l.bf16 %v2743
        %v2808 = vunpack.c.l.bf16 %v2744
        %v2809 = vunpack.c.l.bf16 %v2745
        %v2810 = vunpack.c.l.bf16 %v2746
        %v2811 = vunpack.c.l.bf16 %v2747
        %v2812 = vunpack.c.l.bf16 %v2748
        %v2813 = vunpack.c.l.bf16 %v2749
        %v2814 = vunpack.c.l.bf16 %v2750
        %v2815 = vunpack.c.l.bf16 %v2751
        %v2816 = vunpack.c.l.bf16 %v2752
        %v2817 = vunpack.c.l.bf16 %v2753
        %v2818 = vunpack.c.l.bf16 %v2754
        %v2819 = vunpack.c.l.bf16 %v2755
        %v2820 = vpack.c.bf16 %v2757, %v2756
        %v2821 = vpack.c.bf16 %v2759, %v2758
        %v2822 = vpack.c.bf16 %v2761, %v2760
        %v2823 = vpack.c.bf16 %v2763, %v2762
        %v2824 = vpack.c.bf16 %v2765, %v2764
        %v2825 = vpack.c.bf16 %v2767, %v2766
        %v2826 = vpack.c.bf16 %v2769, %v2768
        %v2827 = vpack.c.bf16 %v2771, %v2770
        %v2828 = vpack.c.bf16 %v2773, %v2772
        %v2829 = vpack.c.bf16 %v2775, %v2774
        %v2830 = vpack.c.bf16 %v2777, %v2776
        %v2831 = vpack.c.bf16 %v2779, %v2778
        %v2832 = vpack.c.bf16 %v2781, %v2780
        %v2833 = vpack.c.bf16 %v2783, %v2782
        %v2834 = vpack.c.bf16 %v2785, %v2784
        %v2835 = vpack.c.bf16 %v2787, %v2786
        %v2836 = vpack.c.bf16 %v2789, %v2788
        %v2837 = vpack.c.bf16 %v2791, %v2790
        %v2838 = vpack.c.bf16 %v2793, %v2792
        %v2839 = vpack.c.bf16 %v2795, %v2794
        %v2840 = vpack.c.bf16 %v2797, %v2796
        %v2841 = vpack.c.bf16 %v2799, %v2798
        %v2842 = vpack.c.bf16 %v2801, %v2800
        %v2843 = vpack.c.bf16 %v2803, %v2802
        %v2844 = vpack.c.bf16 %v2805, %v2804
        %v2845 = vpack.c.bf16 %v2807, %v2806
        %v2846 = vpack.c.bf16 %v2809, %v2808
        %v2847 = vpack.c.bf16 %v2811, %v2810
        %v2848 = vpack.c.bf16 %v2813, %v2812
        %v2849 = vpack.c.bf16 %v2815, %v2814
        %v2850 = vpack.c.bf16 %v2817, %v2816
        %v2851 = vpack.c.bf16 %v2819, %v2818
        %v2852 = vld [vmem:[#allocation2] sm:$0xff]
        %v2853 = vld [vmem:[#allocation2 + $0x8] sm:$0xff]
        %v2854 = vld [vmem:[#allocation2 + $0x10] sm:$0xff]
        %v2855 = vld [vmem:[#allocation2 + $0x18] sm:$0xff]
        %v2856 = vld [vmem:[#allocation2 + $0x20] sm:$0xff]
        %v2857 = vld [vmem:[#allocation2 + $0x28] sm:$0xff]
        %v2858 = vld [vmem:[#allocation2 + $0x30] sm:$0xff]
        %v2859 = vld [vmem:[#allocation2 + $0x38] sm:$0xff]
        %v2860 = vld [vmem:[#allocation2 + $0x40] sm:$0xff]
        %v2861 = vld [vmem:[#allocation2 + $0x48] sm:$0xff]
        %v2862 = vld [vmem:[#allocation2 + $0x50] sm:$0xff]
        %v2863 = vld [vmem:[#allocation2 + $0x58] sm:$0xff]
        %v2864 = vld [vmem:[#allocation2 + $0x60] sm:$0xff]
        %v2865 = vld [vmem:[#allocation2 + $0x68] sm:$0xff]
        %v2866 = vld [vmem:[#allocation2 + $0x70] sm:$0xff]
        %v2867 = vld [vmem:[#allocation2 + $0x78] sm:$0xff]
        %v2868 = vld [vmem:[#allocation2 + $0x80] sm:$0xff]
        %v2869 = vld [vmem:[#allocation2 + $0x88] sm:$0xff]
        %v2870 = vld [vmem:[#allocation2 + $0x90] sm:$0xff]
        %v2871 = vld [vmem:[#allocation2 + $0x98] sm:$0xff]
        %v2872 = vld [vmem:[#allocation2 + $0xa0] sm:$0xff]
        %v2873 = vld [vmem:[#allocation2 + $0xa8] sm:$0xff]
        %v2874 = vld [vmem:[#allocation2 + $0xb0] sm:$0xff]
        %v2875 = vld [vmem:[#allocation2 + $0xb8] sm:$0xff]
        %v2876 = vld [vmem:[#allocation2 + $0xc0] sm:$0xff]
        %v2877 = vld [vmem:[#allocation2 + $0xc8] sm:$0xff]
        %v2878 = vld [vmem:[#allocation2 + $0xd0] sm:$0xff]
        %v2879 = vld [vmem:[#allocation2 + $0xd8] sm:$0xff]
        %v2880 = vld [vmem:[#allocation2 + $0xe0] sm:$0xff]
        %v2881 = vld [vmem:[#allocation2 + $0xe8] sm:$0xff]
        %v2882 = vld [vmem:[#allocation2 + $0xf0] sm:$0xff]
        %v2883 = vld [vmem:[#allocation2 + $0xf8] sm:$0xff]
        %v2884 = vld [vmem:[#allocation2 + $0x100] sm:$0xff]
        %v2885 = vld [vmem:[#allocation2 + $0x108] sm:$0xff]
        %v2886 = vld [vmem:[#allocation2 + $0x110] sm:$0xff]
        %v2887 = vld [vmem:[#allocation2 + $0x118] sm:$0xff]
        %v2888 = vld [vmem:[#allocation2 + $0x120] sm:$0xff]
        %v2889 = vld [vmem:[#allocation2 + $0x128] sm:$0xff]
        %v2890 = vld [vmem:[#allocation2 + $0x130] sm:$0xff]
        %v2891 = vld [vmem:[#allocation2 + $0x138] sm:$0xff]
        %v2892 = vld [vmem:[#allocation2 + $0x140] sm:$0xff]
        %v2893 = vld [vmem:[#allocation2 + $0x148] sm:$0xff]
        %v2894 = vld [vmem:[#allocation2 + $0x150] sm:$0xff]
        %v2895 = vld [vmem:[#allocation2 + $0x158] sm:$0xff]
        %v2896 = vld [vmem:[#allocation2 + $0x160] sm:$0xff]
        %v2897 = vld [vmem:[#allocation2 + $0x168] sm:$0xff]
        %v2898 = vld [vmem:[#allocation2 + $0x170] sm:$0xff]
        %v2899 = vld [vmem:[#allocation2 + $0x178] sm:$0xff]
        %v2900 = vld [vmem:[#allocation2 + $0x180] sm:$0xff]
        %v2901 = vld [vmem:[#allocation2 + $0x188] sm:$0xff]
        %v2902 = vld [vmem:[#allocation2 + $0x190] sm:$0xff]
        %v2903 = vld [vmem:[#allocation2 + $0x198] sm:$0xff]
        %v2904 = vld [vmem:[#allocation2 + $0x1a0] sm:$0xff]
        %v2905 = vld [vmem:[#allocation2 + $0x1a8] sm:$0xff]
        %v2906 = vld [vmem:[#allocation2 + $0x1b0] sm:$0xff]
        %v2907 = vld [vmem:[#allocation2 + $0x1b8] sm:$0xff]
        %v2908 = vld [vmem:[#allocation2 + $0x1c0] sm:$0xff]
        %v2909 = vld [vmem:[#allocation2 + $0x1c8] sm:$0xff]
        %v2910 = vld [vmem:[#allocation2 + $0x1d0] sm:$0xff]
        %v2911 = vld [vmem:[#allocation2 + $0x1d8] sm:$0xff]
        %v2912 = vld [vmem:[#allocation2 + $0x1e0] sm:$0xff]
        %v2913 = vld [vmem:[#allocation2 + $0x1e8] sm:$0xff]
        %v2914 = vld [vmem:[#allocation2 + $0x1f0] sm:$0xff]
        %v2915 = vld [vmem:[#allocation2 + $0x1f8] sm:$0xff]
        %s2916 = scalar_lea.vmem %s214, 192
        %v2917 = vld [vmem:[%s2916] sm:$0xf]
        %v2918 = vld [vmem:[%s2916 + $0x4] sm:$0xf]
        %v2919 = vld [vmem:[%s2916 + $0x8] sm:$0xf]
        %v2920 = vld [vmem:[%s2916 + $0xc] sm:$0xf]
        %v2921 = vld [vmem:[%s2916 + $0x10] sm:$0xf]
        %v2922 = vld [vmem:[%s2916 + $0x14] sm:$0xf]
        %v2923 = vld [vmem:[%s2916 + $0x18] sm:$0xf]
        %v2924 = vld [vmem:[%s2916 + $0x1c] sm:$0xf]
        %v2925 = vld [vmem:[%s2916 + $0x20] sm:$0xf]
        %v2926 = vld [vmem:[%s2916 + $0x24] sm:$0xf]
        %v2927 = vld [vmem:[%s2916 + $0x28] sm:$0xf]
        %v2928 = vld [vmem:[%s2916 + $0x2c] sm:$0xf]
        %v2929 = vld [vmem:[%s2916 + $0x30] sm:$0xf]
        %v2930 = vld [vmem:[%s2916 + $0x34] sm:$0xf]
        %v2931 = vld [vmem:[%s2916 + $0x38] sm:$0xf]
        %v2932 = vld [vmem:[%s2916 + $0x3c] sm:$0xf]
        %v2949 = vunpack.c.l.b16 %v2917
        %v2950 = vunpack.c.l.b16 %v2918
        %v2951 = vunpack.c.l.b16 %v2919
        %v2952 = vunpack.c.l.b16 %v2920
        %v2953 = vunpack.c.l.b16 %v2921
        %v2954 = vunpack.c.l.b16 %v2922
        %v2955 = vunpack.c.l.b16 %v2923
        %v2956 = vunpack.c.l.b16 %v2924
        %v2957 = vunpack.c.l.b16 %v2925
        %v2958 = vunpack.c.l.b16 %v2926
        %v2959 = vunpack.c.l.b16 %v2927
        %v2960 = vunpack.c.l.b16 %v2928
        %v2961 = vunpack.c.l.b16 %v2929
        %v2962 = vunpack.c.l.b16 %v2930
        %v2963 = vunpack.c.l.b16 %v2931
        %v2964 = vunpack.c.l.b16 %v2932
        %v2965 = vpack.c.b16 %v2950, %v2949
        %v2966 = vpack.c.b16 %v2952, %v2951
        %v2967 = vpack.c.b16 %v2954, %v2953
        %v2968 = vpack.c.b16 %v2956, %v2955
        %v2969 = vpack.c.b16 %v2958, %v2957
        %v2970 = vpack.c.b16 %v2960, %v2959
        %v2971 = vpack.c.b16 %v2962, %v2961
        %v2972 = vpack.c.b16 %v2964, %v2963
        %2981 = vmatpush.bf16.msra.mxu0 %v2972
        %2982 = vmatpush.bf16.msra.mxu0 %v2971
        %2983 = vmatpush.bf16.msra.mxu0 %v2970
        %2984 = vmatpush.bf16.msra.mxu0 %v2969
        %2985 = vmatpush.bf16.msra.mxu0 %v2968
        %2986 = vmatpush.bf16.msra.mxu0 %v2967
        %2987 = vmatpush.bf16.msra.mxu0 %v2966
        %2988 = vmatpush.bf16.msra.mxu0 %v2965
        %2989 = vmatmul.bf16.gmra.mxu0 %v2820
        %v2990 = vpop.f32.mrf.mxu0
        %v2991 = vadd.f32 0.0, %v2990
        %v2992 = vpop.f32.mrf.mxu0
        %v2993 = vadd.f32 0.0, %v2992
        %2994 = vmatmul.bf16.gmra.mxu0 %v2821
        %v2995 = vpop.f32.mrf.mxu0
        %v2996 = vadd.f32 0.0, %v2995
        %v2997 = vpop.f32.mrf.mxu0
        %v2998 = vadd.f32 0.0, %v2997
        %2999 = vmatmul.bf16.gmra.mxu0 %v2822
        %v3000 = vpop.f32.mrf.mxu0
        %v3001 = vadd.f32 0.0, %v3000
        %v3002 = vpop.f32.mrf.mxu0
        %v3003 = vadd.f32 0.0, %v3002
        %3004 = vmatmul.bf16.gmra.mxu0 %v2823
        %v3005 = vpop.f32.mrf.mxu0
        %v3006 = vadd.f32 0.0, %v3005
        %v3007 = vpop.f32.mrf.mxu0
        %v3008 = vadd.f32 0.0, %v3007
        %3009 = vmatmul.bf16.gmra.mxu0 %v2824
        %v3010 = vpop.f32.mrf.mxu0
        %v3011 = vadd.f32 0.0, %v3010
        %v3012 = vpop.f32.mrf.mxu0
        %v3013 = vadd.f32 0.0, %v3012
        %3014 = vmatmul.bf16.gmra.mxu0 %v2825
        %v3015 = vpop.f32.mrf.mxu0
        %v3016 = vadd.f32 0.0, %v3015
        %v3017 = vpop.f32.mrf.mxu0
        %v3018 = vadd.f32 0.0, %v3017
        %3019 = vmatmul.bf16.gmra.mxu0 %v2826
        %v3020 = vpop.f32.mrf.mxu0
        %v3021 = vadd.f32 0.0, %v3020
        %v3022 = vpop.f32.mrf.mxu0
        %v3023 = vadd.f32 0.0, %v3022
        %3024 = vmatmul.bf16.gmra.mxu0 %v2827
        %v3025 = vpop.f32.mrf.mxu0
        %v3026 = vadd.f32 0.0, %v3025
        %v3027 = vpop.f32.mrf.mxu0
        %v3028 = vadd.f32 0.0, %v3027
        %3029 = vmatmul.bf16.gmra.mxu0 %v2828
        %v3030 = vpop.f32.mrf.mxu0
        %v3031 = vadd.f32 0.0, %v3030
        %v3032 = vpop.f32.mrf.mxu0
        %v3033 = vadd.f32 0.0, %v3032
        %3034 = vmatmul.bf16.gmra.mxu0 %v2829
        %v3035 = vpop.f32.mrf.mxu0
        %v3036 = vadd.f32 0.0, %v3035
        %v3037 = vpop.f32.mrf.mxu0
        %v3038 = vadd.f32 0.0, %v3037
        %3039 = vmatmul.bf16.gmra.mxu0 %v2830
        %v3040 = vpop.f32.mrf.mxu0
        %v3041 = vadd.f32 0.0, %v3040
        %v3042 = vpop.f32.mrf.mxu0
        %v3043 = vadd.f32 0.0, %v3042
        %3044 = vmatmul.bf16.gmra.mxu0 %v2831
        %v3045 = vpop.f32.mrf.mxu0
        %v3046 = vadd.f32 0.0, %v3045
        %v3047 = vpop.f32.mrf.mxu0
        %v3048 = vadd.f32 0.0, %v3047
        %3049 = vmatmul.bf16.gmra.mxu0 %v2832
        %v3050 = vpop.f32.mrf.mxu0
        %v3051 = vadd.f32 0.0, %v3050
        %v3052 = vpop.f32.mrf.mxu0
        %v3053 = vadd.f32 0.0, %v3052
        %3054 = vmatmul.bf16.gmra.mxu0 %v2833
        %v3055 = vpop.f32.mrf.mxu0
        %v3056 = vadd.f32 0.0, %v3055
        %v3057 = vpop.f32.mrf.mxu0
        %v3058 = vadd.f32 0.0, %v3057
        %3059 = vmatmul.bf16.gmra.mxu0 %v2834
        %v3060 = vpop.f32.mrf.mxu0
        %v3061 = vadd.f32 0.0, %v3060
        %v3062 = vpop.f32.mrf.mxu0
        %v3063 = vadd.f32 0.0, %v3062
        %3064 = vmatmul.bf16.gmra.mxu0 %v2835
        %v3065 = vpop.f32.mrf.mxu0
        %v3066 = vadd.f32 0.0, %v3065
        %v3067 = vpop.f32.mrf.mxu0
        %v3068 = vadd.f32 0.0, %v3067
        %3069 = vmatmul.bf16.gmra.mxu0 %v2836
        %v3070 = vpop.f32.mrf.mxu0
        %v3071 = vadd.f32 0.0, %v3070
        %v3072 = vpop.f32.mrf.mxu0
        %v3073 = vadd.f32 0.0, %v3072
        %3074 = vmatmul.bf16.gmra.mxu0 %v2837
        %v3075 = vpop.f32.mrf.mxu0
        %v3076 = vadd.f32 0.0, %v3075
        %v3077 = vpop.f32.mrf.mxu0
        %v3078 = vadd.f32 0.0, %v3077
        %3079 = vmatmul.bf16.gmra.mxu0 %v2838
        %v3080 = vpop.f32.mrf.mxu0
        %v3081 = vadd.f32 0.0, %v3080
        %v3082 = vpop.f32.mrf.mxu0
        %v3083 = vadd.f32 0.0, %v3082
        %3084 = vmatmul.bf16.gmra.mxu0 %v2839
        %v3085 = vpop.f32.mrf.mxu0
        %v3086 = vadd.f32 0.0, %v3085
        %v3087 = vpop.f32.mrf.mxu0
        %v3088 = vadd.f32 0.0, %v3087
        %3089 = vmatmul.bf16.gmra.mxu0 %v2840
        %v3090 = vpop.f32.mrf.mxu0
        %v3091 = vadd.f32 0.0, %v3090
        %v3092 = vpop.f32.mrf.mxu0
        %v3093 = vadd.f32 0.0, %v3092
        %3094 = vmatmul.bf16.gmra.mxu0 %v2841
        %v3095 = vpop.f32.mrf.mxu0
        %v3096 = vadd.f32 0.0, %v3095
        %v3097 = vpop.f32.mrf.mxu0
        %v3098 = vadd.f32 0.0, %v3097
        %3099 = vmatmul.bf16.gmra.mxu0 %v2842
        %v3100 = vpop.f32.mrf.mxu0
        %v3101 = vadd.f32 0.0, %v3100
        %v3102 = vpop.f32.mrf.mxu0
        %v3103 = vadd.f32 0.0, %v3102
        %3104 = vmatmul.bf16.gmra.mxu0 %v2843
        %v3105 = vpop.f32.mrf.mxu0
        %v3106 = vadd.f32 0.0, %v3105
        %v3107 = vpop.f32.mrf.mxu0
        %v3108 = vadd.f32 0.0, %v3107
        %3109 = vmatmul.bf16.gmra.mxu0 %v2844
        %v3110 = vpop.f32.mrf.mxu0
        %v3111 = vadd.f32 0.0, %v3110
        %v3112 = vpop.f32.mrf.mxu0
        %v3113 = vadd.f32 0.0, %v3112
        %3114 = vmatmul.bf16.gmra.mxu0 %v2845
        %v3115 = vpop.f32.mrf.mxu0
        %v3116 = vadd.f32 0.0, %v3115
        %v3117 = vpop.f32.mrf.mxu0
        %v3118 = vadd.f32 0.0, %v3117
        %3119 = vmatmul.bf16.gmra.mxu0 %v2846
        %v3120 = vpop.f32.mrf.mxu0
        %v3121 = vadd.f32 0.0, %v3120
        %v3122 = vpop.f32.mrf.mxu0
        %v3123 = vadd.f32 0.0, %v3122
        %3124 = vmatmul.bf16.gmra.mxu0 %v2847
        %v3125 = vpop.f32.mrf.mxu0
        %v3126 = vadd.f32 0.0, %v3125
        %v3127 = vpop.f32.mrf.mxu0
        %v3128 = vadd.f32 0.0, %v3127
        %3129 = vmatmul.bf16.gmra.mxu0 %v2848
        %v3130 = vpop.f32.mrf.mxu0
        %v3131 = vadd.f32 0.0, %v3130
        %v3132 = vpop.f32.mrf.mxu0
        %v3133 = vadd.f32 0.0, %v3132
        %3134 = vmatmul.bf16.gmra.mxu0 %v2849
        %v3135 = vpop.f32.mrf.mxu0
        %v3136 = vadd.f32 0.0, %v3135
        %v3137 = vpop.f32.mrf.mxu0
        %v3138 = vadd.f32 0.0, %v3137
        %3139 = vmatmul.bf16.gmra.mxu0 %v2850
        %v3140 = vpop.f32.mrf.mxu0
        %v3141 = vadd.f32 0.0, %v3140
        %v3142 = vpop.f32.mrf.mxu0
        %v3143 = vadd.f32 0.0, %v3142
        %3144 = vmatmul.bf16.gmra.mxu0 %v2851
        %v3145 = vpop.f32.mrf.mxu0
        %v3146 = vadd.f32 0.0, %v3145
        %v3147 = vpop.f32.mrf.mxu0
        %v3148 = vadd.f32 0.0, %v3147
        %3149 = vdwg.mxu0
        %v3150 = vadd.f32 %v2852, %v2991
        %v3151 = vadd.f32 %v2853, %v2993
        %v3152 = vadd.f32 %v2854, %v2996
        %v3153 = vadd.f32 %v2855, %v2998
        %v3154 = vadd.f32 %v2856, %v3001
        %v3155 = vadd.f32 %v2857, %v3003
        %v3156 = vadd.f32 %v2858, %v3006
        %v3157 = vadd.f32 %v2859, %v3008
        %v3158 = vadd.f32 %v2860, %v3011
        %v3159 = vadd.f32 %v2861, %v3013
        %v3160 = vadd.f32 %v2862, %v3016
        %v3161 = vadd.f32 %v2863, %v3018
        %v3162 = vadd.f32 %v2864, %v3021
        %v3163 = vadd.f32 %v2865, %v3023
        %v3164 = vadd.f32 %v2866, %v3026
        %v3165 = vadd.f32 %v2867, %v3028
        %v3166 = vadd.f32 %v2868, %v3031
        %v3167 = vadd.f32 %v2869, %v3033
        %v3168 = vadd.f32 %v2870, %v3036
        %v3169 = vadd.f32 %v2871, %v3038
        %v3170 = vadd.f32 %v2872, %v3041
        %v3171 = vadd.f32 %v2873, %v3043
        %v3172 = vadd.f32 %v2874, %v3046
        %v3173 = vadd.f32 %v2875, %v3048
        %v3174 = vadd.f32 %v2876, %v3051
        %v3175 = vadd.f32 %v2877, %v3053
        %v3176 = vadd.f32 %v2878, %v3056
        %v3177 = vadd.f32 %v2879, %v3058
        %v3178 = vadd.f32 %v2880, %v3061
        %v3179 = vadd.f32 %v2881, %v3063
        %v3180 = vadd.f32 %v2882, %v3066
        %v3181 = vadd.f32 %v2883, %v3068
        %v3182 = vadd.f32 %v2884, %v3071
        %v3183 = vadd.f32 %v2885, %v3073
        %v3184 = vadd.f32 %v2886, %v3076
        %v3185 = vadd.f32 %v2887, %v3078
        %v3186 = vadd.f32 %v2888, %v3081
        %v3187 = vadd.f32 %v2889, %v3083
        %v3188 = vadd.f32 %v2890, %v3086
        %v3189 = vadd.f32 %v2891, %v3088
        %v3190 = vadd.f32 %v2892, %v3091
        %v3191 = vadd.f32 %v2893, %v3093
        %v3192 = vadd.f32 %v2894, %v3096
        %v3193 = vadd.f32 %v2895, %v3098
        %v3194 = vadd.f32 %v2896, %v3101
        %v3195 = vadd.f32 %v2897, %v3103
        %v3196 = vadd.f32 %v2898, %v3106
        %v3197 = vadd.f32 %v2899, %v3108
        %v3198 = vadd.f32 %v2900, %v3111
        %v3199 = vadd.f32 %v2901, %v3113
        %v3200 = vadd.f32 %v2902, %v3116
        %v3201 = vadd.f32 %v2903, %v3118
        %v3202 = vadd.f32 %v2904, %v3121
        %v3203 = vadd.f32 %v2905, %v3123
        %v3204 = vadd.f32 %v2906, %v3126
        %v3205 = vadd.f32 %v2907, %v3128
        %v3206 = vadd.f32 %v2908, %v3131
        %v3207 = vadd.f32 %v2909, %v3133
        %v3208 = vadd.f32 %v2910, %v3136
        %v3209 = vadd.f32 %v2911, %v3138
        %v3210 = vadd.f32 %v2912, %v3141
        %v3211 = vadd.f32 %v2913, %v3143
        %v3212 = vadd.f32 %v2914, %v3146
        %v3213 = vadd.f32 %v2915, %v3148
        %3214 = vst [vmem:[#allocation2] sm:$0xff] %v3150
        %3215 = vst [vmem:[#allocation2 + $0x8] sm:$0xff] %v3151
        %3216 = vst [vmem:[#allocation2 + $0x10] sm:$0xff] %v3152
        %3217 = vst [vmem:[#allocation2 + $0x18] sm:$0xff] %v3153
        %3218 = vst [vmem:[#allocation2 + $0x20] sm:$0xff] %v3154
        %3219 = vst [vmem:[#allocation2 + $0x28] sm:$0xff] %v3155
        %3220 = vst [vmem:[#allocation2 + $0x30] sm:$0xff] %v3156
        %3221 = vst [vmem:[#allocation2 + $0x38] sm:$0xff] %v3157
        %3222 = vst [vmem:[#allocation2 + $0x40] sm:$0xff] %v3158
        %3223 = vst [vmem:[#allocation2 + $0x48] sm:$0xff] %v3159
        %3224 = vst [vmem:[#allocation2 + $0x50] sm:$0xff] %v3160
        %3225 = vst [vmem:[#allocation2 + $0x58] sm:$0xff] %v3161
        %3226 = vst [vmem:[#allocation2 + $0x60] sm:$0xff] %v3162
        %3227 = vst [vmem:[#allocation2 + $0x68] sm:$0xff] %v3163
        %3228 = vst [vmem:[#allocation2 + $0x70] sm:$0xff] %v3164
        %3229 = vst [vmem:[#allocation2 + $0x78] sm:$0xff] %v3165
        %3230 = vst [vmem:[#allocation2 + $0x80] sm:$0xff] %v3166
        %3231 = vst [vmem:[#allocation2 + $0x88] sm:$0xff] %v3167
        %3232 = vst [vmem:[#allocation2 + $0x90] sm:$0xff] %v3168
        %3233 = vst [vmem:[#allocation2 + $0x98] sm:$0xff] %v3169
        %3234 = vst [vmem:[#allocation2 + $0xa0] sm:$0xff] %v3170
        %3235 = vst [vmem:[#allocation2 + $0xa8] sm:$0xff] %v3171
        %3236 = vst [vmem:[#allocation2 + $0xb0] sm:$0xff] %v3172
        %3237 = vst [vmem:[#allocation2 + $0xb8] sm:$0xff] %v3173
        %3238 = vst [vmem:[#allocation2 + $0xc0] sm:$0xff] %v3174
        %3239 = vst [vmem:[#allocation2 + $0xc8] sm:$0xff] %v3175
        %3240 = vst [vmem:[#allocation2 + $0xd0] sm:$0xff] %v3176
        %3241 = vst [vmem:[#allocation2 + $0xd8] sm:$0xff] %v3177
        %3242 = vst [vmem:[#allocation2 + $0xe0] sm:$0xff] %v3178
        %3243 = vst [vmem:[#allocation2 + $0xe8] sm:$0xff] %v3179
        %3244 = vst [vmem:[#allocation2 + $0xf0] sm:$0xff] %v3180
        %3245 = vst [vmem:[#allocation2 + $0xf8] sm:$0xff] %v3181
        %3246 = vst [vmem:[#allocation2 + $0x100] sm:$0xff] %v3182
        %3247 = vst [vmem:[#allocation2 + $0x108] sm:$0xff] %v3183
        %3248 = vst [vmem:[#allocation2 + $0x110] sm:$0xff] %v3184
        %3249 = vst [vmem:[#allocation2 + $0x118] sm:$0xff] %v3185
        %3250 = vst [vmem:[#allocation2 + $0x120] sm:$0xff] %v3186
        %3251 = vst [vmem:[#allocation2 + $0x128] sm:$0xff] %v3187
        %3252 = vst [vmem:[#allocation2 + $0x130] sm:$0xff] %v3188
        %3253 = vst [vmem:[#allocation2 + $0x138] sm:$0xff] %v3189
        %3254 = vst [vmem:[#allocation2 + $0x140] sm:$0xff] %v3190
        %3255 = vst [vmem:[#allocation2 + $0x148] sm:$0xff] %v3191
        %3256 = vst [vmem:[#allocation2 + $0x150] sm:$0xff] %v3192
        %3257 = vst [vmem:[#allocation2 + $0x158] sm:$0xff] %v3193
        %3258 = vst [vmem:[#allocation2 + $0x160] sm:$0xff] %v3194
        %3259 = vst [vmem:[#allocation2 + $0x168] sm:$0xff] %v3195
        %3260 = vst [vmem:[#allocation2 + $0x170] sm:$0xff] %v3196
        %3261 = vst [vmem:[#allocation2 + $0x178] sm:$0xff] %v3197
        %3262 = vst [vmem:[#allocation2 + $0x180] sm:$0xff] %v3198
        %3263 = vst [vmem:[#allocation2 + $0x188] sm:$0xff] %v3199
        %3264 = vst [vmem:[#allocation2 + $0x190] sm:$0xff] %v3200
        %3265 = vst [vmem:[#allocation2 + $0x198] sm:$0xff] %v3201
        %3266 = vst [vmem:[#allocation2 + $0x1a0] sm:$0xff] %v3202
        %3267 = vst [vmem:[#allocation2 + $0x1a8] sm:$0xff] %v3203
        %3268 = vst [vmem:[#allocation2 + $0x1b0] sm:$0xff] %v3204
        %3269 = vst [vmem:[#allocation2 + $0x1b8] sm:$0xff] %v3205
        %3270 = vst [vmem:[#allocation2 + $0x1c0] sm:$0xff] %v3206
        %3271 = vst [vmem:[#allocation2 + $0x1c8] sm:$0xff] %v3207
        %3272 = vst [vmem:[#allocation2 + $0x1d0] sm:$0xff] %v3208
        %3273 = vst [vmem:[#allocation2 + $0x1d8] sm:$0xff] %v3209
        %3274 = vst [vmem:[#allocation2 + $0x1e0] sm:$0xff] %v3210
        %3275 = vst [vmem:[#allocation2 + $0x1e8] sm:$0xff] %v3211
        %3276 = vst [vmem:[#allocation2 + $0x1f0] sm:$0xff] %v3212
        %3277 = vst [vmem:[#allocation2 + $0x1f8] sm:$0xff] %v3213
        %v3278 = vld [vmem:[%s2691] sm:$0xf]
        %v3279 = vld [vmem:[%s2691 + $0x4] sm:$0xf]
        %v3280 = vld [vmem:[%s2691 + $0x8] sm:$0xf]
        %v3281 = vld [vmem:[%s2691 + $0xc] sm:$0xf]
        %v3282 = vld [vmem:[%s2691 + $0x10] sm:$0x1]
        %v3283 = vld [vmem:[%s2691 + $0x14] sm:$0xf]
        %v3284 = vld [vmem:[%s2691 + $0x18] sm:$0xf]
        %v3285 = vld [vmem:[%s2691 + $0x1c] sm:$0xf]
        %v3286 = vld [vmem:[%s2691 + $0x20] sm:$0xf]
        %v3287 = vld [vmem:[%s2691 + $0x24] sm:$0x1]
        %v3288 = vld [vmem:[%s2691 + $0x28] sm:$0xf]
        %v3289 = vld [vmem:[%s2691 + $0x2c] sm:$0xf]
        %v3290 = vld [vmem:[%s2691 + $0x30] sm:$0xf]
        %v3291 = vld [vmem:[%s2691 + $0x34] sm:$0xf]
        %v3292 = vld [vmem:[%s2691 + $0x38] sm:$0x1]
        %v3293 = vld [vmem:[%s2691 + $0x3c] sm:$0xf]
        %v3294 = vld [vmem:[%s2691 + $0x40] sm:$0xf]
        %v3295 = vld [vmem:[%s2691 + $0x44] sm:$0xf]
        %v3296 = vld [vmem:[%s2691 + $0x48] sm:$0xf]
        %v3297 = vld [vmem:[%s2691 + $0x4c] sm:$0x1]
        %v3298 = vld [vmem:[%s2691 + $0x50] sm:$0xf]
        %v3299 = vld [vmem:[%s2691 + $0x54] sm:$0xf]
        %v3300 = vld [vmem:[%s2691 + $0x58] sm:$0xf]
        %v3301 = vld [vmem:[%s2691 + $0x5c] sm:$0xf]
        %v3302 = vld [vmem:[%s2691 + $0x60] sm:$0x1]
        %v3303 = vld [vmem:[%s2691 + $0x64] sm:$0xf]
        %v3304 = vld [vmem:[%s2691 + $0x68] sm:$0xf]
        %v3305 = vld [vmem:[%s2691 + $0x6c] sm:$0xf]
        %v3306 = vld [vmem:[%s2691 + $0x70] sm:$0xf]
        %v3307 = vld [vmem:[%s2691 + $0x74] sm:$0x1]
        %v3308 = vld [vmem:[%s2691 + $0x78] sm:$0xf]
        %v3309 = vld [vmem:[%s2691 + $0x7c] sm:$0xf]
        %v3310 = vld [vmem:[%s2691 + $0x80] sm:$0xf]
        %v3311 = vld [vmem:[%s2691 + $0x84] sm:$0xf]
        %v3312 = vld [vmem:[%s2691 + $0x88] sm:$0x1]
        %v3313 = vld [vmem:[%s2691 + $0x8c] sm:$0xf]
        %v3314 = vld [vmem:[%s2691 + $0x90] sm:$0xf]
        %v3315 = vld [vmem:[%s2691 + $0x94] sm:$0xf]
        %v3316 = vld [vmem:[%s2691 + $0x98] sm:$0xf]
        %v3317 = vld [vmem:[%s2691 + $0x9c] sm:$0x1]
        %v3318 = vld [vmem:[%s2691 + $0xa0] sm:$0xf]
        %v3319 = vld [vmem:[%s2691 + $0xa4] sm:$0xf]
        %v3320 = vld [vmem:[%s2691 + $0xa8] sm:$0xf]
        %v3321 = vld [vmem:[%s2691 + $0xac] sm:$0xf]
        %v3322 = vld [vmem:[%s2691 + $0xb0] sm:$0x1]
        %v3323 = vld [vmem:[%s2691 + $0xb4] sm:$0xf]
        %v3324 = vld [vmem:[%s2691 + $0xb8] sm:$0xf]
        %v3325 = vld [vmem:[%s2691 + $0xbc] sm:$0xf]
        %v3326 = vld [vmem:[%s2691 + $0xc0] sm:$0xf]
        %v3327 = vld [vmem:[%s2691 + $0xc4] sm:$0x1]
        %v3328 = vld [vmem:[%s2691 + $0xc8] sm:$0xf]
        %v3329 = vld [vmem:[%s2691 + $0xcc] sm:$0xf]
        %v3330 = vld [vmem:[%s2691 + $0xd0] sm:$0xf]
        %v3331 = vld [vmem:[%s2691 + $0xd4] sm:$0xf]
        %v3332 = vld [vmem:[%s2691 + $0xd8] sm:$0x1]
        %v3333 = vld [vmem:[%s2691 + $0xdc] sm:$0xf]
        %v3334 = vld [vmem:[%s2691 + $0xe0] sm:$0xf]
        %v3335 = vld [vmem:[%s2691 + $0xe4] sm:$0xf]
        %v3336 = vld [vmem:[%s2691 + $0xe8] sm:$0xf]
        %v3337 = vld [vmem:[%s2691 + $0xec] sm:$0x1]
        %v3338 = vld [vmem:[%s2691 + $0xf0] sm:$0xf]
        %v3339 = vld [vmem:[%s2691 + $0xf4] sm:$0xf]
        %v3340 = vld [vmem:[%s2691 + $0xf8] sm:$0xf]
        %v3341 = vld [vmem:[%s2691 + $0xfc] sm:$0xf]
        %v3342 = vld [vmem:[%s2691 + $0x100] sm:$0x1]
        %v3343 = vld [vmem:[%s2691 + $0x104] sm:$0xf]
        %v3344 = vld [vmem:[%s2691 + $0x108] sm:$0xf]
        %v3345 = vld [vmem:[%s2691 + $0x10c] sm:$0xf]
        %v3346 = vld [vmem:[%s2691 + $0x110] sm:$0xf]
        %v3347 = vld [vmem:[%s2691 + $0x114] sm:$0x1]
        %v3348 = vld [vmem:[%s2691 + $0x118] sm:$0xf]
        %v3349 = vld [vmem:[%s2691 + $0x11c] sm:$0xf]
        %v3350 = vld [vmem:[%s2691 + $0x120] sm:$0xf]
        %v3351 = vld [vmem:[%s2691 + $0x124] sm:$0xf]
        %v3352 = vld [vmem:[%s2691 + $0x128] sm:$0x1]
        %v3353 = vld [vmem:[%s2691 + $0x12c] sm:$0xf]
        %v3354 = vld [vmem:[%s2691 + $0x130] sm:$0xf]
        %v3355 = vld [vmem:[%s2691 + $0x134] sm:$0xf]
        %v3356 = vld [vmem:[%s2691 + $0x138] sm:$0xf]
        %v3357 = vld [vmem:[%s2691 + $0x13c] sm:$0x1]
        %v3358 = vunpack.c.l.bf16 %v3278
        %v3359 = vunpack.c.l.bf16 %v3279
        %v3360 = vunpack.c.l.bf16 %v3280
        %v3361 = vunpack.c.l.bf16 %v3281
        %v3362 = vunpack.c.l.bf16 %v3282
        %v3363 = vunpack.c.l.bf16 %v3283
        %v3364 = vunpack.c.l.bf16 %v3284
        %v3365 = vunpack.c.l.bf16 %v3285
        %v3366 = vunpack.c.l.bf16 %v3286
        %v3367 = vunpack.c.l.bf16 %v3287
        %v3368 = vunpack.c.l.bf16 %v3288
        %v3369 = vunpack.c.l.bf16 %v3289
        %v3370 = vunpack.c.l.bf16 %v3290
        %v3371 = vunpack.c.l.bf16 %v3291
        %v3372 = vunpack.c.l.bf16 %v3292
        %v3373 = vunpack.c.l.bf16 %v3293
        %v3374 = vunpack.c.l.bf16 %v3294
        %v3375 = vunpack.c.l.bf16 %v3295
        %v3376 = vunpack.c.l.bf16 %v3296
        %v3377 = vunpack.c.l.bf16 %v3297
        %v3378 = vunpack.c.l.bf16 %v3298
        %v3379 = vunpack.c.l.bf16 %v3299
        %v3380 = vunpack.c.l.bf16 %v3300
        %v3381 = vunpack.c.l.bf16 %v3301
        %v3382 = vunpack.c.l.bf16 %v3302
        %v3383 = vunpack.c.l.bf16 %v3303
        %v3384 = vunpack.c.l.bf16 %v3304
        %v3385 = vunpack.c.l.bf16 %v3305
        %v3386 = vunpack.c.l.bf16 %v3306
        %v3387 = vunpack.c.l.bf16 %v3307
        %v3388 = vunpack.c.l.bf16 %v3308
        %v3389 = vunpack.c.l.bf16 %v3309
        %v3390 = vunpack.c.l.bf16 %v3310
        %v3391 = vunpack.c.l.bf16 %v3311
        %v3392 = vunpack.c.l.bf16 %v3312
        %v3393 = vunpack.c.l.bf16 %v3313
        %v3394 = vunpack.c.l.bf16 %v3314
        %v3395 = vunpack.c.l.bf16 %v3315
        %v3396 = vunpack.c.l.bf16 %v3316
        %v3397 = vunpack.c.l.bf16 %v3317
        %v3398 = vunpack.c.l.bf16 %v3318
        %v3399 = vunpack.c.l.bf16 %v3319
        %v3400 = vunpack.c.l.bf16 %v3320
        %v3401 = vunpack.c.l.bf16 %v3321
        %v3402 = vunpack.c.l.bf16 %v3322
        %v3403 = vunpack.c.l.bf16 %v3323
        %v3404 = vunpack.c.l.bf16 %v3324
        %v3405 = vunpack.c.l.bf16 %v3325
        %v3406 = vunpack.c.l.bf16 %v3326
        %v3407 = vunpack.c.l.bf16 %v3327
        %v3408 = vunpack.c.l.bf16 %v3328
        %v3409 = vunpack.c.l.bf16 %v3329
        %v3410 = vunpack.c.l.bf16 %v3330
        %v3411 = vunpack.c.l.bf16 %v3331
        %v3412 = vunpack.c.l.bf16 %v3332
        %v3413 = vunpack.c.l.bf16 %v3333
        %v3414 = vunpack.c.l.bf16 %v3334
        %v3415 = vunpack.c.l.bf16 %v3335
        %v3416 = vunpack.c.l.bf16 %v3336
        %v3417 = vunpack.c.l.bf16 %v3337
        %v3418 = vunpack.c.l.bf16 %v3338
        %v3419 = vunpack.c.l.bf16 %v3339
        %v3420 = vunpack.c.l.bf16 %v3340
        %v3421 = vunpack.c.l.bf16 %v3341
        %v3422 = vunpack.c.l.bf16 %v3342
        %v3423 = vunpack.c.l.bf16 %v3343
        %v3424 = vunpack.c.l.bf16 %v3344
        %v3425 = vunpack.c.l.bf16 %v3345
        %v3426 = vunpack.c.l.bf16 %v3346
        %v3427 = vunpack.c.l.bf16 %v3347
        %v3428 = vunpack.c.l.bf16 %v3348
        %v3429 = vunpack.c.l.bf16 %v3349
        %v3430 = vunpack.c.l.bf16 %v3350
        %v3431 = vunpack.c.l.bf16 %v3351
        %v3432 = vunpack.c.l.bf16 %v3352
        %v3433 = vunpack.c.l.bf16 %v3353
        %v3434 = vunpack.c.l.bf16 %v3354
        %v3435 = vunpack.c.l.bf16 %v3355
        %v3436 = vunpack.c.l.bf16 %v3356
        %v3437 = vunpack.c.l.bf16 %v3357
        %v3518 = vrot.slane %v3358, 1
        %v3519 = vrot.slane %v3359, 1
        %v3520 = vsel %vm1114, %v3518, %v3519
        %v3521 = vrot.slane %v3360, 1
        %v3522 = vsel %vm1114, %v3519, %v3521
        %v3523 = vrot.slane %v3361, 1
        %v3524 = vsel %vm1114, %v3521, %v3523
        %v3525 = vrot.slane %v3362, 1
        %v3526 = vsel %vm1114, %v3523, %v3525
        %v3527 = vrot.slane %v3363, 1
        %v3528 = vrot.slane %v3364, 1
        %v3529 = vsel %vm1114, %v3527, %v3528
        %v3530 = vrot.slane %v3365, 1
        %v3531 = vsel %vm1114, %v3528, %v3530
        %v3532 = vrot.slane %v3366, 1
        %v3533 = vsel %vm1114, %v3530, %v3532
        %v3534 = vrot.slane %v3367, 1
        %v3535 = vsel %vm1114, %v3532, %v3534
        %v3536 = vrot.slane %v3368, 1
        %v3537 = vrot.slane %v3369, 1
        %v3538 = vsel %vm1114, %v3536, %v3537
        %v3539 = vrot.slane %v3370, 1
        %v3540 = vsel %vm1114, %v3537, %v3539
        %v3541 = vrot.slane %v3371, 1
        %v3542 = vsel %vm1114, %v3539, %v3541
        %v3543 = vrot.slane %v3372, 1
        %v3544 = vsel %vm1114, %v3541, %v3543
        %v3545 = vrot.slane %v3373, 1
        %v3546 = vrot.slane %v3374, 1
        %v3547 = vsel %vm1114, %v3545, %v3546
        %v3548 = vrot.slane %v3375, 1
        %v3549 = vsel %vm1114, %v3546, %v3548
        %v3550 = vrot.slane %v3376, 1
        %v3551 = vsel %vm1114, %v3548, %v3550
        %v3552 = vrot.slane %v3377, 1
        %v3553 = vsel %vm1114, %v3550, %v3552
        %v3554 = vrot.slane %v3378, 1
        %v3555 = vrot.slane %v3379, 1
        %v3556 = vsel %vm1114, %v3554, %v3555
        %v3557 = vrot.slane %v3380, 1
        %v3558 = vsel %vm1114, %v3555, %v3557
        %v3559 = vrot.slane %v3381, 1
        %v3560 = vsel %vm1114, %v3557, %v3559
        %v3561 = vrot.slane %v3382, 1
        %v3562 = vsel %vm1114, %v3559, %v3561
        %v3563 = vrot.slane %v3383, 1
        %v3564 = vrot.slane %v3384, 1
        %v3565 = vsel %vm1114, %v3563, %v3564
        %v3566 = vrot.slane %v3385, 1
        %v3567 = vsel %vm1114, %v3564, %v3566
        %v3568 = vrot.slane %v3386, 1
        %v3569 = vsel %vm1114, %v3566, %v3568
        %v3570 = vrot.slane %v3387, 1
        %v3571 = vsel %vm1114, %v3568, %v3570
        %v3572 = vrot.slane %v3388, 1
        %v3573 = vrot.slane %v3389, 1
        %v3574 = vsel %vm1114, %v3572, %v3573
        %v3575 = vrot.slane %v3390, 1
        %v3576 = vsel %vm1114, %v3573, %v3575
        %v3577 = vrot.slane %v3391, 1
        %v3578 = vsel %vm1114, %v3575, %v3577
        %v3579 = vrot.slane %v3392, 1
        %v3580 = vsel %vm1114, %v3577, %v3579
        %v3581 = vrot.slane %v3393, 1
        %v3582 = vrot.slane %v3394, 1
        %v3583 = vsel %vm1114, %v3581, %v3582
        %v3584 = vrot.slane %v3395, 1
        %v3585 = vsel %vm1114, %v3582, %v3584
        %v3586 = vrot.slane %v3396, 1
        %v3587 = vsel %vm1114, %v3584, %v3586
        %v3588 = vrot.slane %v3397, 1
        %v3589 = vsel %vm1114, %v3586, %v3588
        %v3590 = vrot.slane %v3398, 1
        %v3591 = vrot.slane %v3399, 1
        %v3592 = vsel %vm1114, %v3590, %v3591
        %v3593 = vrot.slane %v3400, 1
        %v3594 = vsel %vm1114, %v3591, %v3593
        %v3595 = vrot.slane %v3401, 1
        %v3596 = vsel %vm1114, %v3593, %v3595
        %v3597 = vrot.slane %v3402, 1
        %v3598 = vsel %vm1114, %v3595, %v3597
        %v3599 = vrot.slane %v3403, 1
        %v3600 = vrot.slane %v3404, 1
        %v3601 = vsel %vm1114, %v3599, %v3600
        %v3602 = vrot.slane %v3405, 1
        %v3603 = vsel %vm1114, %v3600, %v3602
        %v3604 = vrot.slane %v3406, 1
        %v3605 = vsel %vm1114, %v3602, %v3604
        %v3606 = vrot.slane %v3407, 1
        %v3607 = vsel %vm1114, %v3604, %v3606
        %v3608 = vrot.slane %v3408, 1
        %v3609 = vrot.slane %v3409, 1
        %v3610 = vsel %vm1114, %v3608, %v3609
        %v3611 = vrot.slane %v3410, 1
        %v3612 = vsel %vm1114, %v3609, %v3611
        %v3613 = vrot.slane %v3411, 1
        %v3614 = vsel %vm1114, %v3611, %v3613
        %v3615 = vrot.slane %v3412, 1
        %v3616 = vsel %vm1114, %v3613, %v3615
        %v3617 = vrot.slane %v3413, 1
        %v3618 = vrot.slane %v3414, 1
        %v3619 = vsel %vm1114, %v3617, %v3618
        %v3620 = vrot.slane %v3415, 1
        %v3621 = vsel %vm1114, %v3618, %v3620
        %v3622 = vrot.slane %v3416, 1
        %v3623 = vsel %vm1114, %v3620, %v3622
        %v3624 = vrot.slane %v3417, 1
        %v3625 = vsel %vm1114, %v3622, %v3624
        %v3626 = vrot.slane %v3418, 1
        %v3627 = vrot.slane %v3419, 1
        %v3628 = vsel %vm1114, %v3626, %v3627
        %v3629 = vrot.slane %v3420, 1
        %v3630 = vsel %vm1114, %v3627, %v3629
        %v3631 = vrot.slane %v3421, 1
        %v3632 = vsel %vm1114, %v3629, %v3631
        %v3633 = vrot.slane %v3422, 1
        %v3634 = vsel %vm1114, %v3631, %v3633
        %v3635 = vrot.slane %v3423, 1
        %v3636 = vrot.slane %v3424, 1
        %v3637 = vsel %vm1114, %v3635, %v3636
        %v3638 = vrot.slane %v3425, 1
        %v3639 = vsel %vm1114, %v3636, %v3638
        %v3640 = vrot.slane %v3426, 1
        %v3641 = vsel %vm1114, %v3638, %v3640
        %v3642 = vrot.slane %v3427, 1
        %v3643 = vsel %vm1114, %v3640, %v3642
        %v3644 = vrot.slane %v3428, 1
        %v3645 = vrot.slane %v3429, 1
        %v3646 = vsel %vm1114, %v3644, %v3645
        %v3647 = vrot.slane %v3430, 1
        %v3648 = vsel %vm1114, %v3645, %v3647
        %v3649 = vrot.slane %v3431, 1
        %v3650 = vsel %vm1114, %v3647, %v3649
        %v3651 = vrot.slane %v3432, 1
        %v3652 = vsel %vm1114, %v3649, %v3651
        %v3653 = vrot.slane %v3433, 1
        %v3654 = vrot.slane %v3434, 1
        %v3655 = vsel %vm1114, %v3653, %v3654
        %v3656 = vrot.slane %v3435, 1
        %v3657 = vsel %vm1114, %v3654, %v3656
        %v3658 = vrot.slane %v3436, 1
        %v3659 = vsel %vm1114, %v3656, %v3658
        %v3660 = vrot.slane %v3437, 1
        %v3661 = vsel %vm1114, %v3658, %v3660
        %v3726 = vpack.c.bf16 %v3522, %v3520
        %v3727 = vpack.c.bf16 %v3526, %v3524
        %v3728 = vpack.c.bf16 %v3531, %v3529
        %v3729 = vpack.c.bf16 %v3535, %v3533
        %v3730 = vpack.c.bf16 %v3540, %v3538
        %v3731 = vpack.c.bf16 %v3544, %v3542
        %v3732 = vpack.c.bf16 %v3549, %v3547
        %v3733 = vpack.c.bf16 %v3553, %v3551
        %v3734 = vpack.c.bf16 %v3558, %v3556
        %v3735 = vpack.c.bf16 %v3562, %v3560
        %v3736 = vpack.c.bf16 %v3567, %v3565
        %v3737 = vpack.c.bf16 %v3571, %v3569
        %v3738 = vpack.c.bf16 %v3576, %v3574
        %v3739 = vpack.c.bf16 %v3580, %v3578
        %v3740 = vpack.c.bf16 %v3585, %v3583
        %v3741 = vpack.c.bf16 %v3589, %v3587
        %v3742 = vpack.c.bf16 %v3594, %v3592
        %v3743 = vpack.c.bf16 %v3598, %v3596
        %v3744 = vpack.c.bf16 %v3603, %v3601
        %v3745 = vpack.c.bf16 %v3607, %v3605
        %v3746 = vpack.c.bf16 %v3612, %v3610
        %v3747 = vpack.c.bf16 %v3616, %v3614
        %v3748 = vpack.c.bf16 %v3621, %v3619
        %v3749 = vpack.c.bf16 %v3625, %v3623
        %v3750 = vpack.c.bf16 %v3630, %v3628
        %v3751 = vpack.c.bf16 %v3634, %v3632
        %v3752 = vpack.c.bf16 %v3639, %v3637
        %v3753 = vpack.c.bf16 %v3643, %v3641
        %v3754 = vpack.c.bf16 %v3648, %v3646
        %v3755 = vpack.c.bf16 %v3652, %v3650
        %v3756 = vpack.c.bf16 %v3657, %v3655
        %v3757 = vpack.c.bf16 %v3661, %v3659
        %v3758 = vld [vmem:[#allocation2] sm:$0xff]
        %v3759 = vld [vmem:[#allocation2 + $0x8] sm:$0xff]
        %v3760 = vld [vmem:[#allocation2 + $0x10] sm:$0xff]
        %v3761 = vld [vmem:[#allocation2 + $0x18] sm:$0xff]
        %v3762 = vld [vmem:[#allocation2 + $0x20] sm:$0xff]
        %v3763 = vld [vmem:[#allocation2 + $0x28] sm:$0xff]
        %v3764 = vld [vmem:[#allocation2 + $0x30] sm:$0xff]
        %v3765 = vld [vmem:[#allocation2 + $0x38] sm:$0xff]
        %v3766 = vld [vmem:[#allocation2 + $0x40] sm:$0xff]
        %v3767 = vld [vmem:[#allocation2 + $0x48] sm:$0xff]
        %v3768 = vld [vmem:[#allocation2 + $0x50] sm:$0xff]
        %v3769 = vld [vmem:[#allocation2 + $0x58] sm:$0xff]
        %v3770 = vld [vmem:[#allocation2 + $0x60] sm:$0xff]
        %v3771 = vld [vmem:[#allocation2 + $0x68] sm:$0xff]
        %v3772 = vld [vmem:[#allocation2 + $0x70] sm:$0xff]
        %v3773 = vld [vmem:[#allocation2 + $0x78] sm:$0xff]
        %v3774 = vld [vmem:[#allocation2 + $0x80] sm:$0xff]
        %v3775 = vld [vmem:[#allocation2 + $0x88] sm:$0xff]
        %v3776 = vld [vmem:[#allocation2 + $0x90] sm:$0xff]
        %v3777 = vld [vmem:[#allocation2 + $0x98] sm:$0xff]
        %v3778 = vld [vmem:[#allocation2 + $0xa0] sm:$0xff]
        %v3779 = vld [vmem:[#allocation2 + $0xa8] sm:$0xff]
        %v3780 = vld [vmem:[#allocation2 + $0xb0] sm:$0xff]
        %v3781 = vld [vmem:[#allocation2 + $0xb8] sm:$0xff]
        %v3782 = vld [vmem:[#allocation2 + $0xc0] sm:$0xff]
        %v3783 = vld [vmem:[#allocation2 + $0xc8] sm:$0xff]
        %v3784 = vld [vmem:[#allocation2 + $0xd0] sm:$0xff]
        %v3785 = vld [vmem:[#allocation2 + $0xd8] sm:$0xff]
        %v3786 = vld [vmem:[#allocation2 + $0xe0] sm:$0xff]
        %v3787 = vld [vmem:[#allocation2 + $0xe8] sm:$0xff]
        %v3788 = vld [vmem:[#allocation2 + $0xf0] sm:$0xff]
        %v3789 = vld [vmem:[#allocation2 + $0xf8] sm:$0xff]
        %v3790 = vld [vmem:[#allocation2 + $0x100] sm:$0xff]
        %v3791 = vld [vmem:[#allocation2 + $0x108] sm:$0xff]
        %v3792 = vld [vmem:[#allocation2 + $0x110] sm:$0xff]
        %v3793 = vld [vmem:[#allocation2 + $0x118] sm:$0xff]
        %v3794 = vld [vmem:[#allocation2 + $0x120] sm:$0xff]
        %v3795 = vld [vmem:[#allocation2 + $0x128] sm:$0xff]
        %v3796 = vld [vmem:[#allocation2 + $0x130] sm:$0xff]
        %v3797 = vld [vmem:[#allocation2 + $0x138] sm:$0xff]
        %v3798 = vld [vmem:[#allocation2 + $0x140] sm:$0xff]
        %v3799 = vld [vmem:[#allocation2 + $0x148] sm:$0xff]
        %v3800 = vld [vmem:[#allocation2 + $0x150] sm:$0xff]
        %v3801 = vld [vmem:[#allocation2 + $0x158] sm:$0xff]
        %v3802 = vld [vmem:[#allocation2 + $0x160] sm:$0xff]
        %v3803 = vld [vmem:[#allocation2 + $0x168] sm:$0xff]
        %v3804 = vld [vmem:[#allocation2 + $0x170] sm:$0xff]
        %v3805 = vld [vmem:[#allocation2 + $0x178] sm:$0xff]
        %v3806 = vld [vmem:[#allocation2 + $0x180] sm:$0xff]
        %v3807 = vld [vmem:[#allocation2 + $0x188] sm:$0xff]
        %v3808 = vld [vmem:[#allocation2 + $0x190] sm:$0xff]
        %v3809 = vld [vmem:[#allocation2 + $0x198] sm:$0xff]
        %v3810 = vld [vmem:[#allocation2 + $0x1a0] sm:$0xff]
        %v3811 = vld [vmem:[#allocation2 + $0x1a8] sm:$0xff]
        %v3812 = vld [vmem:[#allocation2 + $0x1b0] sm:$0xff]
        %v3813 = vld [vmem:[#allocation2 + $0x1b8] sm:$0xff]
        %v3814 = vld [vmem:[#allocation2 + $0x1c0] sm:$0xff]
        %v3815 = vld [vmem:[#allocation2 + $0x1c8] sm:$0xff]
        %v3816 = vld [vmem:[#allocation2 + $0x1d0] sm:$0xff]
        %v3817 = vld [vmem:[#allocation2 + $0x1d8] sm:$0xff]
        %v3818 = vld [vmem:[#allocation2 + $0x1e0] sm:$0xff]
        %v3819 = vld [vmem:[#allocation2 + $0x1e8] sm:$0xff]
        %v3820 = vld [vmem:[#allocation2 + $0x1f0] sm:$0xff]
        %v3821 = vld [vmem:[#allocation2 + $0x1f8] sm:$0xff]
        %s3822 = scalar_lea.vmem %s214, 256
        %v3823 = vld [vmem:[%s3822] sm:$0xf]
        %v3824 = vld [vmem:[%s3822 + $0x4] sm:$0xf]
        %v3825 = vld [vmem:[%s3822 + $0x8] sm:$0xf]
        %v3826 = vld [vmem:[%s3822 + $0xc] sm:$0xf]
        %v3827 = vld [vmem:[%s3822 + $0x10] sm:$0xf]
        %v3828 = vld [vmem:[%s3822 + $0x14] sm:$0xf]
        %v3829 = vld [vmem:[%s3822 + $0x18] sm:$0xf]
        %v3830 = vld [vmem:[%s3822 + $0x1c] sm:$0xf]
        %v3831 = vld [vmem:[%s3822 + $0x20] sm:$0xf]
        %v3832 = vld [vmem:[%s3822 + $0x24] sm:$0xf]
        %v3833 = vld [vmem:[%s3822 + $0x28] sm:$0xf]
        %v3834 = vld [vmem:[%s3822 + $0x2c] sm:$0xf]
        %v3835 = vld [vmem:[%s3822 + $0x30] sm:$0xf]
        %v3836 = vld [vmem:[%s3822 + $0x34] sm:$0xf]
        %v3837 = vld [vmem:[%s3822 + $0x38] sm:$0xf]
        %v3838 = vld [vmem:[%s3822 + $0x3c] sm:$0xf]
        %v3855 = vunpack.c.l.b16 %v3823
        %v3856 = vunpack.c.l.b16 %v3824
        %v3857 = vunpack.c.l.b16 %v3825
        %v3858 = vunpack.c.l.b16 %v3826
        %v3859 = vunpack.c.l.b16 %v3827
        %v3860 = vunpack.c.l.b16 %v3828
        %v3861 = vunpack.c.l.b16 %v3829
        %v3862 = vunpack.c.l.b16 %v3830
        %v3863 = vunpack.c.l.b16 %v3831
        %v3864 = vunpack.c.l.b16 %v3832
        %v3865 = vunpack.c.l.b16 %v3833
        %v3866 = vunpack.c.l.b16 %v3834
        %v3867 = vunpack.c.l.b16 %v3835
        %v3868 = vunpack.c.l.b16 %v3836
        %v3869 = vunpack.c.l.b16 %v3837
        %v3870 = vunpack.c.l.b16 %v3838
        %v3871 = vpack.c.b16 %v3856, %v3855
        %v3872 = vpack.c.b16 %v3858, %v3857
        %v3873 = vpack.c.b16 %v3860, %v3859
        %v3874 = vpack.c.b16 %v3862, %v3861
        %v3875 = vpack.c.b16 %v3864, %v3863
        %v3876 = vpack.c.b16 %v3866, %v3865
        %v3877 = vpack.c.b16 %v3868, %v3867
        %v3878 = vpack.c.b16 %v3870, %v3869
        %3887 = vmatpush.bf16.msra.mxu0 %v3878
        %3888 = vmatpush.bf16.msra.mxu0 %v3877
        %3889 = vmatpush.bf16.msra.mxu0 %v3876
        %3890 = vmatpush.bf16.msra.mxu0 %v3875
        %3891 = vmatpush.bf16.msra.mxu0 %v3874
        %3892 = vmatpush.bf16.msra.mxu0 %v3873
        %3893 = vmatpush.bf16.msra.mxu0 %v3872
        %3894 = vmatpush.bf16.msra.mxu0 %v3871
        %3895 = vmatmul.bf16.gmra.mxu0 %v3726
        %v3896 = vpop.f32.mrf.mxu0
        %v3897 = vadd.f32 0.0, %v3896
        %v3898 = vpop.f32.mrf.mxu0
        %v3899 = vadd.f32 0.0, %v3898
        %3900 = vmatmul.bf16.gmra.mxu0 %v3727
        %v3901 = vpop.f32.mrf.mxu0
        %v3902 = vadd.f32 0.0, %v3901
        %v3903 = vpop.f32.mrf.mxu0
        %v3904 = vadd.f32 0.0, %v3903
        %3905 = vmatmul.bf16.gmra.mxu0 %v3728
        %v3906 = vpop.f32.mrf.mxu0
        %v3907 = vadd.f32 0.0, %v3906
        %v3908 = vpop.f32.mrf.mxu0
        %v3909 = vadd.f32 0.0, %v3908
        %3910 = vmatmul.bf16.gmra.mxu0 %v3729
        %v3911 = vpop.f32.mrf.mxu0
        %v3912 = vadd.f32 0.0, %v3911
        %v3913 = vpop.f32.mrf.mxu0
        %v3914 = vadd.f32 0.0, %v3913
        %3915 = vmatmul.bf16.gmra.mxu0 %v3730
        %v3916 = vpop.f32.mrf.mxu0
        %v3917 = vadd.f32 0.0, %v3916
        %v3918 = vpop.f32.mrf.mxu0
        %v3919 = vadd.f32 0.0, %v3918
        %3920 = vmatmul.bf16.gmra.mxu0 %v3731
        %v3921 = vpop.f32.mrf.mxu0
        %v3922 = vadd.f32 0.0, %v3921
        %v3923 = vpop.f32.mrf.mxu0
        %v3924 = vadd.f32 0.0, %v3923
        %3925 = vmatmul.bf16.gmra.mxu0 %v3732
        %v3926 = vpop.f32.mrf.mxu0
        %v3927 = vadd.f32 0.0, %v3926
        %v3928 = vpop.f32.mrf.mxu0
        %v3929 = vadd.f32 0.0, %v3928
        %3930 = vmatmul.bf16.gmra.mxu0 %v3733
        %v3931 = vpop.f32.mrf.mxu0
        %v3932 = vadd.f32 0.0, %v3931
        %v3933 = vpop.f32.mrf.mxu0
        %v3934 = vadd.f32 0.0, %v3933
        %3935 = vmatmul.bf16.gmra.mxu0 %v3734
        %v3936 = vpop.f32.mrf.mxu0
        %v3937 = vadd.f32 0.0, %v3936
        %v3938 = vpop.f32.mrf.mxu0
        %v3939 = vadd.f32 0.0, %v3938
        %3940 = vmatmul.bf16.gmra.mxu0 %v3735
        %v3941 = vpop.f32.mrf.mxu0
        %v3942 = vadd.f32 0.0, %v3941
        %v3943 = vpop.f32.mrf.mxu0
        %v3944 = vadd.f32 0.0, %v3943
        %3945 = vmatmul.bf16.gmra.mxu0 %v3736
        %v3946 = vpop.f32.mrf.mxu0
        %v3947 = vadd.f32 0.0, %v3946
        %v3948 = vpop.f32.mrf.mxu0
        %v3949 = vadd.f32 0.0, %v3948
        %3950 = vmatmul.bf16.gmra.mxu0 %v3737
        %v3951 = vpop.f32.mrf.mxu0
        %v3952 = vadd.f32 0.0, %v3951
        %v3953 = vpop.f32.mrf.mxu0
        %v3954 = vadd.f32 0.0, %v3953
        %3955 = vmatmul.bf16.gmra.mxu0 %v3738
        %v3956 = vpop.f32.mrf.mxu0
        %v3957 = vadd.f32 0.0, %v3956
        %v3958 = vpop.f32.mrf.mxu0
        %v3959 = vadd.f32 0.0, %v3958
        %3960 = vmatmul.bf16.gmra.mxu0 %v3739
        %v3961 = vpop.f32.mrf.mxu0
        %v3962 = vadd.f32 0.0, %v3961
        %v3963 = vpop.f32.mrf.mxu0
        %v3964 = vadd.f32 0.0, %v3963
        %3965 = vmatmul.bf16.gmra.mxu0 %v3740
        %v3966 = vpop.f32.mrf.mxu0
        %v3967 = vadd.f32 0.0, %v3966
        %v3968 = vpop.f32.mrf.mxu0
        %v3969 = vadd.f32 0.0, %v3968
        %3970 = vmatmul.bf16.gmra.mxu0 %v3741
        %v3971 = vpop.f32.mrf.mxu0
        %v3972 = vadd.f32 0.0, %v3971
        %v3973 = vpop.f32.mrf.mxu0
        %v3974 = vadd.f32 0.0, %v3973
        %3975 = vmatmul.bf16.gmra.mxu0 %v3742
        %v3976 = vpop.f32.mrf.mxu0
        %v3977 = vadd.f32 0.0, %v3976
        %v3978 = vpop.f32.mrf.mxu0
        %v3979 = vadd.f32 0.0, %v3978
        %3980 = vmatmul.bf16.gmra.mxu0 %v3743
        %v3981 = vpop.f32.mrf.mxu0
        %v3982 = vadd.f32 0.0, %v3981
        %v3983 = vpop.f32.mrf.mxu0
        %v3984 = vadd.f32 0.0, %v3983
        %3985 = vmatmul.bf16.gmra.mxu0 %v3744
        %v3986 = vpop.f32.mrf.mxu0
        %v3987 = vadd.f32 0.0, %v3986
        %v3988 = vpop.f32.mrf.mxu0
        %v3989 = vadd.f32 0.0, %v3988
        %3990 = vmatmul.bf16.gmra.mxu0 %v3745
        %v3991 = vpop.f32.mrf.mxu0
        %v3992 = vadd.f32 0.0, %v3991
        %v3993 = vpop.f32.mrf.mxu0
        %v3994 = vadd.f32 0.0, %v3993
        %3995 = vmatmul.bf16.gmra.mxu0 %v3746
        %v3996 = vpop.f32.mrf.mxu0
        %v3997 = vadd.f32 0.0, %v3996
        %v3998 = vpop.f32.mrf.mxu0
        %v3999 = vadd.f32 0.0, %v3998
        %4000 = vmatmul.bf16.gmra.mxu0 %v3747
        %v4001 = vpop.f32.mrf.mxu0
        %v4002 = vadd.f32 0.0, %v4001
        %v4003 = vpop.f32.mrf.mxu0
        %v4004 = vadd.f32 0.0, %v4003
        %4005 = vmatmul.bf16.gmra.mxu0 %v3748
        %v4006 = vpop.f32.mrf.mxu0
        %v4007 = vadd.f32 0.0, %v4006
        %v4008 = vpop.f32.mrf.mxu0
        %v4009 = vadd.f32 0.0, %v4008
        %4010 = vmatmul.bf16.gmra.mxu0 %v3749
        %v4011 = vpop.f32.mrf.mxu0
        %v4012 = vadd.f32 0.0, %v4011
        %v4013 = vpop.f32.mrf.mxu0
        %v4014 = vadd.f32 0.0, %v4013
        %4015 = vmatmul.bf16.gmra.mxu0 %v3750
        %v4016 = vpop.f32.mrf.mxu0
        %v4017 = vadd.f32 0.0, %v4016
        %v4018 = vpop.f32.mrf.mxu0
        %v4019 = vadd.f32 0.0, %v4018
        %4020 = vmatmul.bf16.gmra.mxu0 %v3751
        %v4021 = vpop.f32.mrf.mxu0
        %v4022 = vadd.f32 0.0, %v4021
        %v4023 = vpop.f32.mrf.mxu0
        %v4024 = vadd.f32 0.0, %v4023
        %4025 = vmatmul.bf16.gmra.mxu0 %v3752
        %v4026 = vpop.f32.mrf.mxu0
        %v4027 = vadd.f32 0.0, %v4026
        %v4028 = vpop.f32.mrf.mxu0
        %v4029 = vadd.f32 0.0, %v4028
        %4030 = vmatmul.bf16.gmra.mxu0 %v3753
        %v4031 = vpop.f32.mrf.mxu0
        %v4032 = vadd.f32 0.0, %v4031
        %v4033 = vpop.f32.mrf.mxu0
        %v4034 = vadd.f32 0.0, %v4033
        %4035 = vmatmul.bf16.gmra.mxu0 %v3754
        %v4036 = vpop.f32.mrf.mxu0
        %v4037 = vadd.f32 0.0, %v4036
        %v4038 = vpop.f32.mrf.mxu0
        %v4039 = vadd.f32 0.0, %v4038
        %4040 = vmatmul.bf16.gmra.mxu0 %v3755
        %v4041 = vpop.f32.mrf.mxu0
        %v4042 = vadd.f32 0.0, %v4041
        %v4043 = vpop.f32.mrf.mxu0
        %v4044 = vadd.f32 0.0, %v4043
        %4045 = vmatmul.bf16.gmra.mxu0 %v3756
        %v4046 = vpop.f32.mrf.mxu0
        %v4047 = vadd.f32 0.0, %v4046
        %v4048 = vpop.f32.mrf.mxu0
        %v4049 = vadd.f32 0.0, %v4048
        %4050 = vmatmul.bf16.gmra.mxu0 %v3757
        %v4051 = vpop.f32.mrf.mxu0
        %v4052 = vadd.f32 0.0, %v4051
        %v4053 = vpop.f32.mrf.mxu0
        %v4054 = vadd.f32 0.0, %v4053
        %4055 = vdwg.mxu0
        %v4056 = vadd.f32 %v3758, %v3897
        %v4057 = vadd.f32 %v3759, %v3899
        %v4058 = vadd.f32 %v3760, %v3902
        %v4059 = vadd.f32 %v3761, %v3904
        %v4060 = vadd.f32 %v3762, %v3907
        %v4061 = vadd.f32 %v3763, %v3909
        %v4062 = vadd.f32 %v3764, %v3912
        %v4063 = vadd.f32 %v3765, %v3914
        %v4064 = vadd.f32 %v3766, %v3917
        %v4065 = vadd.f32 %v3767, %v3919
        %v4066 = vadd.f32 %v3768, %v3922
        %v4067 = vadd.f32 %v3769, %v3924
        %v4068 = vadd.f32 %v3770, %v3927
        %v4069 = vadd.f32 %v3771, %v3929
        %v4070 = vadd.f32 %v3772, %v3932
        %v4071 = vadd.f32 %v3773, %v3934
        %v4072 = vadd.f32 %v3774, %v3937
        %v4073 = vadd.f32 %v3775, %v3939
        %v4074 = vadd.f32 %v3776, %v3942
        %v4075 = vadd.f32 %v3777, %v3944
        %v4076 = vadd.f32 %v3778, %v3947
        %v4077 = vadd.f32 %v3779, %v3949
        %v4078 = vadd.f32 %v3780, %v3952
        %v4079 = vadd.f32 %v3781, %v3954
        %v4080 = vadd.f32 %v3782, %v3957
        %v4081 = vadd.f32 %v3783, %v3959
        %v4082 = vadd.f32 %v3784, %v3962
        %v4083 = vadd.f32 %v3785, %v3964
        %v4084 = vadd.f32 %v3786, %v3967
        %v4085 = vadd.f32 %v3787, %v3969
        %v4086 = vadd.f32 %v3788, %v3972
        %v4087 = vadd.f32 %v3789, %v3974
        %v4088 = vadd.f32 %v3790, %v3977
        %v4089 = vadd.f32 %v3791, %v3979
        %v4090 = vadd.f32 %v3792, %v3982
        %v4091 = vadd.f32 %v3793, %v3984
        %v4092 = vadd.f32 %v3794, %v3987
        %v4093 = vadd.f32 %v3795, %v3989
        %v4094 = vadd.f32 %v3796, %v3992
        %v4095 = vadd.f32 %v3797, %v3994
        %v4096 = vadd.f32 %v3798, %v3997
        %v4097 = vadd.f32 %v3799, %v3999
        %v4098 = vadd.f32 %v3800, %v4002
        %v4099 = vadd.f32 %v3801, %v4004
        %v4100 = vadd.f32 %v3802, %v4007
        %v4101 = vadd.f32 %v3803, %v4009
        %v4102 = vadd.f32 %v3804, %v4012
        %v4103 = vadd.f32 %v3805, %v4014
        %v4104 = vadd.f32 %v3806, %v4017
        %v4105 = vadd.f32 %v3807, %v4019
        %v4106 = vadd.f32 %v3808, %v4022
        %v4107 = vadd.f32 %v3809, %v4024
        %v4108 = vadd.f32 %v3810, %v4027
        %v4109 = vadd.f32 %v3811, %v4029
        %v4110 = vadd.f32 %v3812, %v4032
        %v4111 = vadd.f32 %v3813, %v4034
        %v4112 = vadd.f32 %v3814, %v4037
        %v4113 = vadd.f32 %v3815, %v4039
        %v4114 = vadd.f32 %v3816, %v4042
        %v4115 = vadd.f32 %v3817, %v4044
        %v4116 = vadd.f32 %v3818, %v4047
        %v4117 = vadd.f32 %v3819, %v4049
        %v4118 = vadd.f32 %v3820, %v4052
        %v4119 = vadd.f32 %v3821, %v4054
        %4120 = vst [vmem:[#allocation2] sm:$0xff] %v4056
        %4121 = vst [vmem:[#allocation2 + $0x8] sm:$0xff] %v4057
        %4122 = vst [vmem:[#allocation2 + $0x10] sm:$0xff] %v4058
        %4123 = vst [vmem:[#allocation2 + $0x18] sm:$0xff] %v4059
        %4124 = vst [vmem:[#allocation2 + $0x20] sm:$0xff] %v4060
        %4125 = vst [vmem:[#allocation2 + $0x28] sm:$0xff] %v4061
        %4126 = vst [vmem:[#allocation2 + $0x30] sm:$0xff] %v4062
        %4127 = vst [vmem:[#allocation2 + $0x38] sm:$0xff] %v4063
        %4128 = vst [vmem:[#allocation2 + $0x40] sm:$0xff] %v4064
        %4129 = vst [vmem:[#allocation2 + $0x48] sm:$0xff] %v4065
        %4130 = vst [vmem:[#allocation2 + $0x50] sm:$0xff] %v4066
        %4131 = vst [vmem:[#allocation2 + $0x58] sm:$0xff] %v4067
        %4132 = vst [vmem:[#allocation2 + $0x60] sm:$0xff] %v4068
        %4133 = vst [vmem:[#allocation2 + $0x68] sm:$0xff] %v4069
        %4134 = vst [vmem:[#allocation2 + $0x70] sm:$0xff] %v4070
        %4135 = vst [vmem:[#allocation2 + $0x78] sm:$0xff] %v4071
        %4136 = vst [vmem:[#allocation2 + $0x80] sm:$0xff] %v4072
        %4137 = vst [vmem:[#allocation2 + $0x88] sm:$0xff] %v4073
        %4138 = vst [vmem:[#allocation2 + $0x90] sm:$0xff] %v4074
        %4139 = vst [vmem:[#allocation2 + $0x98] sm:$0xff] %v4075
        %4140 = vst [vmem:[#allocation2 + $0xa0] sm:$0xff] %v4076
        %4141 = vst [vmem:[#allocation2 + $0xa8] sm:$0xff] %v4077
        %4142 = vst [vmem:[#allocation2 + $0xb0] sm:$0xff] %v4078
        %4143 = vst [vmem:[#allocation2 + $0xb8] sm:$0xff] %v4079
        %4144 = vst [vmem:[#allocation2 + $0xc0] sm:$0xff] %v4080
        %4145 = vst [vmem:[#allocation2 + $0xc8] sm:$0xff] %v4081
        %4146 = vst [vmem:[#allocation2 + $0xd0] sm:$0xff] %v4082
        %4147 = vst [vmem:[#allocation2 + $0xd8] sm:$0xff] %v4083
        %4148 = vst [vmem:[#allocation2 + $0xe0] sm:$0xff] %v4084
        %4149 = vst [vmem:[#allocation2 + $0xe8] sm:$0xff] %v4085
        %4150 = vst [vmem:[#allocation2 + $0xf0] sm:$0xff] %v4086
        %4151 = vst [vmem:[#allocation2 + $0xf8] sm:$0xff] %v4087
        %4152 = vst [vmem:[#allocation2 + $0x100] sm:$0xff] %v4088
        %4153 = vst [vmem:[#allocation2 + $0x108] sm:$0xff] %v4089
        %4154 = vst [vmem:[#allocation2 + $0x110] sm:$0xff] %v4090
        %4155 = vst [vmem:[#allocation2 + $0x118] sm:$0xff] %v4091
        %4156 = vst [vmem:[#allocation2 + $0x120] sm:$0xff] %v4092
        %4157 = vst [vmem:[#allocation2 + $0x128] sm:$0xff] %v4093
        %4158 = vst [vmem:[#allocation2 + $0x130] sm:$0xff] %v4094
        %4159 = vst [vmem:[#allocation2 + $0x138] sm:$0xff] %v4095
        %4160 = vst [vmem:[#allocation2 + $0x140] sm:$0xff] %v4096
        %4161 = vst [vmem:[#allocation2 + $0x148] sm:$0xff] %v4097
        %4162 = vst [vmem:[#allocation2 + $0x150] sm:$0xff] %v4098
        %4163 = vst [vmem:[#allocation2 + $0x158] sm:$0xff] %v4099
        %4164 = vst [vmem:[#allocation2 + $0x160] sm:$0xff] %v4100
        %4165 = vst [vmem:[#allocation2 + $0x168] sm:$0xff] %v4101
        %4166 = vst [vmem:[#allocation2 + $0x170] sm:$0xff] %v4102
        %4167 = vst [vmem:[#allocation2 + $0x178] sm:$0xff] %v4103
        %4168 = vst [vmem:[#allocation2 + $0x180] sm:$0xff] %v4104
        %4169 = vst [vmem:[#allocation2 + $0x188] sm:$0xff] %v4105
        %4170 = vst [vmem:[#allocation2 + $0x190] sm:$0xff] %v4106
        %4171 = vst [vmem:[#allocation2 + $0x198] sm:$0xff] %v4107
        %4172 = vst [vmem:[#allocation2 + $0x1a0] sm:$0xff] %v4108
        %4173 = vst [vmem:[#allocation2 + $0x1a8] sm:$0xff] %v4109
        %4174 = vst [vmem:[#allocation2 + $0x1b0] sm:$0xff] %v4110
        %4175 = vst [vmem:[#allocation2 + $0x1b8] sm:$0xff] %v4111
        %4176 = vst [vmem:[#allocation2 + $0x1c0] sm:$0xff] %v4112
        %4177 = vst [vmem:[#allocation2 + $0x1c8] sm:$0xff] %v4113
        %4178 = vst [vmem:[#allocation2 + $0x1d0] sm:$0xff] %v4114
        %4179 = vst [vmem:[#allocation2 + $0x1d8] sm:$0xff] %v4115
        %4180 = vst [vmem:[#allocation2 + $0x1e0] sm:$0xff] %v4116
        %4181 = vst [vmem:[#allocation2 + $0x1e8] sm:$0xff] %v4117
        %4182 = vst [vmem:[#allocation2 + $0x1f0] sm:$0xff] %v4118
        %4183 = vst [vmem:[#allocation2 + $0x1f8] sm:$0xff] %v4119
        %v4184 = vld [vmem:[%s2691] sm:$0xe]
        %v4185 = vld [vmem:[%s2691 + $0x4] sm:$0xf]
        %v4186 = vld [vmem:[%s2691 + $0x8] sm:$0xf]
        %v4187 = vld [vmem:[%s2691 + $0xc] sm:$0xf]
        %v4188 = vld [vmem:[%s2691 + $0x10] sm:$0x1]
        %v4189 = vld [vmem:[%s2691 + $0x14] sm:$0xe]
        %v4190 = vld [vmem:[%s2691 + $0x18] sm:$0xf]
        %v4191 = vld [vmem:[%s2691 + $0x1c] sm:$0xf]
        %v4192 = vld [vmem:[%s2691 + $0x20] sm:$0xf]
        %v4193 = vld [vmem:[%s2691 + $0x24] sm:$0x1]
        %v4194 = vld [vmem:[%s2691 + $0x28] sm:$0xe]
        %v4195 = vld [vmem:[%s2691 + $0x2c] sm:$0xf]
        %v4196 = vld [vmem:[%s2691 + $0x30] sm:$0xf]
        %v4197 = vld [vmem:[%s2691 + $0x34] sm:$0xf]
        %v4198 = vld [vmem:[%s2691 + $0x38] sm:$0x1]
        %v4199 = vld [vmem:[%s2691 + $0x3c] sm:$0xe]
        %v4200 = vld [vmem:[%s2691 + $0x40] sm:$0xf]
        %v4201 = vld [vmem:[%s2691 + $0x44] sm:$0xf]
        %v4202 = vld [vmem:[%s2691 + $0x48] sm:$0xf]
        %v4203 = vld [vmem:[%s2691 + $0x4c] sm:$0x1]
        %v4204 = vld [vmem:[%s2691 + $0x50] sm:$0xe]
        %v4205 = vld [vmem:[%s2691 + $0x54] sm:$0xf]
        %v4206 = vld [vmem:[%s2691 + $0x58] sm:$0xf]
        %v4207 = vld [vmem:[%s2691 + $0x5c] sm:$0xf]
        %v4208 = vld [vmem:[%s2691 + $0x60] sm:$0x1]
        %v4209 = vld [vmem:[%s2691 + $0x64] sm:$0xe]
        %v4210 = vld [vmem:[%s2691 + $0x68] sm:$0xf]
        %v4211 = vld [vmem:[%s2691 + $0x6c] sm:$0xf]
        %v4212 = vld [vmem:[%s2691 + $0x70] sm:$0xf]
        %v4213 = vld [vmem:[%s2691 + $0x74] sm:$0x1]
        %v4214 = vld [vmem:[%s2691 + $0x78] sm:$0xe]
        %v4215 = vld [vmem:[%s2691 + $0x7c] sm:$0xf]
        %v4216 = vld [vmem:[%s2691 + $0x80] sm:$0xf]
        %v4217 = vld [vmem:[%s2691 + $0x84] sm:$0xf]
        %v4218 = vld [vmem:[%s2691 + $0x88] sm:$0x1]
        %v4219 = vld [vmem:[%s2691 + $0x8c] sm:$0xe]
        %v4220 = vld [vmem:[%s2691 + $0x90] sm:$0xf]
        %v4221 = vld [vmem:[%s2691 + $0x94] sm:$0xf]
        %v4222 = vld [vmem:[%s2691 + $0x98] sm:$0xf]
        %v4223 = vld [vmem:[%s2691 + $0x9c] sm:$0x1]
        %v4224 = vld [vmem:[%s2691 + $0xa0] sm:$0xe]
        %v4225 = vld [vmem:[%s2691 + $0xa4] sm:$0xf]
        %v4226 = vld [vmem:[%s2691 + $0xa8] sm:$0xf]
        %v4227 = vld [vmem:[%s2691 + $0xac] sm:$0xf]
        %v4228 = vld [vmem:[%s2691 + $0xb0] sm:$0x1]
        %v4229 = vld [vmem:[%s2691 + $0xb4] sm:$0xe]
        %v4230 = vld [vmem:[%s2691 + $0xb8] sm:$0xf]
        %v4231 = vld [vmem:[%s2691 + $0xbc] sm:$0xf]
        %v4232 = vld [vmem:[%s2691 + $0xc0] sm:$0xf]
        %v4233 = vld [vmem:[%s2691 + $0xc4] sm:$0x1]
        %v4234 = vld [vmem:[%s2691 + $0xc8] sm:$0xe]
        %v4235 = vld [vmem:[%s2691 + $0xcc] sm:$0xf]
        %v4236 = vld [vmem:[%s2691 + $0xd0] sm:$0xf]
        %v4237 = vld [vmem:[%s2691 + $0xd4] sm:$0xf]
        %v4238 = vld [vmem:[%s2691 + $0xd8] sm:$0x1]
        %v4239 = vld [vmem:[%s2691 + $0xdc] sm:$0xe]
        %v4240 = vld [vmem:[%s2691 + $0xe0] sm:$0xf]
        %v4241 = vld [vmem:[%s2691 + $0xe4] sm:$0xf]
        %v4242 = vld [vmem:[%s2691 + $0xe8] sm:$0xf]
        %v4243 = vld [vmem:[%s2691 + $0xec] sm:$0x1]
        %v4244 = vld [vmem:[%s2691 + $0xf0] sm:$0xe]
        %v4245 = vld [vmem:[%s2691 + $0xf4] sm:$0xf]
        %v4246 = vld [vmem:[%s2691 + $0xf8] sm:$0xf]
        %v4247 = vld [vmem:[%s2691 + $0xfc] sm:$0xf]
        %v4248 = vld [vmem:[%s2691 + $0x100] sm:$0x1]
        %v4249 = vld [vmem:[%s2691 + $0x104] sm:$0xe]
        %v4250 = vld [vmem:[%s2691 + $0x108] sm:$0xf]
        %v4251 = vld [vmem:[%s2691 + $0x10c] sm:$0xf]
        %v4252 = vld [vmem:[%s2691 + $0x110] sm:$0xf]
        %v4253 = vld [vmem:[%s2691 + $0x114] sm:$0x1]
        %v4254 = vld [vmem:[%s2691 + $0x118] sm:$0xe]
        %v4255 = vld [vmem:[%s2691 + $0x11c] sm:$0xf]
        %v4256 = vld [vmem:[%s2691 + $0x120] sm:$0xf]
        %v4257 = vld [vmem:[%s2691 + $0x124] sm:$0xf]
        %v4258 = vld [vmem:[%s2691 + $0x128] sm:$0x1]
        %v4259 = vld [vmem:[%s2691 + $0x12c] sm:$0xe]
        %v4260 = vld [vmem:[%s2691 + $0x130] sm:$0xf]
        %v4261 = vld [vmem:[%s2691 + $0x134] sm:$0xf]
        %v4262 = vld [vmem:[%s2691 + $0x138] sm:$0xf]
        %v4263 = vld [vmem:[%s2691 + $0x13c] sm:$0x1]
        %v4264 = vunpack.c.l.bf16 %v4184
        %v4265 = vunpack.c.l.bf16 %v4185
        %v4266 = vunpack.c.l.bf16 %v4186
        %v4267 = vunpack.c.l.bf16 %v4187
        %v4268 = vunpack.c.l.bf16 %v4188
        %v4269 = vunpack.c.l.bf16 %v4189
        %v4270 = vunpack.c.l.bf16 %v4190
        %v4271 = vunpack.c.l.bf16 %v4191
        %v4272 = vunpack.c.l.bf16 %v4192
        %v4273 = vunpack.c.l.bf16 %v4193
        %v4274 = vunpack.c.l.bf16 %v4194
        %v4275 = vunpack.c.l.bf16 %v4195
        %v4276 = vunpack.c.l.bf16 %v4196
        %v4277 = vunpack.c.l.bf16 %v4197
        %v4278 = vunpack.c.l.bf16 %v4198
        %v4279 = vunpack.c.l.bf16 %v4199
        %v4280 = vunpack.c.l.bf16 %v4200
        %v4281 = vunpack.c.l.bf16 %v4201
        %v4282 = vunpack.c.l.bf16 %v4202
        %v4283 = vunpack.c.l.bf16 %v4203
        %v4284 = vunpack.c.l.bf16 %v4204
        %v4285 = vunpack.c.l.bf16 %v4205
        %v4286 = vunpack.c.l.bf16 %v4206
        %v4287 = vunpack.c.l.bf16 %v4207
        %v4288 = vunpack.c.l.bf16 %v4208
        %v4289 = vunpack.c.l.bf16 %v4209
        %v4290 = vunpack.c.l.bf16 %v4210
        %v4291 = vunpack.c.l.bf16 %v4211
        %v4292 = vunpack.c.l.bf16 %v4212
        %v4293 = vunpack.c.l.bf16 %v4213
        %v4294 = vunpack.c.l.bf16 %v4214
        %v4295 = vunpack.c.l.bf16 %v4215
        %v4296 = vunpack.c.l.bf16 %v4216
        %v4297 = vunpack.c.l.bf16 %v4217
        %v4298 = vunpack.c.l.bf16 %v4218
        %v4299 = vunpack.c.l.bf16 %v4219
        %v4300 = vunpack.c.l.bf16 %v4220
        %v4301 = vunpack.c.l.bf16 %v4221
        %v4302 = vunpack.c.l.bf16 %v4222
        %v4303 = vunpack.c.l.bf16 %v4223
        %v4304 = vunpack.c.l.bf16 %v4224
        %v4305 = vunpack.c.l.bf16 %v4225
        %v4306 = vunpack.c.l.bf16 %v4226
        %v4307 = vunpack.c.l.bf16 %v4227
        %v4308 = vunpack.c.l.bf16 %v4228
        %v4309 = vunpack.c.l.bf16 %v4229
        %v4310 = vunpack.c.l.bf16 %v4230
        %v4311 = vunpack.c.l.bf16 %v4231
        %v4312 = vunpack.c.l.bf16 %v4232
        %v4313 = vunpack.c.l.bf16 %v4233
        %v4314 = vunpack.c.l.bf16 %v4234
        %v4315 = vunpack.c.l.bf16 %v4235
        %v4316 = vunpack.c.l.bf16 %v4236
        %v4317 = vunpack.c.l.bf16 %v4237
        %v4318 = vunpack.c.l.bf16 %v4238
        %v4319 = vunpack.c.l.bf16 %v4239
        %v4320 = vunpack.c.l.bf16 %v4240
        %v4321 = vunpack.c.l.bf16 %v4241
        %v4322 = vunpack.c.l.bf16 %v4242
        %v4323 = vunpack.c.l.bf16 %v4243
        %v4324 = vunpack.c.l.bf16 %v4244
        %v4325 = vunpack.c.l.bf16 %v4245
        %v4326 = vunpack.c.l.bf16 %v4246
        %v4327 = vunpack.c.l.bf16 %v4247
        %v4328 = vunpack.c.l.bf16 %v4248
        %v4329 = vunpack.c.l.bf16 %v4249
        %v4330 = vunpack.c.l.bf16 %v4250
        %v4331 = vunpack.c.l.bf16 %v4251
        %v4332 = vunpack.c.l.bf16 %v4252
        %v4333 = vunpack.c.l.bf16 %v4253
        %v4334 = vunpack.c.l.bf16 %v4254
        %v4335 = vunpack.c.l.bf16 %v4255
        %v4336 = vunpack.c.l.bf16 %v4256
        %v4337 = vunpack.c.l.bf16 %v4257
        %v4338 = vunpack.c.l.bf16 %v4258
        %v4339 = vunpack.c.l.bf16 %v4259
        %v4340 = vunpack.c.l.bf16 %v4260
        %v4341 = vunpack.c.l.bf16 %v4261
        %v4342 = vunpack.c.l.bf16 %v4262
        %v4343 = vunpack.c.l.bf16 %v4263
        %v4424 = vrot.slane %v4264, 2
        %v4425 = vrot.slane %v4265, 2
        %v4426 = vsel %vm2021, %v4424, %v4425
        %v4427 = vrot.slane %v4266, 2
        %v4428 = vsel %vm2021, %v4425, %v4427
        %v4429 = vrot.slane %v4267, 2
        %v4430 = vsel %vm2021, %v4427, %v4429
        %v4431 = vrot.slane %v4268, 2
        %v4432 = vsel %vm2021, %v4429, %v4431
        %v4433 = vrot.slane %v4269, 2
        %v4434 = vrot.slane %v4270, 2
        %v4435 = vsel %vm2021, %v4433, %v4434
        %v4436 = vrot.slane %v4271, 2
        %v4437 = vsel %vm2021, %v4434, %v4436
        %v4438 = vrot.slane %v4272, 2
        %v4439 = vsel %vm2021, %v4436, %v4438
        %v4440 = vrot.slane %v4273, 2
        %v4441 = vsel %vm2021, %v4438, %v4440
        %v4442 = vrot.slane %v4274, 2
        %v4443 = vrot.slane %v4275, 2
        %v4444 = vsel %vm2021, %v4442, %v4443
        %v4445 = vrot.slane %v4276, 2
        %v4446 = vsel %vm2021, %v4443, %v4445
        %v4447 = vrot.slane %v4277, 2
        %v4448 = vsel %vm2021, %v4445, %v4447
        %v4449 = vrot.slane %v4278, 2
        %v4450 = vsel %vm2021, %v4447, %v4449
        %v4451 = vrot.slane %v4279, 2
        %v4452 = vrot.slane %v4280, 2
        %v4453 = vsel %vm2021, %v4451, %v4452
        %v4454 = vrot.slane %v4281, 2
        %v4455 = vsel %vm2021, %v4452, %v4454
        %v4456 = vrot.slane %v4282, 2
        %v4457 = vsel %vm2021, %v4454, %v4456
        %v4458 = vrot.slane %v4283, 2
        %v4459 = vsel %vm2021, %v4456, %v4458
        %v4460 = vrot.slane %v4284, 2
        %v4461 = vrot.slane %v4285, 2
        %v4462 = vsel %vm2021, %v4460, %v4461
        %v4463 = vrot.slane %v4286, 2
        %v4464 = vsel %vm2021, %v4461, %v4463
        %v4465 = vrot.slane %v4287, 2
        %v4466 = vsel %vm2021, %v4463, %v4465
        %v4467 = vrot.slane %v4288, 2
        %v4468 = vsel %vm2021, %v4465, %v4467
        %v4469 = vrot.slane %v4289, 2
        %v4470 = vrot.slane %v4290, 2
        %v4471 = vsel %vm2021, %v4469, %v4470
        %v4472 = vrot.slane %v4291, 2
        %v4473 = vsel %vm2021, %v4470, %v4472
        %v4474 = vrot.slane %v4292, 2
        %v4475 = vsel %vm2021, %v4472, %v4474
        %v4476 = vrot.slane %v4293, 2
        %v4477 = vsel %vm2021, %v4474, %v4476
        %v4478 = vrot.slane %v4294, 2
        %v4479 = vrot.slane %v4295, 2
        %v4480 = vsel %vm2021, %v4478, %v4479
        %v4481 = vrot.slane %v4296, 2
        %v4482 = vsel %vm2021, %v4479, %v4481
        %v4483 = vrot.slane %v4297, 2
        %v4484 = vsel %vm2021, %v4481, %v4483
        %v4485 = vrot.slane %v4298, 2
        %v4486 = vsel %vm2021, %v4483, %v4485
        %v4487 = vrot.slane %v4299, 2
        %v4488 = vrot.slane %v4300, 2
        %v4489 = vsel %vm2021, %v4487, %v4488
        %v4490 = vrot.slane %v4301, 2
        %v4491 = vsel %vm2021, %v4488, %v4490
        %v4492 = vrot.slane %v4302, 2
        %v4493 = vsel %vm2021, %v4490, %v4492
        %v4494 = vrot.slane %v4303, 2
        %v4495 = vsel %vm2021, %v4492, %v4494
        %v4496 = vrot.slane %v4304, 2
        %v4497 = vrot.slane %v4305, 2
        %v4498 = vsel %vm2021, %v4496, %v4497
        %v4499 = vrot.slane %v4306, 2
        %v4500 = vsel %vm2021, %v4497, %v4499
        %v4501 = vrot.slane %v4307, 2
        %v4502 = vsel %vm2021, %v4499, %v4501
        %v4503 = vrot.slane %v4308, 2
        %v4504 = vsel %vm2021, %v4501, %v4503
        %v4505 = vrot.slane %v4309, 2
        %v4506 = vrot.slane %v4310, 2
        %v4507 = vsel %vm2021, %v4505, %v4506
        %v4508 = vrot.slane %v4311, 2
        %v4509 = vsel %vm2021, %v4506, %v4508
        %v4510 = vrot.slane %v4312, 2
        %v4511 = vsel %vm2021, %v4508, %v4510
        %v4512 = vrot.slane %v4313, 2
        %v4513 = vsel %vm2021, %v4510, %v4512
        %v4514 = vrot.slane %v4314, 2
        %v4515 = vrot.slane %v4315, 2
        %v4516 = vsel %vm2021, %v4514, %v4515
        %v4517 = vrot.slane %v4316, 2
        %v4518 = vsel %vm2021, %v4515, %v4517
        %v4519 = vrot.slane %v4317, 2
        %v4520 = vsel %vm2021, %v4517, %v4519
        %v4521 = vrot.slane %v4318, 2
        %v4522 = vsel %vm2021, %v4519, %v4521
        %v4523 = vrot.slane %v4319, 2
        %v4524 = vrot.slane %v4320, 2
        %v4525 = vsel %vm2021, %v4523, %v4524
        %v4526 = vrot.slane %v4321, 2
        %v4527 = vsel %vm2021, %v4524, %v4526
        %v4528 = vrot.slane %v4322, 2
        %v4529 = vsel %vm2021, %v4526, %v4528
        %v4530 = vrot.slane %v4323, 2
        %v4531 = vsel %vm2021, %v4528, %v4530
        %v4532 = vrot.slane %v4324, 2
        %v4533 = vrot.slane %v4325, 2
        %v4534 = vsel %vm2021, %v4532, %v4533
        %v4535 = vrot.slane %v4326, 2
        %v4536 = vsel %vm2021, %v4533, %v4535
        %v4537 = vrot.slane %v4327, 2
        %v4538 = vsel %vm2021, %v4535, %v4537
        %v4539 = vrot.slane %v4328, 2
        %v4540 = vsel %vm2021, %v4537, %v4539
        %v4541 = vrot.slane %v4329, 2
        %v4542 = vrot.slane %v4330, 2
        %v4543 = vsel %vm2021, %v4541, %v4542
        %v4544 = vrot.slane %v4331, 2
        %v4545 = vsel %vm2021, %v4542, %v4544
        %v4546 = vrot.slane %v4332, 2
        %v4547 = vsel %vm2021, %v4544, %v4546
        %v4548 = vrot.slane %v4333, 2
        %v4549 = vsel %vm2021, %v4546, %v4548
        %v4550 = vrot.slane %v4334, 2
        %v4551 = vrot.slane %v4335, 2
        %v4552 = vsel %vm2021, %v4550, %v4551
        %v4553 = vrot.slane %v4336, 2
        %v4554 = vsel %vm2021, %v4551, %v4553
        %v4555 = vrot.slane %v4337, 2
        %v4556 = vsel %vm2021, %v4553, %v4555
        %v4557 = vrot.slane %v4338, 2
        %v4558 = vsel %vm2021, %v4555, %v4557
        %v4559 = vrot.slane %v4339, 2
        %v4560 = vrot.slane %v4340, 2
        %v4561 = vsel %vm2021, %v4559, %v4560
        %v4562 = vrot.slane %v4341, 2
        %v4563 = vsel %vm2021, %v4560, %v4562
        %v4564 = vrot.slane %v4342, 2
        %v4565 = vsel %vm2021, %v4562, %v4564
        %v4566 = vrot.slane %v4343, 2
        %v4567 = vsel %vm2021, %v4564, %v4566
        %v4632 = vpack.c.bf16 %v4428, %v4426
        %v4633 = vpack.c.bf16 %v4432, %v4430
        %v4634 = vpack.c.bf16 %v4437, %v4435
        %v4635 = vpack.c.bf16 %v4441, %v4439
        %v4636 = vpack.c.bf16 %v4446, %v4444
        %v4637 = vpack.c.bf16 %v4450, %v4448
        %v4638 = vpack.c.bf16 %v4455, %v4453
        %v4639 = vpack.c.bf16 %v4459, %v4457
        %v4640 = vpack.c.bf16 %v4464, %v4462
        %v4641 = vpack.c.bf16 %v4468, %v4466
        %v4642 = vpack.c.bf16 %v4473, %v4471
        %v4643 = vpack.c.bf16 %v4477, %v4475
        %v4644 = vpack.c.bf16 %v4482, %v4480
        %v4645 = vpack.c.bf16 %v4486, %v4484
        %v4646 = vpack.c.bf16 %v4491, %v4489
        %v4647 = vpack.c.bf16 %v4495, %v4493
        %v4648 = vpack.c.bf16 %v4500, %v4498
        %v4649 = vpack.c.bf16 %v4504, %v4502
        %v4650 = vpack.c.bf16 %v4509, %v4507
        %v4651 = vpack.c.bf16 %v4513, %v4511
        %v4652 = vpack.c.bf16 %v4518, %v4516
        %v4653 = vpack.c.bf16 %v4522, %v4520
        %v4654 = vpack.c.bf16 %v4527, %v4525
        %v4655 = vpack.c.bf16 %v4531, %v4529
        %v4656 = vpack.c.bf16 %v4536, %v4534
        %v4657 = vpack.c.bf16 %v4540, %v4538
        %v4658 = vpack.c.bf16 %v4545, %v4543
        %v4659 = vpack.c.bf16 %v4549, %v4547
        %v4660 = vpack.c.bf16 %v4554, %v4552
        %v4661 = vpack.c.bf16 %v4558, %v4556
        %v4662 = vpack.c.bf16 %v4563, %v4561
        %v4663 = vpack.c.bf16 %v4567, %v4565
        %v4664 = vld [vmem:[#allocation2] sm:$0xff]
        %v4665 = vld [vmem:[#allocation2 + $0x8] sm:$0xff]
        %v4666 = vld [vmem:[#allocation2 + $0x10] sm:$0xff]
        %v4667 = vld [vmem:[#allocation2 + $0x18] sm:$0xff]
        %v4668 = vld [vmem:[#allocation2 + $0x20] sm:$0xff]
        %v4669 = vld [vmem:[#allocation2 + $0x28] sm:$0xff]
        %v4670 = vld [vmem:[#allocation2 + $0x30] sm:$0xff]
        %v4671 = vld [vmem:[#allocation2 + $0x38] sm:$0xff]
        %v4672 = vld [vmem:[#allocation2 + $0x40] sm:$0xff]
        %v4673 = vld [vmem:[#allocation2 + $0x48] sm:$0xff]
        %v4674 = vld [vmem:[#allocation2 + $0x50] sm:$0xff]
        %v4675 = vld [vmem:[#allocation2 + $0x58] sm:$0xff]
        %v4676 = vld [vmem:[#allocation2 + $0x60] sm:$0xff]
        %v4677 = vld [vmem:[#allocation2 + $0x68] sm:$0xff]
        %v4678 = vld [vmem:[#allocation2 + $0x70] sm:$0xff]
        %v4679 = vld [vmem:[#allocation2 + $0x78] sm:$0xff]
        %v4680 = vld [vmem:[#allocation2 + $0x80] sm:$0xff]
        %v4681 = vld [vmem:[#allocation2 + $0x88] sm:$0xff]
        %v4682 = vld [vmem:[#allocation2 + $0x90] sm:$0xff]
        %v4683 = vld [vmem:[#allocation2 + $0x98] sm:$0xff]
        %v4684 = vld [vmem:[#allocation2 + $0xa0] sm:$0xff]
        %v4685 = vld [vmem:[#allocation2 + $0xa8] sm:$0xff]
        %v4686 = vld [vmem:[#allocation2 + $0xb0] sm:$0xff]
        %v4687 = vld [vmem:[#allocation2 + $0xb8] sm:$0xff]
        %v4688 = vld [vmem:[#allocation2 + $0xc0] sm:$0xff]
        %v4689 = vld [vmem:[#allocation2 + $0xc8] sm:$0xff]
        %v4690 = vld [vmem:[#allocation2 + $0xd0] sm:$0xff]
        %v4691 = vld [vmem:[#allocation2 + $0xd8] sm:$0xff]
        %v4692 = vld [vmem:[#allocation2 + $0xe0] sm:$0xff]
        %v4693 = vld [vmem:[#allocation2 + $0xe8] sm:$0xff]
        %v4694 = vld [vmem:[#allocation2 + $0xf0] sm:$0xff]
        %v4695 = vld [vmem:[#allocation2 + $0xf8] sm:$0xff]
        %v4696 = vld [vmem:[#allocation2 + $0x100] sm:$0xff]
        %v4697 = vld [vmem:[#allocation2 + $0x108] sm:$0xff]
        %v4698 = vld [vmem:[#allocation2 + $0x110] sm:$0xff]
        %v4699 = vld [vmem:[#allocation2 + $0x118] sm:$0xff]
        %v4700 = vld [vmem:[#allocation2 + $0x120] sm:$0xff]
        %v4701 = vld [vmem:[#allocation2 + $0x128] sm:$0xff]
        %v4702 = vld [vmem:[#allocation2 + $0x130] sm:$0xff]
        %v4703 = vld [vmem:[#allocation2 + $0x138] sm:$0xff]
        %v4704 = vld [vmem:[#allocation2 + $0x140] sm:$0xff]
        %v4705 = vld [vmem:[#allocation2 + $0x148] sm:$0xff]
        %v4706 = vld [vmem:[#allocation2 + $0x150] sm:$0xff]
        %v4707 = vld [vmem:[#allocation2 + $0x158] sm:$0xff]
        %v4708 = vld [vmem:[#allocation2 + $0x160] sm:$0xff]
        %v4709 = vld [vmem:[#allocation2 + $0x168] sm:$0xff]
        %v4710 = vld [vmem:[#allocation2 + $0x170] sm:$0xff]
        %v4711 = vld [vmem:[#allocation2 + $0x178] sm:$0xff]
        %v4712 = vld [vmem:[#allocation2 + $0x180] sm:$0xff]
        %v4713 = vld [vmem:[#allocation2 + $0x188] sm:$0xff]
        %v4714 = vld [vmem:[#allocation2 + $0x190] sm:$0xff]
        %v4715 = vld [vmem:[#allocation2 + $0x198] sm:$0xff]
        %v4716 = vld [vmem:[#allocation2 + $0x1a0] sm:$0xff]
        %v4717 = vld [vmem:[#allocation2 + $0x1a8] sm:$0xff]
        %v4718 = vld [vmem:[#allocation2 + $0x1b0] sm:$0xff]
        %v4719 = vld [vmem:[#allocation2 + $0x1b8] sm:$0xff]
        %v4720 = vld [vmem:[#allocation2 + $0x1c0] sm:$0xff]
        %v4721 = vld [vmem:[#allocation2 + $0x1c8] sm:$0xff]
        %v4722 = vld [vmem:[#allocation2 + $0x1d0] sm:$0xff]
        %v4723 = vld [vmem:[#allocation2 + $0x1d8] sm:$0xff]
        %v4724 = vld [vmem:[#allocation2 + $0x1e0] sm:$0xff]
        %v4725 = vld [vmem:[#allocation2 + $0x1e8] sm:$0xff]
        %v4726 = vld [vmem:[#allocation2 + $0x1f0] sm:$0xff]
        %v4727 = vld [vmem:[#allocation2 + $0x1f8] sm:$0xff]
        %s4728 = scalar_lea.vmem %s214, 320
        %v4729 = vld [vmem:[%s4728] sm:$0xf]
        %v4730 = vld [vmem:[%s4728 + $0x4] sm:$0xf]
        %v4731 = vld [vmem:[%s4728 + $0x8] sm:$0xf]
        %v4732 = vld [vmem:[%s4728 + $0xc] sm:$0xf]
        %v4733 = vld [vmem:[%s4728 + $0x10] sm:$0xf]
        %v4734 = vld [vmem:[%s4728 + $0x14] sm:$0xf]
        %v4735 = vld [vmem:[%s4728 + $0x18] sm:$0xf]
        %v4736 = vld [vmem:[%s4728 + $0x1c] sm:$0xf]
        %v4737 = vld [vmem:[%s4728 + $0x20] sm:$0xf]
        %v4738 = vld [vmem:[%s4728 + $0x24] sm:$0xf]
        %v4739 = vld [vmem:[%s4728 + $0x28] sm:$0xf]
        %v4740 = vld [vmem:[%s4728 + $0x2c] sm:$0xf]
        %v4741 = vld [vmem:[%s4728 + $0x30] sm:$0xf]
        %v4742 = vld [vmem:[%s4728 + $0x34] sm:$0xf]
        %v4743 = vld [vmem:[%s4728 + $0x38] sm:$0xf]
        %v4744 = vld [vmem:[%s4728 + $0x3c] sm:$0xf]
        %v4761 = vunpack.c.l.b16 %v4729
        %v4762 = vunpack.c.l.b16 %v4730
        %v4763 = vunpack.c.l.b16 %v4731
        %v4764 = vunpack.c.l.b16 %v4732
        %v4765 = vunpack.c.l.b16 %v4733
        %v4766 = vunpack.c.l.b16 %v4734
        %v4767 = vunpack.c.l.b16 %v4735
        %v4768 = vunpack.c.l.b16 %v4736
        %v4769 = vunpack.c.l.b16 %v4737
        %v4770 = vunpack.c.l.b16 %v4738
        %v4771 = vunpack.c.l.b16 %v4739
        %v4772 = vunpack.c.l.b16 %v4740
        %v4773 = vunpack.c.l.b16 %v4741
        %v4774 = vunpack.c.l.b16 %v4742
        %v4775 = vunpack.c.l.b16 %v4743
        %v4776 = vunpack.c.l.b16 %v4744
        %v4777 = vpack.c.b16 %v4762, %v4761
        %v4778 = vpack.c.b16 %v4764, %v4763
        %v4779 = vpack.c.b16 %v4766, %v4765
        %v4780 = vpack.c.b16 %v4768, %v4767
        %v4781 = vpack.c.b16 %v4770, %v4769
        %v4782 = vpack.c.b16 %v4772, %v4771
        %v4783 = vpack.c.b16 %v4774, %v4773
        %v4784 = vpack.c.b16 %v4776, %v4775
        %4793 = vmatpush.bf16.msra.mxu0 %v4784
        %4794 = vmatpush.bf16.msra.mxu0 %v4783
        %4795 = vmatpush.bf16.msra.mxu0 %v4782
        %4796 = vmatpush.bf16.msra.mxu0 %v4781
        %4797 = vmatpush.bf16.msra.mxu0 %v4780
        %4798 = vmatpush.bf16.msra.mxu0 %v4779
        %4799 = vmatpush.bf16.msra.mxu0 %v4778
        %4800 = vmatpush.bf16.msra.mxu0 %v4777
        %4801 = vmatmul.bf16.gmra.mxu0 %v4632
        %v4802 = vpop.f32.mrf.mxu0
        %v4803 = vadd.f32 0.0, %v4802
        %v4804 = vpop.f32.mrf.mxu0
        %v4805 = vadd.f32 0.0, %v4804
        %4806 = vmatmul.bf16.gmra.mxu0 %v4633
        %v4807 = vpop.f32.mrf.mxu0
        %v4808 = vadd.f32 0.0, %v4807
        %v4809 = vpop.f32.mrf.mxu0
        %v4810 = vadd.f32 0.0, %v4809
        %4811 = vmatmul.bf16.gmra.mxu0 %v4634
        %v4812 = vpop.f32.mrf.mxu0
        %v4813 = vadd.f32 0.0, %v4812
        %v4814 = vpop.f32.mrf.mxu0
        %v4815 = vadd.f32 0.0, %v4814
        %4816 = vmatmul.bf16.gmra.mxu0 %v4635
        %v4817 = vpop.f32.mrf.mxu0
        %v4818 = vadd.f32 0.0, %v4817
        %v4819 = vpop.f32.mrf.mxu0
        %v4820 = vadd.f32 0.0, %v4819
        %4821 = vmatmul.bf16.gmra.mxu0 %v4636
        %v4822 = vpop.f32.mrf.mxu0
        %v4823 = vadd.f32 0.0, %v4822
        %v4824 = vpop.f32.mrf.mxu0
        %v4825 = vadd.f32 0.0, %v4824
        %4826 = vmatmul.bf16.gmra.mxu0 %v4637
        %v4827 = vpop.f32.mrf.mxu0
        %v4828 = vadd.f32 0.0, %v4827
        %v4829 = vpop.f32.mrf.mxu0
        %v4830 = vadd.f32 0.0, %v4829
        %4831 = vmatmul.bf16.gmra.mxu0 %v4638
        %v4832 = vpop.f32.mrf.mxu0
        %v4833 = vadd.f32 0.0, %v4832
        %v4834 = vpop.f32.mrf.mxu0
        %v4835 = vadd.f32 0.0, %v4834
        %4836 = vmatmul.bf16.gmra.mxu0 %v4639
        %v4837 = vpop.f32.mrf.mxu0
        %v4838 = vadd.f32 0.0, %v4837
        %v4839 = vpop.f32.mrf.mxu0
        %v4840 = vadd.f32 0.0, %v4839
        %4841 = vmatmul.bf16.gmra.mxu0 %v4640
        %v4842 = vpop.f32.mrf.mxu0
        %v4843 = vadd.f32 0.0, %v4842
        %v4844 = vpop.f32.mrf.mxu0
        %v4845 = vadd.f32 0.0, %v4844
        %4846 = vmatmul.bf16.gmra.mxu0 %v4641
        %v4847 = vpop.f32.mrf.mxu0
        %v4848 = vadd.f32 0.0, %v4847
        %v4849 = vpop.f32.mrf.mxu0
        %v4850 = vadd.f32 0.0, %v4849
        %4851 = vmatmul.bf16.gmra.mxu0 %v4642
        %v4852 = vpop.f32.mrf.mxu0
        %v4853 = vadd.f32 0.0, %v4852
        %v4854 = vpop.f32.mrf.mxu0
        %v4855 = vadd.f32 0.0, %v4854
        %4856 = vmatmul.bf16.gmra.mxu0 %v4643
        %v4857 = vpop.f32.mrf.mxu0
        %v4858 = vadd.f32 0.0, %v4857
        %v4859 = vpop.f32.mrf.mxu0
        %v4860 = vadd.f32 0.0, %v4859
        %4861 = vmatmul.bf16.gmra.mxu0 %v4644
        %v4862 = vpop.f32.mrf.mxu0
        %v4863 = vadd.f32 0.0, %v4862
        %v4864 = vpop.f32.mrf.mxu0
        %v4865 = vadd.f32 0.0, %v4864
        %4866 = vmatmul.bf16.gmra.mxu0 %v4645
        %v4867 = vpop.f32.mrf.mxu0
        %v4868 = vadd.f32 0.0, %v4867
        %v4869 = vpop.f32.mrf.mxu0
        %v4870 = vadd.f32 0.0, %v4869
        %4871 = vmatmul.bf16.gmra.mxu0 %v4646
        %v4872 = vpop.f32.mrf.mxu0
        %v4873 = vadd.f32 0.0, %v4872
        %v4874 = vpop.f32.mrf.mxu0
        %v4875 = vadd.f32 0.0, %v4874
        %4876 = vmatmul.bf16.gmra.mxu0 %v4647
        %v4877 = vpop.f32.mrf.mxu0
        %v4878 = vadd.f32 0.0, %v4877
        %v4879 = vpop.f32.mrf.mxu0
        %v4880 = vadd.f32 0.0, %v4879
        %4881 = vmatmul.bf16.gmra.mxu0 %v4648
        %v4882 = vpop.f32.mrf.mxu0
        %v4883 = vadd.f32 0.0, %v4882
        %v4884 = vpop.f32.mrf.mxu0
        %v4885 = vadd.f32 0.0, %v4884
        %4886 = vmatmul.bf16.gmra.mxu0 %v4649
        %v4887 = vpop.f32.mrf.mxu0
        %v4888 = vadd.f32 0.0, %v4887
        %v4889 = vpop.f32.mrf.mxu0
        %v4890 = vadd.f32 0.0, %v4889
        %4891 = vmatmul.bf16.gmra.mxu0 %v4650
        %v4892 = vpop.f32.mrf.mxu0
        %v4893 = vadd.f32 0.0, %v4892
        %v4894 = vpop.f32.mrf.mxu0
        %v4895 = vadd.f32 0.0, %v4894
        %4896 = vmatmul.bf16.gmra.mxu0 %v4651
        %v4897 = vpop.f32.mrf.mxu0
        %v4898 = vadd.f32 0.0, %v4897
        %v4899 = vpop.f32.mrf.mxu0
        %v4900 = vadd.f32 0.0, %v4899
        %4901 = vmatmul.bf16.gmra.mxu0 %v4652
        %v4902 = vpop.f32.mrf.mxu0
        %v4903 = vadd.f32 0.0, %v4902
        %v4904 = vpop.f32.mrf.mxu0
        %v4905 = vadd.f32 0.0, %v4904
        %4906 = vmatmul.bf16.gmra.mxu0 %v4653
        %v4907 = vpop.f32.mrf.mxu0
        %v4908 = vadd.f32 0.0, %v4907
        %v4909 = vpop.f32.mrf.mxu0
        %v4910 = vadd.f32 0.0, %v4909
        %4911 = vmatmul.bf16.gmra.mxu0 %v4654
        %v4912 = vpop.f32.mrf.mxu0
        %v4913 = vadd.f32 0.0, %v4912
        %v4914 = vpop.f32.mrf.mxu0
        %v4915 = vadd.f32 0.0, %v4914
        %4916 = vmatmul.bf16.gmra.mxu0 %v4655
        %v4917 = vpop.f32.mrf.mxu0
        %v4918 = vadd.f32 0.0, %v4917
        %v4919 = vpop.f32.mrf.mxu0
        %v4920 = vadd.f32 0.0, %v4919
        %4921 = vmatmul.bf16.gmra.mxu0 %v4656
        %v4922 = vpop.f32.mrf.mxu0
        %v4923 = vadd.f32 0.0, %v4922
        %v4924 = vpop.f32.mrf.mxu0
        %v4925 = vadd.f32 0.0, %v4924
        %4926 = vmatmul.bf16.gmra.mxu0 %v4657
        %v4927 = vpop.f32.mrf.mxu0
        %v4928 = vadd.f32 0.0, %v4927
        %v4929 = vpop.f32.mrf.mxu0
        %v4930 = vadd.f32 0.0, %v4929
        %4931 = vmatmul.bf16.gmra.mxu0 %v4658
        %v4932 = vpop.f32.mrf.mxu0
        %v4933 = vadd.f32 0.0, %v4932
        %v4934 = vpop.f32.mrf.mxu0
        %v4935 = vadd.f32 0.0, %v4934
        %4936 = vmatmul.bf16.gmra.mxu0 %v4659
        %v4937 = vpop.f32.mrf.mxu0
        %v4938 = vadd.f32 0.0, %v4937
        %v4939 = vpop.f32.mrf.mxu0
        %v4940 = vadd.f32 0.0, %v4939
        %4941 = vmatmul.bf16.gmra.mxu0 %v4660
        %v4942 = vpop.f32.mrf.mxu0
        %v4943 = vadd.f32 0.0, %v4942
        %v4944 = vpop.f32.mrf.mxu0
        %v4945 = vadd.f32 0.0, %v4944
        %4946 = vmatmul.bf16.gmra.mxu0 %v4661
        %v4947 = vpop.f32.mrf.mxu0
        %v4948 = vadd.f32 0.0, %v4947
        %v4949 = vpop.f32.mrf.mxu0
        %v4950 = vadd.f32 0.0, %v4949
        %4951 = vmatmul.bf16.gmra.mxu0 %v4662
        %v4952 = vpop.f32.mrf.mxu0
        %v4953 = vadd.f32 0.0, %v4952
        %v4954 = vpop.f32.mrf.mxu0
        %v4955 = vadd.f32 0.0, %v4954
        %4956 = vmatmul.bf16.gmra.mxu0 %v4663
        %v4957 = vpop.f32.mrf.mxu0
        %v4958 = vadd.f32 0.0, %v4957
        %v4959 = vpop.f32.mrf.mxu0
        %v4960 = vadd.f32 0.0, %v4959
        %4961 = vdwg.mxu0
        %v4962 = vadd.f32 %v4664, %v4803
        %v4963 = vadd.f32 %v4665, %v4805
        %v4964 = vadd.f32 %v4666, %v4808
        %v4965 = vadd.f32 %v4667, %v4810
        %v4966 = vadd.f32 %v4668, %v4813
        %v4967 = vadd.f32 %v4669, %v4815
        %v4968 = vadd.f32 %v4670, %v4818
        %v4969 = vadd.f32 %v4671, %v4820
        %v4970 = vadd.f32 %v4672, %v4823
        %v4971 = vadd.f32 %v4673, %v4825
        %v4972 = vadd.f32 %v4674, %v4828
        %v4973 = vadd.f32 %v4675, %v4830
        %v4974 = vadd.f32 %v4676, %v4833
        %v4975 = vadd.f32 %v4677, %v4835
        %v4976 = vadd.f32 %v4678, %v4838
        %v4977 = vadd.f32 %v4679, %v4840
        %v4978 = vadd.f32 %v4680, %v4843
        %v4979 = vadd.f32 %v4681, %v4845
        %v4980 = vadd.f32 %v4682, %v4848
        %v4981 = vadd.f32 %v4683, %v4850
        %v4982 = vadd.f32 %v4684, %v4853
        %v4983 = vadd.f32 %v4685, %v4855
        %v4984 = vadd.f32 %v4686, %v4858
        %v4985 = vadd.f32 %v4687, %v4860
        %v4986 = vadd.f32 %v4688, %v4863
        %v4987 = vadd.f32 %v4689, %v4865
        %v4988 = vadd.f32 %v4690, %v4868
        %v4989 = vadd.f32 %v4691, %v4870
        %v4990 = vadd.f32 %v4692, %v4873
        %v4991 = vadd.f32 %v4693, %v4875
        %v4992 = vadd.f32 %v4694, %v4878
        %v4993 = vadd.f32 %v4695, %v4880
        %v4994 = vadd.f32 %v4696, %v4883
        %v4995 = vadd.f32 %v4697, %v4885
        %v4996 = vadd.f32 %v4698, %v4888
        %v4997 = vadd.f32 %v4699, %v4890
        %v4998 = vadd.f32 %v4700, %v4893
        %v4999 = vadd.f32 %v4701, %v4895
        %v5000 = vadd.f32 %v4702, %v4898
        %v5001 = vadd.f32 %v4703, %v4900
        %v5002 = vadd.f32 %v4704, %v4903
        %v5003 = vadd.f32 %v4705, %v4905
        %v5004 = vadd.f32 %v4706, %v4908
        %v5005 = vadd.f32 %v4707, %v4910
        %v5006 = vadd.f32 %v4708, %v4913
        %v5007 = vadd.f32 %v4709, %v4915
        %v5008 = vadd.f32 %v4710, %v4918
        %v5009 = vadd.f32 %v4711, %v4920
        %v5010 = vadd.f32 %v4712, %v4923
        %v5011 = vadd.f32 %v4713, %v4925
        %v5012 = vadd.f32 %v4714, %v4928
        %v5013 = vadd.f32 %v4715, %v4930
        %v5014 = vadd.f32 %v4716, %v4933
        %v5015 = vadd.f32 %v4717, %v4935
        %v5016 = vadd.f32 %v4718, %v4938
        %v5017 = vadd.f32 %v4719, %v4940
        %v5018 = vadd.f32 %v4720, %v4943
        %v5019 = vadd.f32 %v4721, %v4945
        %v5020 = vadd.f32 %v4722, %v4948
        %v5021 = vadd.f32 %v4723, %v4950
        %v5022 = vadd.f32 %v4724, %v4953
        %v5023 = vadd.f32 %v4725, %v4955
        %v5024 = vadd.f32 %v4726, %v4958
        %v5025 = vadd.f32 %v4727, %v4960
        %5026 = vst [vmem:[#allocation2] sm:$0xff] %v4962
        %5027 = vst [vmem:[#allocation2 + $0x8] sm:$0xff] %v4963
        %5028 = vst [vmem:[#allocation2 + $0x10] sm:$0xff] %v4964
        %5029 = vst [vmem:[#allocation2 + $0x18] sm:$0xff] %v4965
        %5030 = vst [vmem:[#allocation2 + $0x20] sm:$0xff] %v4966
        %5031 = vst [vmem:[#allocation2 + $0x28] sm:$0xff] %v4967
        %5032 = vst [vmem:[#allocation2 + $0x30] sm:$0xff] %v4968
        %5033 = vst [vmem:[#allocation2 + $0x38] sm:$0xff] %v4969
        %5034 = vst [vmem:[#allocation2 + $0x40] sm:$0xff] %v4970
        %5035 = vst [vmem:[#allocation2 + $0x48] sm:$0xff] %v4971
        %5036 = vst [vmem:[#allocation2 + $0x50] sm:$0xff] %v4972
        %5037 = vst [vmem:[#allocation2 + $0x58] sm:$0xff] %v4973
        %5038 = vst [vmem:[#allocation2 + $0x60] sm:$0xff] %v4974
        %5039 = vst [vmem:[#allocation2 + $0x68] sm:$0xff] %v4975
        %5040 = vst [vmem:[#allocation2 + $0x70] sm:$0xff] %v4976
        %5041 = vst [vmem:[#allocation2 + $0x78] sm:$0xff] %v4977
        %5042 = vst [vmem:[#allocation2 + $0x80] sm:$0xff] %v4978
        %5043 = vst [vmem:[#allocation2 + $0x88] sm:$0xff] %v4979
        %5044 = vst [vmem:[#allocation2 + $0x90] sm:$0xff] %v4980
        %5045 = vst [vmem:[#allocation2 + $0x98] sm:$0xff] %v4981
        %5046 = vst [vmem:[#allocation2 + $0xa0] sm:$0xff] %v4982
        %5047 = vst [vmem:[#allocation2 + $0xa8] sm:$0xff] %v4983
        %5048 = vst [vmem:[#allocation2 + $0xb0] sm:$0xff] %v4984
        %5049 = vst [vmem:[#allocation2 + $0xb8] sm:$0xff] %v4985
        %5050 = vst [vmem:[#allocation2 + $0xc0] sm:$0xff] %v4986
        %5051 = vst [vmem:[#allocation2 + $0xc8] sm:$0xff] %v4987
        %5052 = vst [vmem:[#allocation2 + $0xd0] sm:$0xff] %v4988
        %5053 = vst [vmem:[#allocation2 + $0xd8] sm:$0xff] %v4989
        %5054 = vst [vmem:[#allocation2 + $0xe0] sm:$0xff] %v4990
        %5055 = vst [vmem:[#allocation2 + $0xe8] sm:$0xff] %v4991
        %5056 = vst [vmem:[#allocation2 + $0xf0] sm:$0xff] %v4992
        %5057 = vst [vmem:[#allocation2 + $0xf8] sm:$0xff] %v4993
        %5058 = vst [vmem:[#allocation2 + $0x100] sm:$0xff] %v4994
        %5059 = vst [vmem:[#allocation2 + $0x108] sm:$0xff] %v4995
        %5060 = vst [vmem:[#allocation2 + $0x110] sm:$0xff] %v4996
        %5061 = vst [vmem:[#allocation2 + $0x118] sm:$0xff] %v4997
        %5062 = vst [vmem:[#allocation2 + $0x120] sm:$0xff] %v4998
        %5063 = vst [vmem:[#allocation2 + $0x128] sm:$0xff] %v4999
        %5064 = vst [vmem:[#allocation2 + $0x130] sm:$0xff] %v5000
        %5065 = vst [vmem:[#allocation2 + $0x138] sm:$0xff] %v5001
        %5066 = vst [vmem:[#allocation2 + $0x140] sm:$0xff] %v5002
        %5067 = vst [vmem:[#allocation2 + $0x148] sm:$0xff] %v5003
        %5068 = vst [vmem:[#allocation2 + $0x150] sm:$0xff] %v5004
        %5069 = vst [vmem:[#allocation2 + $0x158] sm:$0xff] %v5005
        %5070 = vst [vmem:[#allocation2 + $0x160] sm:$0xff] %v5006
        %5071 = vst [vmem:[#allocation2 + $0x168] sm:$0xff] %v5007
        %5072 = vst [vmem:[#allocation2 + $0x170] sm:$0xff] %v5008
        %5073 = vst [vmem:[#allocation2 + $0x178] sm:$0xff] %v5009
        %5074 = vst [vmem:[#allocation2 + $0x180] sm:$0xff] %v5010
        %5075 = vst [vmem:[#allocation2 + $0x188] sm:$0xff] %v5011
        %5076 = vst [vmem:[#allocation2 + $0x190] sm:$0xff] %v5012
        %5077 = vst [vmem:[#allocation2 + $0x198] sm:$0xff] %v5013
        %5078 = vst [vmem:[#allocation2 + $0x1a0] sm:$0xff] %v5014
        %5079 = vst [vmem:[#allocation2 + $0x1a8] sm:$0xff] %v5015
        %5080 = vst [vmem:[#allocation2 + $0x1b0] sm:$0xff] %v5016
        %5081 = vst [vmem:[#allocation2 + $0x1b8] sm:$0xff] %v5017
        %5082 = vst [vmem:[#allocation2 + $0x1c0] sm:$0xff] %v5018
        %5083 = vst [vmem:[#allocation2 + $0x1c8] sm:$0xff] %v5019
        %5084 = vst [vmem:[#allocation2 + $0x1d0] sm:$0xff] %v5020
        %5085 = vst [vmem:[#allocation2 + $0x1d8] sm:$0xff] %v5021
        %5086 = vst [vmem:[#allocation2 + $0x1e0] sm:$0xff] %v5022
        %5087 = vst [vmem:[#allocation2 + $0x1e8] sm:$0xff] %v5023
        %5088 = vst [vmem:[#allocation2 + $0x1f0] sm:$0xff] %v5024
        %5089 = vst [vmem:[#allocation2 + $0x1f8] sm:$0xff] %v5025
        %s5090 = sadd.s32 %s285, 2
        %s5091 = smul.u32 %s5090, 5
        %s5092 = smul.addr %s5091, 4
        %s5093 = scalar_lea.vmem %s206, %s5092
        %v5094 = vld [vmem:[%s5093] sm:$0xf]
        %v5095 = vld [vmem:[%s5093 + $0x4] sm:$0xf]
        %v5096 = vld [vmem:[%s5093 + $0x8] sm:$0xf]
        %v5097 = vld [vmem:[%s5093 + $0xc] sm:$0xf]
        %v5098 = vld [vmem:[%s5093 + $0x14] sm:$0xf]
        %v5099 = vld [vmem:[%s5093 + $0x18] sm:$0xf]
        %v5100 = vld [vmem:[%s5093 + $0x1c] sm:$0xf]
        %v5101 = vld [vmem:[%s5093 + $0x20] sm:$0xf]
        %v5102 = vld [vmem:[%s5093 + $0x28] sm:$0xf]
        %v5103 = vld [vmem:[%s5093 + $0x2c] sm:$0xf]
        %v5104 = vld [vmem:[%s5093 + $0x30] sm:$0xf]
        %v5105 = vld [vmem:[%s5093 + $0x34] sm:$0xf]
        %v5106 = vld [vmem:[%s5093 + $0x3c] sm:$0xf]
        %v5107 = vld [vmem:[%s5093 + $0x40] sm:$0xf]
        %v5108 = vld [vmem:[%s5093 + $0x44] sm:$0xf]
        %v5109 = vld [vmem:[%s5093 + $0x48] sm:$0xf]
        %v5110 = vld [vmem:[%s5093 + $0x50] sm:$0xf]
        %v5111 = vld [vmem:[%s5093 + $0x54] sm:$0xf]
        %v5112 = vld [vmem:[%s5093 + $0x58] sm:$0xf]
        %v5113 = vld [vmem:[%s5093 + $0x5c] sm:$0xf]
        %v5114 = vld [vmem:[%s5093 + $0x64] sm:$0xf]
        %v5115 = vld [vmem:[%s5093 + $0x68] sm:$0xf]
        %v5116 = vld [vmem:[%s5093 + $0x6c] sm:$0xf]
        %v5117 = vld [vmem:[%s5093 + $0x70] sm:$0xf]
        %v5118 = vld [vmem:[%s5093 + $0x78] sm:$0xf]
        %v5119 = vld [vmem:[%s5093 + $0x7c] sm:$0xf]
        %v5120 = vld [vmem:[%s5093 + $0x80] sm:$0xf]
        %v5121 = vld [vmem:[%s5093 + $0x84] sm:$0xf]
        %v5122 = vld [vmem:[%s5093 + $0x8c] sm:$0xf]
        %v5123 = vld [vmem:[%s5093 + $0x90] sm:$0xf]
        %v5124 = vld [vmem:[%s5093 + $0x94] sm:$0xf]
        %v5125 = vld [vmem:[%s5093 + $0x98] sm:$0xf]
        %v5126 = vld [vmem:[%s5093 + $0xa0] sm:$0xf]
        %v5127 = vld [vmem:[%s5093 + $0xa4] sm:$0xf]
        %v5128 = vld [vmem:[%s5093 + $0xa8] sm:$0xf]
        %v5129 = vld [vmem:[%s5093 + $0xac] sm:$0xf]
        %v5130 = vld [vmem:[%s5093 + $0xb4] sm:$0xf]
        %v5131 = vld [vmem:[%s5093 + $0xb8] sm:$0xf]
        %v5132 = vld [vmem:[%s5093 + $0xbc] sm:$0xf]
        %v5133 = vld [vmem:[%s5093 + $0xc0] sm:$0xf]
        %v5134 = vld [vmem:[%s5093 + $0xc8] sm:$0xf]
        %v5135 = vld [vmem:[%s5093 + $0xcc] sm:$0xf]
        %v5136 = vld [vmem:[%s5093 + $0xd0] sm:$0xf]
        %v5137 = vld [vmem:[%s5093 + $0xd4] sm:$0xf]
        %v5138 = vld [vmem:[%s5093 + $0xdc] sm:$0xf]
        %v5139 = vld [vmem:[%s5093 + $0xe0] sm:$0xf]
        %v5140 = vld [vmem:[%s5093 + $0xe4] sm:$0xf]
        %v5141 = vld [vmem:[%s5093 + $0xe8] sm:$0xf]
        %v5142 = vld [vmem:[%s5093 + $0xf0] sm:$0xf]
        %v5143 = vld [vmem:[%s5093 + $0xf4] sm:$0xf]
        %v5144 = vld [vmem:[%s5093 + $0xf8] sm:$0xf]
        %v5145 = vld [vmem:[%s5093 + $0xfc] sm:$0xf]
        %v5146 = vld [vmem:[%s5093 + $0x104] sm:$0xf]
        %v5147 = vld [vmem:[%s5093 + $0x108] sm:$0xf]
        %v5148 = vld [vmem:[%s5093 + $0x10c] sm:$0xf]
        %v5149 = vld [vmem:[%s5093 + $0x110] sm:$0xf]
        %v5150 = vld [vmem:[%s5093 + $0x118] sm:$0xf]
        %v5151 = vld [vmem:[%s5093 + $0x11c] sm:$0xf]
        %v5152 = vld [vmem:[%s5093 + $0x120] sm:$0xf]
        %v5153 = vld [vmem:[%s5093 + $0x124] sm:$0xf]
        %v5154 = vld [vmem:[%s5093 + $0x12c] sm:$0xf]
        %v5155 = vld [vmem:[%s5093 + $0x130] sm:$0xf]
        %v5156 = vld [vmem:[%s5093 + $0x134] sm:$0xf]
        %v5157 = vld [vmem:[%s5093 + $0x138] sm:$0xf]
        %v5158 = vunpack.c.l.bf16 %v5094
        %v5159 = vunpack.c.l.bf16 %v5095
        %v5160 = vunpack.c.l.bf16 %v5096
        %v5161 = vunpack.c.l.bf16 %v5097
        %v5162 = vunpack.c.l.bf16 %v5098
        %v5163 = vunpack.c.l.bf16 %v5099
        %v5164 = vunpack.c.l.bf16 %v5100
        %v5165 = vunpack.c.l.bf16 %v5101
        %v5166 = vunpack.c.l.bf16 %v5102
        %v5167 = vunpack.c.l.bf16 %v5103
        %v5168 = vunpack.c.l.bf16 %v5104
        %v5169 = vunpack.c.l.bf16 %v5105
        %v5170 = vunpack.c.l.bf16 %v5106
        %v5171 = vunpack.c.l.bf16 %v5107
        %v5172 = vunpack.c.l.bf16 %v5108
        %v5173 = vunpack.c.l.bf16 %v5109
        %v5174 = vunpack.c.l.bf16 %v5110
        %v5175 = vunpack.c.l.bf16 %v5111
        %v5176 = vunpack.c.l.bf16 %v5112
        %v5177 = vunpack.c.l.bf16 %v5113
        %v5178 = vunpack.c.l.bf16 %v5114
        %v5179 = vunpack.c.l.bf16 %v5115
        %v5180 = vunpack.c.l.bf16 %v5116
        %v5181 = vunpack.c.l.bf16 %v5117
        %v5182 = vunpack.c.l.bf16 %v5118
        %v5183 = vunpack.c.l.bf16 %v5119
        %v5184 = vunpack.c.l.bf16 %v5120
        %v5185 = vunpack.c.l.bf16 %v5121
        %v5186 = vunpack.c.l.bf16 %v5122
        %v5187 = vunpack.c.l.bf16 %v5123
        %v5188 = vunpack.c.l.bf16 %v5124
        %v5189 = vunpack.c.l.bf16 %v5125
        %v5190 = vunpack.c.l.bf16 %v5126
        %v5191 = vunpack.c.l.bf16 %v5127
        %v5192 = vunpack.c.l.bf16 %v5128
        %v5193 = vunpack.c.l.bf16 %v5129
        %v5194 = vunpack.c.l.bf16 %v5130
        %v5195 = vunpack.c.l.bf16 %v5131
        %v5196 = vunpack.c.l.bf16 %v5132
        %v5197 = vunpack.c.l.bf16 %v5133
        %v5198 = vunpack.c.l.bf16 %v5134
        %v5199 = vunpack.c.l.bf16 %v5135
        %v5200 = vunpack.c.l.bf16 %v5136
        %v5201 = vunpack.c.l.bf16 %v5137
        %v5202 = vunpack.c.l.bf16 %v5138
        %v5203 = vunpack.c.l.bf16 %v5139
        %v5204 = vunpack.c.l.bf16 %v5140
        %v5205 = vunpack.c.l.bf16 %v5141
        %v5206 = vunpack.c.l.bf16 %v5142
        %v5207 = vunpack.c.l.bf16 %v5143
        %v5208 = vunpack.c.l.bf16 %v5144
        %v5209 = vunpack.c.l.bf16 %v5145
        %v5210 = vunpack.c.l.bf16 %v5146
        %v5211 = vunpack.c.l.bf16 %v5147
        %v5212 = vunpack.c.l.bf16 %v5148
        %v5213 = vunpack.c.l.bf16 %v5149
        %v5214 = vunpack.c.l.bf16 %v5150
        %v5215 = vunpack.c.l.bf16 %v5151
        %v5216 = vunpack.c.l.bf16 %v5152
        %v5217 = vunpack.c.l.bf16 %v5153
        %v5218 = vunpack.c.l.bf16 %v5154
        %v5219 = vunpack.c.l.bf16 %v5155
        %v5220 = vunpack.c.l.bf16 %v5156
        %v5221 = vunpack.c.l.bf16 %v5157
        %v5222 = vpack.c.bf16 %v5159, %v5158
        %v5223 = vpack.c.bf16 %v5161, %v5160
        %v5224 = vpack.c.bf16 %v5163, %v5162
        %v5225 = vpack.c.bf16 %v5165, %v5164
        %v5226 = vpack.c.bf16 %v5167, %v5166
        %v5227 = vpack.c.bf16 %v5169, %v5168
        %v5228 = vpack.c.bf16 %v5171, %v5170
        %v5229 = vpack.c.bf16 %v5173, %v5172
        %v5230 = vpack.c.bf16 %v5175, %v5174
        %v5231 = vpack.c.bf16 %v5177, %v5176
        %v5232 = vpack.c.bf16 %v5179, %v5178
        %v5233 = vpack.c.bf16 %v5181, %v5180
        %v5234 = vpack.c.bf16 %v5183, %v5182
        %v5235 = vpack.c.bf16 %v5185, %v5184
        %v5236 = vpack.c.bf16 %v5187, %v5186
        %v5237 = vpack.c.bf16 %v5189, %v5188
        %v5238 = vpack.c.bf16 %v5191, %v5190
        %v5239 = vpack.c.bf16 %v5193, %v5192
        %v5240 = vpack.c.bf16 %v5195, %v5194
        %v5241 = vpack.c.bf16 %v5197, %v5196
        %v5242 = vpack.c.bf16 %v5199, %v5198
        %v5243 = vpack.c.bf16 %v5201, %v5200
        %v5244 = vpack.c.bf16 %v5203, %v5202
        %v5245 = vpack.c.bf16 %v5205, %v5204
        %v5246 = vpack.c.bf16 %v5207, %v5206
        %v5247 = vpack.c.bf16 %v5209, %v5208
        %v5248 = vpack.c.bf16 %v5211, %v5210
        %v5249 = vpack.c.bf16 %v5213, %v5212
        %v5250 = vpack.c.bf16 %v5215, %v5214
        %v5251 = vpack.c.bf16 %v5217, %v5216
        %v5252 = vpack.c.bf16 %v5219, %v5218
        %v5253 = vpack.c.bf16 %v5221, %v5220
        %v5254 = vld [vmem:[#allocation2] sm:$0xff]
        %v5255 = vld [vmem:[#allocation2 + $0x8] sm:$0xff]
        %v5256 = vld [vmem:[#allocation2 + $0x10] sm:$0xff]
        %v5257 = vld [vmem:[#allocation2 + $0x18] sm:$0xff]
        %v5258 = vld [vmem:[#allocation2 + $0x20] sm:$0xff]
        %v5259 = vld [vmem:[#allocation2 + $0x28] sm:$0xff]
        %v5260 = vld [vmem:[#allocation2 + $0x30] sm:$0xff]
        %v5261 = vld [vmem:[#allocation2 + $0x38] sm:$0xff]
        %v5262 = vld [vmem:[#allocation2 + $0x40] sm:$0xff]
        %v5263 = vld [vmem:[#allocation2 + $0x48] sm:$0xff]
        %v5264 = vld [vmem:[#allocation2 + $0x50] sm:$0xff]
        %v5265 = vld [vmem:[#allocation2 + $0x58] sm:$0xff]
        %v5266 = vld [vmem:[#allocation2 + $0x60] sm:$0xff]
        %v5267 = vld [vmem:[#allocation2 + $0x68] sm:$0xff]
        %v5268 = vld [vmem:[#allocation2 + $0x70] sm:$0xff]
        %v5269 = vld [vmem:[#allocation2 + $0x78] sm:$0xff]
        %v5270 = vld [vmem:[#allocation2 + $0x80] sm:$0xff]
        %v5271 = vld [vmem:[#allocation2 + $0x88] sm:$0xff]
        %v5272 = vld [vmem:[#allocation2 + $0x90] sm:$0xff]
        %v5273 = vld [vmem:[#allocation2 + $0x98] sm:$0xff]
        %v5274 = vld [vmem:[#allocation2 + $0xa0] sm:$0xff]
        %v5275 = vld [vmem:[#allocation2 + $0xa8] sm:$0xff]
        %v5276 = vld [vmem:[#allocation2 + $0xb0] sm:$0xff]
        %v5277 = vld [vmem:[#allocation2 + $0xb8] sm:$0xff]
        %v5278 = vld [vmem:[#allocation2 + $0xc0] sm:$0xff]
        %v5279 = vld [vmem:[#allocation2 + $0xc8] sm:$0xff]
        %v5280 = vld [vmem:[#allocation2 + $0xd0] sm:$0xff]
        %v5281 = vld [vmem:[#allocation2 + $0xd8] sm:$0xff]
        %v5282 = vld [vmem:[#allocation2 + $0xe0] sm:$0xff]
        %v5283 = vld [vmem:[#allocation2 + $0xe8] sm:$0xff]
        %v5284 = vld [vmem:[#allocation2 + $0xf0] sm:$0xff]
        %v5285 = vld [vmem:[#allocation2 + $0xf8] sm:$0xff]
        %v5286 = vld [vmem:[#allocation2 + $0x100] sm:$0xff]
        %v5287 = vld [vmem:[#allocation2 + $0x108] sm:$0xff]
        %v5288 = vld [vmem:[#allocation2 + $0x110] sm:$0xff]
        %v5289 = vld [vmem:[#allocation2 + $0x118] sm:$0xff]
        %v5290 = vld [vmem:[#allocation2 + $0x120] sm:$0xff]
        %v5291 = vld [vmem:[#allocation2 + $0x128] sm:$0xff]
        %v5292 = vld [vmem:[#allocation2 + $0x130] sm:$0xff]
        %v5293 = vld [vmem:[#allocation2 + $0x138] sm:$0xff]
        %v5294 = vld [vmem:[#allocation2 + $0x140] sm:$0xff]
        %v5295 = vld [vmem:[#allocation2 + $0x148] sm:$0xff]
        %v5296 = vld [vmem:[#allocation2 + $0x150] sm:$0xff]
        %v5297 = vld [vmem:[#allocation2 + $0x158] sm:$0xff]
        %v5298 = vld [vmem:[#allocation2 + $0x160] sm:$0xff]
        %v5299 = vld [vmem:[#allocation2 + $0x168] sm:$0xff]
        %v5300 = vld [vmem:[#allocation2 + $0x170] sm:$0xff]
        %v5301 = vld [vmem:[#allocation2 + $0x178] sm:$0xff]
        %v5302 = vld [vmem:[#allocation2 + $0x180] sm:$0xff]
        %v5303 = vld [vmem:[#allocation2 + $0x188] sm:$0xff]
        %v5304 = vld [vmem:[#allocation2 + $0x190] sm:$0xff]
        %v5305 = vld [vmem:[#allocation2 + $0x198] sm:$0xff]
        %v5306 = vld [vmem:[#allocation2 + $0x1a0] sm:$0xff]
        %v5307 = vld [vmem:[#allocation2 + $0x1a8] sm:$0xff]
        %v5308 = vld [vmem:[#allocation2 + $0x1b0] sm:$0xff]
        %v5309 = vld [vmem:[#allocation2 + $0x1b8] sm:$0xff]
        %v5310 = vld [vmem:[#allocation2 + $0x1c0] sm:$0xff]
        %v5311 = vld [vmem:[#allocation2 + $0x1c8] sm:$0xff]
        %v5312 = vld [vmem:[#allocation2 + $0x1d0] sm:$0xff]
        %v5313 = vld [vmem:[#allocation2 + $0x1d8] sm:$0xff]
        %v5314 = vld [vmem:[#allocation2 + $0x1e0] sm:$0xff]
        %v5315 = vld [vmem:[#allocation2 + $0x1e8] sm:$0xff]
        %v5316 = vld [vmem:[#allocation2 + $0x1f0] sm:$0xff]
        %v5317 = vld [vmem:[#allocation2 + $0x1f8] sm:$0xff]
        %s5318 = scalar_lea.vmem %s214, 384
        %v5319 = vld [vmem:[%s5318] sm:$0xf]
        %v5320 = vld [vmem:[%s5318 + $0x4] sm:$0xf]
        %v5321 = vld [vmem:[%s5318 + $0x8] sm:$0xf]
        %v5322 = vld [vmem:[%s5318 + $0xc] sm:$0xf]
        %v5323 = vld [vmem:[%s5318 + $0x10] sm:$0xf]
        %v5324 = vld [vmem:[%s5318 + $0x14] sm:$0xf]
        %v5325 = vld [vmem:[%s5318 + $0x18] sm:$0xf]
        %v5326 = vld [vmem:[%s5318 + $0x1c] sm:$0xf]
        %v5327 = vld [vmem:[%s5318 + $0x20] sm:$0xf]
        %v5328 = vld [vmem:[%s5318 + $0x24] sm:$0xf]
        %v5329 = vld [vmem:[%s5318 + $0x28] sm:$0xf]
        %v5330 = vld [vmem:[%s5318 + $0x2c] sm:$0xf]
        %v5331 = vld [vmem:[%s5318 + $0x30] sm:$0xf]
        %v5332 = vld [vmem:[%s5318 + $0x34] sm:$0xf]
        %v5333 = vld [vmem:[%s5318 + $0x38] sm:$0xf]
        %v5334 = vld [vmem:[%s5318 + $0x3c] sm:$0xf]
        %v5351 = vunpack.c.l.b16 %v5319
        %v5352 = vunpack.c.l.b16 %v5320
        %v5353 = vunpack.c.l.b16 %v5321
        %v5354 = vunpack.c.l.b16 %v5322
        %v5355 = vunpack.c.l.b16 %v5323
        %v5356 = vunpack.c.l.b16 %v5324
        %v5357 = vunpack.c.l.b16 %v5325
        %v5358 = vunpack.c.l.b16 %v5326
        %v5359 = vunpack.c.l.b16 %v5327
        %v5360 = vunpack.c.l.b16 %v5328
        %v5361 = vunpack.c.l.b16 %v5329
        %v5362 = vunpack.c.l.b16 %v5330
        %v5363 = vunpack.c.l.b16 %v5331
        %v5364 = vunpack.c.l.b16 %v5332
        %v5365 = vunpack.c.l.b16 %v5333
        %v5366 = vunpack.c.l.b16 %v5334
        %v5367 = vpack.c.b16 %v5352, %v5351
        %v5368 = vpack.c.b16 %v5354, %v5353
        %v5369 = vpack.c.b16 %v5356, %v5355
        %v5370 = vpack.c.b16 %v5358, %v5357
        %v5371 = vpack.c.b16 %v5360, %v5359
        %v5372 = vpack.c.b16 %v5362, %v5361
        %v5373 = vpack.c.b16 %v5364, %v5363
        %v5374 = vpack.c.b16 %v5366, %v5365
        %5383 = vmatpush.bf16.msra.mxu0 %v5374
        %5384 = vmatpush.bf16.msra.mxu0 %v5373
        %5385 = vmatpush.bf16.msra.mxu0 %v5372
        %5386 = vmatpush.bf16.msra.mxu0 %v5371
        %5387 = vmatpush.bf16.msra.mxu0 %v5370
        %5388 = vmatpush.bf16.msra.mxu0 %v5369
        %5389 = vmatpush.bf16.msra.mxu0 %v5368
        %5390 = vmatpush.bf16.msra.mxu0 %v5367
        %5391 = vmatmul.bf16.gmra.mxu0 %v5222
        %v5392 = vpop.f32.mrf.mxu0
        %v5393 = vadd.f32 0.0, %v5392
        %v5394 = vpop.f32.mrf.mxu0
        %v5395 = vadd.f32 0.0, %v5394
        %5396 = vmatmul.bf16.gmra.mxu0 %v5223
        %v5397 = vpop.f32.mrf.mxu0
        %v5398 = vadd.f32 0.0, %v5397
        %v5399 = vpop.f32.mrf.mxu0
        %v5400 = vadd.f32 0.0, %v5399
        %5401 = vmatmul.bf16.gmra.mxu0 %v5224
        %v5402 = vpop.f32.mrf.mxu0
        %v5403 = vadd.f32 0.0, %v5402
        %v5404 = vpop.f32.mrf.mxu0
        %v5405 = vadd.f32 0.0, %v5404
        %5406 = vmatmul.bf16.gmra.mxu0 %v5225
        %v5407 = vpop.f32.mrf.mxu0
        %v5408 = vadd.f32 0.0, %v5407
        %v5409 = vpop.f32.mrf.mxu0
        %v5410 = vadd.f32 0.0, %v5409
        %5411 = vmatmul.bf16.gmra.mxu0 %v5226
        %v5412 = vpop.f32.mrf.mxu0
        %v5413 = vadd.f32 0.0, %v5412
        %v5414 = vpop.f32.mrf.mxu0
        %v5415 = vadd.f32 0.0, %v5414
        %5416 = vmatmul.bf16.gmra.mxu0 %v5227
        %v5417 = vpop.f32.mrf.mxu0
        %v5418 = vadd.f32 0.0, %v5417
        %v5419 = vpop.f32.mrf.mxu0
        %v5420 = vadd.f32 0.0, %v5419
        %5421 = vmatmul.bf16.gmra.mxu0 %v5228
        %v5422 = vpop.f32.mrf.mxu0
        %v5423 = vadd.f32 0.0, %v5422
        %v5424 = vpop.f32.mrf.mxu0
        %v5425 = vadd.f32 0.0, %v5424
        %5426 = vmatmul.bf16.gmra.mxu0 %v5229
        %v5427 = vpop.f32.mrf.mxu0
        %v5428 = vadd.f32 0.0, %v5427
        %v5429 = vpop.f32.mrf.mxu0
        %v5430 = vadd.f32 0.0, %v5429
        %5431 = vmatmul.bf16.gmra.mxu0 %v5230
        %v5432 = vpop.f32.mrf.mxu0
        %v5433 = vadd.f32 0.0, %v5432
        %v5434 = vpop.f32.mrf.mxu0
        %v5435 = vadd.f32 0.0, %v5434
        %5436 = vmatmul.bf16.gmra.mxu0 %v5231
        %v5437 = vpop.f32.mrf.mxu0
        %v5438 = vadd.f32 0.0, %v5437
        %v5439 = vpop.f32.mrf.mxu0
        %v5440 = vadd.f32 0.0, %v5439
        %5441 = vmatmul.bf16.gmra.mxu0 %v5232
        %v5442 = vpop.f32.mrf.mxu0
        %v5443 = vadd.f32 0.0, %v5442
        %v5444 = vpop.f32.mrf.mxu0
        %v5445 = vadd.f32 0.0, %v5444
        %5446 = vmatmul.bf16.gmra.mxu0 %v5233
        %v5447 = vpop.f32.mrf.mxu0
        %v5448 = vadd.f32 0.0, %v5447
        %v5449 = vpop.f32.mrf.mxu0
        %v5450 = vadd.f32 0.0, %v5449
        %5451 = vmatmul.bf16.gmra.mxu0 %v5234
        %v5452 = vpop.f32.mrf.mxu0
        %v5453 = vadd.f32 0.0, %v5452
        %v5454 = vpop.f32.mrf.mxu0
        %v5455 = vadd.f32 0.0, %v5454
        %5456 = vmatmul.bf16.gmra.mxu0 %v5235
        %v5457 = vpop.f32.mrf.mxu0
        %v5458 = vadd.f32 0.0, %v5457
        %v5459 = vpop.f32.mrf.mxu0
        %v5460 = vadd.f32 0.0, %v5459
        %5461 = vmatmul.bf16.gmra.mxu0 %v5236
        %v5462 = vpop.f32.mrf.mxu0
        %v5463 = vadd.f32 0.0, %v5462
        %v5464 = vpop.f32.mrf.mxu0
        %v5465 = vadd.f32 0.0, %v5464
        %5466 = vmatmul.bf16.gmra.mxu0 %v5237
        %v5467 = vpop.f32.mrf.mxu0
        %v5468 = vadd.f32 0.0, %v5467
        %v5469 = vpop.f32.mrf.mxu0
        %v5470 = vadd.f32 0.0, %v5469
        %5471 = vmatmul.bf16.gmra.mxu0 %v5238
        %v5472 = vpop.f32.mrf.mxu0
        %v5473 = vadd.f32 0.0, %v5472
        %v5474 = vpop.f32.mrf.mxu0
        %v5475 = vadd.f32 0.0, %v5474
        %5476 = vmatmul.bf16.gmra.mxu0 %v5239
        %v5477 = vpop.f32.mrf.mxu0
        %v5478 = vadd.f32 0.0, %v5477
        %v5479 = vpop.f32.mrf.mxu0
        %v5480 = vadd.f32 0.0, %v5479
        %5481 = vmatmul.bf16.gmra.mxu0 %v5240
        %v5482 = vpop.f32.mrf.mxu0
        %v5483 = vadd.f32 0.0, %v5482
        %v5484 = vpop.f32.mrf.mxu0
        %v5485 = vadd.f32 0.0, %v5484
        %5486 = vmatmul.bf16.gmra.mxu0 %v5241
        %v5487 = vpop.f32.mrf.mxu0
        %v5488 = vadd.f32 0.0, %v5487
        %v5489 = vpop.f32.mrf.mxu0
        %v5490 = vadd.f32 0.0, %v5489
        %5491 = vmatmul.bf16.gmra.mxu0 %v5242
        %v5492 = vpop.f32.mrf.mxu0
        %v5493 = vadd.f32 0.0, %v5492
        %v5494 = vpop.f32.mrf.mxu0
        %v5495 = vadd.f32 0.0, %v5494
        %5496 = vmatmul.bf16.gmra.mxu0 %v5243
        %v5497 = vpop.f32.mrf.mxu0
        %v5498 = vadd.f32 0.0, %v5497
        %v5499 = vpop.f32.mrf.mxu0
        %v5500 = vadd.f32 0.0, %v5499
        %5501 = vmatmul.bf16.gmra.mxu0 %v5244
        %v5502 = vpop.f32.mrf.mxu0
        %v5503 = vadd.f32 0.0, %v5502
        %v5504 = vpop.f32.mrf.mxu0
        %v5505 = vadd.f32 0.0, %v5504
        %5506 = vmatmul.bf16.gmra.mxu0 %v5245
        %v5507 = vpop.f32.mrf.mxu0
        %v5508 = vadd.f32 0.0, %v5507
        %v5509 = vpop.f32.mrf.mxu0
        %v5510 = vadd.f32 0.0, %v5509
        %5511 = vmatmul.bf16.gmra.mxu0 %v5246
        %v5512 = vpop.f32.mrf.mxu0
        %v5513 = vadd.f32 0.0, %v5512
        %v5514 = vpop.f32.mrf.mxu0
        %v5515 = vadd.f32 0.0, %v5514
        %5516 = vmatmul.bf16.gmra.mxu0 %v5247
        %v5517 = vpop.f32.mrf.mxu0
        %v5518 = vadd.f32 0.0, %v5517
        %v5519 = vpop.f32.mrf.mxu0
        %v5520 = vadd.f32 0.0, %v5519
        %5521 = vmatmul.bf16.gmra.mxu0 %v5248
        %v5522 = vpop.f32.mrf.mxu0
        %v5523 = vadd.f32 0.0, %v5522
        %v5524 = vpop.f32.mrf.mxu0
        %v5525 = vadd.f32 0.0, %v5524
        %5526 = vmatmul.bf16.gmra.mxu0 %v5249
        %v5527 = vpop.f32.mrf.mxu0
        %v5528 = vadd.f32 0.0, %v5527
        %v5529 = vpop.f32.mrf.mxu0
        %v5530 = vadd.f32 0.0, %v5529
        %5531 = vmatmul.bf16.gmra.mxu0 %v5250
        %v5532 = vpop.f32.mrf.mxu0
        %v5533 = vadd.f32 0.0, %v5532
        %v5534 = vpop.f32.mrf.mxu0
        %v5535 = vadd.f32 0.0, %v5534
        %5536 = vmatmul.bf16.gmra.mxu0 %v5251
        %v5537 = vpop.f32.mrf.mxu0
        %v5538 = vadd.f32 0.0, %v5537
        %v5539 = vpop.f32.mrf.mxu0
        %v5540 = vadd.f32 0.0, %v5539
        %5541 = vmatmul.bf16.gmra.mxu0 %v5252
        %v5542 = vpop.f32.mrf.mxu0
        %v5543 = vadd.f32 0.0, %v5542
        %v5544 = vpop.f32.mrf.mxu0
        %v5545 = vadd.f32 0.0, %v5544
        %5546 = vmatmul.bf16.gmra.mxu0 %v5253
        %v5547 = vpop.f32.mrf.mxu0
        %v5548 = vadd.f32 0.0, %v5547
        %v5549 = vpop.f32.mrf.mxu0
        %v5550 = vadd.f32 0.0, %v5549
        %5551 = vdwg.mxu0
        %v5552 = vadd.f32 %v5254, %v5393
        %v5553 = vadd.f32 %v5255, %v5395
        %v5554 = vadd.f32 %v5256, %v5398
        %v5555 = vadd.f32 %v5257, %v5400
        %v5556 = vadd.f32 %v5258, %v5403
        %v5557 = vadd.f32 %v5259, %v5405
        %v5558 = vadd.f32 %v5260, %v5408
        %v5559 = vadd.f32 %v5261, %v5410
        %v5560 = vadd.f32 %v5262, %v5413
        %v5561 = vadd.f32 %v5263, %v5415
        %v5562 = vadd.f32 %v5264, %v5418
        %v5563 = vadd.f32 %v5265, %v5420
        %v5564 = vadd.f32 %v5266, %v5423
        %v5565 = vadd.f32 %v5267, %v5425
        %v5566 = vadd.f32 %v5268, %v5428
        %v5567 = vadd.f32 %v5269, %v5430
        %v5568 = vadd.f32 %v5270, %v5433
        %v5569 = vadd.f32 %v5271, %v5435
        %v5570 = vadd.f32 %v5272, %v5438
        %v5571 = vadd.f32 %v5273, %v5440
        %v5572 = vadd.f32 %v5274, %v5443
        %v5573 = vadd.f32 %v5275, %v5445
        %v5574 = vadd.f32 %v5276, %v5448
        %v5575 = vadd.f32 %v5277, %v5450
        %v5576 = vadd.f32 %v5278, %v5453
        %v5577 = vadd.f32 %v5279, %v5455
        %v5578 = vadd.f32 %v5280, %v5458
        %v5579 = vadd.f32 %v5281, %v5460
        %v5580 = vadd.f32 %v5282, %v5463
        %v5581 = vadd.f32 %v5283, %v5465
        %v5582 = vadd.f32 %v5284, %v5468
        %v5583 = vadd.f32 %v5285, %v5470
        %v5584 = vadd.f32 %v5286, %v5473
        %v5585 = vadd.f32 %v5287, %v5475
        %v5586 = vadd.f32 %v5288, %v5478
        %v5587 = vadd.f32 %v5289, %v5480
        %v5588 = vadd.f32 %v5290, %v5483
        %v5589 = vadd.f32 %v5291, %v5485
        %v5590 = vadd.f32 %v5292, %v5488
        %v5591 = vadd.f32 %v5293, %v5490
        %v5592 = vadd.f32 %v5294, %v5493
        %v5593 = vadd.f32 %v5295, %v5495
        %v5594 = vadd.f32 %v5296, %v5498
        %v5595 = vadd.f32 %v5297, %v5500
        %v5596 = vadd.f32 %v5298, %v5503
        %v5597 = vadd.f32 %v5299, %v5505
        %v5598 = vadd.f32 %v5300, %v5508
        %v5599 = vadd.f32 %v5301, %v5510
        %v5600 = vadd.f32 %v5302, %v5513
        %v5601 = vadd.f32 %v5303, %v5515
        %v5602 = vadd.f32 %v5304, %v5518
        %v5603 = vadd.f32 %v5305, %v5520
        %v5604 = vadd.f32 %v5306, %v5523
        %v5605 = vadd.f32 %v5307, %v5525
        %v5606 = vadd.f32 %v5308, %v5528
        %v5607 = vadd.f32 %v5309, %v5530
        %v5608 = vadd.f32 %v5310, %v5533
        %v5609 = vadd.f32 %v5311, %v5535
        %v5610 = vadd.f32 %v5312, %v5538
        %v5611 = vadd.f32 %v5313, %v5540
        %v5612 = vadd.f32 %v5314, %v5543
        %v5613 = vadd.f32 %v5315, %v5545
        %v5614 = vadd.f32 %v5316, %v5548
        %v5615 = vadd.f32 %v5317, %v5550
        %5616 = vst [vmem:[#allocation2] sm:$0xff] %v5552
        %5617 = vst [vmem:[#allocation2 + $0x8] sm:$0xff] %v5553
        %5618 = vst [vmem:[#allocation2 + $0x10] sm:$0xff] %v5554
        %5619 = vst [vmem:[#allocation2 + $0x18] sm:$0xff] %v5555
        %5620 = vst [vmem:[#allocation2 + $0x20] sm:$0xff] %v5556
        %5621 = vst [vmem:[#allocation2 + $0x28] sm:$0xff] %v5557
        %5622 = vst [vmem:[#allocation2 + $0x30] sm:$0xff] %v5558
        %5623 = vst [vmem:[#allocation2 + $0x38] sm:$0xff] %v5559
        %5624 = vst [vmem:[#allocation2 + $0x40] sm:$0xff] %v5560
        %5625 = vst [vmem:[#allocation2 + $0x48] sm:$0xff] %v5561
        %5626 = vst [vmem:[#allocation2 + $0x50] sm:$0xff] %v5562
        %5627 = vst [vmem:[#allocation2 + $0x58] sm:$0xff] %v5563
        %5628 = vst [vmem:[#allocation2 + $0x60] sm:$0xff] %v5564
        %5629 = vst [vmem:[#allocation2 + $0x68] sm:$0xff] %v5565
        %5630 = vst [vmem:[#allocation2 + $0x70] sm:$0xff] %v5566
        %5631 = vst [vmem:[#allocation2 + $0x78] sm:$0xff] %v5567
        %5632 = vst [vmem:[#allocation2 + $0x80] sm:$0xff] %v5568
        %5633 = vst [vmem:[#allocation2 + $0x88] sm:$0xff] %v5569
        %5634 = vst [vmem:[#allocation2 + $0x90] sm:$0xff] %v5570
        %5635 = vst [vmem:[#allocation2 + $0x98] sm:$0xff] %v5571
        %5636 = vst [vmem:[#allocation2 + $0xa0] sm:$0xff] %v5572
        %5637 = vst [vmem:[#allocation2 + $0xa8] sm:$0xff] %v5573
        %5638 = vst [vmem:[#allocation2 + $0xb0] sm:$0xff] %v5574
        %5639 = vst [vmem:[#allocation2 + $0xb8] sm:$0xff] %v5575
        %5640 = vst [vmem:[#allocation2 + $0xc0] sm:$0xff] %v5576
        %5641 = vst [vmem:[#allocation2 + $0xc8] sm:$0xff] %v5577
        %5642 = vst [vmem:[#allocation2 + $0xd0] sm:$0xff] %v5578
        %5643 = vst [vmem:[#allocation2 + $0xd8] sm:$0xff] %v5579
        %5644 = vst [vmem:[#allocation2 + $0xe0] sm:$0xff] %v5580
        %5645 = vst [vmem:[#allocation2 + $0xe8] sm:$0xff] %v5581
        %5646 = vst [vmem:[#allocation2 + $0xf0] sm:$0xff] %v5582
        %5647 = vst [vmem:[#allocation2 + $0xf8] sm:$0xff] %v5583
        %5648 = vst [vmem:[#allocation2 + $0x100] sm:$0xff] %v5584
        %5649 = vst [vmem:[#allocation2 + $0x108] sm:$0xff] %v5585
        %5650 = vst [vmem:[#allocation2 + $0x110] sm:$0xff] %v5586
        %5651 = vst [vmem:[#allocation2 + $0x118] sm:$0xff] %v5587
        %5652 = vst [vmem:[#allocation2 + $0x120] sm:$0xff] %v5588
        %5653 = vst [vmem:[#allocation2 + $0x128] sm:$0xff] %v5589
        %5654 = vst [vmem:[#allocation2 + $0x130] sm:$0xff] %v5590
        %5655 = vst [vmem:[#allocation2 + $0x138] sm:$0xff] %v5591
        %5656 = vst [vmem:[#allocation2 + $0x140] sm:$0xff] %v5592
        %5657 = vst [vmem:[#allocation2 + $0x148] sm:$0xff] %v5593
        %5658 = vst [vmem:[#allocation2 + $0x150] sm:$0xff] %v5594
        %5659 = vst [vmem:[#allocation2 + $0x158] sm:$0xff] %v5595
        %5660 = vst [vmem:[#allocation2 + $0x160] sm:$0xff] %v5596
        %5661 = vst [vmem:[#allocation2 + $0x168] sm:$0xff] %v5597
        %5662 = vst [vmem:[#allocation2 + $0x170] sm:$0xff] %v5598
        %5663 = vst [vmem:[#allocation2 + $0x178] sm:$0xff] %v5599
        %5664 = vst [vmem:[#allocation2 + $0x180] sm:$0xff] %v5600
        %5665 = vst [vmem:[#allocation2 + $0x188] sm:$0xff] %v5601
        %5666 = vst [vmem:[#allocation2 + $0x190] sm:$0xff] %v5602
        %5667 = vst [vmem:[#allocation2 + $0x198] sm:$0xff] %v5603
        %5668 = vst [vmem:[#allocation2 + $0x1a0] sm:$0xff] %v5604
        %5669 = vst [vmem:[#allocation2 + $0x1a8] sm:$0xff] %v5605
        %5670 = vst [vmem:[#allocation2 + $0x1b0] sm:$0xff] %v5606
        %5671 = vst [vmem:[#allocation2 + $0x1b8] sm:$0xff] %v5607
        %5672 = vst [vmem:[#allocation2 + $0x1c0] sm:$0xff] %v5608
        %5673 = vst [vmem:[#allocation2 + $0x1c8] sm:$0xff] %v5609
        %5674 = vst [vmem:[#allocation2 + $0x1d0] sm:$0xff] %v5610
        %5675 = vst [vmem:[#allocation2 + $0x1d8] sm:$0xff] %v5611
        %5676 = vst [vmem:[#allocation2 + $0x1e0] sm:$0xff] %v5612
        %5677 = vst [vmem:[#allocation2 + $0x1e8] sm:$0xff] %v5613
        %5678 = vst [vmem:[#allocation2 + $0x1f0] sm:$0xff] %v5614
        %5679 = vst [vmem:[#allocation2 + $0x1f8] sm:$0xff] %v5615
        %v5680 = vld [vmem:[%s5093] sm:$0xf]
        %v5681 = vld [vmem:[%s5093 + $0x4] sm:$0xf]
        %v5682 = vld [vmem:[%s5093 + $0x8] sm:$0xf]
        %v5683 = vld [vmem:[%s5093 + $0xc] sm:$0xf]
        %v5684 = vld [vmem:[%s5093 + $0x10] sm:$0x1]
        %v5685 = vld [vmem:[%s5093 + $0x14] sm:$0xf]
        %v5686 = vld [vmem:[%s5093 + $0x18] sm:$0xf]
        %v5687 = vld [vmem:[%s5093 + $0x1c] sm:$0xf]
        %v5688 = vld [vmem:[%s5093 + $0x20] sm:$0xf]
        %v5689 = vld [vmem:[%s5093 + $0x24] sm:$0x1]
        %v5690 = vld [vmem:[%s5093 + $0x28] sm:$0xf]
        %v5691 = vld [vmem:[%s5093 + $0x2c] sm:$0xf]
        %v5692 = vld [vmem:[%s5093 + $0x30] sm:$0xf]
        %v5693 = vld [vmem:[%s5093 + $0x34] sm:$0xf]
        %v5694 = vld [vmem:[%s5093 + $0x38] sm:$0x1]
        %v5695 = vld [vmem:[%s5093 + $0x3c] sm:$0xf]
        %v5696 = vld [vmem:[%s5093 + $0x40] sm:$0xf]
        %v5697 = vld [vmem:[%s5093 + $0x44] sm:$0xf]
        %v5698 = vld [vmem:[%s5093 + $0x48] sm:$0xf]
        %v5699 = vld [vmem:[%s5093 + $0x4c] sm:$0x1]
        %v5700 = vld [vmem:[%s5093 + $0x50] sm:$0xf]
        %v5701 = vld [vmem:[%s5093 + $0x54] sm:$0xf]
        %v5702 = vld [vmem:[%s5093 + $0x58] sm:$0xf]
        %v5703 = vld [vmem:[%s5093 + $0x5c] sm:$0xf]
        %v5704 = vld [vmem:[%s5093 + $0x60] sm:$0x1]
        %v5705 = vld [vmem:[%s5093 + $0x64] sm:$0xf]
        %v5706 = vld [vmem:[%s5093 + $0x68] sm:$0xf]
        %v5707 = vld [vmem:[%s5093 + $0x6c] sm:$0xf]
        %v5708 = vld [vmem:[%s5093 + $0x70] sm:$0xf]
        %v5709 = vld [vmem:[%s5093 + $0x74] sm:$0x1]
        %v5710 = vld [vmem:[%s5093 + $0x78] sm:$0xf]
        %v5711 = vld [vmem:[%s5093 + $0x7c] sm:$0xf]
        %v5712 = vld [vmem:[%s5093 + $0x80] sm:$0xf]
        %v5713 = vld [vmem:[%s5093 + $0x84] sm:$0xf]
        %v5714 = vld [vmem:[%s5093 + $0x88] sm:$0x1]
        %v5715 = vld [vmem:[%s5093 + $0x8c] sm:$0xf]
        %v5716 = vld [vmem:[%s5093 + $0x90] sm:$0xf]
        %v5717 = vld [vmem:[%s5093 + $0x94] sm:$0xf]
        %v5718 = vld [vmem:[%s5093 + $0x98] sm:$0xf]
        %v5719 = vld [vmem:[%s5093 + $0x9c] sm:$0x1]
        %v5720 = vld [vmem:[%s5093 + $0xa0] sm:$0xf]
        %v5721 = vld [vmem:[%s5093 + $0xa4] sm:$0xf]
        %v5722 = vld [vmem:[%s5093 + $0xa8] sm:$0xf]
        %v5723 = vld [vmem:[%s5093 + $0xac] sm:$0xf]
        %v5724 = vld [vmem:[%s5093 + $0xb0] sm:$0x1]
        %v5725 = vld [vmem:[%s5093 + $0xb4] sm:$0xf]
        %v5726 = vld [vmem:[%s5093 + $0xb8] sm:$0xf]
        %v5727 = vld [vmem:[%s5093 + $0xbc] sm:$0xf]
        %v5728 = vld [vmem:[%s5093 + $0xc0] sm:$0xf]
        %v5729 = vld [vmem:[%s5093 + $0xc4] sm:$0x1]
        %v5730 = vld [vmem:[%s5093 + $0xc8] sm:$0xf]
        %v5731 = vld [vmem:[%s5093 + $0xcc] sm:$0xf]
        %v5732 = vld [vmem:[%s5093 + $0xd0] sm:$0xf]
        %v5733 = vld [vmem:[%s5093 + $0xd4] sm:$0xf]
        %v5734 = vld [vmem:[%s5093 + $0xd8] sm:$0x1]
        %v5735 = vld [vmem:[%s5093 + $0xdc] sm:$0xf]
        %v5736 = vld [vmem:[%s5093 + $0xe0] sm:$0xf]
        %v5737 = vld [vmem:[%s5093 + $0xe4] sm:$0xf]
        %v5738 = vld [vmem:[%s5093 + $0xe8] sm:$0xf]
        %v5739 = vld [vmem:[%s5093 + $0xec] sm:$0x1]
        %v5740 = vld [vmem:[%s5093 + $0xf0] sm:$0xf]
        %v5741 = vld [vmem:[%s5093 + $0xf4] sm:$0xf]
        %v5742 = vld [vmem:[%s5093 + $0xf8] sm:$0xf]
        %v5743 = vld [vmem:[%s5093 + $0xfc] sm:$0xf]
        %v5744 = vld [vmem:[%s5093 + $0x100] sm:$0x1]
        %v5745 = vld [vmem:[%s5093 + $0x104] sm:$0xf]
        %v5746 = vld [vmem:[%s5093 + $0x108] sm:$0xf]
        %v5747 = vld [vmem:[%s5093 + $0x10c] sm:$0xf]
        %v5748 = vld [vmem:[%s5093 + $0x110] sm:$0xf]
        %v5749 = vld [vmem:[%s5093 + $0x114] sm:$0x1]
        %v5750 = vld [vmem:[%s5093 + $0x118] sm:$0xf]
        %v5751 = vld [vmem:[%s5093 + $0x11c] sm:$0xf]
        %v5752 = vld [vmem:[%s5093 + $0x120] sm:$0xf]
        %v5753 = vld [vmem:[%s5093 + $0x124] sm:$0xf]
        %v5754 = vld [vmem:[%s5093 + $0x128] sm:$0x1]
        %v5755 = vld [vmem:[%s5093 + $0x12c] sm:$0xf]
        %v5756 = vld [vmem:[%s5093 + $0x130] sm:$0xf]
        %v5757 = vld [vmem:[%s5093 + $0x134] sm:$0xf]
        %v5758 = vld [vmem:[%s5093 + $0x138] sm:$0xf]
        %v5759 = vld [vmem:[%s5093 + $0x13c] sm:$0x1]
        %v5760 = vunpack.c.l.bf16 %v5680
        %v5761 = vunpack.c.l.bf16 %v5681
        %v5762 = vunpack.c.l.bf16 %v5682
        %v5763 = vunpack.c.l.bf16 %v5683
        %v5764 = vunpack.c.l.bf16 %v5684
        %v5765 = vunpack.c.l.bf16 %v5685
        %v5766 = vunpack.c.l.bf16 %v5686
        %v5767 = vunpack.c.l.bf16 %v5687
        %v5768 = vunpack.c.l.bf16 %v5688
        %v5769 = vunpack.c.l.bf16 %v5689
        %v5770 = vunpack.c.l.bf16 %v5690
        %v5771 = vunpack.c.l.bf16 %v5691
        %v5772 = vunpack.c.l.bf16 %v5692
        %v5773 = vunpack.c.l.bf16 %v5693
        %v5774 = vunpack.c.l.bf16 %v5694
        %v5775 = vunpack.c.l.bf16 %v5695
        %v5776 = vunpack.c.l.bf16 %v5696
        %v5777 = vunpack.c.l.bf16 %v5697
        %v5778 = vunpack.c.l.bf16 %v5698
        %v5779 = vunpack.c.l.bf16 %v5699
        %v5780 = vunpack.c.l.bf16 %v5700
        %v5781 = vunpack.c.l.bf16 %v5701
        %v5782 = vunpack.c.l.bf16 %v5702
        %v5783 = vunpack.c.l.bf16 %v5703
        %v5784 = vunpack.c.l.bf16 %v5704
        %v5785 = vunpack.c.l.bf16 %v5705
        %v5786 = vunpack.c.l.bf16 %v5706
        %v5787 = vunpack.c.l.bf16 %v5707
        %v5788 = vunpack.c.l.bf16 %v5708
        %v5789 = vunpack.c.l.bf16 %v5709
        %v5790 = vunpack.c.l.bf16 %v5710
        %v5791 = vunpack.c.l.bf16 %v5711
        %v5792 = vunpack.c.l.bf16 %v5712
        %v5793 = vunpack.c.l.bf16 %v5713
        %v5794 = vunpack.c.l.bf16 %v5714
        %v5795 = vunpack.c.l.bf16 %v5715
        %v5796 = vunpack.c.l.bf16 %v5716
        %v5797 = vunpack.c.l.bf16 %v5717
        %v5798 = vunpack.c.l.bf16 %v5718
        %v5799 = vunpack.c.l.bf16 %v5719
        %v5800 = vunpack.c.l.bf16 %v5720
        %v5801 = vunpack.c.l.bf16 %v5721
        %v5802 = vunpack.c.l.bf16 %v5722
        %v5803 = vunpack.c.l.bf16 %v5723
        %v5804 = vunpack.c.l.bf16 %v5724
        %v5805 = vunpack.c.l.bf16 %v5725
        %v5806 = vunpack.c.l.bf16 %v5726
        %v5807 = vunpack.c.l.bf16 %v5727
        %v5808 = vunpack.c.l.bf16 %v5728
        %v5809 = vunpack.c.l.bf16 %v5729
        %v5810 = vunpack.c.l.bf16 %v5730
        %v5811 = vunpack.c.l.bf16 %v5731
        %v5812 = vunpack.c.l.bf16 %v5732
        %v5813 = vunpack.c.l.bf16 %v5733
        %v5814 = vunpack.c.l.bf16 %v5734
        %v5815 = vunpack.c.l.bf16 %v5735
        %v5816 = vunpack.c.l.bf16 %v5736
        %v5817 = vunpack.c.l.bf16 %v5737
        %v5818 = vunpack.c.l.bf16 %v5738
        %v5819 = vunpack.c.l.bf16 %v5739
        %v5820 = vunpack.c.l.bf16 %v5740
        %v5821 = vunpack.c.l.bf16 %v5741
        %v5822 = vunpack.c.l.bf16 %v5742
        %v5823 = vunpack.c.l.bf16 %v5743
        %v5824 = vunpack.c.l.bf16 %v5744
        %v5825 = vunpack.c.l.bf16 %v5745
        %v5826 = vunpack.c.l.bf16 %v5746
        %v5827 = vunpack.c.l.bf16 %v5747
        %v5828 = vunpack.c.l.bf16 %v5748
        %v5829 = vunpack.c.l.bf16 %v5749
        %v5830 = vunpack.c.l.bf16 %v5750
        %v5831 = vunpack.c.l.bf16 %v5751
        %v5832 = vunpack.c.l.bf16 %v5752
        %v5833 = vunpack.c.l.bf16 %v5753
        %v5834 = vunpack.c.l.bf16 %v5754
        %v5835 = vunpack.c.l.bf16 %v5755
        %v5836 = vunpack.c.l.bf16 %v5756
        %v5837 = vunpack.c.l.bf16 %v5757
        %v5838 = vunpack.c.l.bf16 %v5758
        %v5839 = vunpack.c.l.bf16 %v5759
        %v5920 = vrot.slane %v5760, 1
        %v5921 = vrot.slane %v5761, 1
        %v5922 = vsel %vm1114, %v5920, %v5921
        %v5923 = vrot.slane %v5762, 1
        %v5924 = vsel %vm1114, %v5921, %v5923
        %v5925 = vrot.slane %v5763, 1
        %v5926 = vsel %vm1114, %v5923, %v5925
        %v5927 = vrot.slane %v5764, 1
        %v5928 = vsel %vm1114, %v5925, %v5927
        %v5929 = vrot.slane %v5765, 1
        %v5930 = vrot.slane %v5766, 1
        %v5931 = vsel %vm1114, %v5929, %v5930
        %v5932 = vrot.slane %v5767, 1
        %v5933 = vsel %vm1114, %v5930, %v5932
        %v5934 = vrot.slane %v5768, 1
        %v5935 = vsel %vm1114, %v5932, %v5934
        %v5936 = vrot.slane %v5769, 1
        %v5937 = vsel %vm1114, %v5934, %v5936
        %v5938 = vrot.slane %v5770, 1
        %v5939 = vrot.slane %v5771, 1
        %v5940 = vsel %vm1114, %v5938, %v5939
        %v5941 = vrot.slane %v5772, 1
        %v5942 = vsel %vm1114, %v5939, %v5941
        %v5943 = vrot.slane %v5773, 1
        %v5944 = vsel %vm1114, %v5941, %v5943
        %v5945 = vrot.slane %v5774, 1
        %v5946 = vsel %vm1114, %v5943, %v5945
        %v5947 = vrot.slane %v5775, 1
        %v5948 = vrot.slane %v5776, 1
        %v5949 = vsel %vm1114, %v5947, %v5948
        %v5950 = vrot.slane %v5777, 1
        %v5951 = vsel %vm1114, %v5948, %v5950
        %v5952 = vrot.slane %v5778, 1
        %v5953 = vsel %vm1114, %v5950, %v5952
        %v5954 = vrot.slane %v5779, 1
        %v5955 = vsel %vm1114, %v5952, %v5954
        %v5956 = vrot.slane %v5780, 1
        %v5957 = vrot.slane %v5781, 1
        %v5958 = vsel %vm1114, %v5956, %v5957
        %v5959 = vrot.slane %v5782, 1
        %v5960 = vsel %vm1114, %v5957, %v5959
        %v5961 = vrot.slane %v5783, 1
        %v5962 = vsel %vm1114, %v5959, %v5961
        %v5963 = vrot.slane %v5784, 1
        %v5964 = vsel %vm1114, %v5961, %v5963
        %v5965 = vrot.slane %v5785, 1
        %v5966 = vrot.slane %v5786, 1
        %v5967 = vsel %vm1114, %v5965, %v5966
        %v5968 = vrot.slane %v5787, 1
        %v5969 = vsel %vm1114, %v5966, %v5968
        %v5970 = vrot.slane %v5788, 1
        %v5971 = vsel %vm1114, %v5968, %v5970
        %v5972 = vrot.slane %v5789, 1
        %v5973 = vsel %vm1114, %v5970, %v5972
        %v5974 = vrot.slane %v5790, 1
        %v5975 = vrot.slane %v5791, 1
        %v5976 = vsel %vm1114, %v5974, %v5975
        %v5977 = vrot.slane %v5792, 1
        %v5978 = vsel %vm1114, %v5975, %v5977
        %v5979 = vrot.slane %v5793, 1
        %v5980 = vsel %vm1114, %v5977, %v5979
        %v5981 = vrot.slane %v5794, 1
        %v5982 = vsel %vm1114, %v5979, %v5981
        %v5983 = vrot.slane %v5795, 1
        %v5984 = vrot.slane %v5796, 1
        %v5985 = vsel %vm1114, %v5983, %v5984
        %v5986 = vrot.slane %v5797, 1
        %v5987 = vsel %vm1114, %v5984, %v5986
        %v5988 = vrot.slane %v5798, 1
        %v5989 = vsel %vm1114, %v5986, %v5988
        %v5990 = vrot.slane %v5799, 1
        %v5991 = vsel %vm1114, %v5988, %v5990
        %v5992 = vrot.slane %v5800, 1
        %v5993 = vrot.slane %v5801, 1
        %v5994 = vsel %vm1114, %v5992, %v5993
        %v5995 = vrot.slane %v5802, 1
        %v5996 = vsel %vm1114, %v5993, %v5995
        %v5997 = vrot.slane %v5803, 1
        %v5998 = vsel %vm1114, %v5995, %v5997
        %v5999 = vrot.slane %v5804, 1
        %v6000 = vsel %vm1114, %v5997, %v5999
        %v6001 = vrot.slane %v5805, 1
        %v6002 = vrot.slane %v5806, 1
        %v6003 = vsel %vm1114, %v6001, %v6002
        %v6004 = vrot.slane %v5807, 1
        %v6005 = vsel %vm1114, %v6002, %v6004
        %v6006 = vrot.slane %v5808, 1
        %v6007 = vsel %vm1114, %v6004, %v6006
        %v6008 = vrot.slane %v5809, 1
        %v6009 = vsel %vm1114, %v6006, %v6008
        %v6010 = vrot.slane %v5810, 1
        %v6011 = vrot.slane %v5811, 1
        %v6012 = vsel %vm1114, %v6010, %v6011
        %v6013 = vrot.slane %v5812, 1
        %v6014 = vsel %vm1114, %v6011, %v6013
        %v6015 = vrot.slane %v5813, 1
        %v6016 = vsel %vm1114, %v6013, %v6015
        %v6017 = vrot.slane %v5814, 1
        %v6018 = vsel %vm1114, %v6015, %v6017
        %v6019 = vrot.slane %v5815, 1
        %v6020 = vrot.slane %v5816, 1
        %v6021 = vsel %vm1114, %v6019, %v6020
        %v6022 = vrot.slane %v5817, 1
        %v6023 = vsel %vm1114, %v6020, %v6022
        %v6024 = vrot.slane %v5818, 1
        %v6025 = vsel %vm1114, %v6022, %v6024
        %v6026 = vrot.slane %v5819, 1
        %v6027 = vsel %vm1114, %v6024, %v6026
        %v6028 = vrot.slane %v5820, 1
        %v6029 = vrot.slane %v5821, 1
        %v6030 = vsel %vm1114, %v6028, %v6029
        %v6031 = vrot.slane %v5822, 1
        %v6032 = vsel %vm1114, %v6029, %v6031
        %v6033 = vrot.slane %v5823, 1
        %v6034 = vsel %vm1114, %v6031, %v6033
        %v6035 = vrot.slane %v5824, 1
        %v6036 = vsel %vm1114, %v6033, %v6035
        %v6037 = vrot.slane %v5825, 1
        %v6038 = vrot.slane %v5826, 1
        %v6039 = vsel %vm1114, %v6037, %v6038
        %v6040 = vrot.slane %v5827, 1
        %v6041 = vsel %vm1114, %v6038, %v6040
        %v6042 = vrot.slane %v5828, 1
        %v6043 = vsel %vm1114, %v6040, %v6042
        %v6044 = vrot.slane %v5829, 1
        %v6045 = vsel %vm1114, %v6042, %v6044
        %v6046 = vrot.slane %v5830, 1
        %v6047 = vrot.slane %v5831, 1
        %v6048 = vsel %vm1114, %v6046, %v6047
        %v6049 = vrot.slane %v5832, 1
        %v6050 = vsel %vm1114, %v6047, %v6049
        %v6051 = vrot.slane %v5833, 1
        %v6052 = vsel %vm1114, %v6049, %v6051
        %v6053 = vrot.slane %v5834, 1
        %v6054 = vsel %vm1114, %v6051, %v6053
        %v6055 = vrot.slane %v5835, 1
        %v6056 = vrot.slane %v5836, 1
        %v6057 = vsel %vm1114, %v6055, %v6056
        %v6058 = vrot.slane %v5837, 1
        %v6059 = vsel %vm1114, %v6056, %v6058
        %v6060 = vrot.slane %v5838, 1
        %v6061 = vsel %vm1114, %v6058, %v6060
        %v6062 = vrot.slane %v5839, 1
        %v6063 = vsel %vm1114, %v6060, %v6062
        %v6128 = vpack.c.bf16 %v5924, %v5922
        %v6129 = vpack.c.bf16 %v5928, %v5926
        %v6130 = vpack.c.bf16 %v5933, %v5931
        %v6131 = vpack.c.bf16 %v5937, %v5935
        %v6132 = vpack.c.bf16 %v5942, %v5940
        %v6133 = vpack.c.bf16 %v5946, %v5944
        %v6134 = vpack.c.bf16 %v5951, %v5949
        %v6135 = vpack.c.bf16 %v5955, %v5953
        %v6136 = vpack.c.bf16 %v5960, %v5958
        %v6137 = vpack.c.bf16 %v5964, %v5962
        %v6138 = vpack.c.bf16 %v5969, %v5967
        %v6139 = vpack.c.bf16 %v5973, %v5971
        %v6140 = vpack.c.bf16 %v5978, %v5976
        %v6141 = vpack.c.bf16 %v5982, %v5980
        %v6142 = vpack.c.bf16 %v5987, %v5985
        %v6143 = vpack.c.bf16 %v5991, %v5989
        %v6144 = vpack.c.bf16 %v5996, %v5994
        %v6145 = vpack.c.bf16 %v6000, %v5998
        %v6146 = vpack.c.bf16 %v6005, %v6003
        %v6147 = vpack.c.bf16 %v6009, %v6007
        %v6148 = vpack.c.bf16 %v6014, %v6012
        %v6149 = vpack.c.bf16 %v6018, %v6016
        %v6150 = vpack.c.bf16 %v6023, %v6021
        %v6151 = vpack.c.bf16 %v6027, %v6025
        %v6152 = vpack.c.bf16 %v6032, %v6030
        %v6153 = vpack.c.bf16 %v6036, %v6034
        %v6154 = vpack.c.bf16 %v6041, %v6039
        %v6155 = vpack.c.bf16 %v6045, %v6043
        %v6156 = vpack.c.bf16 %v6050, %v6048
        %v6157 = vpack.c.bf16 %v6054, %v6052
        %v6158 = vpack.c.bf16 %v6059, %v6057
        %v6159 = vpack.c.bf16 %v6063, %v6061
        %v6160 = vld [vmem:[#allocation2] sm:$0xff]
        %v6161 = vld [vmem:[#allocation2 + $0x8] sm:$0xff]
        %v6162 = vld [vmem:[#allocation2 + $0x10] sm:$0xff]
        %v6163 = vld [vmem:[#allocation2 + $0x18] sm:$0xff]
        %v6164 = vld [vmem:[#allocation2 + $0x20] sm:$0xff]
        %v6165 = vld [vmem:[#allocation2 + $0x28] sm:$0xff]
        %v6166 = vld [vmem:[#allocation2 + $0x30] sm:$0xff]
        %v6167 = vld [vmem:[#allocation2 + $0x38] sm:$0xff]
        %v6168 = vld [vmem:[#allocation2 + $0x40] sm:$0xff]
        %v6169 = vld [vmem:[#allocation2 + $0x48] sm:$0xff]
        %v6170 = vld [vmem:[#allocation2 + $0x50] sm:$0xff]
        %v6171 = vld [vmem:[#allocation2 + $0x58] sm:$0xff]
        %v6172 = vld [vmem:[#allocation2 + $0x60] sm:$0xff]
        %v6173 = vld [vmem:[#allocation2 + $0x68] sm:$0xff]
        %v6174 = vld [vmem:[#allocation2 + $0x70] sm:$0xff]
        %v6175 = vld [vmem:[#allocation2 + $0x78] sm:$0xff]
        %v6176 = vld [vmem:[#allocation2 + $0x80] sm:$0xff]
        %v6177 = vld [vmem:[#allocation2 + $0x88] sm:$0xff]
        %v6178 = vld [vmem:[#allocation2 + $0x90] sm:$0xff]
        %v6179 = vld [vmem:[#allocation2 + $0x98] sm:$0xff]
        %v6180 = vld [vmem:[#allocation2 + $0xa0] sm:$0xff]
        %v6181 = vld [vmem:[#allocation2 + $0xa8] sm:$0xff]
        %v6182 = vld [vmem:[#allocation2 + $0xb0] sm:$0xff]
        %v6183 = vld [vmem:[#allocation2 + $0xb8] sm:$0xff]
        %v6184 = vld [vmem:[#allocation2 + $0xc0] sm:$0xff]
        %v6185 = vld [vmem:[#allocation2 + $0xc8] sm:$0xff]
        %v6186 = vld [vmem:[#allocation2 + $0xd0] sm:$0xff]
        %v6187 = vld [vmem:[#allocation2 + $0xd8] sm:$0xff]
        %v6188 = vld [vmem:[#allocation2 + $0xe0] sm:$0xff]
        %v6189 = vld [vmem:[#allocation2 + $0xe8] sm:$0xff]
        %v6190 = vld [vmem:[#allocation2 + $0xf0] sm:$0xff]
        %v6191 = vld [vmem:[#allocation2 + $0xf8] sm:$0xff]
        %v6192 = vld [vmem:[#allocation2 + $0x100] sm:$0xff]
        %v6193 = vld [vmem:[#allocation2 + $0x108] sm:$0xff]
        %v6194 = vld [vmem:[#allocation2 + $0x110] sm:$0xff]
        %v6195 = vld [vmem:[#allocation2 + $0x118] sm:$0xff]
        %v6196 = vld [vmem:[#allocation2 + $0x120] sm:$0xff]
        %v6197 = vld [vmem:[#allocation2 + $0x128] sm:$0xff]
        %v6198 = vld [vmem:[#allocation2 + $0x130] sm:$0xff]
        %v6199 = vld [vmem:[#allocation2 + $0x138] sm:$0xff]
        %v6200 = vld [vmem:[#allocation2 + $0x140] sm:$0xff]
        %v6201 = vld [vmem:[#allocation2 + $0x148] sm:$0xff]
        %v6202 = vld [vmem:[#allocation2 + $0x150] sm:$0xff]
        %v6203 = vld [vmem:[#allocation2 + $0x158] sm:$0xff]
        %v6204 = vld [vmem:[#allocation2 + $0x160] sm:$0xff]
        %v6205 = vld [vmem:[#allocation2 + $0x168] sm:$0xff]
        %v6206 = vld [vmem:[#allocation2 + $0x170] sm:$0xff]
        %v6207 = vld [vmem:[#allocation2 + $0x178] sm:$0xff]
        %v6208 = vld [vmem:[#allocation2 + $0x180] sm:$0xff]
        %v6209 = vld [vmem:[#allocation2 + $0x188] sm:$0xff]
        %v6210 = vld [vmem:[#allocation2 + $0x190] sm:$0xff]
        %v6211 = vld [vmem:[#allocation2 + $0x198] sm:$0xff]
        %v6212 = vld [vmem:[#allocation2 + $0x1a0] sm:$0xff]
        %v6213 = vld [vmem:[#allocation2 + $0x1a8] sm:$0xff]
        %v6214 = vld [vmem:[#allocation2 + $0x1b0] sm:$0xff]
        %v6215 = vld [vmem:[#allocation2 + $0x1b8] sm:$0xff]
        %v6216 = vld [vmem:[#allocation2 + $0x1c0] sm:$0xff]
        %v6217 = vld [vmem:[#allocation2 + $0x1c8] sm:$0xff]
        %v6218 = vld [vmem:[#allocation2 + $0x1d0] sm:$0xff]
        %v6219 = vld [vmem:[#allocation2 + $0x1d8] sm:$0xff]
        %v6220 = vld [vmem:[#allocation2 + $0x1e0] sm:$0xff]
        %v6221 = vld [vmem:[#allocation2 + $0x1e8] sm:$0xff]
        %v6222 = vld [vmem:[#allocation2 + $0x1f0] sm:$0xff]
        %v6223 = vld [vmem:[#allocation2 + $0x1f8] sm:$0xff]
        %s6224 = scalar_lea.vmem %s214, 448
        %v6225 = vld [vmem:[%s6224] sm:$0xf]
        %v6226 = vld [vmem:[%s6224 + $0x4] sm:$0xf]
        %v6227 = vld [vmem:[%s6224 + $0x8] sm:$0xf]
        %v6228 = vld [vmem:[%s6224 + $0xc] sm:$0xf]
        %v6229 = vld [vmem:[%s6224 + $0x10] sm:$0xf]
        %v6230 = vld [vmem:[%s6224 + $0x14] sm:$0xf]
        %v6231 = vld [vmem:[%s6224 + $0x18] sm:$0xf]
        %v6232 = vld [vmem:[%s6224 + $0x1c] sm:$0xf]
        %v6233 = vld [vmem:[%s6224 + $0x20] sm:$0xf]
        %v6234 = vld [vmem:[%s6224 + $0x24] sm:$0xf]
        %v6235 = vld [vmem:[%s6224 + $0x28] sm:$0xf]
        %v6236 = vld [vmem:[%s6224 + $0x2c] sm:$0xf]
        %v6237 = vld [vmem:[%s6224 + $0x30] sm:$0xf]
        %v6238 = vld [vmem:[%s6224 + $0x34] sm:$0xf]
        %v6239 = vld [vmem:[%s6224 + $0x38] sm:$0xf]
        %v6240 = vld [vmem:[%s6224 + $0x3c] sm:$0xf]
        %v6257 = vunpack.c.l.b16 %v6225
        %v6258 = vunpack.c.l.b16 %v6226
        %v6259 = vunpack.c.l.b16 %v6227
        %v6260 = vunpack.c.l.b16 %v6228
        %v6261 = vunpack.c.l.b16 %v6229
        %v6262 = vunpack.c.l.b16 %v6230
        %v6263 = vunpack.c.l.b16 %v6231
        %v6264 = vunpack.c.l.b16 %v6232
        %v6265 = vunpack.c.l.b16 %v6233
        %v6266 = vunpack.c.l.b16 %v6234
        %v6267 = vunpack.c.l.b16 %v6235
        %v6268 = vunpack.c.l.b16 %v6236
        %v6269 = vunpack.c.l.b16 %v6237
        %v6270 = vunpack.c.l.b16 %v6238
        %v6271 = vunpack.c.l.b16 %v6239
        %v6272 = vunpack.c.l.b16 %v6240
        %v6273 = vpack.c.b16 %v6258, %v6257
        %v6274 = vpack.c.b16 %v6260, %v6259
        %v6275 = vpack.c.b16 %v6262, %v6261
        %v6276 = vpack.c.b16 %v6264, %v6263
        %v6277 = vpack.c.b16 %v6266, %v6265
        %v6278 = vpack.c.b16 %v6268, %v6267
        %v6279 = vpack.c.b16 %v6270, %v6269
        %v6280 = vpack.c.b16 %v6272, %v6271
        %6289 = vmatpush.bf16.msra.mxu0 %v6280
        %6290 = vmatpush.bf16.msra.mxu0 %v6279
        %6291 = vmatpush.bf16.msra.mxu0 %v6278
        %6292 = vmatpush.bf16.msra.mxu0 %v6277
        %6293 = vmatpush.bf16.msra.mxu0 %v6276
        %6294 = vmatpush.bf16.msra.mxu0 %v6275
        %6295 = vmatpush.bf16.msra.mxu0 %v6274
        %6296 = vmatpush.bf16.msra.mxu0 %v6273
        %6297 = vmatmul.bf16.gmra.mxu0 %v6128
        %v6298 = vpop.f32.mrf.mxu0
        %v6299 = vadd.f32 0.0, %v6298
        %v6300 = vpop.f32.mrf.mxu0
        %v6301 = vadd.f32 0.0, %v6300
        %6302 = vmatmul.bf16.gmra.mxu0 %v6129
        %v6303 = vpop.f32.mrf.mxu0
        %v6304 = vadd.f32 0.0, %v6303
        %v6305 = vpop.f32.mrf.mxu0
        %v6306 = vadd.f32 0.0, %v6305
        %6307 = vmatmul.bf16.gmra.mxu0 %v6130
        %v6308 = vpop.f32.mrf.mxu0
        %v6309 = vadd.f32 0.0, %v6308
        %v6310 = vpop.f32.mrf.mxu0
        %v6311 = vadd.f32 0.0, %v6310
        %6312 = vmatmul.bf16.gmra.mxu0 %v6131
        %v6313 = vpop.f32.mrf.mxu0
        %v6314 = vadd.f32 0.0, %v6313
        %v6315 = vpop.f32.mrf.mxu0
        %v6316 = vadd.f32 0.0, %v6315
        %6317 = vmatmul.bf16.gmra.mxu0 %v6132
        %v6318 = vpop.f32.mrf.mxu0
        %v6319 = vadd.f32 0.0, %v6318
        %v6320 = vpop.f32.mrf.mxu0
        %v6321 = vadd.f32 0.0, %v6320
        %6322 = vmatmul.bf16.gmra.mxu0 %v6133
        %v6323 = vpop.f32.mrf.mxu0
        %v6324 = vadd.f32 0.0, %v6323
        %v6325 = vpop.f32.mrf.mxu0
        %v6326 = vadd.f32 0.0, %v6325
        %6327 = vmatmul.bf16.gmra.mxu0 %v6134
        %v6328 = vpop.f32.mrf.mxu0
        %v6329 = vadd.f32 0.0, %v6328
        %v6330 = vpop.f32.mrf.mxu0
        %v6331 = vadd.f32 0.0, %v6330
        %6332 = vmatmul.bf16.gmra.mxu0 %v6135
        %v6333 = vpop.f32.mrf.mxu0
        %v6334 = vadd.f32 0.0, %v6333
        %v6335 = vpop.f32.mrf.mxu0
        %v6336 = vadd.f32 0.0, %v6335
        %6337 = vmatmul.bf16.gmra.mxu0 %v6136
        %v6338 = vpop.f32.mrf.mxu0
        %v6339 = vadd.f32 0.0, %v6338
        %v6340 = vpop.f32.mrf.mxu0
        %v6341 = vadd.f32 0.0, %v6340
        %6342 = vmatmul.bf16.gmra.mxu0 %v6137
        %v6343 = vpop.f32.mrf.mxu0
        %v6344 = vadd.f32 0.0, %v6343
        %v6345 = vpop.f32.mrf.mxu0
        %v6346 = vadd.f32 0.0, %v6345
        %6347 = vmatmul.bf16.gmra.mxu0 %v6138
        %v6348 = vpop.f32.mrf.mxu0
        %v6349 = vadd.f32 0.0, %v6348
        %v6350 = vpop.f32.mrf.mxu0
        %v6351 = vadd.f32 0.0, %v6350
        %6352 = vmatmul.bf16.gmra.mxu0 %v6139
        %v6353 = vpop.f32.mrf.mxu0
        %v6354 = vadd.f32 0.0, %v6353
        %v6355 = vpop.f32.mrf.mxu0
        %v6356 = vadd.f32 0.0, %v6355
        %6357 = vmatmul.bf16.gmra.mxu0 %v6140
        %v6358 = vpop.f32.mrf.mxu0
        %v6359 = vadd.f32 0.0, %v6358
        %v6360 = vpop.f32.mrf.mxu0
        %v6361 = vadd.f32 0.0, %v6360
        %6362 = vmatmul.bf16.gmra.mxu0 %v6141
        %v6363 = vpop.f32.mrf.mxu0
        %v6364 = vadd.f32 0.0, %v6363
        %v6365 = vpop.f32.mrf.mxu0
        %v6366 = vadd.f32 0.0, %v6365
        %6367 = vmatmul.bf16.gmra.mxu0 %v6142
        %v6368 = vpop.f32.mrf.mxu0
        %v6369 = vadd.f32 0.0, %v6368
        %v6370 = vpop.f32.mrf.mxu0
        %v6371 = vadd.f32 0.0, %v6370
        %6372 = vmatmul.bf16.gmra.mxu0 %v6143
        %v6373 = vpop.f32.mrf.mxu0
        %v6374 = vadd.f32 0.0, %v6373
        %v6375 = vpop.f32.mrf.mxu0
        %v6376 = vadd.f32 0.0, %v6375
        %6377 = vmatmul.bf16.gmra.mxu0 %v6144
        %v6378 = vpop.f32.mrf.mxu0
        %v6379 = vadd.f32 0.0, %v6378
        %v6380 = vpop.f32.mrf.mxu0
        %v6381 = vadd.f32 0.0, %v6380
        %6382 = vmatmul.bf16.gmra.mxu0 %v6145
        %v6383 = vpop.f32.mrf.mxu0
        %v6384 = vadd.f32 0.0, %v6383
        %v6385 = vpop.f32.mrf.mxu0
        %v6386 = vadd.f32 0.0, %v6385
        %6387 = vmatmul.bf16.gmra.mxu0 %v6146
        %v6388 = vpop.f32.mrf.mxu0
        %v6389 = vadd.f32 0.0, %v6388
        %v6390 = vpop.f32.mrf.mxu0
        %v6391 = vadd.f32 0.0, %v6390
        %6392 = vmatmul.bf16.gmra.mxu0 %v6147
        %v6393 = vpop.f32.mrf.mxu0
        %v6394 = vadd.f32 0.0, %v6393
        %v6395 = vpop.f32.mrf.mxu0
        %v6396 = vadd.f32 0.0, %v6395
        %6397 = vmatmul.bf16.gmra.mxu0 %v6148
        %v6398 = vpop.f32.mrf.mxu0
        %v6399 = vadd.f32 0.0, %v6398
        %v6400 = vpop.f32.mrf.mxu0
        %v6401 = vadd.f32 0.0, %v6400
        %6402 = vmatmul.bf16.gmra.mxu0 %v6149
        %v6403 = vpop.f32.mrf.mxu0
        %v6404 = vadd.f32 0.0, %v6403
        %v6405 = vpop.f32.mrf.mxu0
        %v6406 = vadd.f32 0.0, %v6405
        %6407 = vmatmul.bf16.gmra.mxu0 %v6150
        %v6408 = vpop.f32.mrf.mxu0
        %v6409 = vadd.f32 0.0, %v6408
        %v6410 = vpop.f32.mrf.mxu0
        %v6411 = vadd.f32 0.0, %v6410
        %6412 = vmatmul.bf16.gmra.mxu0 %v6151
        %v6413 = vpop.f32.mrf.mxu0
        %v6414 = vadd.f32 0.0, %v6413
        %v6415 = vpop.f32.mrf.mxu0
        %v6416 = vadd.f32 0.0, %v6415
        %6417 = vmatmul.bf16.gmra.mxu0 %v6152
        %v6418 = vpop.f32.mrf.mxu0
        %v6419 = vadd.f32 0.0, %v6418
        %v6420 = vpop.f32.mrf.mxu0
        %v6421 = vadd.f32 0.0, %v6420
        %6422 = vmatmul.bf16.gmra.mxu0 %v6153
        %v6423 = vpop.f32.mrf.mxu0
        %v6424 = vadd.f32 0.0, %v6423
        %v6425 = vpop.f32.mrf.mxu0
        %v6426 = vadd.f32 0.0, %v6425
        %6427 = vmatmul.bf16.gmra.mxu0 %v6154
        %v6428 = vpop.f32.mrf.mxu0
        %v6429 = vadd.f32 0.0, %v6428
        %v6430 = vpop.f32.mrf.mxu0
        %v6431 = vadd.f32 0.0, %v6430
        %6432 = vmatmul.bf16.gmra.mxu0 %v6155
        %v6433 = vpop.f32.mrf.mxu0
        %v6434 = vadd.f32 0.0, %v6433
        %v6435 = vpop.f32.mrf.mxu0
        %v6436 = vadd.f32 0.0, %v6435
        %6437 = vmatmul.bf16.gmra.mxu0 %v6156
        %v6438 = vpop.f32.mrf.mxu0
        %v6439 = vadd.f32 0.0, %v6438
        %v6440 = vpop.f32.mrf.mxu0
        %v6441 = vadd.f32 0.0, %v6440
        %6442 = vmatmul.bf16.gmra.mxu0 %v6157
        %v6443 = vpop.f32.mrf.mxu0
        %v6444 = vadd.f32 0.0, %v6443
        %v6445 = vpop.f32.mrf.mxu0
        %v6446 = vadd.f32 0.0, %v6445
        %6447 = vmatmul.bf16.gmra.mxu0 %v6158
        %v6448 = vpop.f32.mrf.mxu0
        %v6449 = vadd.f32 0.0, %v6448
        %v6450 = vpop.f32.mrf.mxu0
        %v6451 = vadd.f32 0.0, %v6450
        %6452 = vmatmul.bf16.gmra.mxu0 %v6159
        %v6453 = vpop.f32.mrf.mxu0
        %v6454 = vadd.f32 0.0, %v6453
        %v6455 = vpop.f32.mrf.mxu0
        %v6456 = vadd.f32 0.0, %v6455
        %6457 = vdwg.mxu0
        %v6458 = vadd.f32 %v6160, %v6299
        %v6459 = vadd.f32 %v6161, %v6301
        %v6460 = vadd.f32 %v6162, %v6304
        %v6461 = vadd.f32 %v6163, %v6306
        %v6462 = vadd.f32 %v6164, %v6309
        %v6463 = vadd.f32 %v6165, %v6311
        %v6464 = vadd.f32 %v6166, %v6314
        %v6465 = vadd.f32 %v6167, %v6316
        %v6466 = vadd.f32 %v6168, %v6319
        %v6467 = vadd.f32 %v6169, %v6321
        %v6468 = vadd.f32 %v6170, %v6324
        %v6469 = vadd.f32 %v6171, %v6326
        %v6470 = vadd.f32 %v6172, %v6329
        %v6471 = vadd.f32 %v6173, %v6331
        %v6472 = vadd.f32 %v6174, %v6334
        %v6473 = vadd.f32 %v6175, %v6336
        %v6474 = vadd.f32 %v6176, %v6339
        %v6475 = vadd.f32 %v6177, %v6341
        %v6476 = vadd.f32 %v6178, %v6344
        %v6477 = vadd.f32 %v6179, %v6346
        %v6478 = vadd.f32 %v6180, %v6349
        %v6479 = vadd.f32 %v6181, %v6351
        %v6480 = vadd.f32 %v6182, %v6354
        %v6481 = vadd.f32 %v6183, %v6356
        %v6482 = vadd.f32 %v6184, %v6359
        %v6483 = vadd.f32 %v6185, %v6361
        %v6484 = vadd.f32 %v6186, %v6364
        %v6485 = vadd.f32 %v6187, %v6366
        %v6486 = vadd.f32 %v6188, %v6369
        %v6487 = vadd.f32 %v6189, %v6371
        %v6488 = vadd.f32 %v6190, %v6374
        %v6489 = vadd.f32 %v6191, %v6376
        %v6490 = vadd.f32 %v6192, %v6379
        %v6491 = vadd.f32 %v6193, %v6381
        %v6492 = vadd.f32 %v6194, %v6384
        %v6493 = vadd.f32 %v6195, %v6386
        %v6494 = vadd.f32 %v6196, %v6389
        %v6495 = vadd.f32 %v6197, %v6391
        %v6496 = vadd.f32 %v6198, %v6394
        %v6497 = vadd.f32 %v6199, %v6396
        %v6498 = vadd.f32 %v6200, %v6399
        %v6499 = vadd.f32 %v6201, %v6401
        %v6500 = vadd.f32 %v6202, %v6404
        %v6501 = vadd.f32 %v6203, %v6406
        %v6502 = vadd.f32 %v6204, %v6409
        %v6503 = vadd.f32 %v6205, %v6411
        %v6504 = vadd.f32 %v6206, %v6414
        %v6505 = vadd.f32 %v6207, %v6416
        %v6506 = vadd.f32 %v6208, %v6419
        %v6507 = vadd.f32 %v6209, %v6421
        %v6508 = vadd.f32 %v6210, %v6424
        %v6509 = vadd.f32 %v6211, %v6426
        %v6510 = vadd.f32 %v6212, %v6429
        %v6511 = vadd.f32 %v6213, %v6431
        %v6512 = vadd.f32 %v6214, %v6434
        %v6513 = vadd.f32 %v6215, %v6436
        %v6514 = vadd.f32 %v6216, %v6439
        %v6515 = vadd.f32 %v6217, %v6441
        %v6516 = vadd.f32 %v6218, %v6444
        %v6517 = vadd.f32 %v6219, %v6446
        %v6518 = vadd.f32 %v6220, %v6449
        %v6519 = vadd.f32 %v6221, %v6451
        %v6520 = vadd.f32 %v6222, %v6454
        %v6521 = vadd.f32 %v6223, %v6456
        %6522 = vst [vmem:[#allocation2] sm:$0xff] %v6458
        %6523 = vst [vmem:[#allocation2 + $0x8] sm:$0xff] %v6459
        %6524 = vst [vmem:[#allocation2 + $0x10] sm:$0xff] %v6460
        %6525 = vst [vmem:[#allocation2 + $0x18] sm:$0xff] %v6461
        %6526 = vst [vmem:[#allocation2 + $0x20] sm:$0xff] %v6462
        %6527 = vst [vmem:[#allocation2 + $0x28] sm:$0xff] %v6463
        %6528 = vst [vmem:[#allocation2 + $0x30] sm:$0xff] %v6464
        %6529 = vst [vmem:[#allocation2 + $0x38] sm:$0xff] %v6465
        %6530 = vst [vmem:[#allocation2 + $0x40] sm:$0xff] %v6466
        %6531 = vst [vmem:[#allocation2 + $0x48] sm:$0xff] %v6467
        %6532 = vst [vmem:[#allocation2 + $0x50] sm:$0xff] %v6468
        %6533 = vst [vmem:[#allocation2 + $0x58] sm:$0xff] %v6469
        %6534 = vst [vmem:[#allocation2 + $0x60] sm:$0xff] %v6470
        %6535 = vst [vmem:[#allocation2 + $0x68] sm:$0xff] %v6471
        %6536 = vst [vmem:[#allocation2 + $0x70] sm:$0xff] %v6472
        %6537 = vst [vmem:[#allocation2 + $0x78] sm:$0xff] %v6473
        %6538 = vst [vmem:[#allocation2 + $0x80] sm:$0xff] %v6474
        %6539 = vst [vmem:[#allocation2 + $0x88] sm:$0xff] %v6475
        %6540 = vst [vmem:[#allocation2 + $0x90] sm:$0xff] %v6476
        %6541 = vst [vmem:[#allocation2 + $0x98] sm:$0xff] %v6477
        %6542 = vst [vmem:[#allocation2 + $0xa0] sm:$0xff] %v6478
        %6543 = vst [vmem:[#allocation2 + $0xa8] sm:$0xff] %v6479
        %6544 = vst [vmem:[#allocation2 + $0xb0] sm:$0xff] %v6480
        %6545 = vst [vmem:[#allocation2 + $0xb8] sm:$0xff] %v6481
        %6546 = vst [vmem:[#allocation2 + $0xc0] sm:$0xff] %v6482
        %6547 = vst [vmem:[#allocation2 + $0xc8] sm:$0xff] %v6483
        %6548 = vst [vmem:[#allocation2 + $0xd0] sm:$0xff] %v6484
        %6549 = vst [vmem:[#allocation2 + $0xd8] sm:$0xff] %v6485
        %6550 = vst [vmem:[#allocation2 + $0xe0] sm:$0xff] %v6486
        %6551 = vst [vmem:[#allocation2 + $0xe8] sm:$0xff] %v6487
        %6552 = vst [vmem:[#allocation2 + $0xf0] sm:$0xff] %v6488
        %6553 = vst [vmem:[#allocation2 + $0xf8] sm:$0xff] %v6489
        %6554 = vst [vmem:[#allocation2 + $0x100] sm:$0xff] %v6490
        %6555 = vst [vmem:[#allocation2 + $0x108] sm:$0xff] %v6491
        %6556 = vst [vmem:[#allocation2 + $0x110] sm:$0xff] %v6492
        %6557 = vst [vmem:[#allocation2 + $0x118] sm:$0xff] %v6493
        %6558 = vst [vmem:[#allocation2 + $0x120] sm:$0xff] %v6494
        %6559 = vst [vmem:[#allocation2 + $0x128] sm:$0xff] %v6495
        %6560 = vst [vmem:[#allocation2 + $0x130] sm:$0xff] %v6496
        %6561 = vst [vmem:[#allocation2 + $0x138] sm:$0xff] %v6497
        %6562 = vst [vmem:[#allocation2 + $0x140] sm:$0xff] %v6498
        %6563 = vst [vmem:[#allocation2 + $0x148] sm:$0xff] %v6499
        %6564 = vst [vmem:[#allocation2 + $0x150] sm:$0xff] %v6500
        %6565 = vst [vmem:[#allocation2 + $0x158] sm:$0xff] %v6501
        %6566 = vst [vmem:[#allocation2 + $0x160] sm:$0xff] %v6502
        %6567 = vst [vmem:[#allocation2 + $0x168] sm:$0xff] %v6503
        %6568 = vst [vmem:[#allocation2 + $0x170] sm:$0xff] %v6504
        %6569 = vst [vmem:[#allocation2 + $0x178] sm:$0xff] %v6505
        %6570 = vst [vmem:[#allocation2 + $0x180] sm:$0xff] %v6506
        %6571 = vst [vmem:[#allocation2 + $0x188] sm:$0xff] %v6507
        %6572 = vst [vmem:[#allocation2 + $0x190] sm:$0xff] %v6508
        %6573 = vst [vmem:[#allocation2 + $0x198] sm:$0xff] %v6509
        %6574 = vst [vmem:[#allocation2 + $0x1a0] sm:$0xff] %v6510
        %6575 = vst [vmem:[#allocation2 + $0x1a8] sm:$0xff] %v6511
        %6576 = vst [vmem:[#allocation2 + $0x1b0] sm:$0xff] %v6512
        %6577 = vst [vmem:[#allocation2 + $0x1b8] sm:$0xff] %v6513
        %6578 = vst [vmem:[#allocation2 + $0x1c0] sm:$0xff] %v6514
        %6579 = vst [vmem:[#allocation2 + $0x1c8] sm:$0xff] %v6515
        %6580 = vst [vmem:[#allocation2 + $0x1d0] sm:$0xff] %v6516
        %6581 = vst [vmem:[#allocation2 + $0x1d8] sm:$0xff] %v6517
        %6582 = vst [vmem:[#allocation2 + $0x1e0] sm:$0xff] %v6518
        %6583 = vst [vmem:[#allocation2 + $0x1e8] sm:$0xff] %v6519
        %6584 = vst [vmem:[#allocation2 + $0x1f0] sm:$0xff] %v6520
        %6585 = vst [vmem:[#allocation2 + $0x1f8] sm:$0xff] %v6521
        %v6586 = vld [vmem:[%s5093] sm:$0xe]
        %v6587 = vld [vmem:[%s5093 + $0x4] sm:$0xf]
        %v6588 = vld [vmem:[%s5093 + $0x8] sm:$0xf]
        %v6589 = vld [vmem:[%s5093 + $0xc] sm:$0xf]
        %v6590 = vld [vmem:[%s5093 + $0x10] sm:$0x1]
        %v6591 = vld [vmem:[%s5093 + $0x14] sm:$0xe]
        %v6592 = vld [vmem:[%s5093 + $0x18] sm:$0xf]
        %v6593 = vld [vmem:[%s5093 + $0x1c] sm:$0xf]
        %v6594 = vld [vmem:[%s5093 + $0x20] sm:$0xf]
        %v6595 = vld [vmem:[%s5093 + $0x24] sm:$0x1]
        %v6596 = vld [vmem:[%s5093 + $0x28] sm:$0xe]
        %v6597 = vld [vmem:[%s5093 + $0x2c] sm:$0xf]
        %v6598 = vld [vmem:[%s5093 + $0x30] sm:$0xf]
        %v6599 = vld [vmem:[%s5093 + $0x34] sm:$0xf]
        %v6600 = vld [vmem:[%s5093 + $0x38] sm:$0x1]
        %v6601 = vld [vmem:[%s5093 + $0x3c] sm:$0xe]
        %v6602 = vld [vmem:[%s5093 + $0x40] sm:$0xf]
        %v6603 = vld [vmem:[%s5093 + $0x44] sm:$0xf]
        %v6604 = vld [vmem:[%s5093 + $0x48] sm:$0xf]
        %v6605 = vld [vmem:[%s5093 + $0x4c] sm:$0x1]
        %v6606 = vld [vmem:[%s5093 + $0x50] sm:$0xe]
        %v6607 = vld [vmem:[%s5093 + $0x54] sm:$0xf]
        %v6608 = vld [vmem:[%s5093 + $0x58] sm:$0xf]
        %v6609 = vld [vmem:[%s5093 + $0x5c] sm:$0xf]
        %v6610 = vld [vmem:[%s5093 + $0x60] sm:$0x1]
        %v6611 = vld [vmem:[%s5093 + $0x64] sm:$0xe]
        %v6612 = vld [vmem:[%s5093 + $0x68] sm:$0xf]
        %v6613 = vld [vmem:[%s5093 + $0x6c] sm:$0xf]
        %v6614 = vld [vmem:[%s5093 + $0x70] sm:$0xf]
        %v6615 = vld [vmem:[%s5093 + $0x74] sm:$0x1]
        %v6616 = vld [vmem:[%s5093 + $0x78] sm:$0xe]
        %v6617 = vld [vmem:[%s5093 + $0x7c] sm:$0xf]
        %v6618 = vld [vmem:[%s5093 + $0x80] sm:$0xf]
        %v6619 = vld [vmem:[%s5093 + $0x84] sm:$0xf]
        %v6620 = vld [vmem:[%s5093 + $0x88] sm:$0x1]
        %v6621 = vld [vmem:[%s5093 + $0x8c] sm:$0xe]
        %v6622 = vld [vmem:[%s5093 + $0x90] sm:$0xf]
        %v6623 = vld [vmem:[%s5093 + $0x94] sm:$0xf]
        %v6624 = vld [vmem:[%s5093 + $0x98] sm:$0xf]
        %v6625 = vld [vmem:[%s5093 + $0x9c] sm:$0x1]
        %v6626 = vld [vmem:[%s5093 + $0xa0] sm:$0xe]
        %v6627 = vld [vmem:[%s5093 + $0xa4] sm:$0xf]
        %v6628 = vld [vmem:[%s5093 + $0xa8] sm:$0xf]
        %v6629 = vld [vmem:[%s5093 + $0xac] sm:$0xf]
        %v6630 = vld [vmem:[%s5093 + $0xb0] sm:$0x1]
        %v6631 = vld [vmem:[%s5093 + $0xb4] sm:$0xe]
        %v6632 = vld [vmem:[%s5093 + $0xb8] sm:$0xf]
        %v6633 = vld [vmem:[%s5093 + $0xbc] sm:$0xf]
        %v6634 = vld [vmem:[%s5093 + $0xc0] sm:$0xf]
        %v6635 = vld [vmem:[%s5093 + $0xc4] sm:$0x1]
        %v6636 = vld [vmem:[%s5093 + $0xc8] sm:$0xe]
        %v6637 = vld [vmem:[%s5093 + $0xcc] sm:$0xf]
        %v6638 = vld [vmem:[%s5093 + $0xd0] sm:$0xf]
        %v6639 = vld [vmem:[%s5093 + $0xd4] sm:$0xf]
        %v6640 = vld [vmem:[%s5093 + $0xd8] sm:$0x1]
        %v6641 = vld [vmem:[%s5093 + $0xdc] sm:$0xe]
        %v6642 = vld [vmem:[%s5093 + $0xe0] sm:$0xf]
        %v6643 = vld [vmem:[%s5093 + $0xe4] sm:$0xf]
        %v6644 = vld [vmem:[%s5093 + $0xe8] sm:$0xf]
        %v6645 = vld [vmem:[%s5093 + $0xec] sm:$0x1]
        %v6646 = vld [vmem:[%s5093 + $0xf0] sm:$0xe]
        %v6647 = vld [vmem:[%s5093 + $0xf4] sm:$0xf]
        %v6648 = vld [vmem:[%s5093 + $0xf8] sm:$0xf]
        %v6649 = vld [vmem:[%s5093 + $0xfc] sm:$0xf]
        %v6650 = vld [vmem:[%s5093 + $0x100] sm:$0x1]
        %v6651 = vld [vmem:[%s5093 + $0x104] sm:$0xe]
        %v6652 = vld [vmem:[%s5093 + $0x108] sm:$0xf]
        %v6653 = vld [vmem:[%s5093 + $0x10c] sm:$0xf]
        %v6654 = vld [vmem:[%s5093 + $0x110] sm:$0xf]
        %v6655 = vld [vmem:[%s5093 + $0x114] sm:$0x1]
        %v6656 = vld [vmem:[%s5093 + $0x118] sm:$0xe]
        %v6657 = vld [vmem:[%s5093 + $0x11c] sm:$0xf]
        %v6658 = vld [vmem:[%s5093 + $0x120] sm:$0xf]
        %v6659 = vld [vmem:[%s5093 + $0x124] sm:$0xf]
        %v6660 = vld [vmem:[%s5093 + $0x128] sm:$0x1]
        %v6661 = vld [vmem:[%s5093 + $0x12c] sm:$0xe]
        %v6662 = vld [vmem:[%s5093 + $0x130] sm:$0xf]
        %v6663 = vld [vmem:[%s5093 + $0x134] sm:$0xf]
        %v6664 = vld [vmem:[%s5093 + $0x138] sm:$0xf]
        %v6665 = vld [vmem:[%s5093 + $0x13c] sm:$0x1]
        %v6666 = vunpack.c.l.bf16 %v6586
        %v6667 = vunpack.c.l.bf16 %v6587
        %v6668 = vunpack.c.l.bf16 %v6588
        %v6669 = vunpack.c.l.bf16 %v6589
        %v6670 = vunpack.c.l.bf16 %v6590
        %v6671 = vunpack.c.l.bf16 %v6591
        %v6672 = vunpack.c.l.bf16 %v6592
        %v6673 = vunpack.c.l.bf16 %v6593
        %v6674 = vunpack.c.l.bf16 %v6594
        %v6675 = vunpack.c.l.bf16 %v6595
        %v6676 = vunpack.c.l.bf16 %v6596
        %v6677 = vunpack.c.l.bf16 %v6597
        %v6678 = vunpack.c.l.bf16 %v6598
        %v6679 = vunpack.c.l.bf16 %v6599
        %v6680 = vunpack.c.l.bf16 %v6600
        %v6681 = vunpack.c.l.bf16 %v6601
        %v6682 = vunpack.c.l.bf16 %v6602
        %v6683 = vunpack.c.l.bf16 %v6603
        %v6684 = vunpack.c.l.bf16 %v6604
        %v6685 = vunpack.c.l.bf16 %v6605
        %v6686 = vunpack.c.l.bf16 %v6606
        %v6687 = vunpack.c.l.bf16 %v6607
        %v6688 = vunpack.c.l.bf16 %v6608
        %v6689 = vunpack.c.l.bf16 %v6609
        %v6690 = vunpack.c.l.bf16 %v6610
        %v6691 = vunpack.c.l.bf16 %v6611
        %v6692 = vunpack.c.l.bf16 %v6612
        %v6693 = vunpack.c.l.bf16 %v6613
        %v6694 = vunpack.c.l.bf16 %v6614
        %v6695 = vunpack.c.l.bf16 %v6615
        %v6696 = vunpack.c.l.bf16 %v6616
        %v6697 = vunpack.c.l.bf16 %v6617
        %v6698 = vunpack.c.l.bf16 %v6618
        %v6699 = vunpack.c.l.bf16 %v6619
        %v6700 = vunpack.c.l.bf16 %v6620
        %v6701 = vunpack.c.l.bf16 %v6621
        %v6702 = vunpack.c.l.bf16 %v6622
        %v6703 = vunpack.c.l.bf16 %v6623
        %v6704 = vunpack.c.l.bf16 %v6624
        %v6705 = vunpack.c.l.bf16 %v6625
        %v6706 = vunpack.c.l.bf16 %v6626
        %v6707 = vunpack.c.l.bf16 %v6627
        %v6708 = vunpack.c.l.bf16 %v6628
        %v6709 = vunpack.c.l.bf16 %v6629
        %v6710 = vunpack.c.l.bf16 %v6630
        %v6711 = vunpack.c.l.bf16 %v6631
        %v6712 = vunpack.c.l.bf16 %v6632
        %v6713 = vunpack.c.l.bf16 %v6633
        %v6714 = vunpack.c.l.bf16 %v6634
        %v6715 = vunpack.c.l.bf16 %v6635
        %v6716 = vunpack.c.l.bf16 %v6636
        %v6717 = vunpack.c.l.bf16 %v6637
        %v6718 = vunpack.c.l.bf16 %v6638
        %v6719 = vunpack.c.l.bf16 %v6639
        %v6720 = vunpack.c.l.bf16 %v6640
        %v6721 = vunpack.c.l.bf16 %v6641
        %v6722 = vunpack.c.l.bf16 %v6642
        %v6723 = vunpack.c.l.bf16 %v6643
        %v6724 = vunpack.c.l.bf16 %v6644
        %v6725 = vunpack.c.l.bf16 %v6645
        %v6726 = vunpack.c.l.bf16 %v6646
        %v6727 = vunpack.c.l.bf16 %v6647
        %v6728 = vunpack.c.l.bf16 %v6648
        %v6729 = vunpack.c.l.bf16 %v6649
        %v6730 = vunpack.c.l.bf16 %v6650
        %v6731 = vunpack.c.l.bf16 %v6651
        %v6732 = vunpack.c.l.bf16 %v6652
        %v6733 = vunpack.c.l.bf16 %v6653
        %v6734 = vunpack.c.l.bf16 %v6654
        %v6735 = vunpack.c.l.bf16 %v6655
        %v6736 = vunpack.c.l.bf16 %v6656
        %v6737 = vunpack.c.l.bf16 %v6657
        %v6738 = vunpack.c.l.bf16 %v6658
        %v6739 = vunpack.c.l.bf16 %v6659
        %v6740 = vunpack.c.l.bf16 %v6660
        %v6741 = vunpack.c.l.bf16 %v6661
        %v6742 = vunpack.c.l.bf16 %v6662
        %v6743 = vunpack.c.l.bf16 %v6663
        %v6744 = vunpack.c.l.bf16 %v6664
        %v6745 = vunpack.c.l.bf16 %v6665
        %v6826 = vrot.slane %v6666, 2
        %v6827 = vrot.slane %v6667, 2
        %v6828 = vsel %vm2021, %v6826, %v6827
        %v6829 = vrot.slane %v6668, 2
        %v6830 = vsel %vm2021, %v6827, %v6829
        %v6831 = vrot.slane %v6669, 2
        %v6832 = vsel %vm2021, %v6829, %v6831
        %v6833 = vrot.slane %v6670, 2
        %v6834 = vsel %vm2021, %v6831, %v6833
        %v6835 = vrot.slane %v6671, 2
        %v6836 = vrot.slane %v6672, 2
        %v6837 = vsel %vm2021, %v6835, %v6836
        %v6838 = vrot.slane %v6673, 2
        %v6839 = vsel %vm2021, %v6836, %v6838
        %v6840 = vrot.slane %v6674, 2
        %v6841 = vsel %vm2021, %v6838, %v6840
        %v6842 = vrot.slane %v6675, 2
        %v6843 = vsel %vm2021, %v6840, %v6842
        %v6844 = vrot.slane %v6676, 2
        %v6845 = vrot.slane %v6677, 2
        %v6846 = vsel %vm2021, %v6844, %v6845
        %v6847 = vrot.slane %v6678, 2
        %v6848 = vsel %vm2021, %v6845, %v6847
        %v6849 = vrot.slane %v6679, 2
        %v6850 = vsel %vm2021, %v6847, %v6849
        %v6851 = vrot.slane %v6680, 2
        %v6852 = vsel %vm2021, %v6849, %v6851
        %v6853 = vrot.slane %v6681, 2
        %v6854 = vrot.slane %v6682, 2
        %v6855 = vsel %vm2021, %v6853, %v6854
        %v6856 = vrot.slane %v6683, 2
        %v6857 = vsel %vm2021, %v6854, %v6856
        %v6858 = vrot.slane %v6684, 2
        %v6859 = vsel %vm2021, %v6856, %v6858
        %v6860 = vrot.slane %v6685, 2
        %v6861 = vsel %vm2021, %v6858, %v6860
        %v6862 = vrot.slane %v6686, 2
        %v6863 = vrot.slane %v6687, 2
        %v6864 = vsel %vm2021, %v6862, %v6863
        %v6865 = vrot.slane %v6688, 2
        %v6866 = vsel %vm2021, %v6863, %v6865
        %v6867 = vrot.slane %v6689, 2
        %v6868 = vsel %vm2021, %v6865, %v6867
        %v6869 = vrot.slane %v6690, 2
        %v6870 = vsel %vm2021, %v6867, %v6869
        %v6871 = vrot.slane %v6691, 2
        %v6872 = vrot.slane %v6692, 2
        %v6873 = vsel %vm2021, %v6871, %v6872
        %v6874 = vrot.slane %v6693, 2
        %v6875 = vsel %vm2021, %v6872, %v6874
        %v6876 = vrot.slane %v6694, 2
        %v6877 = vsel %vm2021, %v6874, %v6876
        %v6878 = vrot.slane %v6695, 2
        %v6879 = vsel %vm2021, %v6876, %v6878
        %v6880 = vrot.slane %v6696, 2
        %v6881 = vrot.slane %v6697, 2
        %v6882 = vsel %vm2021, %v6880, %v6881
        %v6883 = vrot.slane %v6698, 2
        %v6884 = vsel %vm2021, %v6881, %v6883
        %v6885 = vrot.slane %v6699, 2
        %v6886 = vsel %vm2021, %v6883, %v6885
        %v6887 = vrot.slane %v6700, 2
        %v6888 = vsel %vm2021, %v6885, %v6887
        %v6889 = vrot.slane %v6701, 2
        %v6890 = vrot.slane %v6702, 2
        %v6891 = vsel %vm2021, %v6889, %v6890
        %v6892 = vrot.slane %v6703, 2
        %v6893 = vsel %vm2021, %v6890, %v6892
        %v6894 = vrot.slane %v6704, 2
        %v6895 = vsel %vm2021, %v6892, %v6894
        %v6896 = vrot.slane %v6705, 2
        %v6897 = vsel %vm2021, %v6894, %v6896
        %v6898 = vrot.slane %v6706, 2
        %v6899 = vrot.slane %v6707, 2
        %v6900 = vsel %vm2021, %v6898, %v6899
        %v6901 = vrot.slane %v6708, 2
        %v6902 = vsel %vm2021, %v6899, %v6901
        %v6903 = vrot.slane %v6709, 2
        %v6904 = vsel %vm2021, %v6901, %v6903
        %v6905 = vrot.slane %v6710, 2
        %v6906 = vsel %vm2021, %v6903, %v6905
        %v6907 = vrot.slane %v6711, 2
        %v6908 = vrot.slane %v6712, 2
        %v6909 = vsel %vm2021, %v6907, %v6908
        %v6910 = vrot.slane %v6713, 2
        %v6911 = vsel %vm2021, %v6908, %v6910
        %v6912 = vrot.slane %v6714, 2
        %v6913 = vsel %vm2021, %v6910, %v6912
        %v6914 = vrot.slane %v6715, 2
        %v6915 = vsel %vm2021, %v6912, %v6914
        %v6916 = vrot.slane %v6716, 2
        %v6917 = vrot.slane %v6717, 2
        %v6918 = vsel %vm2021, %v6916, %v6917
        %v6919 = vrot.slane %v6718, 2
        %v6920 = vsel %vm2021, %v6917, %v6919
        %v6921 = vrot.slane %v6719, 2
        %v6922 = vsel %vm2021, %v6919, %v6921
        %v6923 = vrot.slane %v6720, 2
        %v6924 = vsel %vm2021, %v6921, %v6923
        %v6925 = vrot.slane %v6721, 2
        %v6926 = vrot.slane %v6722, 2
        %v6927 = vsel %vm2021, %v6925, %v6926
        %v6928 = vrot.slane %v6723, 2
        %v6929 = vsel %vm2021, %v6926, %v6928
        %v6930 = vrot.slane %v6724, 2
        %v6931 = vsel %vm2021, %v6928, %v6930
        %v6932 = vrot.slane %v6725, 2
        %v6933 = vsel %vm2021, %v6930, %v6932
        %v6934 = vrot.slane %v6726, 2
        %v6935 = vrot.slane %v6727, 2
        %v6936 = vsel %vm2021, %v6934, %v6935
        %v6937 = vrot.slane %v6728, 2
        %v6938 = vsel %vm2021, %v6935, %v6937
        %v6939 = vrot.slane %v6729, 2
        %v6940 = vsel %vm2021, %v6937, %v6939
        %v6941 = vrot.slane %v6730, 2
        %v6942 = vsel %vm2021, %v6939, %v6941
        %v6943 = vrot.slane %v6731, 2
        %v6944 = vrot.slane %v6732, 2
        %v6945 = vsel %vm2021, %v6943, %v6944
        %v6946 = vrot.slane %v6733, 2
        %v6947 = vsel %vm2021, %v6944, %v6946
        %v6948 = vrot.slane %v6734, 2
        %v6949 = vsel %vm2021, %v6946, %v6948
        %v6950 = vrot.slane %v6735, 2
        %v6951 = vsel %vm2021, %v6948, %v6950
        %v6952 = vrot.slane %v6736, 2
        %v6953 = vrot.slane %v6737, 2
        %v6954 = vsel %vm2021, %v6952, %v6953
        %v6955 = vrot.slane %v6738, 2
        %v6956 = vsel %vm2021, %v6953, %v6955
        %v6957 = vrot.slane %v6739, 2
        %v6958 = vsel %vm2021, %v6955, %v6957
        %v6959 = vrot.slane %v6740, 2
        %v6960 = vsel %vm2021, %v6957, %v6959
        %v6961 = vrot.slane %v6741, 2
        %v6962 = vrot.slane %v6742, 2
        %v6963 = vsel %vm2021, %v6961, %v6962
        %v6964 = vrot.slane %v6743, 2
        %v6965 = vsel %vm2021, %v6962, %v6964
        %v6966 = vrot.slane %v6744, 2
        %v6967 = vsel %vm2021, %v6964, %v6966
        %v6968 = vrot.slane %v6745, 2
        %v6969 = vsel %vm2021, %v6966, %v6968
        %v7034 = vpack.c.bf16 %v6830, %v6828
        %v7035 = vpack.c.bf16 %v6834, %v6832
        %v7036 = vpack.c.bf16 %v6839, %v6837
        %v7037 = vpack.c.bf16 %v6843, %v6841
        %v7038 = vpack.c.bf16 %v6848, %v6846
        %v7039 = vpack.c.bf16 %v6852, %v6850
        %v7040 = vpack.c.bf16 %v6857, %v6855
        %v7041 = vpack.c.bf16 %v6861, %v6859
        %v7042 = vpack.c.bf16 %v6866, %v6864
        %v7043 = vpack.c.bf16 %v6870, %v6868
        %v7044 = vpack.c.bf16 %v6875, %v6873
        %v7045 = vpack.c.bf16 %v6879, %v6877
        %v7046 = vpack.c.bf16 %v6884, %v6882
        %v7047 = vpack.c.bf16 %v6888, %v6886
        %v7048 = vpack.c.bf16 %v6893, %v6891
        %v7049 = vpack.c.bf16 %v6897, %v6895
        %v7050 = vpack.c.bf16 %v6902, %v6900
        %v7051 = vpack.c.bf16 %v6906, %v6904
        %v7052 = vpack.c.bf16 %v6911, %v6909
        %v7053 = vpack.c.bf16 %v6915, %v6913
        %v7054 = vpack.c.bf16 %v6920, %v6918
        %v7055 = vpack.c.bf16 %v6924, %v6922
        %v7056 = vpack.c.bf16 %v6929, %v6927
        %v7057 = vpack.c.bf16 %v6933, %v6931
        %v7058 = vpack.c.bf16 %v6938, %v6936
        %v7059 = vpack.c.bf16 %v6942, %v6940
        %v7060 = vpack.c.bf16 %v6947, %v6945
        %v7061 = vpack.c.bf16 %v6951, %v6949
        %v7062 = vpack.c.bf16 %v6956, %v6954
        %v7063 = vpack.c.bf16 %v6960, %v6958
        %v7064 = vpack.c.bf16 %v6965, %v6963
        %v7065 = vpack.c.bf16 %v6969, %v6967
        %v7066 = vld [vmem:[#allocation2] sm:$0xff]
        %v7067 = vld [vmem:[#allocation2 + $0x8] sm:$0xff]
        %v7068 = vld [vmem:[#allocation2 + $0x10] sm:$0xff]
        %v7069 = vld [vmem:[#allocation2 + $0x18] sm:$0xff]
        %v7070 = vld [vmem:[#allocation2 + $0x20] sm:$0xff]
        %v7071 = vld [vmem:[#allocation2 + $0x28] sm:$0xff]
        %v7072 = vld [vmem:[#allocation2 + $0x30] sm:$0xff]
        %v7073 = vld [vmem:[#allocation2 + $0x38] sm:$0xff]
        %v7074 = vld [vmem:[#allocation2 + $0x40] sm:$0xff]
        %v7075 = vld [vmem:[#allocation2 + $0x48] sm:$0xff]
        %v7076 = vld [vmem:[#allocation2 + $0x50] sm:$0xff]
        %v7077 = vld [vmem:[#allocation2 + $0x58] sm:$0xff]
        %v7078 = vld [vmem:[#allocation2 + $0x60] sm:$0xff]
        %v7079 = vld [vmem:[#allocation2 + $0x68] sm:$0xff]
        %v7080 = vld [vmem:[#allocation2 + $0x70] sm:$0xff]
        %v7081 = vld [vmem:[#allocation2 + $0x78] sm:$0xff]
        %v7082 = vld [vmem:[#allocation2 + $0x80] sm:$0xff]
        %v7083 = vld [vmem:[#allocation2 + $0x88] sm:$0xff]
        %v7084 = vld [vmem:[#allocation2 + $0x90] sm:$0xff]
        %v7085 = vld [vmem:[#allocation2 + $0x98] sm:$0xff]
        %v7086 = vld [vmem:[#allocation2 + $0xa0] sm:$0xff]
        %v7087 = vld [vmem:[#allocation2 + $0xa8] sm:$0xff]
        %v7088 = vld [vmem:[#allocation2 + $0xb0] sm:$0xff]
        %v7089 = vld [vmem:[#allocation2 + $0xb8] sm:$0xff]
        %v7090 = vld [vmem:[#allocation2 + $0xc0] sm:$0xff]
        %v7091 = vld [vmem:[#allocation2 + $0xc8] sm:$0xff]
        %v7092 = vld [vmem:[#allocation2 + $0xd0] sm:$0xff]
        %v7093 = vld [vmem:[#allocation2 + $0xd8] sm:$0xff]
        %v7094 = vld [vmem:[#allocation2 + $0xe0] sm:$0xff]
        %v7095 = vld [vmem:[#allocation2 + $0xe8] sm:$0xff]
        %v7096 = vld [vmem:[#allocation2 + $0xf0] sm:$0xff]
        %v7097 = vld [vmem:[#allocation2 + $0xf8] sm:$0xff]
        %v7098 = vld [vmem:[#allocation2 + $0x100] sm:$0xff]
        %v7099 = vld [vmem:[#allocation2 + $0x108] sm:$0xff]
        %v7100 = vld [vmem:[#allocation2 + $0x110] sm:$0xff]
        %v7101 = vld [vmem:[#allocation2 + $0x118] sm:$0xff]
        %v7102 = vld [vmem:[#allocation2 + $0x120] sm:$0xff]
        %v7103 = vld [vmem:[#allocation2 + $0x128] sm:$0xff]
        %v7104 = vld [vmem:[#allocation2 + $0x130] sm:$0xff]
        %v7105 = vld [vmem:[#allocation2 + $0x138] sm:$0xff]
        %v7106 = vld [vmem:[#allocation2 + $0x140] sm:$0xff]
        %v7107 = vld [vmem:[#allocation2 + $0x148] sm:$0xff]
        %v7108 = vld [vmem:[#allocation2 + $0x150] sm:$0xff]
        %v7109 = vld [vmem:[#allocation2 + $0x158] sm:$0xff]
        %v7110 = vld [vmem:[#allocation2 + $0x160] sm:$0xff]
        %v7111 = vld [vmem:[#allocation2 + $0x168] sm:$0xff]
        %v7112 = vld [vmem:[#allocation2 + $0x170] sm:$0xff]
        %v7113 = vld [vmem:[#allocation2 + $0x178] sm:$0xff]
        %v7114 = vld [vmem:[#allocation2 + $0x180] sm:$0xff]
        %v7115 = vld [vmem:[#allocation2 + $0x188] sm:$0xff]
        %v7116 = vld [vmem:[#allocation2 + $0x190] sm:$0xff]
        %v7117 = vld [vmem:[#allocation2 + $0x198] sm:$0xff]
        %v7118 = vld [vmem:[#allocation2 + $0x1a0] sm:$0xff]
        %v7119 = vld [vmem:[#allocation2 + $0x1a8] sm:$0xff]
        %v7120 = vld [vmem:[#allocation2 + $0x1b0] sm:$0xff]
        %v7121 = vld [vmem:[#allocation2 + $0x1b8] sm:$0xff]
        %v7122 = vld [vmem:[#allocation2 + $0x1c0] sm:$0xff]
        %v7123 = vld [vmem:[#allocation2 + $0x1c8] sm:$0xff]
        %v7124 = vld [vmem:[#allocation2 + $0x1d0] sm:$0xff]
        %v7125 = vld [vmem:[#allocation2 + $0x1d8] sm:$0xff]
        %v7126 = vld [vmem:[#allocation2 + $0x1e0] sm:$0xff]
        %v7127 = vld [vmem:[#allocation2 + $0x1e8] sm:$0xff]
        %v7128 = vld [vmem:[#allocation2 + $0x1f0] sm:$0xff]
        %v7129 = vld [vmem:[#allocation2 + $0x1f8] sm:$0xff]
        %s7130 = scalar_lea.vmem %s214, 512
        %v7131 = vld [vmem:[%s7130] sm:$0xf]
        %v7132 = vld [vmem:[%s7130 + $0x4] sm:$0xf]
        %v7133 = vld [vmem:[%s7130 + $0x8] sm:$0xf]
        %v7134 = vld [vmem:[%s7130 + $0xc] sm:$0xf]
        %v7135 = vld [vmem:[%s7130 + $0x10] sm:$0xf]
        %v7136 = vld [vmem:[%s7130 + $0x14] sm:$0xf]
        %v7137 = vld [vmem:[%s7130 + $0x18] sm:$0xf]
        %v7138 = vld [vmem:[%s7130 + $0x1c] sm:$0xf]
        %v7139 = vld [vmem:[%s7130 + $0x20] sm:$0xf]
        %v7140 = vld [vmem:[%s7130 + $0x24] sm:$0xf]
        %v7141 = vld [vmem:[%s7130 + $0x28] sm:$0xf]
        %v7142 = vld [vmem:[%s7130 + $0x2c] sm:$0xf]
        %v7143 = vld [vmem:[%s7130 + $0x30] sm:$0xf]
        %v7144 = vld [vmem:[%s7130 + $0x34] sm:$0xf]
        %v7145 = vld [vmem:[%s7130 + $0x38] sm:$0xf]
        %v7146 = vld [vmem:[%s7130 + $0x3c] sm:$0xf]
        %v7163 = vunpack.c.l.b16 %v7131
        %v7164 = vunpack.c.l.b16 %v7132
        %v7165 = vunpack.c.l.b16 %v7133
        %v7166 = vunpack.c.l.b16 %v7134
        %v7167 = vunpack.c.l.b16 %v7135
        %v7168 = vunpack.c.l.b16 %v7136
        %v7169 = vunpack.c.l.b16 %v7137
        %v7170 = vunpack.c.l.b16 %v7138
        %v7171 = vunpack.c.l.b16 %v7139
        %v7172 = vunpack.c.l.b16 %v7140
        %v7173 = vunpack.c.l.b16 %v7141
        %v7174 = vunpack.c.l.b16 %v7142
        %v7175 = vunpack.c.l.b16 %v7143
        %v7176 = vunpack.c.l.b16 %v7144
        %v7177 = vunpack.c.l.b16 %v7145
        %v7178 = vunpack.c.l.b16 %v7146
        %v7179 = vpack.c.b16 %v7164, %v7163
        %v7180 = vpack.c.b16 %v7166, %v7165
        %v7181 = vpack.c.b16 %v7168, %v7167
        %v7182 = vpack.c.b16 %v7170, %v7169
        %v7183 = vpack.c.b16 %v7172, %v7171
        %v7184 = vpack.c.b16 %v7174, %v7173
        %v7185 = vpack.c.b16 %v7176, %v7175
        %v7186 = vpack.c.b16 %v7178, %v7177
        %7195 = vmatpush.bf16.msra.mxu0 %v7186
        %7196 = vmatpush.bf16.msra.mxu0 %v7185
        %7197 = vmatpush.bf16.msra.mxu0 %v7184
        %7198 = vmatpush.bf16.msra.mxu0 %v7183
        %7199 = vmatpush.bf16.msra.mxu0 %v7182
        %7200 = vmatpush.bf16.msra.mxu0 %v7181
        %7201 = vmatpush.bf16.msra.mxu0 %v7180
        %7202 = vmatpush.bf16.msra.mxu0 %v7179
        %7203 = vmatmul.bf16.gmra.mxu0 %v7034
        %v7204 = vpop.f32.mrf.mxu0
        %v7205 = vadd.f32 0.0, %v7204
        %v7206 = vpop.f32.mrf.mxu0
        %v7207 = vadd.f32 0.0, %v7206
        %7208 = vmatmul.bf16.gmra.mxu0 %v7035
        %v7209 = vpop.f32.mrf.mxu0
        %v7210 = vadd.f32 0.0, %v7209
        %v7211 = vpop.f32.mrf.mxu0
        %v7212 = vadd.f32 0.0, %v7211
        %7213 = vmatmul.bf16.gmra.mxu0 %v7036
        %v7214 = vpop.f32.mrf.mxu0
        %v7215 = vadd.f32 0.0, %v7214
        %v7216 = vpop.f32.mrf.mxu0
        %v7217 = vadd.f32 0.0, %v7216
        %7218 = vmatmul.bf16.gmra.mxu0 %v7037
        %v7219 = vpop.f32.mrf.mxu0
        %v7220 = vadd.f32 0.0, %v7219
        %v7221 = vpop.f32.mrf.mxu0
        %v7222 = vadd.f32 0.0, %v7221
        %7223 = vmatmul.bf16.gmra.mxu0 %v7038
        %v7224 = vpop.f32.mrf.mxu0
        %v7225 = vadd.f32 0.0, %v7224
        %v7226 = vpop.f32.mrf.mxu0
        %v7227 = vadd.f32 0.0, %v7226
        %7228 = vmatmul.bf16.gmra.mxu0 %v7039
        %v7229 = vpop.f32.mrf.mxu0
        %v7230 = vadd.f32 0.0, %v7229
        %v7231 = vpop.f32.mrf.mxu0
        %v7232 = vadd.f32 0.0, %v7231
        %7233 = vmatmul.bf16.gmra.mxu0 %v7040
        %v7234 = vpop.f32.mrf.mxu0
        %v7235 = vadd.f32 0.0, %v7234
        %v7236 = vpop.f32.mrf.mxu0
        %v7237 = vadd.f32 0.0, %v7236
        %7238 = vmatmul.bf16.gmra.mxu0 %v7041
        %v7239 = vpop.f32.mrf.mxu0
        %v7240 = vadd.f32 0.0, %v7239
        %v7241 = vpop.f32.mrf.mxu0
        %v7242 = vadd.f32 0.0, %v7241
        %7243 = vmatmul.bf16.gmra.mxu0 %v7042
        %v7244 = vpop.f32.mrf.mxu0
        %v7245 = vadd.f32 0.0, %v7244
        %v7246 = vpop.f32.mrf.mxu0
        %v7247 = vadd.f32 0.0, %v7246
        %7248 = vmatmul.bf16.gmra.mxu0 %v7043
        %v7249 = vpop.f32.mrf.mxu0
        %v7250 = vadd.f32 0.0, %v7249
        %v7251 = vpop.f32.mrf.mxu0
        %v7252 = vadd.f32 0.0, %v7251
        %7253 = vmatmul.bf16.gmra.mxu0 %v7044
        %v7254 = vpop.f32.mrf.mxu0
        %v7255 = vadd.f32 0.0, %v7254
        %v7256 = vpop.f32.mrf.mxu0
        %v7257 = vadd.f32 0.0, %v7256
        %7258 = vmatmul.bf16.gmra.mxu0 %v7045
        %v7259 = vpop.f32.mrf.mxu0
        %v7260 = vadd.f32 0.0, %v7259
        %v7261 = vpop.f32.mrf.mxu0
        %v7262 = vadd.f32 0.0, %v7261
        %7263 = vmatmul.bf16.gmra.mxu0 %v7046
        %v7264 = vpop.f32.mrf.mxu0
        %v7265 = vadd.f32 0.0, %v7264
        %v7266 = vpop.f32.mrf.mxu0
        %v7267 = vadd.f32 0.0, %v7266
        %7268 = vmatmul.bf16.gmra.mxu0 %v7047
        %v7269 = vpop.f32.mrf.mxu0
        %v7270 = vadd.f32 0.0, %v7269
        %v7271 = vpop.f32.mrf.mxu0
        %v7272 = vadd.f32 0.0, %v7271
        %7273 = vmatmul.bf16.gmra.mxu0 %v7048
        %v7274 = vpop.f32.mrf.mxu0
        %v7275 = vadd.f32 0.0, %v7274
        %v7276 = vpop.f32.mrf.mxu0
        %v7277 = vadd.f32 0.0, %v7276
        %7278 = vmatmul.bf16.gmra.mxu0 %v7049
        %v7279 = vpop.f32.mrf.mxu0
        %v7280 = vadd.f32 0.0, %v7279
        %v7281 = vpop.f32.mrf.mxu0
        %v7282 = vadd.f32 0.0, %v7281
        %7283 = vmatmul.bf16.gmra.mxu0 %v7050
        %v7284 = vpop.f32.mrf.mxu0
        %v7285 = vadd.f32 0.0, %v7284
        %v7286 = vpop.f32.mrf.mxu0
        %v7287 = vadd.f32 0.0, %v7286
        %7288 = vmatmul.bf16.gmra.mxu0 %v7051
        %v7289 = vpop.f32.mrf.mxu0
        %v7290 = vadd.f32 0.0, %v7289
        %v7291 = vpop.f32.mrf.mxu0
        %v7292 = vadd.f32 0.0, %v7291
        %7293 = vmatmul.bf16.gmra.mxu0 %v7052
        %v7294 = vpop.f32.mrf.mxu0
        %v7295 = vadd.f32 0.0, %v7294
        %v7296 = vpop.f32.mrf.mxu0
        %v7297 = vadd.f32 0.0, %v7296
        %7298 = vmatmul.bf16.gmra.mxu0 %v7053
        %v7299 = vpop.f32.mrf.mxu0
        %v7300 = vadd.f32 0.0, %v7299
        %v7301 = vpop.f32.mrf.mxu0
        %v7302 = vadd.f32 0.0, %v7301
        %7303 = vmatmul.bf16.gmra.mxu0 %v7054
        %v7304 = vpop.f32.mrf.mxu0
        %v7305 = vadd.f32 0.0, %v7304
        %v7306 = vpop.f32.mrf.mxu0
        %v7307 = vadd.f32 0.0, %v7306
        %7308 = vmatmul.bf16.gmra.mxu0 %v7055
        %v7309 = vpop.f32.mrf.mxu0
        %v7310 = vadd.f32 0.0, %v7309
        %v7311 = vpop.f32.mrf.mxu0
        %v7312 = vadd.f32 0.0, %v7311
        %7313 = vmatmul.bf16.gmra.mxu0 %v7056
        %v7314 = vpop.f32.mrf.mxu0
        %v7315 = vadd.f32 0.0, %v7314
        %v7316 = vpop.f32.mrf.mxu0
        %v7317 = vadd.f32 0.0, %v7316
        %7318 = vmatmul.bf16.gmra.mxu0 %v7057
        %v7319 = vpop.f32.mrf.mxu0
        %v7320 = vadd.f32 0.0, %v7319
        %v7321 = vpop.f32.mrf.mxu0
        %v7322 = vadd.f32 0.0, %v7321
        %7323 = vmatmul.bf16.gmra.mxu0 %v7058
        %v7324 = vpop.f32.mrf.mxu0
        %v7325 = vadd.f32 0.0, %v7324
        %v7326 = vpop.f32.mrf.mxu0
        %v7327 = vadd.f32 0.0, %v7326
        %7328 = vmatmul.bf16.gmra.mxu0 %v7059
        %v7329 = vpop.f32.mrf.mxu0
        %v7330 = vadd.f32 0.0, %v7329
        %v7331 = vpop.f32.mrf.mxu0
        %v7332 = vadd.f32 0.0, %v7331
        %7333 = vmatmul.bf16.gmra.mxu0 %v7060
        %v7334 = vpop.f32.mrf.mxu0
        %v7335 = vadd.f32 0.0, %v7334
        %v7336 = vpop.f32.mrf.mxu0
        %v7337 = vadd.f32 0.0, %v7336
        %7338 = vmatmul.bf16.gmra.mxu0 %v7061
        %v7339 = vpop.f32.mrf.mxu0
        %v7340 = vadd.f32 0.0, %v7339
        %v7341 = vpop.f32.mrf.mxu0
        %v7342 = vadd.f32 0.0, %v7341
        %7343 = vmatmul.bf16.gmra.mxu0 %v7062
        %v7344 = vpop.f32.mrf.mxu0
        %v7345 = vadd.f32 0.0, %v7344
        %v7346 = vpop.f32.mrf.mxu0
        %v7347 = vadd.f32 0.0, %v7346
        %7348 = vmatmul.bf16.gmra.mxu0 %v7063
        %v7349 = vpop.f32.mrf.mxu0
        %v7350 = vadd.f32 0.0, %v7349
        %v7351 = vpop.f32.mrf.mxu0
        %v7352 = vadd.f32 0.0, %v7351
        %7353 = vmatmul.bf16.gmra.mxu0 %v7064
        %v7354 = vpop.f32.mrf.mxu0
        %v7355 = vadd.f32 0.0, %v7354
        %v7356 = vpop.f32.mrf.mxu0
        %v7357 = vadd.f32 0.0, %v7356
        %7358 = vmatmul.bf16.gmra.mxu0 %v7065
        %v7359 = vpop.f32.mrf.mxu0
        %v7360 = vadd.f32 0.0, %v7359
        %v7361 = vpop.f32.mrf.mxu0
        %v7362 = vadd.f32 0.0, %v7361
        %7363 = vdwg.mxu0
        %v7364 = vadd.f32 %v7066, %v7205
        %v7365 = vadd.f32 %v7067, %v7207
        %v7366 = vadd.f32 %v7068, %v7210
        %v7367 = vadd.f32 %v7069, %v7212
        %v7368 = vadd.f32 %v7070, %v7215
        %v7369 = vadd.f32 %v7071, %v7217
        %v7370 = vadd.f32 %v7072, %v7220
        %v7371 = vadd.f32 %v7073, %v7222
        %v7372 = vadd.f32 %v7074, %v7225
        %v7373 = vadd.f32 %v7075, %v7227
        %v7374 = vadd.f32 %v7076, %v7230
        %v7375 = vadd.f32 %v7077, %v7232
        %v7376 = vadd.f32 %v7078, %v7235
        %v7377 = vadd.f32 %v7079, %v7237
        %v7378 = vadd.f32 %v7080, %v7240
        %v7379 = vadd.f32 %v7081, %v7242
        %v7380 = vadd.f32 %v7082, %v7245
        %v7381 = vadd.f32 %v7083, %v7247
        %v7382 = vadd.f32 %v7084, %v7250
        %v7383 = vadd.f32 %v7085, %v7252
        %v7384 = vadd.f32 %v7086, %v7255
        %v7385 = vadd.f32 %v7087, %v7257
        %v7386 = vadd.f32 %v7088, %v7260
        %v7387 = vadd.f32 %v7089, %v7262
        %v7388 = vadd.f32 %v7090, %v7265
        %v7389 = vadd.f32 %v7091, %v7267
        %v7390 = vadd.f32 %v7092, %v7270
        %v7391 = vadd.f32 %v7093, %v7272
        %v7392 = vadd.f32 %v7094, %v7275
        %v7393 = vadd.f32 %v7095, %v7277
        %v7394 = vadd.f32 %v7096, %v7280
        %v7395 = vadd.f32 %v7097, %v7282
        %v7396 = vadd.f32 %v7098, %v7285
        %v7397 = vadd.f32 %v7099, %v7287
        %v7398 = vadd.f32 %v7100, %v7290
        %v7399 = vadd.f32 %v7101, %v7292
        %v7400 = vadd.f32 %v7102, %v7295
        %v7401 = vadd.f32 %v7103, %v7297
        %v7402 = vadd.f32 %v7104, %v7300
        %v7403 = vadd.f32 %v7105, %v7302
        %v7404 = vadd.f32 %v7106, %v7305
        %v7405 = vadd.f32 %v7107, %v7307
        %v7406 = vadd.f32 %v7108, %v7310
        %v7407 = vadd.f32 %v7109, %v7312
        %v7408 = vadd.f32 %v7110, %v7315
        %v7409 = vadd.f32 %v7111, %v7317
        %v7410 = vadd.f32 %v7112, %v7320
        %v7411 = vadd.f32 %v7113, %v7322
        %v7412 = vadd.f32 %v7114, %v7325
        %v7413 = vadd.f32 %v7115, %v7327
        %v7414 = vadd.f32 %v7116, %v7330
        %v7415 = vadd.f32 %v7117, %v7332
        %v7416 = vadd.f32 %v7118, %v7335
        %v7417 = vadd.f32 %v7119, %v7337
        %v7418 = vadd.f32 %v7120, %v7340
        %v7419 = vadd.f32 %v7121, %v7342
        %v7420 = vadd.f32 %v7122, %v7345
        %v7421 = vadd.f32 %v7123, %v7347
        %v7422 = vadd.f32 %v7124, %v7350
        %v7423 = vadd.f32 %v7125, %v7352
        %v7424 = vadd.f32 %v7126, %v7355
        %v7425 = vadd.f32 %v7127, %v7357
        %v7426 = vadd.f32 %v7128, %v7360
        %v7427 = vadd.f32 %v7129, %v7362
        %7428 = vst [vmem:[#allocation2] sm:$0xff] %v7364
        %7429 = vst [vmem:[#allocation2 + $0x8] sm:$0xff] %v7365
        %7430 = vst [vmem:[#allocation2 + $0x10] sm:$0xff] %v7366
        %7431 = vst [vmem:[#allocation2 + $0x18] sm:$0xff] %v7367
        %7432 = vst [vmem:[#allocation2 + $0x20] sm:$0xff] %v7368
        %7433 = vst [vmem:[#allocation2 + $0x28] sm:$0xff] %v7369
        %7434 = vst [vmem:[#allocation2 + $0x30] sm:$0xff] %v7370
        %7435 = vst [vmem:[#allocation2 + $0x38] sm:$0xff] %v7371
        %7436 = vst [vmem:[#allocation2 + $0x40] sm:$0xff] %v7372
        %7437 = vst [vmem:[#allocation2 + $0x48] sm:$0xff] %v7373
        %7438 = vst [vmem:[#allocation2 + $0x50] sm:$0xff] %v7374
        %7439 = vst [vmem:[#allocation2 + $0x58] sm:$0xff] %v7375
        %7440 = vst [vmem:[#allocation2 + $0x60] sm:$0xff] %v7376
        %7441 = vst [vmem:[#allocation2 + $0x68] sm:$0xff] %v7377
        %7442 = vst [vmem:[#allocation2 + $0x70] sm:$0xff] %v7378
        %7443 = vst [vmem:[#allocation2 + $0x78] sm:$0xff] %v7379
        %7444 = vst [vmem:[#allocation2 + $0x80] sm:$0xff] %v7380
        %7445 = vst [vmem:[#allocation2 + $0x88] sm:$0xff] %v7381
        %7446 = vst [vmem:[#allocation2 + $0x90] sm:$0xff] %v7382
        %7447 = vst [vmem:[#allocation2 + $0x98] sm:$0xff] %v7383
        %7448 = vst [vmem:[#allocation2 + $0xa0] sm:$0xff] %v7384
        %7449 = vst [vmem:[#allocation2 + $0xa8] sm:$0xff] %v7385
        %7450 = vst [vmem:[#allocation2 + $0xb0] sm:$0xff] %v7386
        %7451 = vst [vmem:[#allocation2 + $0xb8] sm:$0xff] %v7387
        %7452 = vst [vmem:[#allocation2 + $0xc0] sm:$0xff] %v7388
        %7453 = vst [vmem:[#allocation2 + $0xc8] sm:$0xff] %v7389
        %7454 = vst [vmem:[#allocation2 + $0xd0] sm:$0xff] %v7390
        %7455 = vst [vmem:[#allocation2 + $0xd8] sm:$0xff] %v7391
        %7456 = vst [vmem:[#allocation2 + $0xe0] sm:$0xff] %v7392
        %7457 = vst [vmem:[#allocation2 + $0xe8] sm:$0xff] %v7393
        %7458 = vst [vmem:[#allocation2 + $0xf0] sm:$0xff] %v7394
        %7459 = vst [vmem:[#allocation2 + $0xf8] sm:$0xff] %v7395
        %7460 = vst [vmem:[#allocation2 + $0x100] sm:$0xff] %v7396
        %7461 = vst [vmem:[#allocation2 + $0x108] sm:$0xff] %v7397
        %7462 = vst [vmem:[#allocation2 + $0x110] sm:$0xff] %v7398
        %7463 = vst [vmem:[#allocation2 + $0x118] sm:$0xff] %v7399
        %7464 = vst [vmem:[#allocation2 + $0x120] sm:$0xff] %v7400
        %7465 = vst [vmem:[#allocation2 + $0x128] sm:$0xff] %v7401
        %7466 = vst [vmem:[#allocation2 + $0x130] sm:$0xff] %v7402
        %7467 = vst [vmem:[#allocation2 + $0x138] sm:$0xff] %v7403
        %7468 = vst [vmem:[#allocation2 + $0x140] sm:$0xff] %v7404
        %7469 = vst [vmem:[#allocation2 + $0x148] sm:$0xff] %v7405
        %7470 = vst [vmem:[#allocation2 + $0x150] sm:$0xff] %v7406
        %7471 = vst [vmem:[#allocation2 + $0x158] sm:$0xff] %v7407
        %7472 = vst [vmem:[#allocation2 + $0x160] sm:$0xff] %v7408
        %7473 = vst [vmem:[#allocation2 + $0x168] sm:$0xff] %v7409
        %7474 = vst [vmem:[#allocation2 + $0x170] sm:$0xff] %v7410
        %7475 = vst [vmem:[#allocation2 + $0x178] sm:$0xff] %v7411
        %7476 = vst [vmem:[#allocation2 + $0x180] sm:$0xff] %v7412
        %7477 = vst [vmem:[#allocation2 + $0x188] sm:$0xff] %v7413
        %7478 = vst [vmem:[#allocation2 + $0x190] sm:$0xff] %v7414
        %7479 = vst [vmem:[#allocation2 + $0x198] sm:$0xff] %v7415
        %7480 = vst [vmem:[#allocation2 + $0x1a0] sm:$0xff] %v7416
        %7481 = vst [vmem:[#allocation2 + $0x1a8] sm:$0xff] %v7417
        %7482 = vst [vmem:[#allocation2 + $0x1b0] sm:$0xff] %v7418
        %7483 = vst [vmem:[#allocation2 + $0x1b8] sm:$0xff] %v7419
        %7484 = vst [vmem:[#allocation2 + $0x1c0] sm:$0xff] %v7420
        %7485 = vst [vmem:[#allocation2 + $0x1c8] sm:$0xff] %v7421
        %7486 = vst [vmem:[#allocation2 + $0x1d0] sm:$0xff] %v7422
        %7487 = vst [vmem:[#allocation2 + $0x1d8] sm:$0xff] %v7423
        %7488 = vst [vmem:[#allocation2 + $0x1e0] sm:$0xff] %v7424
        %7489 = vst [vmem:[#allocation2 + $0x1e8] sm:$0xff] %v7425
        %7490 = vst [vmem:[#allocation2 + $0x1f0] sm:$0xff] %v7426
        %7491 = vst [vmem:[#allocation2 + $0x1f8] sm:$0xff] %v7427
        // Predicated region
        $region33: #{tpu_custom_call.1} parent=27 // pred_check
          %p7492 = pneg %p217
        $region34: #{tpu_custom_call.1} parent=27 // pred_check_branch
          %7494 = sbr.rel (%p7492) target = $region36
        $region35: #{tpu_custom_call.1} parent=27 // pred_region
          %v7495 = vld [vmem:[#allocation2] sm:$0xff]
          %v7496 = vld [vmem:[#allocation2 + $0x8] sm:$0xff]
          %v7497 = vld [vmem:[#allocation2 + $0x10] sm:$0xff]
          %v7498 = vld [vmem:[#allocation2 + $0x18] sm:$0xff]
          %v7499 = vld [vmem:[#allocation2 + $0x20] sm:$0xff]
          %v7500 = vld [vmem:[#allocation2 + $0x28] sm:$0xff]
          %v7501 = vld [vmem:[#allocation2 + $0x30] sm:$0xff]
          %v7502 = vld [vmem:[#allocation2 + $0x38] sm:$0xff]
          %v7503 = vld [vmem:[#allocation2 + $0x40] sm:$0xff]
          %v7504 = vld [vmem:[#allocation2 + $0x48] sm:$0xff]
          %v7505 = vld [vmem:[#allocation2 + $0x50] sm:$0xff]
          %v7506 = vld [vmem:[#allocation2 + $0x58] sm:$0xff]
          %v7507 = vld [vmem:[#allocation2 + $0x60] sm:$0xff]
          %v7508 = vld [vmem:[#allocation2 + $0x68] sm:$0xff]
          %v7509 = vld [vmem:[#allocation2 + $0x70] sm:$0xff]
          %v7510 = vld [vmem:[#allocation2 + $0x78] sm:$0xff]
          %v7511 = vld [vmem:[#allocation2 + $0x80] sm:$0xff]
          %v7512 = vld [vmem:[#allocation2 + $0x88] sm:$0xff]
          %v7513 = vld [vmem:[#allocation2 + $0x90] sm:$0xff]
          %v7514 = vld [vmem:[#allocation2 + $0x98] sm:$0xff]
          %v7515 = vld [vmem:[#allocation2 + $0xa0] sm:$0xff]
          %v7516 = vld [vmem:[#allocation2 + $0xa8] sm:$0xff]
          %v7517 = vld [vmem:[#allocation2 + $0xb0] sm:$0xff]
          %v7518 = vld [vmem:[#allocation2 + $0xb8] sm:$0xff]
          %v7519 = vld [vmem:[#allocation2 + $0xc0] sm:$0xff]
          %v7520 = vld [vmem:[#allocation2 + $0xc8] sm:$0xff]
          %v7521 = vld [vmem:[#allocation2 + $0xd0] sm:$0xff]
          %v7522 = vld [vmem:[#allocation2 + $0xd8] sm:$0xff]
          %v7523 = vld [vmem:[#allocation2 + $0xe0] sm:$0xff]
          %v7524 = vld [vmem:[#allocation2 + $0xe8] sm:$0xff]
          %v7525 = vld [vmem:[#allocation2 + $0xf0] sm:$0xff]
          %v7526 = vld [vmem:[#allocation2 + $0xf8] sm:$0xff]
          %v7527 = vld [vmem:[#allocation2 + $0x100] sm:$0xff]
          %v7528 = vld [vmem:[#allocation2 + $0x108] sm:$0xff]
          %v7529 = vld [vmem:[#allocation2 + $0x110] sm:$0xff]
          %v7530 = vld [vmem:[#allocation2 + $0x118] sm:$0xff]
          %v7531 = vld [vmem:[#allocation2 + $0x120] sm:$0xff]
          %v7532 = vld [vmem:[#allocation2 + $0x128] sm:$0xff]
          %v7533 = vld [vmem:[#allocation2 + $0x130] sm:$0xff]
          %v7534 = vld [vmem:[#allocation2 + $0x138] sm:$0xff]
          %v7535 = vld [vmem:[#allocation2 + $0x140] sm:$0xff]
          %v7536 = vld [vmem:[#allocation2 + $0x148] sm:$0xff]
          %v7537 = vld [vmem:[#allocation2 + $0x150] sm:$0xff]
          %v7538 = vld [vmem:[#allocation2 + $0x158] sm:$0xff]
          %v7539 = vld [vmem:[#allocation2 + $0x160] sm:$0xff]
          %v7540 = vld [vmem:[#allocation2 + $0x168] sm:$0xff]
          %v7541 = vld [vmem:[#allocation2 + $0x170] sm:$0xff]
          %v7542 = vld [vmem:[#allocation2 + $0x178] sm:$0xff]
          %v7543 = vld [vmem:[#allocation2 + $0x180] sm:$0xff]
          %v7544 = vld [vmem:[#allocation2 + $0x188] sm:$0xff]
          %v7545 = vld [vmem:[#allocation2 + $0x190] sm:$0xff]
          %v7546 = vld [vmem:[#allocation2 + $0x198] sm:$0xff]
          %v7547 = vld [vmem:[#allocation2 + $0x1a0] sm:$0xff]
          %v7548 = vld [vmem:[#allocation2 + $0x1a8] sm:$0xff]
          %v7549 = vld [vmem:[#allocation2 + $0x1b0] sm:$0xff]
          %v7550 = vld [vmem:[#allocation2 + $0x1b8] sm:$0xff]
          %v7551 = vld [vmem:[#allocation2 + $0x1c0] sm:$0xff]
          %v7552 = vld [vmem:[#allocation2 + $0x1c8] sm:$0xff]
          %v7553 = vld [vmem:[#allocation2 + $0x1d0] sm:$0xff]
          %v7554 = vld [vmem:[#allocation2 + $0x1d8] sm:$0xff]
          %v7555 = vld [vmem:[#allocation2 + $0x1e0] sm:$0xff]
          %v7556 = vld [vmem:[#allocation2 + $0x1e8] sm:$0xff]
          %v7557 = vld [vmem:[#allocation2 + $0x1f0] sm:$0xff]
          %v7558 = vld [vmem:[#allocation2 + $0x1f8] sm:$0xff]
          %v7559 = vpack.c.bf16 %v7495, %v7495
          %v7560 = vpack.c.bf16 %v7496, %v7496
          %v7561 = vpack.c.bf16 %v7497, %v7497
          %v7562 = vpack.c.bf16 %v7498, %v7498
          %v7563 = vpack.c.bf16 %v7499, %v7499
          %v7564 = vpack.c.bf16 %v7500, %v7500
          %v7565 = vpack.c.bf16 %v7501, %v7501
          %v7566 = vpack.c.bf16 %v7502, %v7502
          %v7567 = vpack.c.bf16 %v7503, %v7503
          %v7568 = vpack.c.bf16 %v7504, %v7504
          %v7569 = vpack.c.bf16 %v7505, %v7505
          %v7570 = vpack.c.bf16 %v7506, %v7506
          %v7571 = vpack.c.bf16 %v7507, %v7507
          %v7572 = vpack.c.bf16 %v7508, %v7508
          %v7573 = vpack.c.bf16 %v7509, %v7509
          %v7574 = vpack.c.bf16 %v7510, %v7510
          %v7575 = vpack.c.bf16 %v7511, %v7511
          %v7576 = vpack.c.bf16 %v7512, %v7512
          %v7577 = vpack.c.bf16 %v7513, %v7513
          %v7578 = vpack.c.bf16 %v7514, %v7514
          %v7579 = vpack.c.bf16 %v7515, %v7515
          %v7580 = vpack.c.bf16 %v7516, %v7516
          %v7581 = vpack.c.bf16 %v7517, %v7517
          %v7582 = vpack.c.bf16 %v7518, %v7518
          %v7583 = vpack.c.bf16 %v7519, %v7519
          %v7584 = vpack.c.bf16 %v7520, %v7520
          %v7585 = vpack.c.bf16 %v7521, %v7521
          %v7586 = vpack.c.bf16 %v7522, %v7522
          %v7587 = vpack.c.bf16 %v7523, %v7523
          %v7588 = vpack.c.bf16 %v7524, %v7524
          %v7589 = vpack.c.bf16 %v7525, %v7525
          %v7590 = vpack.c.bf16 %v7526, %v7526
          %v7591 = vpack.c.bf16 %v7527, %v7527
          %v7592 = vpack.c.bf16 %v7528, %v7528
          %v7593 = vpack.c.bf16 %v7529, %v7529
          %v7594 = vpack.c.bf16 %v7530, %v7530
          %v7595 = vpack.c.bf16 %v7531, %v7531
          %v7596 = vpack.c.bf16 %v7532, %v7532
          %v7597 = vpack.c.bf16 %v7533, %v7533
          %v7598 = vpack.c.bf16 %v7534, %v7534
          %v7599 = vpack.c.bf16 %v7535, %v7535
          %v7600 = vpack.c.bf16 %v7536, %v7536
          %v7601 = vpack.c.bf16 %v7537, %v7537
          %v7602 = vpack.c.bf16 %v7538, %v7538
          %v7603 = vpack.c.bf16 %v7539, %v7539
          %v7604 = vpack.c.bf16 %v7540, %v7540
          %v7605 = vpack.c.bf16 %v7541, %v7541
          %v7606 = vpack.c.bf16 %v7542, %v7542
          %v7607 = vpack.c.bf16 %v7543, %v7543
          %v7608 = vpack.c.bf16 %v7544, %v7544
          %v7609 = vpack.c.bf16 %v7545, %v7545
          %v7610 = vpack.c.bf16 %v7546, %v7546
          %v7611 = vpack.c.bf16 %v7547, %v7547
          %v7612 = vpack.c.bf16 %v7548, %v7548
          %v7613 = vpack.c.bf16 %v7549, %v7549
          %v7614 = vpack.c.bf16 %v7550, %v7550
          %v7615 = vpack.c.bf16 %v7551, %v7551
          %v7616 = vpack.c.bf16 %v7552, %v7552
          %v7617 = vpack.c.bf16 %v7553, %v7553
          %v7618 = vpack.c.bf16 %v7554, %v7554
          %v7619 = vpack.c.bf16 %v7555, %v7555
          %v7620 = vpack.c.bf16 %v7556, %v7556
          %v7621 = vpack.c.bf16 %v7557, %v7557
          %v7622 = vpack.c.bf16 %v7558, %v7558
          %7623 = vst [vmem:[%s198] sm:$0xf] %v7559
          %7624 = vst [vmem:[%s198 + $0x4] sm:$0xf] %v7560
          %7625 = vst [vmem:[%s198 + $0x8] sm:$0xf] %v7561
          %7626 = vst [vmem:[%s198 + $0xc] sm:$0xf] %v7562
          %7627 = vst [vmem:[%s198 + $0x10] sm:$0xf] %v7563
          %7628 = vst [vmem:[%s198 + $0x14] sm:$0xf] %v7564
          %7629 = vst [vmem:[%s198 + $0x18] sm:$0xf] %v7565
          %7630 = vst [vmem:[%s198 + $0x1c] sm:$0xf] %v7566
          %7631 = vst [vmem:[%s198 + $0x20] sm:$0xf] %v7567
          %7632 = vst [vmem:[%s198 + $0x24] sm:$0xf] %v7568
          %7633 = vst [vmem:[%s198 + $0x28] sm:$0xf] %v7569
          %7634 = vst [vmem:[%s198 + $0x2c] sm:$0xf] %v7570
          %7635 = vst [vmem:[%s198 + $0x30] sm:$0xf] %v7571
          %7636 = vst [vmem:[%s198 + $0x34] sm:$0xf] %v7572
          %7637 = vst [vmem:[%s198 + $0x38] sm:$0xf] %v7573
          %7638 = vst [vmem:[%s198 + $0x3c] sm:$0xf] %v7574
          %7639 = vst [vmem:[%s198 + $0x40] sm:$0xf] %v7575
          %7640 = vst [vmem:[%s198 + $0x44] sm:$0xf] %v7576
          %7641 = vst [vmem:[%s198 + $0x48] sm:$0xf] %v7577
          %7642 = vst [vmem:[%s198 + $0x4c] sm:$0xf] %v7578
          %7643 = vst [vmem:[%s198 + $0x50] sm:$0xf] %v7579
          %7644 = vst [vmem:[%s198 + $0x54] sm:$0xf] %v7580
          %7645 = vst [vmem:[%s198 + $0x58] sm:$0xf] %v7581
          %7646 = vst [vmem:[%s198 + $0x5c] sm:$0xf] %v7582
          %7647 = vst [vmem:[%s198 + $0x60] sm:$0xf] %v7583
          %7648 = vst [vmem:[%s198 + $0x64] sm:$0xf] %v7584
          %7649 = vst [vmem:[%s198 + $0x68] sm:$0xf] %v7585
          %7650 = vst [vmem:[%s198 + $0x6c] sm:$0xf] %v7586
          %7651 = vst [vmem:[%s198 + $0x70] sm:$0xf] %v7587
          %7652 = vst [vmem:[%s198 + $0x74] sm:$0xf] %v7588
          %7653 = vst [vmem:[%s198 + $0x78] sm:$0xf] %v7589
          %7654 = vst [vmem:[%s198 + $0x7c] sm:$0xf] %v7590
          %7655 = vst [vmem:[%s198 + $0x80] sm:$0xf] %v7591
          %7656 = vst [vmem:[%s198 + $0x84] sm:$0xf] %v7592
          %7657 = vst [vmem:[%s198 + $0x88] sm:$0xf] %v7593
          %7658 = vst [vmem:[%s198 + $0x8c] sm:$0xf] %v7594
          %7659 = vst [vmem:[%s198 + $0x90] sm:$0xf] %v7595
          %7660 = vst [vmem:[%s198 + $0x94] sm:$0xf] %v7596
          %7661 = vst [vmem:[%s198 + $0x98] sm:$0xf] %v7597
          %7662 = vst [vmem:[%s198 + $0x9c] sm:$0xf] %v7598
          %7663 = vst [vmem:[%s198 + $0xa0] sm:$0xf] %v7599
          %7664 = vst [vmem:[%s198 + $0xa4] sm:$0xf] %v7600
          %7665 = vst [vmem:[%s198 + $0xa8] sm:$0xf] %v7601
          %7666 = vst [vmem:[%s198 + $0xac] sm:$0xf] %v7602
          %7667 = vst [vmem:[%s198 + $0xb0] sm:$0xf] %v7603
          %7668 = vst [vmem:[%s198 + $0xb4] sm:$0xf] %v7604
          %7669 = vst [vmem:[%s198 + $0xb8] sm:$0xf] %v7605
          %7670 = vst [vmem:[%s198 + $0xbc] sm:$0xf] %v7606
          %7671 = vst [vmem:[%s198 + $0xc0] sm:$0xf] %v7607
          %7672 = vst [vmem:[%s198 + $0xc4] sm:$0xf] %v7608
          %7673 = vst [vmem:[%s198 + $0xc8] sm:$0xf] %v7609
          %7674 = vst [vmem:[%s198 + $0xcc] sm:$0xf] %v7610
          %7675 = vst [vmem:[%s198 + $0xd0] sm:$0xf] %v7611
          %7676 = vst [vmem:[%s198 + $0xd4] sm:$0xf] %v7612
          %7677 = vst [vmem:[%s198 + $0xd8] sm:$0xf] %v7613
          %7678 = vst [vmem:[%s198 + $0xdc] sm:$0xf] %v7614
          %7679 = vst [vmem:[%s198 + $0xe0] sm:$0xf] %v7615
          %7680 = vst [vmem:[%s198 + $0xe4] sm:$0xf] %v7616
          %7681 = vst [vmem:[%s198 + $0xe8] sm:$0xf] %v7617
          %7682 = vst [vmem:[%s198 + $0xec] sm:$0xf] %v7618
          %7683 = vst [vmem:[%s198 + $0xf0] sm:$0xf] %v7619
          %7684 = vst [vmem:[%s198 + $0xf4] sm:$0xf] %v7620
          %7685 = vst [vmem:[%s198 + $0xf8] sm:$0xf] %v7621
          %7686 = vst [vmem:[%s198 + $0xfc] sm:$0xf] %v7622
        $region36: #{tpu_custom_call.1} parent=27 // pred_fallthru
          _
        %s7687 = sand.u32 %s110, 1
        %s7688 = scalar_lea.sflag [#allocation4], %s7687
        %s7689 = sand.u32 %s110, 1
        %s7690 = smul.addr %s7689, 256
        %s7691 = scalar_lea.vmem [#allocation3], %s7690
        // Predicated region
        $region37: #{tpu_custom_call.1} parent=27 // pred_check
          %p7692 = pneg %p120
        $region38: #{tpu_custom_call.1} parent=27 // pred_check_branch
          %7694 = sbr.rel (%p7692) target = $region40
        $region39: #{tpu_custom_call.1} parent=27 // pred_region
          %s7695 = smul.u32 16, %s23
          %7697 = vsyncadd %s7688, 0
          %s7698 = smul.addr %s7695, 4
          %s7699 = sadd.s32 %s24, %s7698
          %s7700 = smul.addr %s22, 128
          %s7701 = sadd.s32 %s7699, %s7700
          %s7702 = smul.addr %s7701, 4
          %s7703 = scalar_lea.hbm %s2, %s7702
          %s7704 = sshll.u32 %s7691, 4
          %s7705 = int_to_ptr.vmem [resolvable:$true] %s7704
          %s7706 = sshll.u32 %s7703, 4
          %s7707 = int_to_ptr.hbm [resolvable:$true] %s7706
          %7712 = dma.vmem_to_hbm [thread:$0]  %s7705, 4096, %s7707, %s7688, 64, 64, 4
        $region40: #{tpu_custom_call.1} parent=27 // pred_fallthru
          _
      $region28: #{tpu_custom_call.1} parent=5 // pred_fallthru
        _
      %p7713 = scmp.le.s32.totalorder 2, %s11
      // Predicated region
      $region41: #{tpu_custom_call.1} parent=5 // pred_check
        %p7714 = pneg %p7713
      $region42: #{tpu_custom_call.1} parent=5 // pred_check_branch
        %7716 = sbr.rel (%p7714) target = $region44
      $region43: #{tpu_custom_call.1} parent=5 // pred_region
        %s7717 = ssub.s32 %s11, 2
        // Predicated region
        $region45: #{tpu_custom_call.1} parent=43 // pred_check
          %p7718 = pneg %p126
        $region46: #{tpu_custom_call.1} parent=43 // pred_check_branch
          %7720 = sbr.rel (%p7718) target = $region48
        $region47: #{tpu_custom_call.1} parent=43 // pred_region
          %s7721 = sand.u32 %s111, 1
          %s7722 = scalar_lea.sflag [#allocation4], %s7721
          %s7723 = sand.u32 %s111, 1
          %s7724 = smul.addr %s7723, 256
          %s7725 = scalar_lea.vmem [#allocation3], %s7724
          %7727 = dma.done %s7722, 4096
        $region48: #{tpu_custom_call.1} parent=43 // pred_fallthru
          _
      $region44: #{tpu_custom_call.1} parent=5 // pred_fallthru
        _
    $region6: #{tpu_custom_call.1} parent=1 // loop_footer
      %s15 = sadd.s32 1, %s11
    $region7: #{tpu_custom_call.1} parent=1 // loop_footer_branch
      %10 = sbr.rel target = $region3
    $region8: #{tpu_custom_call.1} parent=1 // loop_exit
      _
    %7728 = vsyncpa [#allocation4], 1
    %s7729 = scalar_lea.sflag [#allocation4], 1
    %7730 = vsyncpa %s7729, 1

</llo_original>
